<compile_context>
chip_gen: v5e
topology: v5e:2x2
jax: 0.10.0
libtpu: 0.0.40
codegen_flags: <defaults>
</compile_context>

<pallas_src>
import math

import jax
import jax.numpy as jnp
from jax.experimental import pallas as pl
from jax.experimental.pallas import tpu as pltpu

ALPHA = 0.25
# gamma == 2 -> pow(x, 2) == x * x inside the kernel
NF = 20  # per-gt scalar fields: cx,cy,w,h,theta,class,valid,hx1,hy1,hx2,hy2,parea,quad(8)


# --------------------------- fused Pallas kernel ---------------------------

def _make_kernel(m_gt, c_dim, ta):
    def kernel(gt_ref, anchors_ref, cls_ref, reg_ref,
               cls_out, reg_out, cnt_out,
               acc_cls, acc_reg, acc_pos):
        ti = pl.program_id(1)

        @pl.when(ti == 0)
        def _init():
            acc_cls[...] = jnp.zeros_like(acc_cls)
            acc_reg[...] = jnp.zeros_like(acc_reg)
            acc_pos[...] = jnp.zeros_like(acc_pos)
            cls_out[...] = jnp.zeros_like(cls_out)
            reg_out[...] = jnp.zeros_like(reg_out)
            cnt_out[...] = jnp.zeros_like(cnt_out)

        an = anchors_ref[...]                          # [6, TA] lane-dense anchors
        ax1, ay1 = an[0:1, :], an[1:2, :]
        ax2, ay2 = an[2:3, :], an[3:4, :]
        atheta = an[4:5, :]
        avalid = an[5:6, :] > 0.0
        aw = ax2 - ax1
        ah = ay2 - ay1
        acx = ax1 + 0.5 * aw
        acy = ay1 + 0.5 * ah
        area_a = aw * ah                               # [1, TA]

        gt = gt_ref[0]                                 # [M, NF] (tiny)

        f32 = jnp.float32
        best_iou = jnp.full((1, ta), -1.0, f32)
        best_skew = jnp.zeros((1, ta), f32)
        b_cx = jnp.zeros((1, ta), f32)
        b_cy = jnp.zeros((1, ta), f32)
        b_w = jnp.ones((1, ta), f32)
        b_h = jnp.ones((1, ta), f32)
        b_th = jnp.zeros((1, ta), f32)
        b_cls = jnp.zeros((1, ta), f32)

        for m in range(m_gt):                          # M is small and static -> unrolled
            row = gt[m:m + 1, :]                       # [1, NF]

            def fld(k, _row=row):
                return _row[:, k:k + 1]                # [1, 1]

            cx, cy, gw, gh = fld(0), fld(1), fld(2), fld(3)
            gth, gcls, gval = fld(4), fld(5), fld(6)
            bx1, by1, bx2, by2 = fld(7), fld(8), fld(9), fld(10)
            parea = fld(11)

            # --- horizontal IoU of this gt vs every anchor in the tile (exact divide) ---
            iw = jnp.maximum(jnp.minimum(ax2, bx2) - jnp.maximum(ax1, bx1), 0.0)
            ih = jnp.maximum(jnp.minimum(ay2, by2) - jnp.maximum(ay1, by1), 0.0)
            inter = iw * ih
            ua = jnp.maximum(area_a + (bx2 - bx1) * (by2 - by1) - inter, 1e-8)
            iou = inter / ua
            # padded gt rows can never win (gval in {0, 1}): valid -> iou, invalid -> -1
            iou = iou * gval - (1.0 - gval)

            # --- exact area of (rotated gt quad) ∩ (axis-aligned anchor rect) ---
            # For each quad edge, integrate clamp(y(x), ay1, ay2) over x clipped to [ax1, ax2];
            # the (orientation-signed) sum over edges is the intersection area.
            sarea = jnp.zeros((1, ta), f32)
            for e in range(4):
                e2 = (e + 1) % 4
                xa, ya = fld(12 + 2 * e), fld(13 + 2 * e)
                xb, yb = fld(12 + 2 * e2), fld(13 + 2 * e2)
                dxe = xb - xa
                dx_safe = jnp.where(jnp.abs(dxe) < 1e-9, 1.0, dxe)
                slope = (yb - ya) / dx_safe
                flatf = (jnp.abs(slope) < 1e-9).astype(f32)          # [1,1] in {0,1}
                inv2m = 0.5 / jnp.where(jnp.abs(slope) < 1e-9, 1.0, slope)
                u = jnp.minimum(jnp.maximum(xa, ax1), ax2)           # [1, TA]
                v = jnp.minimum(jnp.maximum(xb, ax1), ax2)
                duv = v - u
                fu = ya + slope * (u - xa)
                fv = ya + slope * (v - xa)

                def int_relu(cc, _fu=fu, _fv=fv, _ya=ya, _duv=duv,
                             _inv2m=inv2m, _flatf=flatf):
                    lo = jnp.maximum(_fu - cc, 0.0)
                    hi = jnp.maximum(_fv - cc, 0.0)
                    lin = jnp.maximum(_ya - cc, 0.0) * _duv          # slope == 0 branch
                    quad = (hi * hi - lo * lo) * _inv2m              # slope != 0 branch
                    return quad + (lin - quad) * _flatf

                sarea = sarea - (ay1 * duv + int_relu(ay1) - int_relu(ay2))
            sarea = jnp.abs(sarea)
            skew = sarea / jnp.maximum(parea + area_a - sarea, 1e-8)

            # running argmax carry (strict > keeps torch's first-index tie-break)
            take = iou > best_iou
            best_iou = jnp.where(take, iou, best_iou)
            best_skew = jnp.where(take, skew, best_skew)
            b_cx = jnp.where(take, cx, b_cx)
            b_cy = jnp.where(take, cy, b_cy)
            b_w = jnp.where(take, gw, b_w)
            b_h = jnp.where(take, gh, b_h)
            b_th = jnp.where(take, gth, b_th)
            b_cls = jnp.where(take, gcls, b_cls)

        pos = (best_iou >= 0.6) & (best_skew >= 0.3)   # rotation-positive anchors
        neg = (best_iou < 0.4) & avalid                # background anchors (padded cols excluded)
        posf = pos.astype(f32)
        acc_pos[...] += posf

        # --- masked smooth-L1 regression loss (targets built on the fly) ---
        aw_s = jnp.maximum(aw, 1e-6)
        ah_s = jnp.maximum(ah, 1e-6)
        tdx = jnp.where(pos, (b_cx - acx) / aw_s, 0.0)
        tdy = jnp.where(pos, (b_cy - acy) / ah_s, 0.0)
        tdw = jnp.where(pos, jnp.log(b_w / aw_s), 0.0)
        tdh = jnp.where(pos, jnp.log(b_h / ah_s), 0.0)
        tdt = jnp.where(pos, (b_th - atheta) * (math.pi / 180.0), 0.0)

        reg = reg_ref[0]                               # [5, TA]

        def sl1(t, r):
            d = jnp.abs(t - r)
            return jnp.where(d <= 1.0, 0.5 * d * d, d - 0.5)

        rl = (sl1(tdx, reg[0:1, :]) + sl1(tdy, reg[1:2, :]) + sl1(tdw, reg[2:3, :])
              + sl1(tdh, reg[3:4, :]) + sl1(tdt, reg[4:5, :]))
        acc_reg[...] += rl * posf

        # --- focal classification loss (single log/element, ignore folded into alpha) ---
        c = jnp.clip(cls_ref[0], 1e-4, 1.0 - 1e-4)                    # [C, TA]
        cls_idx = jnp.where(pos, b_cls, -1.0).astype(jnp.int32)       # -1 sentinel never matches
        class_iota = jax.lax.broadcasted_iota(jnp.int32, (c_dim, ta), 0)
        is_one = class_iota == cls_idx                                # target == 1
        bg_alpha = jnp.where(pos | neg, 1.0 - ALPHA, 0.0)             # 0 -> ignore anchor
        alpha_f = jnp.where(is_one, ALPHA, bg_alpha)
        fw = jnp.where(is_one, 1.0 - c, c)
        bce = -jnp.log(jnp.where(is_one, c, 1.0 - c))
        acc_cls[...] += jnp.sum(alpha_f * (fw * fw) * bce, axis=0, keepdims=True)

        @pl.when(ti == pl.num_programs(1) - 1)
        def _finalize():
            cls_out[...] += jnp.sum(acc_cls[...])
            reg_out[...] += jnp.sum(acc_reg[...])
            cnt_out[...] += jnp.sum(acc_pos[...])

    return kernel


# ----------------------------- small JAX helpers -----------------------------

def _box_points(boxes5):
    """cv2.boxPoints equivalent. boxes5: [..., 5] = (cx, cy, w, h, theta_deg) -> [..., 4, 2]."""
    cx, cy, w, h, th = (boxes5[..., 0], boxes5[..., 1], boxes5[..., 2],
                        boxes5[..., 3], boxes5[..., 4])
    ang = th * (math.pi / 180.0)
    a = jnp.sin(ang) * 0.5
    b = jnp.cos(ang) * 0.5
    p0x = cx - a * h - b * w
    p0y = cy + b * h - a * w
    p1x = cx + a * h - b * w
    p1y = cy - b * h - a * w
    p2x = 2.0 * cx - p0x
    p2y = 2.0 * cy - p0y
    p3x = 2.0 * cx - p1x
    p3y = 2.0 * cy - p1y
    return jnp.stack([jnp.stack([p0x, p0y], -1), jnp.stack([p1x, p1y], -1),
                      jnp.stack([p2x, p2y], -1), jnp.stack([p3x, p3y], -1)], axis=-2)


def _shoelace(pts):
    x, y = pts[..., 0], pts[..., 1]
    x2, y2 = jnp.roll(x, -1, axis=-1), jnp.roll(y, -1, axis=-1)
    return 0.5 * jnp.abs(jnp.sum(x * y2 - x2 * y, axis=-1))


def _pad_last(x, target, value=0.0):
    pad = target - x.shape[-1]
    if pad == 0:
        return x
    widths = [(0, 0)] * (x.ndim - 1) + [(0, pad)]
    return jnp.pad(x, widths, constant_values=x.dtype.type(value))


def _pick_tile(a_pad, c_dim):
    """Largest anchor tile whose double-buffered inputs + scratch stay well under VMEM.

    Budgeted to ~18 MiB so the same tiling is safe on v7x (64 MiB VMEM / 32 MiB scoped
    default) as well as v5e/v6e (128 MiB)."""
    per_anchor = 4 * (2 * (6 + c_dim + 5) + 3)
    budget = 18 * 1024 * 1024
    for cand in (a_pad, 32768, 16384, 8192, 4096, 2048, 1024, 512, 256, 128):
        if cand >= 128 and a_pad % cand == 0 and cand * per_anchor <= budget:
            return cand
    return 128


# ----------------------------- FocalLoss forward -----------------------------

@jax.jit
def focal_loss_forward(classifications, regressions, anchors, annotations):
    f32 = jnp.float32
    classifications = classifications.astype(f32)
    regressions = regressions.astype(f32)
    anchors = anchors.astype(f32)
    annotations = annotations.astype(f32)

    B, A, C = classifications.shape
    M = annotations.shape[1]

    a_pad = ((A + 127) // 128) * 128
    ta = _pick_tile(a_pad, C)
    grid_t = a_pad // ta

    # --- per-gt scalar table [B, M, NF] (tiny) ---
    quads = _box_points(annotations[..., :5])                          # [B, M, 4, 2]
    hx1 = quads[..., 0].min(axis=-1)
    hy1 = quads[..., 1].min(axis=-1)
    hx2 = quads[..., 0].max(axis=-1)
    hy2 = quads[..., 1].max(axis=-1)
    parea = _shoelace(quads)                                           # [B, M]
    valid = (annotations[..., 5] != -1.0).astype(f32)
    gw = jnp.maximum(annotations[..., 2], 1.0)                         # clamp feeds regression only
    gh = jnp.maximum(annotations[..., 3], 1.0)
    gt_tab = jnp.concatenate(
        [annotations[..., 0:2], gw[..., None], gh[..., None],
         annotations[..., 4:5], annotations[..., 5:6], valid[..., None],
         hx1[..., None], hy1[..., None], hx2[..., None], hy2[..., None],
         parea[..., None], quads.reshape(B, M, 8)], axis=-1)           # [B, M, 20]

    # --- anchors, lane-dense [6, A_pad]: x1, y1, x2, y2, theta, valid ---
    anc = anchors[0]
    anchors_t = jnp.concatenate([anc[:, :5].T, jnp.ones((1, A), f32)], axis=0)
    anchors_t = _pad_last(anchors_t, a_pad, 0.0)

    # --- lane-dense model outputs ---
    # TODO(synk): this swapaxes+pad of `classifications` is one extra HBM round trip of the
    # largest tensor; produce it in [B, C, A] upstream (or read [B, A, C] directly when C >= 128).
    cls_t = _pad_last(jnp.swapaxes(classifications, 1, 2), a_pad, 0.5)  # [B, C, A_pad]
    reg_t = _pad_last(jnp.swapaxes(regressions, 1, 2), a_pad, 0.0)      # [B, 5, A_pad]

    kernel = _make_kernel(M, C, ta)
    cost = pl.CostEstimate(
        flops=int(B * a_pad * (M * 170 + C * 8 + 60)),
        transcendentals=int(B * a_pad * (C + 2)),
        bytes_accessed=int(4 * (B * a_pad * (C + 5) + 6 * a_pad + B * M * NF + 3 * B)))

    out3 = jax.ShapeDtypeStruct((B, 1, 1), f32)
    acc_map = lambda bi, ti: (bi, 0, 0)
    cls_sums, reg_sums, pos_cnt = pl.pallas_call(
        kernel,
        out_shape=(out3, out3, out3),
        grid_spec=pltpu.PrefetchScalarGridSpec(
            num_scalar_prefetch=0,
            grid=(B, grid_t),
            in_specs=[pl.BlockSpec((1, M, NF), lambda bi, ti: (bi, 0, 0)),
                      pl.BlockSpec((6, ta), lambda bi, ti: (0, ti)),
                      pl.BlockSpec((1, C, ta), lambda bi, ti: (bi, 0, ti)),
                      pl.BlockSpec((1, 5, ta), lambda bi, ti: (bi, 0, ti))],
            out_specs=(pl.BlockSpec((1, 1, 1), acc_map),
                       pl.BlockSpec((1, 1, 1), acc_map),
                       pl.BlockSpec((1, 1, 1), acc_map)),
            scratch_shapes=[pltpu.VMEM((1, ta), jnp.float32),
                            pltpu.VMEM((1, ta), jnp.float32),
                            pltpu.VMEM((1, ta), jnp.float32)]),
        compiler_params=pltpu.CompilerParams(
            dimension_semantics=("parallel", "arbitrary"),
            vmem_limit_bytes=48 * 1024 * 1024),
        cost_estimate=cost,
    )(gt_tab, anchors_t, cls_t, reg_t)

    num_pos = pos_cnt[:, 0, 0]
    cls_loss = cls_sums[:, 0, 0] / jnp.maximum(num_pos, 1.0)
    reg_loss = jnp.where(num_pos > 0.0,
                         reg_sums[:, 0, 0] / jnp.maximum(5.0 * num_pos, 1.0), 0.0)

    return (jnp.mean(cls_loss, keepdims=True),
            jnp.mean(reg_loss, keepdims=True) * 50.0)


# ----------------------------- demo -----------------------------

if __name__ == "__main__":
    B, A, C, M = 2, 128, 8, 8  # 128 anchors = 16x8 grid, stride 8, 12x12 boxes

    key = jax.random.PRNGKey(0)
    k_cls, k_reg = jax.random.split(key)

    # anchors: [1, A, 5] = (x1, y1, x2, y2, theta=0)
    ys, xs = jnp.meshgrid(jnp.arange(8, dtype=jnp.float32),
                          jnp.arange(16, dtype=jnp.float32), indexing="ij")
    cx = (xs.reshape(-1) + 0.5) * 8.0
    cy = (ys.reshape(-1) + 0.5) * 8.0
    anchors = jnp.stack([cx - 6.0, cy - 6.0, cx + 6.0, cy + 6.0,
                         jnp.zeros_like(cx)], axis=1)[None]                # [1,128,5]

    # annotations: [B, M, 6] = (cx, cy, w, h, theta_deg, class); class -1 => padding
    pad = [0.0, 0.0, 1.0, 1.0, 0.0, -1.0]
    ann0 = [[20.0, 20.0, 12.0, 14.0, 10.0, 2.0],
            [60.0, 36.0, 14.0, 12.0, -15.0, 0.0],
            [100.0, 52.0, 12.0, 12.0, 5.0, 3.0]] + [pad] * (M - 3)
    ann1 = [[36.0, 28.0, 13.0, 13.0, 20.0, 1.0],
            [84.0, 44.0, 12.0, 15.0, -8.0, 2.0]] + [pad] * (M - 2)
    annotations = jnp.asarray([ann0, ann1], dtype=jnp.float32)             # [2,8,6]

    classifications = jax.nn.sigmoid(jax.random.normal(k_cls, (B, A, C), jnp.float32))
    regressions = 0.1 * jax.random.normal(k_reg, (B, A, 5), jnp.float32)

    cls_loss, reg_loss = focal_loss_forward(classifications, regressions, anchors, annotations)
    jax.block_until_ready((cls_loss, reg_loss))

    print("KERNEL_OK")
</pallas_src>

<mosaic_0001>
module attributes {stable_mosaic.version = 11 : i64} {
  func.func @kernel(%arg0: i32, %arg1: i32, %arg2: memref<1x8x20xf32, #tpu.memory_space<vmem>>, %arg3: memref<6x128xf32, #tpu.memory_space<vmem>>, %arg4: memref<1x8x128xf32, #tpu.memory_space<vmem>>, %arg5: memref<1x5x128xf32, #tpu.memory_space<vmem>>, %arg6: memref<1x1x1xf32, #tpu.memory_space<vmem>>, %arg7: memref<1x1x1xf32, #tpu.memory_space<vmem>>, %arg8: memref<1x1x1xf32, #tpu.memory_space<vmem>>, %arg9: memref<1x128xf32, #tpu.memory_space<vmem>>, %arg10: memref<1x128xf32, #tpu.memory_space<vmem>>, %arg11: memref<1x128xf32, #tpu.memory_space<vmem>>) attributes {dimension_semantics = [#tpu.dimension_semantics<parallel>, #tpu.dimension_semantics<arbitrary>], iteration_bounds = array<i64: 2, 1>, scalar_prefetch = 0 : i64, scratch_operands = 3 : i64, tpu.core_type = #tpu.core_type<tc>, window_params = [{transform_indices = @transform_0, window_bounds = array<i64: 1, 8, 20>}, {transform_indices = @transform_1, window_bounds = array<i64: 6, 128>}, {transform_indices = @transform_2, window_bounds = array<i64: 1, 8, 128>}, {transform_indices = @transform_3, window_bounds = array<i64: 1, 5, 128>}, {transform_indices = @transform_4, window_bounds = array<i64: 1, 1, 1>}, {transform_indices = @transform_5, window_bounds = array<i64: 1, 1, 1>}, {transform_indices = @transform_6, window_bounds = array<i64: 1, 1, 1>}]} {
    %c0_i32 = arith.constant 0 : i32
    %0 = arith.cmpi eq, %arg1, %c0_i32 : i32
    %1 = arith.extui %0 : i1 to i32
    %c0_i32_0 = arith.constant 0 : i32
    %2 = arith.cmpi ne, %1, %c0_i32_0 : i32
    scf.if %2 {
      %cst_503 = arith.constant 0.000000e+00 : f32
      %3534 = vector.broadcast %cst_503 : f32 to vector<1x128xf32>
      %c0_504 = arith.constant 0 : index
      %c0_505 = arith.constant 0 : index
      %3535 = vector.load %arg9[%c0_504, %c0_505] : memref<1x128xf32, #tpu.memory_space<vmem>>, vector<1x128xf32>
      tpu.vector_store %arg9[%c0_504, %c0_505], %3534 {strides = array<i32>} : memref<1x128xf32, #tpu.memory_space<vmem>>, vector<1x128xf32>,
      %cst_506 = arith.constant 0.000000e+00 : f32
      %3536 = vector.broadcast %cst_506 : f32 to vector<1x128xf32>
      %c0_507 = arith.constant 0 : index
      %c0_508 = arith.constant 0 : index
      %3537 = vector.load %arg10[%c0_507, %c0_508] : memref<1x128xf32, #tpu.memory_space<vmem>>, vector<1x128xf32>
      tpu.vector_store %arg10[%c0_507, %c0_508], %3536 {strides = array<i32>} : memref<1x128xf32, #tpu.memory_space<vmem>>, vector<1x128xf32>,
      %cst_509 = arith.constant 0.000000e+00 : f32
      %3538 = vector.broadcast %cst_509 : f32 to vector<1x128xf32>
      %c0_510 = arith.constant 0 : index
      %c0_511 = arith.constant 0 : index
      %3539 = vector.load %arg11[%c0_510, %c0_511] : memref<1x128xf32, #tpu.memory_space<vmem>>, vector<1x128xf32>
      tpu.vector_store %arg11[%c0_510, %c0_511], %3538 {strides = array<i32>} : memref<1x128xf32, #tpu.memory_space<vmem>>, vector<1x128xf32>,
      %cst_512 = arith.constant 0.000000e+00 : f32
      %3540 = vector.broadcast %cst_512 : f32 to vector<1x1x1xf32>
      %c0_513 = arith.constant 0 : index
      %c0_514 = arith.constant 0 : index
      %c0_515 = arith.constant 0 : index
      %3541 = vector.load %arg6[%c0_513, %c0_514, %c0_515] : memref<1x1x1xf32, #tpu.memory_space<vmem>>, vector<1x1x1xf32>
      tpu.vector_store %arg6[%c0_513, %c0_514, %c0_515], %3540 {strides = array<i32>} : memref<1x1x1xf32, #tpu.memory_space<vmem>>, vector<1x1x1xf32>,
      %cst_516 = arith.constant 0.000000e+00 : f32
      %3542 = vector.broadcast %cst_516 : f32 to vector<1x1x1xf32>
      %c0_517 = arith.constant 0 : index
      %c0_518 = arith.constant 0 : index
      %c0_519 = arith.constant 0 : index
      %3543 = vector.load %arg7[%c0_517, %c0_518, %c0_519] : memref<1x1x1xf32, #tpu.memory_space<vmem>>, vector<1x1x1xf32>
      tpu.vector_store %arg7[%c0_517, %c0_518, %c0_519], %3542 {strides = array<i32>} : memref<1x1x1xf32, #tpu.memory_space<vmem>>, vector<1x1x1xf32>,
      %cst_520 = arith.constant 0.000000e+00 : f32
      %3544 = vector.broadcast %cst_520 : f32 to vector<1x1x1xf32>
      %c0_521 = arith.constant 0 : index
      %c0_522 = arith.constant 0 : index
      %c0_523 = arith.constant 0 : index
      %3545 = vector.load %arg8[%c0_521, %c0_522, %c0_523] : memref<1x1x1xf32, #tpu.memory_space<vmem>>, vector<1x1x1xf32>
      tpu.vector_store %arg8[%c0_521, %c0_522, %c0_523], %3544 {strides = array<i32>} : memref<1x1x1xf32, #tpu.memory_space<vmem>>, vector<1x1x1xf32>,
    } else {
    }
    %c0 = arith.constant 0 : index
    %c0_1 = arith.constant 0 : index
    %3 = vector.load %arg3[%c0, %c0_1] : memref<6x128xf32, #tpu.memory_space<vmem>>, vector<6x128xf32>
    %4 = vector.extract_strided_slice %3 {offsets = [0, 0], sizes = [1, 128], strides = [1, 1]} : vector<6x128xf32> to vector<1x128xf32>
    %5 = vector.extract_strided_slice %3 {offsets = [1, 0], sizes = [1, 128], strides = [1, 1]} : vector<6x128xf32> to vector<1x128xf32>
    %6 = vector.extract_strided_slice %3 {offsets = [2, 0], sizes = [1, 128], strides = [1, 1]} : vector<6x128xf32> to vector<1x128xf32>
    %7 = vector.extract_strided_slice %3 {offsets = [3, 0], sizes = [1, 128], strides = [1, 1]} : vector<6x128xf32> to vector<1x128xf32>
    %8 = vector.extract_strided_slice %3 {offsets = [4, 0], sizes = [1, 128], strides = [1, 1]} : vector<6x128xf32> to vector<1x128xf32>
    %9 = vector.extract_strided_slice %3 {offsets = [5, 0], sizes = [1, 128], strides = [1, 1]} : vector<6x128xf32> to vector<1x128xf32>
    %cst = arith.constant 0.000000e+00 : f32
    %10 = vector.broadcast %cst : f32 to vector<1x128xf32>
    %11 = arith.cmpf ogt, %9, %10 : vector<1x128xf32>
    %12 = arith.subf %6, %4 : vector<1x128xf32>
    %13 = arith.subf %7, %5 : vector<1x128xf32>
    %cst_2 = arith.constant 5.000000e-01 : f32
    %14 = vector.broadcast %cst_2 : f32 to vector<1x128xf32>
    %15 = arith.mulf %14, %12 : vector<1x128xf32>
    %16 = arith.addf %4, %15 : vector<1x128xf32>
    %cst_3 = arith.constant 5.000000e-01 : f32
    %17 = vector.broadcast %cst_3 : f32 to vector<1x128xf32>
    %18 = arith.mulf %17, %13 : vector<1x128xf32>
    %19 = arith.addf %5, %18 : vector<1x128xf32>
    %20 = arith.mulf %12, %13 : vector<1x128xf32>
    %c0_4 = arith.constant 0 : index
    %c0_5 = arith.constant 0 : index
    %c0_6 = arith.constant 0 : index
    %21 = vector.load %arg2[%c0_4, %c0_5, %c0_6] : memref<1x8x20xf32, #tpu.memory_space<vmem>>, vector<1x8x20xf32>
    %22 = vector.shape_cast %21 : vector<1x8x20xf32> to vector<8x20xf32>
    %cst_7 = arith.constant -1.000000e+00 : f32
    %23 = vector.broadcast %cst_7 : f32 to vector<1x128xf32>
    %cst_8 = arith.constant 0.000000e+00 : f32
    %24 = vector.broadcast %cst_8 : f32 to vector<1x128xf32>
    %cst_9 = arith.constant 0.000000e+00 : f32
    %25 = vector.broadcast %cst_9 : f32 to vector<1x128xf32>
    %cst_10 = arith.constant 0.000000e+00 : f32
    %26 = vector.broadcast %cst_10 : f32 to vector<1x128xf32>
    %cst_11 = arith.constant 1.000000e+00 : f32
    %27 = vector.broadcast %cst_11 : f32 to vector<1x128xf32>
    %cst_12 = arith.constant 1.000000e+00 : f32
    %28 = vector.broadcast %cst_12 : f32 to vector<1x128xf32>
    %cst_13 = arith.constant 0.000000e+00 : f32
    %29 = vector.broadcast %cst_13 : f32 to vector<1x128xf32>
    %cst_14 = arith.constant 0.000000e+00 : f32
    %30 = vector.broadcast %cst_14 : f32 to vector<1x128xf32>
    %31 = vector.extract_strided_slice %22 {offsets = [0, 0], sizes = [1, 20], strides = [1, 1]} : vector<8x20xf32> to vector<1x20xf32>
    %32 = vector.extract_strided_slice %31 {offsets = [0, 0], sizes = [1, 1], strides = [1, 1]} : vector<1x20xf32> to vector<1x1xf32>
    %33 = vector.extract_strided_slice %31 {offsets = [0, 1], sizes = [1, 1], strides = [1, 1]} : vector<1x20xf32> to vector<1x1xf32>
    %34 = vector.extract_strided_slice %31 {offsets = [0, 2], sizes = [1, 1], strides = [1, 1]} : vector<1x20xf32> to vector<1x1xf32>
    %35 = vector.extract_strided_slice %31 {offsets = [0, 3], sizes = [1, 1], strides = [1, 1]} : vector<1x20xf32> to vector<1x1xf32>
    %36 = vector.extract_strided_slice %31 {offsets = [0, 4], sizes = [1, 1], strides = [1, 1]} : vector<1x20xf32> to vector<1x1xf32>
    %37 = vector.extract_strided_slice %31 {offsets = [0, 5], sizes = [1, 1], strides = [1, 1]} : vector<1x20xf32> to vector<1x1xf32>
    %38 = vector.extract_strided_slice %31 {offsets = [0, 6], sizes = [1, 1], strides = [1, 1]} : vector<1x20xf32> to vector<1x1xf32>
    %39 = vector.extract_strided_slice %31 {offsets = [0, 7], sizes = [1, 1], strides = [1, 1]} : vector<1x20xf32> to vector<1x1xf32>
    %40 = vector.extract_strided_slice %31 {offsets = [0, 8], sizes = [1, 1], strides = [1, 1]} : vector<1x20xf32> to vector<1x1xf32>
    %41 = vector.extract_strided_slice %31 {offsets = [0, 9], sizes = [1, 1], strides = [1, 1]} : vector<1x20xf32> to vector<1x1xf32>
    %42 = vector.extract_strided_slice %31 {offsets = [0, 10], sizes = [1, 1], strides = [1, 1]} : vector<1x20xf32> to vector<1x1xf32>
    %43 = vector.extract_strided_slice %31 {offsets = [0, 11], sizes = [1, 1], strides = [1, 1]} : vector<1x20xf32> to vector<1x1xf32>
    %44 = vector.broadcast %41 : vector<1x1xf32> to vector<1x128xf32>
    %45 = arith.minimumf %6, %44 : vector<1x128xf32>
    %46 = vector.broadcast %39 : vector<1x1xf32> to vector<1x128xf32>
    %47 = arith.maximumf %4, %46 : vector<1x128xf32>
    %48 = arith.subf %45, %47 : vector<1x128xf32>
    %cst_15 = arith.constant 0.000000e+00 : f32
    %49 = vector.broadcast %cst_15 : f32 to vector<1x128xf32>
    %50 = arith.maximumf %48, %49 : vector<1x128xf32>
    %51 = vector.broadcast %42 : vector<1x1xf32> to vector<1x128xf32>
    %52 = arith.minimumf %7, %51 : vector<1x128xf32>
    %53 = vector.broadcast %40 : vector<1x1xf32> to vector<1x128xf32>
    %54 = arith.maximumf %5, %53 : vector<1x128xf32>
    %55 = arith.subf %52, %54 : vector<1x128xf32>
    %cst_16 = arith.constant 0.000000e+00 : f32
    %56 = vector.broadcast %cst_16 : f32 to vector<1x128xf32>
    %57 = arith.maximumf %55, %56 : vector<1x128xf32>
    %58 = arith.mulf %50, %57 : vector<1x128xf32>
    %59 = arith.subf %41, %39 : vector<1x1xf32>
    %60 = arith.subf %42, %40 : vector<1x1xf32>
    %61 = arith.mulf %59, %60 : vector<1x1xf32>
    %62 = vector.broadcast %61 : vector<1x1xf32> to vector<1x128xf32>
    %63 = arith.addf %20, %62 : vector<1x128xf32>
    %64 = arith.subf %63, %58 : vector<1x128xf32>
    %cst_17 = arith.constant 9.99999993E-9 : f32
    %65 = vector.broadcast %cst_17 : f32 to vector<1x128xf32>
    %66 = arith.maximumf %64, %65 : vector<1x128xf32>
    %67 = arith.divf %58, %66 : vector<1x128xf32>
    %68 = vector.broadcast %38 : vector<1x1xf32> to vector<1x128xf32>
    %69 = arith.mulf %67, %68 : vector<1x128xf32>
    %cst_18 = arith.constant 1.000000e+00 : f32
    %70 = vector.broadcast %cst_18 : f32 to vector<1x1xf32>
    %71 = arith.subf %70, %38 : vector<1x1xf32>
    %72 = vector.broadcast %71 : vector<1x1xf32> to vector<1x128xf32>
    %73 = arith.subf %69, %72 : vector<1x128xf32>
    %cst_19 = arith.constant 0.000000e+00 : f32
    %74 = vector.broadcast %cst_19 : f32 to vector<1x128xf32>
    %75 = vector.extract_strided_slice %31 {offsets = [0, 12], sizes = [1, 1], strides = [1, 1]} : vector<1x20xf32> to vector<1x1xf32>
    %76 = vector.extract_strided_slice %31 {offsets = [0, 13], sizes = [1, 1], strides = [1, 1]} : vector<1x20xf32> to vector<1x1xf32>
    %77 = vector.extract_strided_slice %31 {offsets = [0, 14], sizes = [1, 1], strides = [1, 1]} : vector<1x20xf32> to vector<1x1xf32>
    %78 = vector.extract_strided_slice %31 {offsets = [0, 15], sizes = [1, 1], strides = [1, 1]} : vector<1x20xf32> to vector<1x1xf32>
    %79 = arith.subf %77, %75 : vector<1x1xf32>
    %80 = math.absf %79 : vector<1x1xf32>
    %cst_20 = arith.constant 9.99999971E-10 : f32
    %81 = vector.broadcast %cst_20 : f32 to vector<1x1xf32>
    %82 = arith.cmpf olt, %80, %81 : vector<1x1xf32>
    %cst_21 = arith.constant 1.000000e+00 : f32
    %83 = vector.broadcast %cst_21 : f32 to vector<1x1xf32>
    %84 = arith.select %82, %83, %79 : vector<1x1xi1>, vector<1x1xf32>
    %85 = arith.subf %78, %76 : vector<1x1xf32>
    %86 = arith.divf %85, %84 : vector<1x1xf32>
    %87 = math.absf %86 : vector<1x1xf32>
    %cst_22 = arith.constant 9.99999971E-10 : f32
    %88 = vector.broadcast %cst_22 : f32 to vector<1x1xf32>
    %89 = arith.cmpf olt, %87, %88 : vector<1x1xf32>
    %90 = arith.extui %89 : vector<1x1xi1> to vector<1x1xi32>
    %91 = arith.sitofp %90 : vector<1x1xi32> to vector<1x1xf32>
    %92 = math.absf %86 : vector<1x1xf32>
    %cst_23 = arith.constant 9.99999971E-10 : f32
    %93 = vector.broadcast %cst_23 : f32 to vector<1x1xf32>
    %94 = arith.cmpf olt, %92, %93 : vector<1x1xf32>
    %cst_24 = arith.constant 1.000000e+00 : f32
    %95 = vector.broadcast %cst_24 : f32 to vector<1x1xf32>
    %96 = arith.select %94, %95, %86 : vector<1x1xi1>, vector<1x1xf32>
    %cst_25 = arith.constant 5.000000e-01 : f32
    %97 = vector.broadcast %cst_25 : f32 to vector<1x1xf32>
    %98 = arith.divf %97, %96 : vector<1x1xf32>
    %99 = vector.broadcast %75 : vector<1x1xf32> to vector<1x128xf32>
    %100 = arith.maximumf %99, %4 : vector<1x128xf32>
    %101 = arith.minimumf %100, %6 : vector<1x128xf32>
    %102 = vector.broadcast %77 : vector<1x1xf32> to vector<1x128xf32>
    %103 = arith.maximumf %102, %4 : vector<1x128xf32>
    %104 = arith.minimumf %103, %6 : vector<1x128xf32>
    %105 = arith.subf %104, %101 : vector<1x128xf32>
    %106 = vector.broadcast %75 : vector<1x1xf32> to vector<1x128xf32>
    %107 = arith.subf %101, %106 : vector<1x128xf32>
    %108 = vector.broadcast %86 : vector<1x1xf32> to vector<1x128xf32>
    %109 = arith.mulf %108, %107 : vector<1x128xf32>
    %110 = vector.broadcast %76 : vector<1x1xf32> to vector<1x128xf32>
    %111 = arith.addf %110, %109 : vector<1x128xf32>
    %112 = vector.broadcast %75 : vector<1x1xf32> to vector<1x128xf32>
    %113 = arith.subf %104, %112 : vector<1x128xf32>
    %114 = vector.broadcast %86 : vector<1x1xf32> to vector<1x128xf32>
    %115 = arith.mulf %114, %113 : vector<1x128xf32>
    %116 = vector.broadcast %76 : vector<1x1xf32> to vector<1x128xf32>
    %117 = arith.addf %116, %115 : vector<1x128xf32>
    %118 = arith.mulf %5, %105 : vector<1x128xf32>
    %119 = arith.subf %111, %5 : vector<1x128xf32>
    %cst_26 = arith.constant 0.000000e+00 : f32
    %120 = vector.broadcast %cst_26 : f32 to vector<1x128xf32>
    %121 = arith.maximumf %119, %120 : vector<1x128xf32>
    %122 = arith.subf %117, %5 : vector<1x128xf32>
    %cst_27 = arith.constant 0.000000e+00 : f32
    %123 = vector.broadcast %cst_27 : f32 to vector<1x128xf32>
    %124 = arith.maximumf %122, %123 : vector<1x128xf32>
    %125 = vector.broadcast %76 : vector<1x1xf32> to vector<1x128xf32>
    %126 = arith.subf %125, %5 : vector<1x128xf32>
    %cst_28 = arith.constant 0.000000e+00 : f32
    %127 = vector.broadcast %cst_28 : f32 to vector<1x128xf32>
    %128 = arith.maximumf %126, %127 : vector<1x128xf32>
    %129 = arith.mulf %128, %105 : vector<1x128xf32>
    %130 = arith.mulf %124, %124 : vector<1x128xf32>
    %131 = arith.mulf %121, %121 : vector<1x128xf32>
    %132 = arith.subf %130, %131 : vector<1x128xf32>
    %133 = vector.broadcast %98 : vector<1x1xf32> to vector<1x128xf32>
    %134 = arith.mulf %132, %133 : vector<1x128xf32>
    %135 = arith.subf %129, %134 : vector<1x128xf32>
    %136 = vector.broadcast %91 : vector<1x1xf32> to vector<1x128xf32>
    %137 = arith.mulf %135, %136 : vector<1x128xf32>
    %138 = arith.addf %134, %137 : vector<1x128xf32>
    %139 = arith.addf %118, %138 : vector<1x128xf32>
    %140 = arith.subf %111, %7 : vector<1x128xf32>
    %cst_29 = arith.constant 0.000000e+00 : f32
    %141 = vector.broadcast %cst_29 : f32 to vector<1x128xf32>
    %142 = arith.maximumf %140, %141 : vector<1x128xf32>
    %143 = arith.subf %117, %7 : vector<1x128xf32>
    %cst_30 = arith.constant 0.000000e+00 : f32
    %144 = vector.broadcast %cst_30 : f32 to vector<1x128xf32>
    %145 = arith.maximumf %143, %144 : vector<1x128xf32>
    %146 = vector.broadcast %76 : vector<1x1xf32> to vector<1x128xf32>
    %147 = arith.subf %146, %7 : vector<1x128xf32>
    %cst_31 = arith.constant 0.000000e+00 : f32
    %148 = vector.broadcast %cst_31 : f32 to vector<1x128xf32>
    %149 = arith.maximumf %147, %148 : vector<1x128xf32>
    %150 = arith.mulf %149, %105 : vector<1x128xf32>
    %151 = arith.mulf %145, %145 : vector<1x128xf32>
    %152 = arith.mulf %142, %142 : vector<1x128xf32>
    %153 = arith.subf %151, %152 : vector<1x128xf32>
    %154 = vector.broadcast %98 : vector<1x1xf32> to vector<1x128xf32>
    %155 = arith.mulf %153, %154 : vector<1x128xf32>
    %156 = arith.subf %150, %155 : vector<1x128xf32>
    %157 = vector.broadcast %91 : vector<1x1xf32> to vector<1x128xf32>
    %158 = arith.mulf %156, %157 : vector<1x128xf32>
    %159 = arith.addf %155, %158 : vector<1x128xf32>
    %160 = arith.subf %139, %159 : vector<1x128xf32>
    %161 = arith.subf %74, %160 : vector<1x128xf32>
    %162 = vector.extract_strided_slice %31 {offsets = [0, 14], sizes = [1, 1], strides = [1, 1]} : vector<1x20xf32> to vector<1x1xf32>
    %163 = vector.extract_strided_slice %31 {offsets = [0, 15], sizes = [1, 1], strides = [1, 1]} : vector<1x20xf32> to vector<1x1xf32>
    %164 = vector.extract_strided_slice %31 {offsets = [0, 16], sizes = [1, 1], strides = [1, 1]} : vector<1x20xf32> to vector<1x1xf32>
    %165 = vector.extract_strided_slice %31 {offsets = [0, 17], sizes = [1, 1], strides = [1, 1]} : vector<1x20xf32> to vector<1x1xf32>
    %166 = arith.subf %164, %162 : vector<1x1xf32>
    %167 = math.absf %166 : vector<1x1xf32>
    %cst_32 = arith.constant 9.99999971E-10 : f32
    %168 = vector.broadcast %cst_32 : f32 to vector<1x1xf32>
    %169 = arith.cmpf olt, %167, %168 : vector<1x1xf32>
    %cst_33 = arith.constant 1.000000e+00 : f32
    %170 = vector.broadcast %cst_33 : f32 to vector<1x1xf32>
    %171 = arith.select %169, %170, %166 : vector<1x1xi1>, vector<1x1xf32>
    %172 = arith.subf %165, %163 : vector<1x1xf32>
    %173 = arith.divf %172, %171 : vector<1x1xf32>
    %174 = math.absf %173 : vector<1x1xf32>
    %cst_34 = arith.constant 9.99999971E-10 : f32
    %175 = vector.broadcast %cst_34 : f32 to vector<1x1xf32>
    %176 = arith.cmpf olt, %174, %175 : vector<1x1xf32>
    %177 = arith.extui %176 : vector<1x1xi1> to vector<1x1xi32>
    %178 = arith.sitofp %177 : vector<1x1xi32> to vector<1x1xf32>
    %179 = math.absf %173 : vector<1x1xf32>
    %cst_35 = arith.constant 9.99999971E-10 : f32
    %180 = vector.broadcast %cst_35 : f32 to vector<1x1xf32>
    %181 = arith.cmpf olt, %179, %180 : vector<1x1xf32>
    %cst_36 = arith.constant 1.000000e+00 : f32
    %182 = vector.broadcast %cst_36 : f32 to vector<1x1xf32>
    %183 = arith.select %181, %182, %173 : vector<1x1xi1>, vector<1x1xf32>
    %cst_37 = arith.constant 5.000000e-01 : f32
    %184 = vector.broadcast %cst_37 : f32 to vector<1x1xf32>
    %185 = arith.divf %184, %183 : vector<1x1xf32>
    %186 = vector.broadcast %162 : vector<1x1xf32> to vector<1x128xf32>
    %187 = arith.maximumf %186, %4 : vector<1x128xf32>
    %188 = arith.minimumf %187, %6 : vector<1x128xf32>
    %189 = vector.broadcast %164 : vector<1x1xf32> to vector<1x128xf32>
    %190 = arith.maximumf %189, %4 : vector<1x128xf32>
    %191 = arith.minimumf %190, %6 : vector<1x128xf32>
    %192 = arith.subf %191, %188 : vector<1x128xf32>
    %193 = vector.broadcast %162 : vector<1x1xf32> to vector<1x128xf32>
    %194 = arith.subf %188, %193 : vector<1x128xf32>
    %195 = vector.broadcast %173 : vector<1x1xf32> to vector<1x128xf32>
    %196 = arith.mulf %195, %194 : vector<1x128xf32>
    %197 = vector.broadcast %163 : vector<1x1xf32> to vector<1x128xf32>
    %198 = arith.addf %197, %196 : vector<1x128xf32>
    %199 = vector.broadcast %162 : vector<1x1xf32> to vector<1x128xf32>
    %200 = arith.subf %191, %199 : vector<1x128xf32>
    %201 = vector.broadcast %173 : vector<1x1xf32> to vector<1x128xf32>
    %202 = arith.mulf %201, %200 : vector<1x128xf32>
    %203 = vector.broadcast %163 : vector<1x1xf32> to vector<1x128xf32>
    %204 = arith.addf %203, %202 : vector<1x128xf32>
    %205 = arith.mulf %5, %192 : vector<1x128xf32>
    %206 = arith.subf %198, %5 : vector<1x128xf32>
    %cst_38 = arith.constant 0.000000e+00 : f32
    %207 = vector.broadcast %cst_38 : f32 to vector<1x128xf32>
    %208 = arith.maximumf %206, %207 : vector<1x128xf32>
    %209 = arith.subf %204, %5 : vector<1x128xf32>
    %cst_39 = arith.constant 0.000000e+00 : f32
    %210 = vector.broadcast %cst_39 : f32 to vector<1x128xf32>
    %211 = arith.maximumf %209, %210 : vector<1x128xf32>
    %212 = vector.broadcast %163 : vector<1x1xf32> to vector<1x128xf32>
    %213 = arith.subf %212, %5 : vector<1x128xf32>
    %cst_40 = arith.constant 0.000000e+00 : f32
    %214 = vector.broadcast %cst_40 : f32 to vector<1x128xf32>
    %215 = arith.maximumf %213, %214 : vector<1x128xf32>
    %216 = arith.mulf %215, %192 : vector<1x128xf32>
    %217 = arith.mulf %211, %211 : vector<1x128xf32>
    %218 = arith.mulf %208, %208 : vector<1x128xf32>
    %219 = arith.subf %217, %218 : vector<1x128xf32>
    %220 = vector.broadcast %185 : vector<1x1xf32> to vector<1x128xf32>
    %221 = arith.mulf %219, %220 : vector<1x128xf32>
    %222 = arith.subf %216, %221 : vector<1x128xf32>
    %223 = vector.broadcast %178 : vector<1x1xf32> to vector<1x128xf32>
    %224 = arith.mulf %222, %223 : vector<1x128xf32>
    %225 = arith.addf %221, %224 : vector<1x128xf32>
    %226 = arith.addf %205, %225 : vector<1x128xf32>
    %227 = arith.subf %198, %7 : vector<1x128xf32>
    %cst_41 = arith.constant 0.000000e+00 : f32
    %228 = vector.broadcast %cst_41 : f32 to vector<1x128xf32>
    %229 = arith.maximumf %227, %228 : vector<1x128xf32>
    %230 = arith.subf %204, %7 : vector<1x128xf32>
    %cst_42 = arith.constant 0.000000e+00 : f32
    %231 = vector.broadcast %cst_42 : f32 to vector<1x128xf32>
    %232 = arith.maximumf %230, %231 : vector<1x128xf32>
    %233 = vector.broadcast %163 : vector<1x1xf32> to vector<1x128xf32>
    %234 = arith.subf %233, %7 : vector<1x128xf32>
    %cst_43 = arith.constant 0.000000e+00 : f32
    %235 = vector.broadcast %cst_43 : f32 to vector<1x128xf32>
    %236 = arith.maximumf %234, %235 : vector<1x128xf32>
    %237 = arith.mulf %236, %192 : vector<1x128xf32>
    %238 = arith.mulf %232, %232 : vector<1x128xf32>
    %239 = arith.mulf %229, %229 : vector<1x128xf32>
    %240 = arith.subf %238, %239 : vector<1x128xf32>
    %241 = vector.broadcast %185 : vector<1x1xf32> to vector<1x128xf32>
    %242 = arith.mulf %240, %241 : vector<1x128xf32>
    %243 = arith.subf %237, %242 : vector<1x128xf32>
    %244 = vector.broadcast %178 : vector<1x1xf32> to vector<1x128xf32>
    %245 = arith.mulf %243, %244 : vector<1x128xf32>
    %246 = arith.addf %242, %245 : vector<1x128xf32>
    %247 = arith.subf %226, %246 : vector<1x128xf32>
    %248 = arith.subf %161, %247 : vector<1x128xf32>
    %249 = vector.extract_strided_slice %31 {offsets = [0, 16], sizes = [1, 1], strides = [1, 1]} : vector<1x20xf32> to vector<1x1xf32>
    %250 = vector.extract_strided_slice %31 {offsets = [0, 17], sizes = [1, 1], strides = [1, 1]} : vector<1x20xf32> to vector<1x1xf32>
    %251 = vector.extract_strided_slice %31 {offsets = [0, 18], sizes = [1, 1], strides = [1, 1]} : vector<1x20xf32> to vector<1x1xf32>
    %252 = vector.extract_strided_slice %31 {offsets = [0, 19], sizes = [1, 1], strides = [1, 1]} : vector<1x20xf32> to vector<1x1xf32>
    %253 = arith.subf %251, %249 : vector<1x1xf32>
    %254 = math.absf %253 : vector<1x1xf32>
    %cst_44 = arith.constant 9.99999971E-10 : f32
    %255 = vector.broadcast %cst_44 : f32 to vector<1x1xf32>
    %256 = arith.cmpf olt, %254, %255 : vector<1x1xf32>
    %cst_45 = arith.constant 1.000000e+00 : f32
    %257 = vector.broadcast %cst_45 : f32 to vector<1x1xf32>
    %258 = arith.select %256, %257, %253 : vector<1x1xi1>, vector<1x1xf32>
    %259 = arith.subf %252, %250 : vector<1x1xf32>
    %260 = arith.divf %259, %258 : vector<1x1xf32>
    %261 = math.absf %260 : vector<1x1xf32>
    %cst_46 = arith.constant 9.99999971E-10 : f32
    %262 = vector.broadcast %cst_46 : f32 to vector<1x1xf32>
    %263 = arith.cmpf olt, %261, %262 : vector<1x1xf32>
    %264 = arith.extui %263 : vector<1x1xi1> to vector<1x1xi32>
    %265 = arith.sitofp %264 : vector<1x1xi32> to vector<1x1xf32>
    %266 = math.absf %260 : vector<1x1xf32>
    %cst_47 = arith.constant 9.99999971E-10 : f32
    %267 = vector.broadcast %cst_47 : f32 to vector<1x1xf32>
    %268 = arith.cmpf olt, %266, %267 : vector<1x1xf32>
    %cst_48 = arith.constant 1.000000e+00 : f32
    %269 = vector.broadcast %cst_48 : f32 to vector<1x1xf32>
    %270 = arith.select %268, %269, %260 : vector<1x1xi1>, vector<1x1xf32>
    %cst_49 = arith.constant 5.000000e-01 : f32
    %271 = vector.broadcast %cst_49 : f32 to vector<1x1xf32>
    %272 = arith.divf %271, %270 : vector<1x1xf32>
    %273 = vector.broadcast %249 : vector<1x1xf32> to vector<1x128xf32>
    %274 = arith.maximumf %273, %4 : vector<1x128xf32>
    %275 = arith.minimumf %274, %6 : vector<1x128xf32>
    %276 = vector.broadcast %251 : vector<1x1xf32> to vector<1x128xf32>
    %277 = arith.maximumf %276, %4 : vector<1x128xf32>
    %278 = arith.minimumf %277, %6 : vector<1x128xf32>
    %279 = arith.subf %278, %275 : vector<1x128xf32>
    %280 = vector.broadcast %249 : vector<1x1xf32> to vector<1x128xf32>
    %281 = arith.subf %275, %280 : vector<1x128xf32>
    %282 = vector.broadcast %260 : vector<1x1xf32> to vector<1x128xf32>
    %283 = arith.mulf %282, %281 : vector<1x128xf32>
    %284 = vector.broadcast %250 : vector<1x1xf32> to vector<1x128xf32>
    %285 = arith.addf %284, %283 : vector<1x128xf32>
    %286 = vector.broadcast %249 : vector<1x1xf32> to vector<1x128xf32>
    %287 = arith.subf %278, %286 : vector<1x128xf32>
    %288 = vector.broadcast %260 : vector<1x1xf32> to vector<1x128xf32>
    %289 = arith.mulf %288, %287 : vector<1x128xf32>
    %290 = vector.broadcast %250 : vector<1x1xf32> to vector<1x128xf32>
    %291 = arith.addf %290, %289 : vector<1x128xf32>
    %292 = arith.mulf %5, %279 : vector<1x128xf32>
    %293 = arith.subf %285, %5 : vector<1x128xf32>
    %cst_50 = arith.constant 0.000000e+00 : f32
    %294 = vector.broadcast %cst_50 : f32 to vector<1x128xf32>
    %295 = arith.maximumf %293, %294 : vector<1x128xf32>
    %296 = arith.subf %291, %5 : vector<1x128xf32>
    %cst_51 = arith.constant 0.000000e+00 : f32
    %297 = vector.broadcast %cst_51 : f32 to vector<1x128xf32>
    %298 = arith.maximumf %296, %297 : vector<1x128xf32>
    %299 = vector.broadcast %250 : vector<1x1xf32> to vector<1x128xf32>
    %300 = arith.subf %299, %5 : vector<1x128xf32>
    %cst_52 = arith.constant 0.000000e+00 : f32
    %301 = vector.broadcast %cst_52 : f32 to vector<1x128xf32>
    %302 = arith.maximumf %300, %301 : vector<1x128xf32>
    %303 = arith.mulf %302, %279 : vector<1x128xf32>
    %304 = arith.mulf %298, %298 : vector<1x128xf32>
    %305 = arith.mulf %295, %295 : vector<1x128xf32>
    %306 = arith.subf %304, %305 : vector<1x128xf32>
    %307 = vector.broadcast %272 : vector<1x1xf32> to vector<1x128xf32>
    %308 = arith.mulf %306, %307 : vector<1x128xf32>
    %309 = arith.subf %303, %308 : vector<1x128xf32>
    %310 = vector.broadcast %265 : vector<1x1xf32> to vector<1x128xf32>
    %311 = arith.mulf %309, %310 : vector<1x128xf32>
    %312 = arith.addf %308, %311 : vector<1x128xf32>
    %313 = arith.addf %292, %312 : vector<1x128xf32>
    %314 = arith.subf %285, %7 : vector<1x128xf32>
    %cst_53 = arith.constant 0.000000e+00 : f32
    %315 = vector.broadcast %cst_53 : f32 to vector<1x128xf32>
    %316 = arith.maximumf %314, %315 : vector<1x128xf32>
    %317 = arith.subf %291, %7 : vector<1x128xf32>
    %cst_54 = arith.constant 0.000000e+00 : f32
    %318 = vector.broadcast %cst_54 : f32 to vector<1x128xf32>
    %319 = arith.maximumf %317, %318 : vector<1x128xf32>
    %320 = vector.broadcast %250 : vector<1x1xf32> to vector<1x128xf32>
    %321 = arith.subf %320, %7 : vector<1x128xf32>
    %cst_55 = arith.constant 0.000000e+00 : f32
    %322 = vector.broadcast %cst_55 : f32 to vector<1x128xf32>
    %323 = arith.maximumf %321, %322 : vector<1x128xf32>
    %324 = arith.mulf %323, %279 : vector<1x128xf32>
    %325 = arith.mulf %319, %319 : vector<1x128xf32>
    %326 = arith.mulf %316, %316 : vector<1x128xf32>
    %327 = arith.subf %325, %326 : vector<1x128xf32>
    %328 = vector.broadcast %272 : vector<1x1xf32> to vector<1x128xf32>
    %329 = arith.mulf %327, %328 : vector<1x128xf32>
    %330 = arith.subf %324, %329 : vector<1x128xf32>
    %331 = vector.broadcast %265 : vector<1x1xf32> to vector<1x128xf32>
    %332 = arith.mulf %330, %331 : vector<1x128xf32>
    %333 = arith.addf %329, %332 : vector<1x128xf32>
    %334 = arith.subf %313, %333 : vector<1x128xf32>
    %335 = arith.subf %248, %334 : vector<1x128xf32>
    %336 = vector.extract_strided_slice %31 {offsets = [0, 18], sizes = [1, 1], strides = [1, 1]} : vector<1x20xf32> to vector<1x1xf32>
    %337 = vector.extract_strided_slice %31 {offsets = [0, 19], sizes = [1, 1], strides = [1, 1]} : vector<1x20xf32> to vector<1x1xf32>
    %338 = vector.extract_strided_slice %31 {offsets = [0, 12], sizes = [1, 1], strides = [1, 1]} : vector<1x20xf32> to vector<1x1xf32>
    %339 = vector.extract_strided_slice %31 {offsets = [0, 13], sizes = [1, 1], strides = [1, 1]} : vector<1x20xf32> to vector<1x1xf32>
    %340 = arith.subf %338, %336 : vector<1x1xf32>
    %341 = math.absf %340 : vector<1x1xf32>
    %cst_56 = arith.constant 9.99999971E-10 : f32
    %342 = vector.broadcast %cst_56 : f32 to vector<1x1xf32>
    %343 = arith.cmpf olt, %341, %342 : vector<1x1xf32>
    %cst_57 = arith.constant 1.000000e+00 : f32
    %344 = vector.broadcast %cst_57 : f32 to vector<1x1xf32>
    %345 = arith.select %343, %344, %340 : vector<1x1xi1>, vector<1x1xf32>
    %346 = arith.subf %339, %337 : vector<1x1xf32>
    %347 = arith.divf %346, %345 : vector<1x1xf32>
    %348 = math.absf %347 : vector<1x1xf32>
    %cst_58 = arith.constant 9.99999971E-10 : f32
    %349 = vector.broadcast %cst_58 : f32 to vector<1x1xf32>
    %350 = arith.cmpf olt, %348, %349 : vector<1x1xf32>
    %351 = arith.extui %350 : vector<1x1xi1> to vector<1x1xi32>
    %352 = arith.sitofp %351 : vector<1x1xi32> to vector<1x1xf32>
    %353 = math.absf %347 : vector<1x1xf32>
    %cst_59 = arith.constant 9.99999971E-10 : f32
    %354 = vector.broadcast %cst_59 : f32 to vector<1x1xf32>
    %355 = arith.cmpf olt, %353, %354 : vector<1x1xf32>
    %cst_60 = arith.constant 1.000000e+00 : f32
    %356 = vector.broadcast %cst_60 : f32 to vector<1x1xf32>
    %357 = arith.select %355, %356, %347 : vector<1x1xi1>, vector<1x1xf32>
    %cst_61 = arith.constant 5.000000e-01 : f32
    %358 = vector.broadcast %cst_61 : f32 to vector<1x1xf32>
    %359 = arith.divf %358, %357 : vector<1x1xf32>
    %360 = vector.broadcast %336 : vector<1x1xf32> to vector<1x128xf32>
    %361 = arith.maximumf %360, %4 : vector<1x128xf32>
    %362 = arith.minimumf %361, %6 : vector<1x128xf32>
    %363 = vector.broadcast %338 : vector<1x1xf32> to vector<1x128xf32>
    %364 = arith.maximumf %363, %4 : vector<1x128xf32>
    %365 = arith.minimumf %364, %6 : vector<1x128xf32>
    %366 = arith.subf %365, %362 : vector<1x128xf32>
    %367 = vector.broadcast %336 : vector<1x1xf32> to vector<1x128xf32>
    %368 = arith.subf %362, %367 : vector<1x128xf32>
    %369 = vector.broadcast %347 : vector<1x1xf32> to vector<1x128xf32>
    %370 = arith.mulf %369, %368 : vector<1x128xf32>
    %371 = vector.broadcast %337 : vector<1x1xf32> to vector<1x128xf32>
    %372 = arith.addf %371, %370 : vector<1x128xf32>
    %373 = vector.broadcast %336 : vector<1x1xf32> to vector<1x128xf32>
    %374 = arith.subf %365, %373 : vector<1x128xf32>
    %375 = vector.broadcast %347 : vector<1x1xf32> to vector<1x128xf32>
    %376 = arith.mulf %375, %374 : vector<1x128xf32>
    %377 = vector.broadcast %337 : vector<1x1xf32> to vector<1x128xf32>
    %378 = arith.addf %377, %376 : vector<1x128xf32>
    %379 = arith.mulf %5, %366 : vector<1x128xf32>
    %380 = arith.subf %372, %5 : vector<1x128xf32>
    %cst_62 = arith.constant 0.000000e+00 : f32
    %381 = vector.broadcast %cst_62 : f32 to vector<1x128xf32>
    %382 = arith.maximumf %380, %381 : vector<1x128xf32>
    %383 = arith.subf %378, %5 : vector<1x128xf32>
    %cst_63 = arith.constant 0.000000e+00 : f32
    %384 = vector.broadcast %cst_63 : f32 to vector<1x128xf32>
    %385 = arith.maximumf %383, %384 : vector<1x128xf32>
    %386 = vector.broadcast %337 : vector<1x1xf32> to vector<1x128xf32>
    %387 = arith.subf %386, %5 : vector<1x128xf32>
    %cst_64 = arith.constant 0.000000e+00 : f32
    %388 = vector.broadcast %cst_64 : f32 to vector<1x128xf32>
    %389 = arith.maximumf %387, %388 : vector<1x128xf32>
    %390 = arith.mulf %389, %366 : vector<1x128xf32>
    %391 = arith.mulf %385, %385 : vector<1x128xf32>
    %392 = arith.mulf %382, %382 : vector<1x128xf32>
    %393 = arith.subf %391, %392 : vector<1x128xf32>
    %394 = vector.broadcast %359 : vector<1x1xf32> to vector<1x128xf32>
    %395 = arith.mulf %393, %394 : vector<1x128xf32>
    %396 = arith.subf %390, %395 : vector<1x128xf32>
    %397 = vector.broadcast %352 : vector<1x1xf32> to vector<1x128xf32>
    %398 = arith.mulf %396, %397 : vector<1x128xf32>
    %399 = arith.addf %395, %398 : vector<1x128xf32>
    %400 = arith.addf %379, %399 : vector<1x128xf32>
    %401 = arith.subf %372, %7 : vector<1x128xf32>
    %cst_65 = arith.constant 0.000000e+00 : f32
    %402 = vector.broadcast %cst_65 : f32 to vector<1x128xf32>
    %403 = arith.maximumf %401, %402 : vector<1x128xf32>
    %404 = arith.subf %378, %7 : vector<1x128xf32>
    %cst_66 = arith.constant 0.000000e+00 : f32
    %405 = vector.broadcast %cst_66 : f32 to vector<1x128xf32>
    %406 = arith.maximumf %404, %405 : vector<1x128xf32>
    %407 = vector.broadcast %337 : vector<1x1xf32> to vector<1x128xf32>
    %408 = arith.subf %407, %7 : vector<1x128xf32>
    %cst_67 = arith.constant 0.000000e+00 : f32
    %409 = vector.broadcast %cst_67 : f32 to vector<1x128xf32>
    %410 = arith.maximumf %408, %409 : vector<1x128xf32>
    %411 = arith.mulf %410, %366 : vector<1x128xf32>
    %412 = arith.mulf %406, %406 : vector<1x128xf32>
    %413 = arith.mulf %403, %403 : vector<1x128xf32>
    %414 = arith.subf %412, %413 : vector<1x128xf32>
    %415 = vector.broadcast %359 : vector<1x1xf32> to vector<1x128xf32>
    %416 = arith.mulf %414, %415 : vector<1x128xf32>
    %417 = arith.subf %411, %416 : vector<1x128xf32>
    %418 = vector.broadcast %352 : vector<1x1xf32> to vector<1x128xf32>
    %419 = arith.mulf %417, %418 : vector<1x128xf32>
    %420 = arith.addf %416, %419 : vector<1x128xf32>
    %421 = arith.subf %400, %420 : vector<1x128xf32>
    %422 = arith.subf %335, %421 : vector<1x128xf32>
    %423 = math.absf %422 : vector<1x128xf32>
    %424 = vector.broadcast %43 : vector<1x1xf32> to vector<1x128xf32>
    %425 = arith.addf %424, %20 : vector<1x128xf32>
    %426 = arith.subf %425, %423 : vector<1x128xf32>
    %cst_68 = arith.constant 9.99999993E-9 : f32
    %427 = vector.broadcast %cst_68 : f32 to vector<1x128xf32>
    %428 = arith.maximumf %426, %427 : vector<1x128xf32>
    %429 = arith.divf %423, %428 : vector<1x128xf32>
    %430 = arith.cmpf ogt, %73, %23 : vector<1x128xf32>
    %431 = arith.select %430, %73, %23 : vector<1x128xi1>, vector<1x128xf32>
    %432 = arith.select %430, %429, %24 : vector<1x128xi1>, vector<1x128xf32>
    %433 = vector.shape_cast %32 : vector<1x1xf32> to vector<1x1xf32>
    %434 = vector.broadcast %433 : vector<1x1xf32> to vector<1x128xf32>
    %435 = arith.select %430, %434, %25 : vector<1x128xi1>, vector<1x128xf32>
    %436 = vector.shape_cast %33 : vector<1x1xf32> to vector<1x1xf32>
    %437 = vector.broadcast %436 : vector<1x1xf32> to vector<1x128xf32>
    %438 = arith.select %430, %437, %26 : vector<1x128xi1>, vector<1x128xf32>
    %439 = vector.shape_cast %34 : vector<1x1xf32> to vector<1x1xf32>
    %440 = vector.broadcast %439 : vector<1x1xf32> to vector<1x128xf32>
    %441 = arith.select %430, %440, %27 : vector<1x128xi1>, vector<1x128xf32>
    %442 = vector.shape_cast %35 : vector<1x1xf32> to vector<1x1xf32>
    %443 = vector.broadcast %442 : vector<1x1xf32> to vector<1x128xf32>
    %444 = arith.select %430, %443, %28 : vector<1x128xi1>, vector<1x128xf32>
    %445 = vector.shape_cast %36 : vector<1x1xf32> to vector<1x1xf32>
    %446 = vector.broadcast %445 : vector<1x1xf32> to vector<1x128xf32>
    %447 = arith.select %430, %446, %29 : vector<1x128xi1>, vector<1x128xf32>
    %448 = vector.shape_cast %37 : vector<1x1xf32> to vector<1x1xf32>
    %449 = vector.broadcast %448 : vector<1x1xf32> to vector<1x128xf32>
    %450 = arith.select %430, %449, %30 : vector<1x128xi1>, vector<1x128xf32>
    %451 = vector.extract_strided_slice %22 {offsets = [1, 0], sizes = [1, 20], strides = [1, 1]} : vector<8x20xf32> to vector<1x20xf32>
    %452 = vector.extract_strided_slice %451 {offsets = [0, 0], sizes = [1, 1], strides = [1, 1]} : vector<1x20xf32> to vector<1x1xf32>
    %453 = vector.extract_strided_slice %451 {offsets = [0, 1], sizes = [1, 1], strides = [1, 1]} : vector<1x20xf32> to vector<1x1xf32>
    %454 = vector.extract_strided_slice %451 {offsets = [0, 2], sizes = [1, 1], strides = [1, 1]} : vector<1x20xf32> to vector<1x1xf32>
    %455 = vector.extract_strided_slice %451 {offsets = [0, 3], sizes = [1, 1], strides = [1, 1]} : vector<1x20xf32> to vector<1x1xf32>
    %456 = vector.extract_strided_slice %451 {offsets = [0, 4], sizes = [1, 1], strides = [1, 1]} : vector<1x20xf32> to vector<1x1xf32>
    %457 = vector.extract_strided_slice %451 {offsets = [0, 5], sizes = [1, 1], strides = [1, 1]} : vector<1x20xf32> to vector<1x1xf32>
    %458 = vector.extract_strided_slice %451 {offsets = [0, 6], sizes = [1, 1], strides = [1, 1]} : vector<1x20xf32> to vector<1x1xf32>
    %459 = vector.extract_strided_slice %451 {offsets = [0, 7], sizes = [1, 1], strides = [1, 1]} : vector<1x20xf32> to vector<1x1xf32>
    %460 = vector.extract_strided_slice %451 {offsets = [0, 8], sizes = [1, 1], strides = [1, 1]} : vector<1x20xf32> to vector<1x1xf32>
    %461 = vector.extract_strided_slice %451 {offsets = [0, 9], sizes = [1, 1], strides = [1, 1]} : vector<1x20xf32> to vector<1x1xf32>
    %462 = vector.extract_strided_slice %451 {offsets = [0, 10], sizes = [1, 1], strides = [1, 1]} : vector<1x20xf32> to vector<1x1xf32>
    %463 = vector.extract_strided_slice %451 {offsets = [0, 11], sizes = [1, 1], strides = [1, 1]} : vector<1x20xf32> to vector<1x1xf32>
    %464 = vector.broadcast %461 : vector<1x1xf32> to vector<1x128xf32>
    %465 = arith.minimumf %6, %464 : vector<1x128xf32>
    %466 = vector.broadcast %459 : vector<1x1xf32> to vector<1x128xf32>
    %467 = arith.maximumf %4, %466 : vector<1x128xf32>
    %468 = arith.subf %465, %467 : vector<1x128xf32>
    %cst_69 = arith.constant 0.000000e+00 : f32
    %469 = vector.broadcast %cst_69 : f32 to vector<1x128xf32>
    %470 = arith.maximumf %468, %469 : vector<1x128xf32>
    %471 = vector.broadcast %462 : vector<1x1xf32> to vector<1x128xf32>
    %472 = arith.minimumf %7, %471 : vector<1x128xf32>
    %473 = vector.broadcast %460 : vector<1x1xf32> to vector<1x128xf32>
    %474 = arith.maximumf %5, %473 : vector<1x128xf32>
    %475 = arith.subf %472, %474 : vector<1x128xf32>
    %cst_70 = arith.constant 0.000000e+00 : f32
    %476 = vector.broadcast %cst_70 : f32 to vector<1x128xf32>
    %477 = arith.maximumf %475, %476 : vector<1x128xf32>
    %478 = arith.mulf %470, %477 : vector<1x128xf32>
    %479 = arith.subf %461, %459 : vector<1x1xf32>
    %480 = arith.subf %462, %460 : vector<1x1xf32>
    %481 = arith.mulf %479, %480 : vector<1x1xf32>
    %482 = vector.broadcast %481 : vector<1x1xf32> to vector<1x128xf32>
    %483 = arith.addf %20, %482 : vector<1x128xf32>
    %484 = arith.subf %483, %478 : vector<1x128xf32>
    %cst_71 = arith.constant 9.99999993E-9 : f32
    %485 = vector.broadcast %cst_71 : f32 to vector<1x128xf32>
    %486 = arith.maximumf %484, %485 : vector<1x128xf32>
    %487 = arith.divf %478, %486 : vector<1x128xf32>
    %488 = vector.broadcast %458 : vector<1x1xf32> to vector<1x128xf32>
    %489 = arith.mulf %487, %488 : vector<1x128xf32>
    %cst_72 = arith.constant 1.000000e+00 : f32
    %490 = vector.broadcast %cst_72 : f32 to vector<1x1xf32>
    %491 = arith.subf %490, %458 : vector<1x1xf32>
    %492 = vector.broadcast %491 : vector<1x1xf32> to vector<1x128xf32>
    %493 = arith.subf %489, %492 : vector<1x128xf32>
    %cst_73 = arith.constant 0.000000e+00 : f32
    %494 = vector.broadcast %cst_73 : f32 to vector<1x128xf32>
    %495 = vector.extract_strided_slice %451 {offsets = [0, 12], sizes = [1, 1], strides = [1, 1]} : vector<1x20xf32> to vector<1x1xf32>
    %496 = vector.extract_strided_slice %451 {offsets = [0, 13], sizes = [1, 1], strides = [1, 1]} : vector<1x20xf32> to vector<1x1xf32>
    %497 = vector.extract_strided_slice %451 {offsets = [0, 14], sizes = [1, 1], strides = [1, 1]} : vector<1x20xf32> to vector<1x1xf32>
    %498 = vector.extract_strided_slice %451 {offsets = [0, 15], sizes = [1, 1], strides = [1, 1]} : vector<1x20xf32> to vector<1x1xf32>
    %499 = arith.subf %497, %495 : vector<1x1xf32>
    %500 = math.absf %499 : vector<1x1xf32>
    %cst_74 = arith.constant 9.99999971E-10 : f32
    %501 = vector.broadcast %cst_74 : f32 to vector<1x1xf32>
    %502 = arith.cmpf olt, %500, %501 : vector<1x1xf32>
    %cst_75 = arith.constant 1.000000e+00 : f32
    %503 = vector.broadcast %cst_75 : f32 to vector<1x1xf32>
    %504 = arith.select %502, %503, %499 : vector<1x1xi1>, vector<1x1xf32>
    %505 = arith.subf %498, %496 : vector<1x1xf32>
    %506 = arith.divf %505, %504 : vector<1x1xf32>
    %507 = math.absf %506 : vector<1x1xf32>
    %cst_76 = arith.constant 9.99999971E-10 : f32
    %508 = vector.broadcast %cst_76 : f32 to vector<1x1xf32>
    %509 = arith.cmpf olt, %507, %508 : vector<1x1xf32>
    %510 = arith.extui %509 : vector<1x1xi1> to vector<1x1xi32>
    %511 = arith.sitofp %510 : vector<1x1xi32> to vector<1x1xf32>
    %512 = math.absf %506 : vector<1x1xf32>
    %cst_77 = arith.constant 9.99999971E-10 : f32
    %513 = vector.broadcast %cst_77 : f32 to vector<1x1xf32>
    %514 = arith.cmpf olt, %512, %513 : vector<1x1xf32>
    %cst_78 = arith.constant 1.000000e+00 : f32
    %515 = vector.broadcast %cst_78 : f32 to vector<1x1xf32>
    %516 = arith.select %514, %515, %506 : vector<1x1xi1>, vector<1x1xf32>
    %cst_79 = arith.constant 5.000000e-01 : f32
    %517 = vector.broadcast %cst_79 : f32 to vector<1x1xf32>
    %518 = arith.divf %517, %516 : vector<1x1xf32>
    %519 = vector.broadcast %495 : vector<1x1xf32> to vector<1x128xf32>
    %520 = arith.maximumf %519, %4 : vector<1x128xf32>
    %521 = arith.minimumf %520, %6 : vector<1x128xf32>
    %522 = vector.broadcast %497 : vector<1x1xf32> to vector<1x128xf32>
    %523 = arith.maximumf %522, %4 : vector<1x128xf32>
    %524 = arith.minimumf %523, %6 : vector<1x128xf32>
    %525 = arith.subf %524, %521 : vector<1x128xf32>
    %526 = vector.broadcast %495 : vector<1x1xf32> to vector<1x128xf32>
    %527 = arith.subf %521, %526 : vector<1x128xf32>
    %528 = vector.broadcast %506 : vector<1x1xf32> to vector<1x128xf32>
    %529 = arith.mulf %528, %527 : vector<1x128xf32>
    %530 = vector.broadcast %496 : vector<1x1xf32> to vector<1x128xf32>
    %531 = arith.addf %530, %529 : vector<1x128xf32>
    %532 = vector.broadcast %495 : vector<1x1xf32> to vector<1x128xf32>
    %533 = arith.subf %524, %532 : vector<1x128xf32>
    %534 = vector.broadcast %506 : vector<1x1xf32> to vector<1x128xf32>
    %535 = arith.mulf %534, %533 : vector<1x128xf32>
    %536 = vector.broadcast %496 : vector<1x1xf32> to vector<1x128xf32>
    %537 = arith.addf %536, %535 : vector<1x128xf32>
    %538 = arith.mulf %5, %525 : vector<1x128xf32>
    %539 = arith.subf %531, %5 : vector<1x128xf32>
    %cst_80 = arith.constant 0.000000e+00 : f32
    %540 = vector.broadcast %cst_80 : f32 to vector<1x128xf32>
    %541 = arith.maximumf %539, %540 : vector<1x128xf32>
    %542 = arith.subf %537, %5 : vector<1x128xf32>
    %cst_81 = arith.constant 0.000000e+00 : f32
    %543 = vector.broadcast %cst_81 : f32 to vector<1x128xf32>
    %544 = arith.maximumf %542, %543 : vector<1x128xf32>
    %545 = vector.broadcast %496 : vector<1x1xf32> to vector<1x128xf32>
    %546 = arith.subf %545, %5 : vector<1x128xf32>
    %cst_82 = arith.constant 0.000000e+00 : f32
    %547 = vector.broadcast %cst_82 : f32 to vector<1x128xf32>
    %548 = arith.maximumf %546, %547 : vector<1x128xf32>
    %549 = arith.mulf %548, %525 : vector<1x128xf32>
    %550 = arith.mulf %544, %544 : vector<1x128xf32>
    %551 = arith.mulf %541, %541 : vector<1x128xf32>
    %552 = arith.subf %550, %551 : vector<1x128xf32>
    %553 = vector.broadcast %518 : vector<1x1xf32> to vector<1x128xf32>
    %554 = arith.mulf %552, %553 : vector<1x128xf32>
    %555 = arith.subf %549, %554 : vector<1x128xf32>
    %556 = vector.broadcast %511 : vector<1x1xf32> to vector<1x128xf32>
    %557 = arith.mulf %555, %556 : vector<1x128xf32>
    %558 = arith.addf %554, %557 : vector<1x128xf32>
    %559 = arith.addf %538, %558 : vector<1x128xf32>
    %560 = arith.subf %531, %7 : vector<1x128xf32>
    %cst_83 = arith.constant 0.000000e+00 : f32
    %561 = vector.broadcast %cst_83 : f32 to vector<1x128xf32>
    %562 = arith.maximumf %560, %561 : vector<1x128xf32>
    %563 = arith.subf %537, %7 : vector<1x128xf32>
    %cst_84 = arith.constant 0.000000e+00 : f32
    %564 = vector.broadcast %cst_84 : f32 to vector<1x128xf32>
    %565 = arith.maximumf %563, %564 : vector<1x128xf32>
    %566 = vector.broadcast %496 : vector<1x1xf32> to vector<1x128xf32>
    %567 = arith.subf %566, %7 : vector<1x128xf32>
    %cst_85 = arith.constant 0.000000e+00 : f32
    %568 = vector.broadcast %cst_85 : f32 to vector<1x128xf32>
    %569 = arith.maximumf %567, %568 : vector<1x128xf32>
    %570 = arith.mulf %569, %525 : vector<1x128xf32>
    %571 = arith.mulf %565, %565 : vector<1x128xf32>
    %572 = arith.mulf %562, %562 : vector<1x128xf32>
    %573 = arith.subf %571, %572 : vector<1x128xf32>
    %574 = vector.broadcast %518 : vector<1x1xf32> to vector<1x128xf32>
    %575 = arith.mulf %573, %574 : vector<1x128xf32>
    %576 = arith.subf %570, %575 : vector<1x128xf32>
    %577 = vector.broadcast %511 : vector<1x1xf32> to vector<1x128xf32>
    %578 = arith.mulf %576, %577 : vector<1x128xf32>
    %579 = arith.addf %575, %578 : vector<1x128xf32>
    %580 = arith.subf %559, %579 : vector<1x128xf32>
    %581 = arith.subf %494, %580 : vector<1x128xf32>
    %582 = vector.extract_strided_slice %451 {offsets = [0, 14], sizes = [1, 1], strides = [1, 1]} : vector<1x20xf32> to vector<1x1xf32>
    %583 = vector.extract_strided_slice %451 {offsets = [0, 15], sizes = [1, 1], strides = [1, 1]} : vector<1x20xf32> to vector<1x1xf32>
    %584 = vector.extract_strided_slice %451 {offsets = [0, 16], sizes = [1, 1], strides = [1, 1]} : vector<1x20xf32> to vector<1x1xf32>
    %585 = vector.extract_strided_slice %451 {offsets = [0, 17], sizes = [1, 1], strides = [1, 1]} : vector<1x20xf32> to vector<1x1xf32>
    %586 = arith.subf %584, %582 : vector<1x1xf32>
    %587 = math.absf %586 : vector<1x1xf32>
    %cst_86 = arith.constant 9.99999971E-10 : f32
    %588 = vector.broadcast %cst_86 : f32 to vector<1x1xf32>
    %589 = arith.cmpf olt, %587, %588 : vector<1x1xf32>
    %cst_87 = arith.constant 1.000000e+00 : f32
    %590 = vector.broadcast %cst_87 : f32 to vector<1x1xf32>
    %591 = arith.select %589, %590, %586 : vector<1x1xi1>, vector<1x1xf32>
    %592 = arith.subf %585, %583 : vector<1x1xf32>
    %593 = arith.divf %592, %591 : vector<1x1xf32>
    %594 = math.absf %593 : vector<1x1xf32>
    %cst_88 = arith.constant 9.99999971E-10 : f32
    %595 = vector.broadcast %cst_88 : f32 to vector<1x1xf32>
    %596 = arith.cmpf olt, %594, %595 : vector<1x1xf32>
    %597 = arith.extui %596 : vector<1x1xi1> to vector<1x1xi32>
    %598 = arith.sitofp %597 : vector<1x1xi32> to vector<1x1xf32>
    %599 = math.absf %593 : vector<1x1xf32>
    %cst_89 = arith.constant 9.99999971E-10 : f32
    %600 = vector.broadcast %cst_89 : f32 to vector<1x1xf32>
    %601 = arith.cmpf olt, %599, %600 : vector<1x1xf32>
    %cst_90 = arith.constant 1.000000e+00 : f32
    %602 = vector.broadcast %cst_90 : f32 to vector<1x1xf32>
    %603 = arith.select %601, %602, %593 : vector<1x1xi1>, vector<1x1xf32>
    %cst_91 = arith.constant 5.000000e-01 : f32
    %604 = vector.broadcast %cst_91 : f32 to vector<1x1xf32>
    %605 = arith.divf %604, %603 : vector<1x1xf32>
    %606 = vector.broadcast %582 : vector<1x1xf32> to vector<1x128xf32>
    %607 = arith.maximumf %606, %4 : vector<1x128xf32>
    %608 = arith.minimumf %607, %6 : vector<1x128xf32>
    %609 = vector.broadcast %584 : vector<1x1xf32> to vector<1x128xf32>
    %610 = arith.maximumf %609, %4 : vector<1x128xf32>
    %611 = arith.minimumf %610, %6 : vector<1x128xf32>
    %612 = arith.subf %611, %608 : vector<1x128xf32>
    %613 = vector.broadcast %582 : vector<1x1xf32> to vector<1x128xf32>
    %614 = arith.subf %608, %613 : vector<1x128xf32>
    %615 = vector.broadcast %593 : vector<1x1xf32> to vector<1x128xf32>
    %616 = arith.mulf %615, %614 : vector<1x128xf32>
    %617 = vector.broadcast %583 : vector<1x1xf32> to vector<1x128xf32>
    %618 = arith.addf %617, %616 : vector<1x128xf32>
    %619 = vector.broadcast %582 : vector<1x1xf32> to vector<1x128xf32>
    %620 = arith.subf %611, %619 : vector<1x128xf32>
    %621 = vector.broadcast %593 : vector<1x1xf32> to vector<1x128xf32>
    %622 = arith.mulf %621, %620 : vector<1x128xf32>
    %623 = vector.broadcast %583 : vector<1x1xf32> to vector<1x128xf32>
    %624 = arith.addf %623, %622 : vector<1x128xf32>
    %625 = arith.mulf %5, %612 : vector<1x128xf32>
    %626 = arith.subf %618, %5 : vector<1x128xf32>
    %cst_92 = arith.constant 0.000000e+00 : f32
    %627 = vector.broadcast %cst_92 : f32 to vector<1x128xf32>
    %628 = arith.maximumf %626, %627 : vector<1x128xf32>
    %629 = arith.subf %624, %5 : vector<1x128xf32>
    %cst_93 = arith.constant 0.000000e+00 : f32
    %630 = vector.broadcast %cst_93 : f32 to vector<1x128xf32>
    %631 = arith.maximumf %629, %630 : vector<1x128xf32>
    %632 = vector.broadcast %583 : vector<1x1xf32> to vector<1x128xf32>
    %633 = arith.subf %632, %5 : vector<1x128xf32>
    %cst_94 = arith.constant 0.000000e+00 : f32
    %634 = vector.broadcast %cst_94 : f32 to vector<1x128xf32>
    %635 = arith.maximumf %633, %634 : vector<1x128xf32>
    %636 = arith.mulf %635, %612 : vector<1x128xf32>
    %637 = arith.mulf %631, %631 : vector<1x128xf32>
    %638 = arith.mulf %628, %628 : vector<1x128xf32>
    %639 = arith.subf %637, %638 : vector<1x128xf32>
    %640 = vector.broadcast %605 : vector<1x1xf32> to vector<1x128xf32>
    %641 = arith.mulf %639, %640 : vector<1x128xf32>
    %642 = arith.subf %636, %641 : vector<1x128xf32>
    %643 = vector.broadcast %598 : vector<1x1xf32> to vector<1x128xf32>
    %644 = arith.mulf %642, %643 : vector<1x128xf32>
    %645 = arith.addf %641, %644 : vector<1x128xf32>
    %646 = arith.addf %625, %645 : vector<1x128xf32>
    %647 = arith.subf %618, %7 : vector<1x128xf32>
    %cst_95 = arith.constant 0.000000e+00 : f32
    %648 = vector.broadcast %cst_95 : f32 to vector<1x128xf32>
    %649 = arith.maximumf %647, %648 : vector<1x128xf32>
    %650 = arith.subf %624, %7 : vector<1x128xf32>
    %cst_96 = arith.constant 0.000000e+00 : f32
    %651 = vector.broadcast %cst_96 : f32 to vector<1x128xf32>
    %652 = arith.maximumf %650, %651 : vector<1x128xf32>
    %653 = vector.broadcast %583 : vector<1x1xf32> to vector<1x128xf32>
    %654 = arith.subf %653, %7 : vector<1x128xf32>
    %cst_97 = arith.constant 0.000000e+00 : f32
    %655 = vector.broadcast %cst_97 : f32 to vector<1x128xf32>
    %656 = arith.maximumf %654, %655 : vector<1x128xf32>
    %657 = arith.mulf %656, %612 : vector<1x128xf32>
    %658 = arith.mulf %652, %652 : vector<1x128xf32>
    %659 = arith.mulf %649, %649 : vector<1x128xf32>
    %660 = arith.subf %658, %659 : vector<1x128xf32>
    %661 = vector.broadcast %605 : vector<1x1xf32> to vector<1x128xf32>
    %662 = arith.mulf %660, %661 : vector<1x128xf32>
    %663 = arith.subf %657, %662 : vector<1x128xf32>
    %664 = vector.broadcast %598 : vector<1x1xf32> to vector<1x128xf32>
    %665 = arith.mulf %663, %664 : vector<1x128xf32>
    %666 = arith.addf %662, %665 : vector<1x128xf32>
    %667 = arith.subf %646, %666 : vector<1x128xf32>
    %668 = arith.subf %581, %667 : vector<1x128xf32>
    %669 = vector.extract_strided_slice %451 {offsets = [0, 16], sizes = [1, 1], strides = [1, 1]} : vector<1x20xf32> to vector<1x1xf32>
    %670 = vector.extract_strided_slice %451 {offsets = [0, 17], sizes = [1, 1], strides = [1, 1]} : vector<1x20xf32> to vector<1x1xf32>
    %671 = vector.extract_strided_slice %451 {offsets = [0, 18], sizes = [1, 1], strides = [1, 1]} : vector<1x20xf32> to vector<1x1xf32>
    %672 = vector.extract_strided_slice %451 {offsets = [0, 19], sizes = [1, 1], strides = [1, 1]} : vector<1x20xf32> to vector<1x1xf32>
    %673 = arith.subf %671, %669 : vector<1x1xf32>
    %674 = math.absf %673 : vector<1x1xf32>
    %cst_98 = arith.constant 9.99999971E-10 : f32
    %675 = vector.broadcast %cst_98 : f32 to vector<1x1xf32>
    %676 = arith.cmpf olt, %674, %675 : vector<1x1xf32>
    %cst_99 = arith.constant 1.000000e+00 : f32
    %677 = vector.broadcast %cst_99 : f32 to vector<1x1xf32>
    %678 = arith.select %676, %677, %673 : vector<1x1xi1>, vector<1x1xf32>
    %679 = arith.subf %672, %670 : vector<1x1xf32>
    %680 = arith.divf %679, %678 : vector<1x1xf32>
    %681 = math.absf %680 : vector<1x1xf32>
    %cst_100 = arith.constant 9.99999971E-10 : f32
    %682 = vector.broadcast %cst_100 : f32 to vector<1x1xf32>
    %683 = arith.cmpf olt, %681, %682 : vector<1x1xf32>
    %684 = arith.extui %683 : vector<1x1xi1> to vector<1x1xi32>
    %685 = arith.sitofp %684 : vector<1x1xi32> to vector<1x1xf32>
    %686 = math.absf %680 : vector<1x1xf32>
    %cst_101 = arith.constant 9.99999971E-10 : f32
    %687 = vector.broadcast %cst_101 : f32 to vector<1x1xf32>
    %688 = arith.cmpf olt, %686, %687 : vector<1x1xf32>
    %cst_102 = arith.constant 1.000000e+00 : f32
    %689 = vector.broadcast %cst_102 : f32 to vector<1x1xf32>
    %690 = arith.select %688, %689, %680 : vector<1x1xi1>, vector<1x1xf32>
    %cst_103 = arith.constant 5.000000e-01 : f32
    %691 = vector.broadcast %cst_103 : f32 to vector<1x1xf32>
    %692 = arith.divf %691, %690 : vector<1x1xf32>
    %693 = vector.broadcast %669 : vector<1x1xf32> to vector<1x128xf32>
    %694 = arith.maximumf %693, %4 : vector<1x128xf32>
    %695 = arith.minimumf %694, %6 : vector<1x128xf32>
    %696 = vector.broadcast %671 : vector<1x1xf32> to vector<1x128xf32>
    %697 = arith.maximumf %696, %4 : vector<1x128xf32>
    %698 = arith.minimumf %697, %6 : vector<1x128xf32>
    %699 = arith.subf %698, %695 : vector<1x128xf32>
    %700 = vector.broadcast %669 : vector<1x1xf32> to vector<1x128xf32>
    %701 = arith.subf %695, %700 : vector<1x128xf32>
    %702 = vector.broadcast %680 : vector<1x1xf32> to vector<1x128xf32>
    %703 = arith.mulf %702, %701 : vector<1x128xf32>
    %704 = vector.broadcast %670 : vector<1x1xf32> to vector<1x128xf32>
    %705 = arith.addf %704, %703 : vector<1x128xf32>
    %706 = vector.broadcast %669 : vector<1x1xf32> to vector<1x128xf32>
    %707 = arith.subf %698, %706 : vector<1x128xf32>
    %708 = vector.broadcast %680 : vector<1x1xf32> to vector<1x128xf32>
    %709 = arith.mulf %708, %707 : vector<1x128xf32>
    %710 = vector.broadcast %670 : vector<1x1xf32> to vector<1x128xf32>
    %711 = arith.addf %710, %709 : vector<1x128xf32>
    %712 = arith.mulf %5, %699 : vector<1x128xf32>
    %713 = arith.subf %705, %5 : vector<1x128xf32>
    %cst_104 = arith.constant 0.000000e+00 : f32
    %714 = vector.broadcast %cst_104 : f32 to vector<1x128xf32>
    %715 = arith.maximumf %713, %714 : vector<1x128xf32>
    %716 = arith.subf %711, %5 : vector<1x128xf32>
    %cst_105 = arith.constant 0.000000e+00 : f32
    %717 = vector.broadcast %cst_105 : f32 to vector<1x128xf32>
    %718 = arith.maximumf %716, %717 : vector<1x128xf32>
    %719 = vector.broadcast %670 : vector<1x1xf32> to vector<1x128xf32>
    %720 = arith.subf %719, %5 : vector<1x128xf32>
    %cst_106 = arith.constant 0.000000e+00 : f32
    %721 = vector.broadcast %cst_106 : f32 to vector<1x128xf32>
    %722 = arith.maximumf %720, %721 : vector<1x128xf32>
    %723 = arith.mulf %722, %699 : vector<1x128xf32>
    %724 = arith.mulf %718, %718 : vector<1x128xf32>
    %725 = arith.mulf %715, %715 : vector<1x128xf32>
    %726 = arith.subf %724, %725 : vector<1x128xf32>
    %727 = vector.broadcast %692 : vector<1x1xf32> to vector<1x128xf32>
    %728 = arith.mulf %726, %727 : vector<1x128xf32>
    %729 = arith.subf %723, %728 : vector<1x128xf32>
    %730 = vector.broadcast %685 : vector<1x1xf32> to vector<1x128xf32>
    %731 = arith.mulf %729, %730 : vector<1x128xf32>
    %732 = arith.addf %728, %731 : vector<1x128xf32>
    %733 = arith.addf %712, %732 : vector<1x128xf32>
    %734 = arith.subf %705, %7 : vector<1x128xf32>
    %cst_107 = arith.constant 0.000000e+00 : f32
    %735 = vector.broadcast %cst_107 : f32 to vector<1x128xf32>
    %736 = arith.maximumf %734, %735 : vector<1x128xf32>
    %737 = arith.subf %711, %7 : vector<1x128xf32>
    %cst_108 = arith.constant 0.000000e+00 : f32
    %738 = vector.broadcast %cst_108 : f32 to vector<1x128xf32>
    %739 = arith.maximumf %737, %738 : vector<1x128xf32>
    %740 = vector.broadcast %670 : vector<1x1xf32> to vector<1x128xf32>
    %741 = arith.subf %740, %7 : vector<1x128xf32>
    %cst_109 = arith.constant 0.000000e+00 : f32
    %742 = vector.broadcast %cst_109 : f32 to vector<1x128xf32>
    %743 = arith.maximumf %741, %742 : vector<1x128xf32>
    %744 = arith.mulf %743, %699 : vector<1x128xf32>
    %745 = arith.mulf %739, %739 : vector<1x128xf32>
    %746 = arith.mulf %736, %736 : vector<1x128xf32>
    %747 = arith.subf %745, %746 : vector<1x128xf32>
    %748 = vector.broadcast %692 : vector<1x1xf32> to vector<1x128xf32>
    %749 = arith.mulf %747, %748 : vector<1x128xf32>
    %750 = arith.subf %744, %749 : vector<1x128xf32>
    %751 = vector.broadcast %685 : vector<1x1xf32> to vector<1x128xf32>
    %752 = arith.mulf %750, %751 : vector<1x128xf32>
    %753 = arith.addf %749, %752 : vector<1x128xf32>
    %754 = arith.subf %733, %753 : vector<1x128xf32>
    %755 = arith.subf %668, %754 : vector<1x128xf32>
    %756 = vector.extract_strided_slice %451 {offsets = [0, 18], sizes = [1, 1], strides = [1, 1]} : vector<1x20xf32> to vector<1x1xf32>
    %757 = vector.extract_strided_slice %451 {offsets = [0, 19], sizes = [1, 1], strides = [1, 1]} : vector<1x20xf32> to vector<1x1xf32>
    %758 = vector.extract_strided_slice %451 {offsets = [0, 12], sizes = [1, 1], strides = [1, 1]} : vector<1x20xf32> to vector<1x1xf32>
    %759 = vector.extract_strided_slice %451 {offsets = [0, 13], sizes = [1, 1], strides = [1, 1]} : vector<1x20xf32> to vector<1x1xf32>
    %760 = arith.subf %758, %756 : vector<1x1xf32>
    %761 = math.absf %760 : vector<1x1xf32>
    %cst_110 = arith.constant 9.99999971E-10 : f32
    %762 = vector.broadcast %cst_110 : f32 to vector<1x1xf32>
    %763 = arith.cmpf olt, %761, %762 : vector<1x1xf32>
    %cst_111 = arith.constant 1.000000e+00 : f32
    %764 = vector.broadcast %cst_111 : f32 to vector<1x1xf32>
    %765 = arith.select %763, %764, %760 : vector<1x1xi1>, vector<1x1xf32>
    %766 = arith.subf %759, %757 : vector<1x1xf32>
    %767 = arith.divf %766, %765 : vector<1x1xf32>
    %768 = math.absf %767 : vector<1x1xf32>
    %cst_112 = arith.constant 9.99999971E-10 : f32
    %769 = vector.broadcast %cst_112 : f32 to vector<1x1xf32>
    %770 = arith.cmpf olt, %768, %769 : vector<1x1xf32>
    %771 = arith.extui %770 : vector<1x1xi1> to vector<1x1xi32>
    %772 = arith.sitofp %771 : vector<1x1xi32> to vector<1x1xf32>
    %773 = math.absf %767 : vector<1x1xf32>
    %cst_113 = arith.constant 9.99999971E-10 : f32
    %774 = vector.broadcast %cst_113 : f32 to vector<1x1xf32>
    %775 = arith.cmpf olt, %773, %774 : vector<1x1xf32>
    %cst_114 = arith.constant 1.000000e+00 : f32
    %776 = vector.broadcast %cst_114 : f32 to vector<1x1xf32>
    %777 = arith.select %775, %776, %767 : vector<1x1xi1>, vector<1x1xf32>
    %cst_115 = arith.constant 5.000000e-01 : f32
    %778 = vector.broadcast %cst_115 : f32 to vector<1x1xf32>
    %779 = arith.divf %778, %777 : vector<1x1xf32>
    %780 = vector.broadcast %756 : vector<1x1xf32> to vector<1x128xf32>
    %781 = arith.maximumf %780, %4 : vector<1x128xf32>
    %782 = arith.minimumf %781, %6 : vector<1x128xf32>
    %783 = vector.broadcast %758 : vector<1x1xf32> to vector<1x128xf32>
    %784 = arith.maximumf %783, %4 : vector<1x128xf32>
    %785 = arith.minimumf %784, %6 : vector<1x128xf32>
    %786 = arith.subf %785, %782 : vector<1x128xf32>
    %787 = vector.broadcast %756 : vector<1x1xf32> to vector<1x128xf32>
    %788 = arith.subf %782, %787 : vector<1x128xf32>
    %789 = vector.broadcast %767 : vector<1x1xf32> to vector<1x128xf32>
    %790 = arith.mulf %789, %788 : vector<1x128xf32>
    %791 = vector.broadcast %757 : vector<1x1xf32> to vector<1x128xf32>
    %792 = arith.addf %791, %790 : vector<1x128xf32>
    %793 = vector.broadcast %756 : vector<1x1xf32> to vector<1x128xf32>
    %794 = arith.subf %785, %793 : vector<1x128xf32>
    %795 = vector.broadcast %767 : vector<1x1xf32> to vector<1x128xf32>
    %796 = arith.mulf %795, %794 : vector<1x128xf32>
    %797 = vector.broadcast %757 : vector<1x1xf32> to vector<1x128xf32>
    %798 = arith.addf %797, %796 : vector<1x128xf32>
    %799 = arith.mulf %5, %786 : vector<1x128xf32>
    %800 = arith.subf %792, %5 : vector<1x128xf32>
    %cst_116 = arith.constant 0.000000e+00 : f32
    %801 = vector.broadcast %cst_116 : f32 to vector<1x128xf32>
    %802 = arith.maximumf %800, %801 : vector<1x128xf32>
    %803 = arith.subf %798, %5 : vector<1x128xf32>
    %cst_117 = arith.constant 0.000000e+00 : f32
    %804 = vector.broadcast %cst_117 : f32 to vector<1x128xf32>
    %805 = arith.maximumf %803, %804 : vector<1x128xf32>
    %806 = vector.broadcast %757 : vector<1x1xf32> to vector<1x128xf32>
    %807 = arith.subf %806, %5 : vector<1x128xf32>
    %cst_118 = arith.constant 0.000000e+00 : f32
    %808 = vector.broadcast %cst_118 : f32 to vector<1x128xf32>
    %809 = arith.maximumf %807, %808 : vector<1x128xf32>
    %810 = arith.mulf %809, %786 : vector<1x128xf32>
    %811 = arith.mulf %805, %805 : vector<1x128xf32>
    %812 = arith.mulf %802, %802 : vector<1x128xf32>
    %813 = arith.subf %811, %812 : vector<1x128xf32>
    %814 = vector.broadcast %779 : vector<1x1xf32> to vector<1x128xf32>
    %815 = arith.mulf %813, %814 : vector<1x128xf32>
    %816 = arith.subf %810, %815 : vector<1x128xf32>
    %817 = vector.broadcast %772 : vector<1x1xf32> to vector<1x128xf32>
    %818 = arith.mulf %816, %817 : vector<1x128xf32>
    %819 = arith.addf %815, %818 : vector<1x128xf32>
    %820 = arith.addf %799, %819 : vector<1x128xf32>
    %821 = arith.subf %792, %7 : vector<1x128xf32>
    %cst_119 = arith.constant 0.000000e+00 : f32
    %822 = vector.broadcast %cst_119 : f32 to vector<1x128xf32>
    %823 = arith.maximumf %821, %822 : vector<1x128xf32>
    %824 = arith.subf %798, %7 : vector<1x128xf32>
    %cst_120 = arith.constant 0.000000e+00 : f32
    %825 = vector.broadcast %cst_120 : f32 to vector<1x128xf32>
    %826 = arith.maximumf %824, %825 : vector<1x128xf32>
    %827 = vector.broadcast %757 : vector<1x1xf32> to vector<1x128xf32>
    %828 = arith.subf %827, %7 : vector<1x128xf32>
    %cst_121 = arith.constant 0.000000e+00 : f32
    %829 = vector.broadcast %cst_121 : f32 to vector<1x128xf32>
    %830 = arith.maximumf %828, %829 : vector<1x128xf32>
    %831 = arith.mulf %830, %786 : vector<1x128xf32>
    %832 = arith.mulf %826, %826 : vector<1x128xf32>
    %833 = arith.mulf %823, %823 : vector<1x128xf32>
    %834 = arith.subf %832, %833 : vector<1x128xf32>
    %835 = vector.broadcast %779 : vector<1x1xf32> to vector<1x128xf32>
    %836 = arith.mulf %834, %835 : vector<1x128xf32>
    %837 = arith.subf %831, %836 : vector<1x128xf32>
    %838 = vector.broadcast %772 : vector<1x1xf32> to vector<1x128xf32>
    %839 = arith.mulf %837, %838 : vector<1x128xf32>
    %840 = arith.addf %836, %839 : vector<1x128xf32>
    %841 = arith.subf %820, %840 : vector<1x128xf32>
    %842 = arith.subf %755, %841 : vector<1x128xf32>
    %843 = math.absf %842 : vector<1x128xf32>
    %844 = vector.broadcast %463 : vector<1x1xf32> to vector<1x128xf32>
    %845 = arith.addf %844, %20 : vector<1x128xf32>
    %846 = arith.subf %845, %843 : vector<1x128xf32>
    %cst_122 = arith.constant 9.99999993E-9 : f32
    %847 = vector.broadcast %cst_122 : f32 to vector<1x128xf32>
    %848 = arith.maximumf %846, %847 : vector<1x128xf32>
    %849 = arith.divf %843, %848 : vector<1x128xf32>
    %850 = arith.cmpf ogt, %493, %431 : vector<1x128xf32>
    %851 = arith.select %850, %493, %431 : vector<1x128xi1>, vector<1x128xf32>
    %852 = arith.select %850, %849, %432 : vector<1x128xi1>, vector<1x128xf32>
    %853 = vector.shape_cast %452 : vector<1x1xf32> to vector<1x1xf32>
    %854 = vector.broadcast %853 : vector<1x1xf32> to vector<1x128xf32>
    %855 = arith.select %850, %854, %435 : vector<1x128xi1>, vector<1x128xf32>
    %856 = vector.shape_cast %453 : vector<1x1xf32> to vector<1x1xf32>
    %857 = vector.broadcast %856 : vector<1x1xf32> to vector<1x128xf32>
    %858 = arith.select %850, %857, %438 : vector<1x128xi1>, vector<1x128xf32>
    %859 = vector.shape_cast %454 : vector<1x1xf32> to vector<1x1xf32>
    %860 = vector.broadcast %859 : vector<1x1xf32> to vector<1x128xf32>
    %861 = arith.select %850, %860, %441 : vector<1x128xi1>, vector<1x128xf32>
    %862 = vector.shape_cast %455 : vector<1x1xf32> to vector<1x1xf32>
    %863 = vector.broadcast %862 : vector<1x1xf32> to vector<1x128xf32>
    %864 = arith.select %850, %863, %444 : vector<1x128xi1>, vector<1x128xf32>
    %865 = vector.shape_cast %456 : vector<1x1xf32> to vector<1x1xf32>
    %866 = vector.broadcast %865 : vector<1x1xf32> to vector<1x128xf32>
    %867 = arith.select %850, %866, %447 : vector<1x128xi1>, vector<1x128xf32>
    %868 = vector.shape_cast %457 : vector<1x1xf32> to vector<1x1xf32>
    %869 = vector.broadcast %868 : vector<1x1xf32> to vector<1x128xf32>
    %870 = arith.select %850, %869, %450 : vector<1x128xi1>, vector<1x128xf32>
    %871 = vector.extract_strided_slice %22 {offsets = [2, 0], sizes = [1, 20], strides = [1, 1]} : vector<8x20xf32> to vector<1x20xf32>
    %872 = vector.extract_strided_slice %871 {offsets = [0, 0], sizes = [1, 1], strides = [1, 1]} : vector<1x20xf32> to vector<1x1xf32>
    %873 = vector.extract_strided_slice %871 {offsets = [0, 1], sizes = [1, 1], strides = [1, 1]} : vector<1x20xf32> to vector<1x1xf32>
    %874 = vector.extract_strided_slice %871 {offsets = [0, 2], sizes = [1, 1], strides = [1, 1]} : vector<1x20xf32> to vector<1x1xf32>
    %875 = vector.extract_strided_slice %871 {offsets = [0, 3], sizes = [1, 1], strides = [1, 1]} : vector<1x20xf32> to vector<1x1xf32>
    %876 = vector.extract_strided_slice %871 {offsets = [0, 4], sizes = [1, 1], strides = [1, 1]} : vector<1x20xf32> to vector<1x1xf32>
    %877 = vector.extract_strided_slice %871 {offsets = [0, 5], sizes = [1, 1], strides = [1, 1]} : vector<1x20xf32> to vector<1x1xf32>
    %878 = vector.extract_strided_slice %871 {offsets = [0, 6], sizes = [1, 1], strides = [1, 1]} : vector<1x20xf32> to vector<1x1xf32>
    %879 = vector.extract_strided_slice %871 {offsets = [0, 7], sizes = [1, 1], strides = [1, 1]} : vector<1x20xf32> to vector<1x1xf32>
    %880 = vector.extract_strided_slice %871 {offsets = [0, 8], sizes = [1, 1], strides = [1, 1]} : vector<1x20xf32> to vector<1x1xf32>
    %881 = vector.extract_strided_slice %871 {offsets = [0, 9], sizes = [1, 1], strides = [1, 1]} : vector<1x20xf32> to vector<1x1xf32>
    %882 = vector.extract_strided_slice %871 {offsets = [0, 10], sizes = [1, 1], strides = [1, 1]} : vector<1x20xf32> to vector<1x1xf32>
    %883 = vector.extract_strided_slice %871 {offsets = [0, 11], sizes = [1, 1], strides = [1, 1]} : vector<1x20xf32> to vector<1x1xf32>
    %884 = vector.broadcast %881 : vector<1x1xf32> to vector<1x128xf32>
    %885 = arith.minimumf %6, %884 : vector<1x128xf32>
    %886 = vector.broadcast %879 : vector<1x1xf32> to vector<1x128xf32>
    %887 = arith.maximumf %4, %886 : vector<1x128xf32>
    %888 = arith.subf %885, %887 : vector<1x128xf32>
    %cst_123 = arith.constant 0.000000e+00 : f32
    %889 = vector.broadcast %cst_123 : f32 to vector<1x128xf32>
    %890 = arith.maximumf %888, %889 : vector<1x128xf32>
    %891 = vector.broadcast %882 : vector<1x1xf32> to vector<1x128xf32>
    %892 = arith.minimumf %7, %891 : vector<1x128xf32>
    %893 = vector.broadcast %880 : vector<1x1xf32> to vector<1x128xf32>
    %894 = arith.maximumf %5, %893 : vector<1x128xf32>
    %895 = arith.subf %892, %894 : vector<1x128xf32>
    %cst_124 = arith.constant 0.000000e+00 : f32
    %896 = vector.broadcast %cst_124 : f32 to vector<1x128xf32>
    %897 = arith.maximumf %895, %896 : vector<1x128xf32>
    %898 = arith.mulf %890, %897 : vector<1x128xf32>
    %899 = arith.subf %881, %879 : vector<1x1xf32>
    %900 = arith.subf %882, %880 : vector<1x1xf32>
    %901 = arith.mulf %899, %900 : vector<1x1xf32>
    %902 = vector.broadcast %901 : vector<1x1xf32> to vector<1x128xf32>
    %903 = arith.addf %20, %902 : vector<1x128xf32>
    %904 = arith.subf %903, %898 : vector<1x128xf32>
    %cst_125 = arith.constant 9.99999993E-9 : f32
    %905 = vector.broadcast %cst_125 : f32 to vector<1x128xf32>
    %906 = arith.maximumf %904, %905 : vector<1x128xf32>
    %907 = arith.divf %898, %906 : vector<1x128xf32>
    %908 = vector.broadcast %878 : vector<1x1xf32> to vector<1x128xf32>
    %909 = arith.mulf %907, %908 : vector<1x128xf32>
    %cst_126 = arith.constant 1.000000e+00 : f32
    %910 = vector.broadcast %cst_126 : f32 to vector<1x1xf32>
    %911 = arith.subf %910, %878 : vector<1x1xf32>
    %912 = vector.broadcast %911 : vector<1x1xf32> to vector<1x128xf32>
    %913 = arith.subf %909, %912 : vector<1x128xf32>
    %cst_127 = arith.constant 0.000000e+00 : f32
    %914 = vector.broadcast %cst_127 : f32 to vector<1x128xf32>
    %915 = vector.extract_strided_slice %871 {offsets = [0, 12], sizes = [1, 1], strides = [1, 1]} : vector<1x20xf32> to vector<1x1xf32>
    %916 = vector.extract_strided_slice %871 {offsets = [0, 13], sizes = [1, 1], strides = [1, 1]} : vector<1x20xf32> to vector<1x1xf32>
    %917 = vector.extract_strided_slice %871 {offsets = [0, 14], sizes = [1, 1], strides = [1, 1]} : vector<1x20xf32> to vector<1x1xf32>
    %918 = vector.extract_strided_slice %871 {offsets = [0, 15], sizes = [1, 1], strides = [1, 1]} : vector<1x20xf32> to vector<1x1xf32>
    %919 = arith.subf %917, %915 : vector<1x1xf32>
    %920 = math.absf %919 : vector<1x1xf32>
    %cst_128 = arith.constant 9.99999971E-10 : f32
    %921 = vector.broadcast %cst_128 : f32 to vector<1x1xf32>
    %922 = arith.cmpf olt, %920, %921 : vector<1x1xf32>
    %cst_129 = arith.constant 1.000000e+00 : f32
    %923 = vector.broadcast %cst_129 : f32 to vector<1x1xf32>
    %924 = arith.select %922, %923, %919 : vector<1x1xi1>, vector<1x1xf32>
    %925 = arith.subf %918, %916 : vector<1x1xf32>
    %926 = arith.divf %925, %924 : vector<1x1xf32>
    %927 = math.absf %926 : vector<1x1xf32>
    %cst_130 = arith.constant 9.99999971E-10 : f32
    %928 = vector.broadcast %cst_130 : f32 to vector<1x1xf32>
    %929 = arith.cmpf olt, %927, %928 : vector<1x1xf32>
    %930 = arith.extui %929 : vector<1x1xi1> to vector<1x1xi32>
    %931 = arith.sitofp %930 : vector<1x1xi32> to vector<1x1xf32>
    %932 = math.absf %926 : vector<1x1xf32>
    %cst_131 = arith.constant 9.99999971E-10 : f32
    %933 = vector.broadcast %cst_131 : f32 to vector<1x1xf32>
    %934 = arith.cmpf olt, %932, %933 : vector<1x1xf32>
    %cst_132 = arith.constant 1.000000e+00 : f32
    %935 = vector.broadcast %cst_132 : f32 to vector<1x1xf32>
    %936 = arith.select %934, %935, %926 : vector<1x1xi1>, vector<1x1xf32>
    %cst_133 = arith.constant 5.000000e-01 : f32
    %937 = vector.broadcast %cst_133 : f32 to vector<1x1xf32>
    %938 = arith.divf %937, %936 : vector<1x1xf32>
    %939 = vector.broadcast %915 : vector<1x1xf32> to vector<1x128xf32>
    %940 = arith.maximumf %939, %4 : vector<1x128xf32>
    %941 = arith.minimumf %940, %6 : vector<1x128xf32>
    %942 = vector.broadcast %917 : vector<1x1xf32> to vector<1x128xf32>
    %943 = arith.maximumf %942, %4 : vector<1x128xf32>
    %944 = arith.minimumf %943, %6 : vector<1x128xf32>
    %945 = arith.subf %944, %941 : vector<1x128xf32>
    %946 = vector.broadcast %915 : vector<1x1xf32> to vector<1x128xf32>
    %947 = arith.subf %941, %946 : vector<1x128xf32>
    %948 = vector.broadcast %926 : vector<1x1xf32> to vector<1x128xf32>
    %949 = arith.mulf %948, %947 : vector<1x128xf32>
    %950 = vector.broadcast %916 : vector<1x1xf32> to vector<1x128xf32>
    %951 = arith.addf %950, %949 : vector<1x128xf32>
    %952 = vector.broadcast %915 : vector<1x1xf32> to vector<1x128xf32>
    %953 = arith.subf %944, %952 : vector<1x128xf32>
    %954 = vector.broadcast %926 : vector<1x1xf32> to vector<1x128xf32>
    %955 = arith.mulf %954, %953 : vector<1x128xf32>
    %956 = vector.broadcast %916 : vector<1x1xf32> to vector<1x128xf32>
    %957 = arith.addf %956, %955 : vector<1x128xf32>
    %958 = arith.mulf %5, %945 : vector<1x128xf32>
    %959 = arith.subf %951, %5 : vector<1x128xf32>
    %cst_134 = arith.constant 0.000000e+00 : f32
    %960 = vector.broadcast %cst_134 : f32 to vector<1x128xf32>
    %961 = arith.maximumf %959, %960 : vector<1x128xf32>
    %962 = arith.subf %957, %5 : vector<1x128xf32>
    %cst_135 = arith.constant 0.000000e+00 : f32
    %963 = vector.broadcast %cst_135 : f32 to vector<1x128xf32>
    %964 = arith.maximumf %962, %963 : vector<1x128xf32>
    %965 = vector.broadcast %916 : vector<1x1xf32> to vector<1x128xf32>
    %966 = arith.subf %965, %5 : vector<1x128xf32>
    %cst_136 = arith.constant 0.000000e+00 : f32
    %967 = vector.broadcast %cst_136 : f32 to vector<1x128xf32>
    %968 = arith.maximumf %966, %967 : vector<1x128xf32>
    %969 = arith.mulf %968, %945 : vector<1x128xf32>
    %970 = arith.mulf %964, %964 : vector<1x128xf32>
    %971 = arith.mulf %961, %961 : vector<1x128xf32>
    %972 = arith.subf %970, %971 : vector<1x128xf32>
    %973 = vector.broadcast %938 : vector<1x1xf32> to vector<1x128xf32>
    %974 = arith.mulf %972, %973 : vector<1x128xf32>
    %975 = arith.subf %969, %974 : vector<1x128xf32>
    %976 = vector.broadcast %931 : vector<1x1xf32> to vector<1x128xf32>
    %977 = arith.mulf %975, %976 : vector<1x128xf32>
    %978 = arith.addf %974, %977 : vector<1x128xf32>
    %979 = arith.addf %958, %978 : vector<1x128xf32>
    %980 = arith.subf %951, %7 : vector<1x128xf32>
    %cst_137 = arith.constant 0.000000e+00 : f32
    %981 = vector.broadcast %cst_137 : f32 to vector<1x128xf32>
    %982 = arith.maximumf %980, %981 : vector<1x128xf32>
    %983 = arith.subf %957, %7 : vector<1x128xf32>
    %cst_138 = arith.constant 0.000000e+00 : f32
    %984 = vector.broadcast %cst_138 : f32 to vector<1x128xf32>
    %985 = arith.maximumf %983, %984 : vector<1x128xf32>
    %986 = vector.broadcast %916 : vector<1x1xf32> to vector<1x128xf32>
    %987 = arith.subf %986, %7 : vector<1x128xf32>
    %cst_139 = arith.constant 0.000000e+00 : f32
    %988 = vector.broadcast %cst_139 : f32 to vector<1x128xf32>
    %989 = arith.maximumf %987, %988 : vector<1x128xf32>
    %990 = arith.mulf %989, %945 : vector<1x128xf32>
    %991 = arith.mulf %985, %985 : vector<1x128xf32>
    %992 = arith.mulf %982, %982 : vector<1x128xf32>
    %993 = arith.subf %991, %992 : vector<1x128xf32>
    %994 = vector.broadcast %938 : vector<1x1xf32> to vector<1x128xf32>
    %995 = arith.mulf %993, %994 : vector<1x128xf32>
    %996 = arith.subf %990, %995 : vector<1x128xf32>
    %997 = vector.broadcast %931 : vector<1x1xf32> to vector<1x128xf32>
    %998 = arith.mulf %996, %997 : vector<1x128xf32>
    %999 = arith.addf %995, %998 : vector<1x128xf32>
    %1000 = arith.subf %979, %999 : vector<1x128xf32>
    %1001 = arith.subf %914, %1000 : vector<1x128xf32>
    %1002 = vector.extract_strided_slice %871 {offsets = [0, 14], sizes = [1, 1], strides = [1, 1]} : vector<1x20xf32> to vector<1x1xf32>
    %1003 = vector.extract_strided_slice %871 {offsets = [0, 15], sizes = [1, 1], strides = [1, 1]} : vector<1x20xf32> to vector<1x1xf32>
    %1004 = vector.extract_strided_slice %871 {offsets = [0, 16], sizes = [1, 1], strides = [1, 1]} : vector<1x20xf32> to vector<1x1xf32>
    %1005 = vector.extract_strided_slice %871 {offsets = [0, 17], sizes = [1, 1], strides = [1, 1]} : vector<1x20xf32> to vector<1x1xf32>
    %1006 = arith.subf %1004, %1002 : vector<1x1xf32>
    %1007 = math.absf %1006 : vector<1x1xf32>
    %cst_140 = arith.constant 9.99999971E-10 : f32
    %1008 = vector.broadcast %cst_140 : f32 to vector<1x1xf32>
    %1009 = arith.cmpf olt, %1007, %1008 : vector<1x1xf32>
    %cst_141 = arith.constant 1.000000e+00 : f32
    %1010 = vector.broadcast %cst_141 : f32 to vector<1x1xf32>
    %1011 = arith.select %1009, %1010, %1006 : vector<1x1xi1>, vector<1x1xf32>
    %1012 = arith.subf %1005, %1003 : vector<1x1xf32>
    %1013 = arith.divf %1012, %1011 : vector<1x1xf32>
    %1014 = math.absf %1013 : vector<1x1xf32>
    %cst_142 = arith.constant 9.99999971E-10 : f32
    %1015 = vector.broadcast %cst_142 : f32 to vector<1x1xf32>
    %1016 = arith.cmpf olt, %1014, %1015 : vector<1x1xf32>
    %1017 = arith.extui %1016 : vector<1x1xi1> to vector<1x1xi32>
    %1018 = arith.sitofp %1017 : vector<1x1xi32> to vector<1x1xf32>
    %1019 = math.absf %1013 : vector<1x1xf32>
    %cst_143 = arith.constant 9.99999971E-10 : f32
    %1020 = vector.broadcast %cst_143 : f32 to vector<1x1xf32>
    %1021 = arith.cmpf olt, %1019, %1020 : vector<1x1xf32>
    %cst_144 = arith.constant 1.000000e+00 : f32
    %1022 = vector.broadcast %cst_144 : f32 to vector<1x1xf32>
    %1023 = arith.select %1021, %1022, %1013 : vector<1x1xi1>, vector<1x1xf32>
    %cst_145 = arith.constant 5.000000e-01 : f32
    %1024 = vector.broadcast %cst_145 : f32 to vector<1x1xf32>
    %1025 = arith.divf %1024, %1023 : vector<1x1xf32>
    %1026 = vector.broadcast %1002 : vector<1x1xf32> to vector<1x128xf32>
    %1027 = arith.maximumf %1026, %4 : vector<1x128xf32>
    %1028 = arith.minimumf %1027, %6 : vector<1x128xf32>
    %1029 = vector.broadcast %1004 : vector<1x1xf32> to vector<1x128xf32>
    %1030 = arith.maximumf %1029, %4 : vector<1x128xf32>
    %1031 = arith.minimumf %1030, %6 : vector<1x128xf32>
    %1032 = arith.subf %1031, %1028 : vector<1x128xf32>
    %1033 = vector.broadcast %1002 : vector<1x1xf32> to vector<1x128xf32>
    %1034 = arith.subf %1028, %1033 : vector<1x128xf32>
    %1035 = vector.broadcast %1013 : vector<1x1xf32> to vector<1x128xf32>
    %1036 = arith.mulf %1035, %1034 : vector<1x128xf32>
    %1037 = vector.broadcast %1003 : vector<1x1xf32> to vector<1x128xf32>
    %1038 = arith.addf %1037, %1036 : vector<1x128xf32>
    %1039 = vector.broadcast %1002 : vector<1x1xf32> to vector<1x128xf32>
    %1040 = arith.subf %1031, %1039 : vector<1x128xf32>
    %1041 = vector.broadcast %1013 : vector<1x1xf32> to vector<1x128xf32>
    %1042 = arith.mulf %1041, %1040 : vector<1x128xf32>
    %1043 = vector.broadcast %1003 : vector<1x1xf32> to vector<1x128xf32>
    %1044 = arith.addf %1043, %1042 : vector<1x128xf32>
    %1045 = arith.mulf %5, %1032 : vector<1x128xf32>
    %1046 = arith.subf %1038, %5 : vector<1x128xf32>
    %cst_146 = arith.constant 0.000000e+00 : f32
    %1047 = vector.broadcast %cst_146 : f32 to vector<1x128xf32>
    %1048 = arith.maximumf %1046, %1047 : vector<1x128xf32>
    %1049 = arith.subf %1044, %5 : vector<1x128xf32>
    %cst_147 = arith.constant 0.000000e+00 : f32
    %1050 = vector.broadcast %cst_147 : f32 to vector<1x128xf32>
    %1051 = arith.maximumf %1049, %1050 : vector<1x128xf32>
    %1052 = vector.broadcast %1003 : vector<1x1xf32> to vector<1x128xf32>
    %1053 = arith.subf %1052, %5 : vector<1x128xf32>
    %cst_148 = arith.constant 0.000000e+00 : f32
    %1054 = vector.broadcast %cst_148 : f32 to vector<1x128xf32>
    %1055 = arith.maximumf %1053, %1054 : vector<1x128xf32>
    %1056 = arith.mulf %1055, %1032 : vector<1x128xf32>
    %1057 = arith.mulf %1051, %1051 : vector<1x128xf32>
    %1058 = arith.mulf %1048, %1048 : vector<1x128xf32>
    %1059 = arith.subf %1057, %1058 : vector<1x128xf32>
    %1060 = vector.broadcast %1025 : vector<1x1xf32> to vector<1x128xf32>
    %1061 = arith.mulf %1059, %1060 : vector<1x128xf32>
    %1062 = arith.subf %1056, %1061 : vector<1x128xf32>
    %1063 = vector.broadcast %1018 : vector<1x1xf32> to vector<1x128xf32>
    %1064 = arith.mulf %1062, %1063 : vector<1x128xf32>
    %1065 = arith.addf %1061, %1064 : vector<1x128xf32>
    %1066 = arith.addf %1045, %1065 : vector<1x128xf32>
    %1067 = arith.subf %1038, %7 : vector<1x128xf32>
    %cst_149 = arith.constant 0.000000e+00 : f32
    %1068 = vector.broadcast %cst_149 : f32 to vector<1x128xf32>
    %1069 = arith.maximumf %1067, %1068 : vector<1x128xf32>
    %1070 = arith.subf %1044, %7 : vector<1x128xf32>
    %cst_150 = arith.constant 0.000000e+00 : f32
    %1071 = vector.broadcast %cst_150 : f32 to vector<1x128xf32>
    %1072 = arith.maximumf %1070, %1071 : vector<1x128xf32>
    %1073 = vector.broadcast %1003 : vector<1x1xf32> to vector<1x128xf32>
    %1074 = arith.subf %1073, %7 : vector<1x128xf32>
    %cst_151 = arith.constant 0.000000e+00 : f32
    %1075 = vector.broadcast %cst_151 : f32 to vector<1x128xf32>
    %1076 = arith.maximumf %1074, %1075 : vector<1x128xf32>
    %1077 = arith.mulf %1076, %1032 : vector<1x128xf32>
    %1078 = arith.mulf %1072, %1072 : vector<1x128xf32>
    %1079 = arith.mulf %1069, %1069 : vector<1x128xf32>
    %1080 = arith.subf %1078, %1079 : vector<1x128xf32>
    %1081 = vector.broadcast %1025 : vector<1x1xf32> to vector<1x128xf32>
    %1082 = arith.mulf %1080, %1081 : vector<1x128xf32>
    %1083 = arith.subf %1077, %1082 : vector<1x128xf32>
    %1084 = vector.broadcast %1018 : vector<1x1xf32> to vector<1x128xf32>
    %1085 = arith.mulf %1083, %1084 : vector<1x128xf32>
    %1086 = arith.addf %1082, %1085 : vector<1x128xf32>
    %1087 = arith.subf %1066, %1086 : vector<1x128xf32>
    %1088 = arith.subf %1001, %1087 : vector<1x128xf32>
    %1089 = vector.extract_strided_slice %871 {offsets = [0, 16], sizes = [1, 1], strides = [1, 1]} : vector<1x20xf32> to vector<1x1xf32>
    %1090 = vector.extract_strided_slice %871 {offsets = [0, 17], sizes = [1, 1], strides = [1, 1]} : vector<1x20xf32> to vector<1x1xf32>
    %1091 = vector.extract_strided_slice %871 {offsets = [0, 18], sizes = [1, 1], strides = [1, 1]} : vector<1x20xf32> to vector<1x1xf32>
    %1092 = vector.extract_strided_slice %871 {offsets = [0, 19], sizes = [1, 1], strides = [1, 1]} : vector<1x20xf32> to vector<1x1xf32>
    %1093 = arith.subf %1091, %1089 : vector<1x1xf32>
    %1094 = math.absf %1093 : vector<1x1xf32>
    %cst_152 = arith.constant 9.99999971E-10 : f32
    %1095 = vector.broadcast %cst_152 : f32 to vector<1x1xf32>
    %1096 = arith.cmpf olt, %1094, %1095 : vector<1x1xf32>
    %cst_153 = arith.constant 1.000000e+00 : f32
    %1097 = vector.broadcast %cst_153 : f32 to vector<1x1xf32>
    %1098 = arith.select %1096, %1097, %1093 : vector<1x1xi1>, vector<1x1xf32>
    %1099 = arith.subf %1092, %1090 : vector<1x1xf32>
    %1100 = arith.divf %1099, %1098 : vector<1x1xf32>
    %1101 = math.absf %1100 : vector<1x1xf32>
    %cst_154 = arith.constant 9.99999971E-10 : f32
    %1102 = vector.broadcast %cst_154 : f32 to vector<1x1xf32>
    %1103 = arith.cmpf olt, %1101, %1102 : vector<1x1xf32>
    %1104 = arith.extui %1103 : vector<1x1xi1> to vector<1x1xi32>
    %1105 = arith.sitofp %1104 : vector<1x1xi32> to vector<1x1xf32>
    %1106 = math.absf %1100 : vector<1x1xf32>
    %cst_155 = arith.constant 9.99999971E-10 : f32
    %1107 = vector.broadcast %cst_155 : f32 to vector<1x1xf32>
    %1108 = arith.cmpf olt, %1106, %1107 : vector<1x1xf32>
    %cst_156 = arith.constant 1.000000e+00 : f32
    %1109 = vector.broadcast %cst_156 : f32 to vector<1x1xf32>
    %1110 = arith.select %1108, %1109, %1100 : vector<1x1xi1>, vector<1x1xf32>
    %cst_157 = arith.constant 5.000000e-01 : f32
    %1111 = vector.broadcast %cst_157 : f32 to vector<1x1xf32>
    %1112 = arith.divf %1111, %1110 : vector<1x1xf32>
    %1113 = vector.broadcast %1089 : vector<1x1xf32> to vector<1x128xf32>
    %1114 = arith.maximumf %1113, %4 : vector<1x128xf32>
    %1115 = arith.minimumf %1114, %6 : vector<1x128xf32>
    %1116 = vector.broadcast %1091 : vector<1x1xf32> to vector<1x128xf32>
    %1117 = arith.maximumf %1116, %4 : vector<1x128xf32>
    %1118 = arith.minimumf %1117, %6 : vector<1x128xf32>
    %1119 = arith.subf %1118, %1115 : vector<1x128xf32>
    %1120 = vector.broadcast %1089 : vector<1x1xf32> to vector<1x128xf32>
    %1121 = arith.subf %1115, %1120 : vector<1x128xf32>
    %1122 = vector.broadcast %1100 : vector<1x1xf32> to vector<1x128xf32>
    %1123 = arith.mulf %1122, %1121 : vector<1x128xf32>
    %1124 = vector.broadcast %1090 : vector<1x1xf32> to vector<1x128xf32>
    %1125 = arith.addf %1124, %1123 : vector<1x128xf32>
    %1126 = vector.broadcast %1089 : vector<1x1xf32> to vector<1x128xf32>
    %1127 = arith.subf %1118, %1126 : vector<1x128xf32>
    %1128 = vector.broadcast %1100 : vector<1x1xf32> to vector<1x128xf32>
    %1129 = arith.mulf %1128, %1127 : vector<1x128xf32>
    %1130 = vector.broadcast %1090 : vector<1x1xf32> to vector<1x128xf32>
    %1131 = arith.addf %1130, %1129 : vector<1x128xf32>
    %1132 = arith.mulf %5, %1119 : vector<1x128xf32>
    %1133 = arith.subf %1125, %5 : vector<1x128xf32>
    %cst_158 = arith.constant 0.000000e+00 : f32
    %1134 = vector.broadcast %cst_158 : f32 to vector<1x128xf32>
    %1135 = arith.maximumf %1133, %1134 : vector<1x128xf32>
    %1136 = arith.subf %1131, %5 : vector<1x128xf32>
    %cst_159 = arith.constant 0.000000e+00 : f32
    %1137 = vector.broadcast %cst_159 : f32 to vector<1x128xf32>
    %1138 = arith.maximumf %1136, %1137 : vector<1x128xf32>
    %1139 = vector.broadcast %1090 : vector<1x1xf32> to vector<1x128xf32>
    %1140 = arith.subf %1139, %5 : vector<1x128xf32>
    %cst_160 = arith.constant 0.000000e+00 : f32
    %1141 = vector.broadcast %cst_160 : f32 to vector<1x128xf32>
    %1142 = arith.maximumf %1140, %1141 : vector<1x128xf32>
    %1143 = arith.mulf %1142, %1119 : vector<1x128xf32>
    %1144 = arith.mulf %1138, %1138 : vector<1x128xf32>
    %1145 = arith.mulf %1135, %1135 : vector<1x128xf32>
    %1146 = arith.subf %1144, %1145 : vector<1x128xf32>
    %1147 = vector.broadcast %1112 : vector<1x1xf32> to vector<1x128xf32>
    %1148 = arith.mulf %1146, %1147 : vector<1x128xf32>
    %1149 = arith.subf %1143, %1148 : vector<1x128xf32>
    %1150 = vector.broadcast %1105 : vector<1x1xf32> to vector<1x128xf32>
    %1151 = arith.mulf %1149, %1150 : vector<1x128xf32>
    %1152 = arith.addf %1148, %1151 : vector<1x128xf32>
    %1153 = arith.addf %1132, %1152 : vector<1x128xf32>
    %1154 = arith.subf %1125, %7 : vector<1x128xf32>
    %cst_161 = arith.constant 0.000000e+00 : f32
    %1155 = vector.broadcast %cst_161 : f32 to vector<1x128xf32>
    %1156 = arith.maximumf %1154, %1155 : vector<1x128xf32>
    %1157 = arith.subf %1131, %7 : vector<1x128xf32>
    %cst_162 = arith.constant 0.000000e+00 : f32
    %1158 = vector.broadcast %cst_162 : f32 to vector<1x128xf32>
    %1159 = arith.maximumf %1157, %1158 : vector<1x128xf32>
    %1160 = vector.broadcast %1090 : vector<1x1xf32> to vector<1x128xf32>
    %1161 = arith.subf %1160, %7 : vector<1x128xf32>
    %cst_163 = arith.constant 0.000000e+00 : f32
    %1162 = vector.broadcast %cst_163 : f32 to vector<1x128xf32>
    %1163 = arith.maximumf %1161, %1162 : vector<1x128xf32>
    %1164 = arith.mulf %1163, %1119 : vector<1x128xf32>
    %1165 = arith.mulf %1159, %1159 : vector<1x128xf32>
    %1166 = arith.mulf %1156, %1156 : vector<1x128xf32>
    %1167 = arith.subf %1165, %1166 : vector<1x128xf32>
    %1168 = vector.broadcast %1112 : vector<1x1xf32> to vector<1x128xf32>
    %1169 = arith.mulf %1167, %1168 : vector<1x128xf32>
    %1170 = arith.subf %1164, %1169 : vector<1x128xf32>
    %1171 = vector.broadcast %1105 : vector<1x1xf32> to vector<1x128xf32>
    %1172 = arith.mulf %1170, %1171 : vector<1x128xf32>
    %1173 = arith.addf %1169, %1172 : vector<1x128xf32>
    %1174 = arith.subf %1153, %1173 : vector<1x128xf32>
    %1175 = arith.subf %1088, %1174 : vector<1x128xf32>
    %1176 = vector.extract_strided_slice %871 {offsets = [0, 18], sizes = [1, 1], strides = [1, 1]} : vector<1x20xf32> to vector<1x1xf32>
    %1177 = vector.extract_strided_slice %871 {offsets = [0, 19], sizes = [1, 1], strides = [1, 1]} : vector<1x20xf32> to vector<1x1xf32>
    %1178 = vector.extract_strided_slice %871 {offsets = [0, 12], sizes = [1, 1], strides = [1, 1]} : vector<1x20xf32> to vector<1x1xf32>
    %1179 = vector.extract_strided_slice %871 {offsets = [0, 13], sizes = [1, 1], strides = [1, 1]} : vector<1x20xf32> to vector<1x1xf32>
    %1180 = arith.subf %1178, %1176 : vector<1x1xf32>
    %1181 = math.absf %1180 : vector<1x1xf32>
    %cst_164 = arith.constant 9.99999971E-10 : f32
    %1182 = vector.broadcast %cst_164 : f32 to vector<1x1xf32>
    %1183 = arith.cmpf olt, %1181, %1182 : vector<1x1xf32>
    %cst_165 = arith.constant 1.000000e+00 : f32
    %1184 = vector.broadcast %cst_165 : f32 to vector<1x1xf32>
    %1185 = arith.select %1183, %1184, %1180 : vector<1x1xi1>, vector<1x1xf32>
    %1186 = arith.subf %1179, %1177 : vector<1x1xf32>
    %1187 = arith.divf %1186, %1185 : vector<1x1xf32>
    %1188 = math.absf %1187 : vector<1x1xf32>
    %cst_166 = arith.constant 9.99999971E-10 : f32
    %1189 = vector.broadcast %cst_166 : f32 to vector<1x1xf32>
    %1190 = arith.cmpf olt, %1188, %1189 : vector<1x1xf32>
    %1191 = arith.extui %1190 : vector<1x1xi1> to vector<1x1xi32>
    %1192 = arith.sitofp %1191 : vector<1x1xi32> to vector<1x1xf32>
    %1193 = math.absf %1187 : vector<1x1xf32>
    %cst_167 = arith.constant 9.99999971E-10 : f32
    %1194 = vector.broadcast %cst_167 : f32 to vector<1x1xf32>
    %1195 = arith.cmpf olt, %1193, %1194 : vector<1x1xf32>
    %cst_168 = arith.constant 1.000000e+00 : f32
    %1196 = vector.broadcast %cst_168 : f32 to vector<1x1xf32>
    %1197 = arith.select %1195, %1196, %1187 : vector<1x1xi1>, vector<1x1xf32>
    %cst_169 = arith.constant 5.000000e-01 : f32
    %1198 = vector.broadcast %cst_169 : f32 to vector<1x1xf32>
    %1199 = arith.divf %1198, %1197 : vector<1x1xf32>
    %1200 = vector.broadcast %1176 : vector<1x1xf32> to vector<1x128xf32>
    %1201 = arith.maximumf %1200, %4 : vector<1x128xf32>
    %1202 = arith.minimumf %1201, %6 : vector<1x128xf32>
    %1203 = vector.broadcast %1178 : vector<1x1xf32> to vector<1x128xf32>
    %1204 = arith.maximumf %1203, %4 : vector<1x128xf32>
    %1205 = arith.minimumf %1204, %6 : vector<1x128xf32>
    %1206 = arith.subf %1205, %1202 : vector<1x128xf32>
    %1207 = vector.broadcast %1176 : vector<1x1xf32> to vector<1x128xf32>
    %1208 = arith.subf %1202, %1207 : vector<1x128xf32>
    %1209 = vector.broadcast %1187 : vector<1x1xf32> to vector<1x128xf32>
    %1210 = arith.mulf %1209, %1208 : vector<1x128xf32>
    %1211 = vector.broadcast %1177 : vector<1x1xf32> to vector<1x128xf32>
    %1212 = arith.addf %1211, %1210 : vector<1x128xf32>
    %1213 = vector.broadcast %1176 : vector<1x1xf32> to vector<1x128xf32>
    %1214 = arith.subf %1205, %1213 : vector<1x128xf32>
    %1215 = vector.broadcast %1187 : vector<1x1xf32> to vector<1x128xf32>
    %1216 = arith.mulf %1215, %1214 : vector<1x128xf32>
    %1217 = vector.broadcast %1177 : vector<1x1xf32> to vector<1x128xf32>
    %1218 = arith.addf %1217, %1216 : vector<1x128xf32>
    %1219 = arith.mulf %5, %1206 : vector<1x128xf32>
    %1220 = arith.subf %1212, %5 : vector<1x128xf32>
    %cst_170 = arith.constant 0.000000e+00 : f32
    %1221 = vector.broadcast %cst_170 : f32 to vector<1x128xf32>
    %1222 = arith.maximumf %1220, %1221 : vector<1x128xf32>
    %1223 = arith.subf %1218, %5 : vector<1x128xf32>
    %cst_171 = arith.constant 0.000000e+00 : f32
    %1224 = vector.broadcast %cst_171 : f32 to vector<1x128xf32>
    %1225 = arith.maximumf %1223, %1224 : vector<1x128xf32>
    %1226 = vector.broadcast %1177 : vector<1x1xf32> to vector<1x128xf32>
    %1227 = arith.subf %1226, %5 : vector<1x128xf32>
    %cst_172 = arith.constant 0.000000e+00 : f32
    %1228 = vector.broadcast %cst_172 : f32 to vector<1x128xf32>
    %1229 = arith.maximumf %1227, %1228 : vector<1x128xf32>
    %1230 = arith.mulf %1229, %1206 : vector<1x128xf32>
    %1231 = arith.mulf %1225, %1225 : vector<1x128xf32>
    %1232 = arith.mulf %1222, %1222 : vector<1x128xf32>
    %1233 = arith.subf %1231, %1232 : vector<1x128xf32>
    %1234 = vector.broadcast %1199 : vector<1x1xf32> to vector<1x128xf32>
    %1235 = arith.mulf %1233, %1234 : vector<1x128xf32>
    %1236 = arith.subf %1230, %1235 : vector<1x128xf32>
    %1237 = vector.broadcast %1192 : vector<1x1xf32> to vector<1x128xf32>
    %1238 = arith.mulf %1236, %1237 : vector<1x128xf32>
    %1239 = arith.addf %1235, %1238 : vector<1x128xf32>
    %1240 = arith.addf %1219, %1239 : vector<1x128xf32>
    %1241 = arith.subf %1212, %7 : vector<1x128xf32>
    %cst_173 = arith.constant 0.000000e+00 : f32
    %1242 = vector.broadcast %cst_173 : f32 to vector<1x128xf32>
    %1243 = arith.maximumf %1241, %1242 : vector<1x128xf32>
    %1244 = arith.subf %1218, %7 : vector<1x128xf32>
    %cst_174 = arith.constant 0.000000e+00 : f32
    %1245 = vector.broadcast %cst_174 : f32 to vector<1x128xf32>
    %1246 = arith.maximumf %1244, %1245 : vector<1x128xf32>
    %1247 = vector.broadcast %1177 : vector<1x1xf32> to vector<1x128xf32>
    %1248 = arith.subf %1247, %7 : vector<1x128xf32>
    %cst_175 = arith.constant 0.000000e+00 : f32
    %1249 = vector.broadcast %cst_175 : f32 to vector<1x128xf32>
    %1250 = arith.maximumf %1248, %1249 : vector<1x128xf32>
    %1251 = arith.mulf %1250, %1206 : vector<1x128xf32>
    %1252 = arith.mulf %1246, %1246 : vector<1x128xf32>
    %1253 = arith.mulf %1243, %1243 : vector<1x128xf32>
    %1254 = arith.subf %1252, %1253 : vector<1x128xf32>
    %1255 = vector.broadcast %1199 : vector<1x1xf32> to vector<1x128xf32>
    %1256 = arith.mulf %1254, %1255 : vector<1x128xf32>
    %1257 = arith.subf %1251, %1256 : vector<1x128xf32>
    %1258 = vector.broadcast %1192 : vector<1x1xf32> to vector<1x128xf32>
    %1259 = arith.mulf %1257, %1258 : vector<1x128xf32>
    %1260 = arith.addf %1256, %1259 : vector<1x128xf32>
    %1261 = arith.subf %1240, %1260 : vector<1x128xf32>
    %1262 = arith.subf %1175, %1261 : vector<1x128xf32>
    %1263 = math.absf %1262 : vector<1x128xf32>
    %1264 = vector.broadcast %883 : vector<1x1xf32> to vector<1x128xf32>
    %1265 = arith.addf %1264, %20 : vector<1x128xf32>
    %1266 = arith.subf %1265, %1263 : vector<1x128xf32>
    %cst_176 = arith.constant 9.99999993E-9 : f32
    %1267 = vector.broadcast %cst_176 : f32 to vector<1x128xf32>
    %1268 = arith.maximumf %1266, %1267 : vector<1x128xf32>
    %1269 = arith.divf %1263, %1268 : vector<1x128xf32>
    %1270 = arith.cmpf ogt, %913, %851 : vector<1x128xf32>
    %1271 = arith.select %1270, %913, %851 : vector<1x128xi1>, vector<1x128xf32>
    %1272 = arith.select %1270, %1269, %852 : vector<1x128xi1>, vector<1x128xf32>
    %1273 = vector.shape_cast %872 : vector<1x1xf32> to vector<1x1xf32>
    %1274 = vector.broadcast %1273 : vector<1x1xf32> to vector<1x128xf32>
    %1275 = arith.select %1270, %1274, %855 : vector<1x128xi1>, vector<1x128xf32>
    %1276 = vector.shape_cast %873 : vector<1x1xf32> to vector<1x1xf32>
    %1277 = vector.broadcast %1276 : vector<1x1xf32> to vector<1x128xf32>
    %1278 = arith.select %1270, %1277, %858 : vector<1x128xi1>, vector<1x128xf32>
    %1279 = vector.shape_cast %874 : vector<1x1xf32> to vector<1x1xf32>
    %1280 = vector.broadcast %1279 : vector<1x1xf32> to vector<1x128xf32>
    %1281 = arith.select %1270, %1280, %861 : vector<1x128xi1>, vector<1x128xf32>
    %1282 = vector.shape_cast %875 : vector<1x1xf32> to vector<1x1xf32>
    %1283 = vector.broadcast %1282 : vector<1x1xf32> to vector<1x128xf32>
    %1284 = arith.select %1270, %1283, %864 : vector<1x128xi1>, vector<1x128xf32>
    %1285 = vector.shape_cast %876 : vector<1x1xf32> to vector<1x1xf32>
    %1286 = vector.broadcast %1285 : vector<1x1xf32> to vector<1x128xf32>
    %1287 = arith.select %1270, %1286, %867 : vector<1x128xi1>, vector<1x128xf32>
    %1288 = vector.shape_cast %877 : vector<1x1xf32> to vector<1x1xf32>
    %1289 = vector.broadcast %1288 : vector<1x1xf32> to vector<1x128xf32>
    %1290 = arith.select %1270, %1289, %870 : vector<1x128xi1>, vector<1x128xf32>
    %1291 = vector.extract_strided_slice %22 {offsets = [3, 0], sizes = [1, 20], strides = [1, 1]} : vector<8x20xf32> to vector<1x20xf32>
    %1292 = vector.extract_strided_slice %1291 {offsets = [0, 0], sizes = [1, 1], strides = [1, 1]} : vector<1x20xf32> to vector<1x1xf32>
    %1293 = vector.extract_strided_slice %1291 {offsets = [0, 1], sizes = [1, 1], strides = [1, 1]} : vector<1x20xf32> to vector<1x1xf32>
    %1294 = vector.extract_strided_slice %1291 {offsets = [0, 2], sizes = [1, 1], strides = [1, 1]} : vector<1x20xf32> to vector<1x1xf32>
    %1295 = vector.extract_strided_slice %1291 {offsets = [0, 3], sizes = [1, 1], strides = [1, 1]} : vector<1x20xf32> to vector<1x1xf32>
    %1296 = vector.extract_strided_slice %1291 {offsets = [0, 4], sizes = [1, 1], strides = [1, 1]} : vector<1x20xf32> to vector<1x1xf32>
    %1297 = vector.extract_strided_slice %1291 {offsets = [0, 5], sizes = [1, 1], strides = [1, 1]} : vector<1x20xf32> to vector<1x1xf32>
    %1298 = vector.extract_strided_slice %1291 {offsets = [0, 6], sizes = [1, 1], strides = [1, 1]} : vector<1x20xf32> to vector<1x1xf32>
    %1299 = vector.extract_strided_slice %1291 {offsets = [0, 7], sizes = [1, 1], strides = [1, 1]} : vector<1x20xf32> to vector<1x1xf32>
    %1300 = vector.extract_strided_slice %1291 {offsets = [0, 8], sizes = [1, 1], strides = [1, 1]} : vector<1x20xf32> to vector<1x1xf32>
    %1301 = vector.extract_strided_slice %1291 {offsets = [0, 9], sizes = [1, 1], strides = [1, 1]} : vector<1x20xf32> to vector<1x1xf32>
    %1302 = vector.extract_strided_slice %1291 {offsets = [0, 10], sizes = [1, 1], strides = [1, 1]} : vector<1x20xf32> to vector<1x1xf32>
    %1303 = vector.extract_strided_slice %1291 {offsets = [0, 11], sizes = [1, 1], strides = [1, 1]} : vector<1x20xf32> to vector<1x1xf32>
    %1304 = vector.broadcast %1301 : vector<1x1xf32> to vector<1x128xf32>
    %1305 = arith.minimumf %6, %1304 : vector<1x128xf32>
    %1306 = vector.broadcast %1299 : vector<1x1xf32> to vector<1x128xf32>
    %1307 = arith.maximumf %4, %1306 : vector<1x128xf32>
    %1308 = arith.subf %1305, %1307 : vector<1x128xf32>
    %cst_177 = arith.constant 0.000000e+00 : f32
    %1309 = vector.broadcast %cst_177 : f32 to vector<1x128xf32>
    %1310 = arith.maximumf %1308, %1309 : vector<1x128xf32>
    %1311 = vector.broadcast %1302 : vector<1x1xf32> to vector<1x128xf32>
    %1312 = arith.minimumf %7, %1311 : vector<1x128xf32>
    %1313 = vector.broadcast %1300 : vector<1x1xf32> to vector<1x128xf32>
    %1314 = arith.maximumf %5, %1313 : vector<1x128xf32>
    %1315 = arith.subf %1312, %1314 : vector<1x128xf32>
    %cst_178 = arith.constant 0.000000e+00 : f32
    %1316 = vector.broadcast %cst_178 : f32 to vector<1x128xf32>
    %1317 = arith.maximumf %1315, %1316 : vector<1x128xf32>
    %1318 = arith.mulf %1310, %1317 : vector<1x128xf32>
    %1319 = arith.subf %1301, %1299 : vector<1x1xf32>
    %1320 = arith.subf %1302, %1300 : vector<1x1xf32>
    %1321 = arith.mulf %1319, %1320 : vector<1x1xf32>
    %1322 = vector.broadcast %1321 : vector<1x1xf32> to vector<1x128xf32>
    %1323 = arith.addf %20, %1322 : vector<1x128xf32>
    %1324 = arith.subf %1323, %1318 : vector<1x128xf32>
    %cst_179 = arith.constant 9.99999993E-9 : f32
    %1325 = vector.broadcast %cst_179 : f32 to vector<1x128xf32>
    %1326 = arith.maximumf %1324, %1325 : vector<1x128xf32>
    %1327 = arith.divf %1318, %1326 : vector<1x128xf32>
    %1328 = vector.broadcast %1298 : vector<1x1xf32> to vector<1x128xf32>
    %1329 = arith.mulf %1327, %1328 : vector<1x128xf32>
    %cst_180 = arith.constant 1.000000e+00 : f32
    %1330 = vector.broadcast %cst_180 : f32 to vector<1x1xf32>
    %1331 = arith.subf %1330, %1298 : vector<1x1xf32>
    %1332 = vector.broadcast %1331 : vector<1x1xf32> to vector<1x128xf32>
    %1333 = arith.subf %1329, %1332 : vector<1x128xf32>
    %cst_181 = arith.constant 0.000000e+00 : f32
    %1334 = vector.broadcast %cst_181 : f32 to vector<1x128xf32>
    %1335 = vector.extract_strided_slice %1291 {offsets = [0, 12], sizes = [1, 1], strides = [1, 1]} : vector<1x20xf32> to vector<1x1xf32>
    %1336 = vector.extract_strided_slice %1291 {offsets = [0, 13], sizes = [1, 1], strides = [1, 1]} : vector<1x20xf32> to vector<1x1xf32>
    %1337 = vector.extract_strided_slice %1291 {offsets = [0, 14], sizes = [1, 1], strides = [1, 1]} : vector<1x20xf32> to vector<1x1xf32>
    %1338 = vector.extract_strided_slice %1291 {offsets = [0, 15], sizes = [1, 1], strides = [1, 1]} : vector<1x20xf32> to vector<1x1xf32>
    %1339 = arith.subf %1337, %1335 : vector<1x1xf32>
    %1340 = math.absf %1339 : vector<1x1xf32>
    %cst_182 = arith.constant 9.99999971E-10 : f32
    %1341 = vector.broadcast %cst_182 : f32 to vector<1x1xf32>
    %1342 = arith.cmpf olt, %1340, %1341 : vector<1x1xf32>
    %cst_183 = arith.constant 1.000000e+00 : f32
    %1343 = vector.broadcast %cst_183 : f32 to vector<1x1xf32>
    %1344 = arith.select %1342, %1343, %1339 : vector<1x1xi1>, vector<1x1xf32>
    %1345 = arith.subf %1338, %1336 : vector<1x1xf32>
    %1346 = arith.divf %1345, %1344 : vector<1x1xf32>
    %1347 = math.absf %1346 : vector<1x1xf32>
    %cst_184 = arith.constant 9.99999971E-10 : f32
    %1348 = vector.broadcast %cst_184 : f32 to vector<1x1xf32>
    %1349 = arith.cmpf olt, %1347, %1348 : vector<1x1xf32>
    %1350 = arith.extui %1349 : vector<1x1xi1> to vector<1x1xi32>
    %1351 = arith.sitofp %1350 : vector<1x1xi32> to vector<1x1xf32>
    %1352 = math.absf %1346 : vector<1x1xf32>
    %cst_185 = arith.constant 9.99999971E-10 : f32
    %1353 = vector.broadcast %cst_185 : f32 to vector<1x1xf32>
    %1354 = arith.cmpf olt, %1352, %1353 : vector<1x1xf32>
    %cst_186 = arith.constant 1.000000e+00 : f32
    %1355 = vector.broadcast %cst_186 : f32 to vector<1x1xf32>
    %1356 = arith.select %1354, %1355, %1346 : vector<1x1xi1>, vector<1x1xf32>
    %cst_187 = arith.constant 5.000000e-01 : f32
    %1357 = vector.broadcast %cst_187 : f32 to vector<1x1xf32>
    %1358 = arith.divf %1357, %1356 : vector<1x1xf32>
    %1359 = vector.broadcast %1335 : vector<1x1xf32> to vector<1x128xf32>
    %1360 = arith.maximumf %1359, %4 : vector<1x128xf32>
    %1361 = arith.minimumf %1360, %6 : vector<1x128xf32>
    %1362 = vector.broadcast %1337 : vector<1x1xf32> to vector<1x128xf32>
    %1363 = arith.maximumf %1362, %4 : vector<1x128xf32>
    %1364 = arith.minimumf %1363, %6 : vector<1x128xf32>
    %1365 = arith.subf %1364, %1361 : vector<1x128xf32>
    %1366 = vector.broadcast %1335 : vector<1x1xf32> to vector<1x128xf32>
    %1367 = arith.subf %1361, %1366 : vector<1x128xf32>
    %1368 = vector.broadcast %1346 : vector<1x1xf32> to vector<1x128xf32>
    %1369 = arith.mulf %1368, %1367 : vector<1x128xf32>
    %1370 = vector.broadcast %1336 : vector<1x1xf32> to vector<1x128xf32>
    %1371 = arith.addf %1370, %1369 : vector<1x128xf32>
    %1372 = vector.broadcast %1335 : vector<1x1xf32> to vector<1x128xf32>
    %1373 = arith.subf %1364, %1372 : vector<1x128xf32>
    %1374 = vector.broadcast %1346 : vector<1x1xf32> to vector<1x128xf32>
    %1375 = arith.mulf %1374, %1373 : vector<1x128xf32>
    %1376 = vector.broadcast %1336 : vector<1x1xf32> to vector<1x128xf32>
    %1377 = arith.addf %1376, %1375 : vector<1x128xf32>
    %1378 = arith.mulf %5, %1365 : vector<1x128xf32>
    %1379 = arith.subf %1371, %5 : vector<1x128xf32>
    %cst_188 = arith.constant 0.000000e+00 : f32
    %1380 = vector.broadcast %cst_188 : f32 to vector<1x128xf32>
    %1381 = arith.maximumf %1379, %1380 : vector<1x128xf32>
    %1382 = arith.subf %1377, %5 : vector<1x128xf32>
    %cst_189 = arith.constant 0.000000e+00 : f32
    %1383 = vector.broadcast %cst_189 : f32 to vector<1x128xf32>
    %1384 = arith.maximumf %1382, %1383 : vector<1x128xf32>
    %1385 = vector.broadcast %1336 : vector<1x1xf32> to vector<1x128xf32>
    %1386 = arith.subf %1385, %5 : vector<1x128xf32>
    %cst_190 = arith.constant 0.000000e+00 : f32
    %1387 = vector.broadcast %cst_190 : f32 to vector<1x128xf32>
    %1388 = arith.maximumf %1386, %1387 : vector<1x128xf32>
    %1389 = arith.mulf %1388, %1365 : vector<1x128xf32>
    %1390 = arith.mulf %1384, %1384 : vector<1x128xf32>
    %1391 = arith.mulf %1381, %1381 : vector<1x128xf32>
    %1392 = arith.subf %1390, %1391 : vector<1x128xf32>
    %1393 = vector.broadcast %1358 : vector<1x1xf32> to vector<1x128xf32>
    %1394 = arith.mulf %1392, %1393 : vector<1x128xf32>
    %1395 = arith.subf %1389, %1394 : vector<1x128xf32>
    %1396 = vector.broadcast %1351 : vector<1x1xf32> to vector<1x128xf32>
    %1397 = arith.mulf %1395, %1396 : vector<1x128xf32>
    %1398 = arith.addf %1394, %1397 : vector<1x128xf32>
    %1399 = arith.addf %1378, %1398 : vector<1x128xf32>
    %1400 = arith.subf %1371, %7 : vector<1x128xf32>
    %cst_191 = arith.constant 0.000000e+00 : f32
    %1401 = vector.broadcast %cst_191 : f32 to vector<1x128xf32>
    %1402 = arith.maximumf %1400, %1401 : vector<1x128xf32>
    %1403 = arith.subf %1377, %7 : vector<1x128xf32>
    %cst_192 = arith.constant 0.000000e+00 : f32
    %1404 = vector.broadcast %cst_192 : f32 to vector<1x128xf32>
    %1405 = arith.maximumf %1403, %1404 : vector<1x128xf32>
    %1406 = vector.broadcast %1336 : vector<1x1xf32> to vector<1x128xf32>
    %1407 = arith.subf %1406, %7 : vector<1x128xf32>
    %cst_193 = arith.constant 0.000000e+00 : f32
    %1408 = vector.broadcast %cst_193 : f32 to vector<1x128xf32>
    %1409 = arith.maximumf %1407, %1408 : vector<1x128xf32>
    %1410 = arith.mulf %1409, %1365 : vector<1x128xf32>
    %1411 = arith.mulf %1405, %1405 : vector<1x128xf32>
    %1412 = arith.mulf %1402, %1402 : vector<1x128xf32>
    %1413 = arith.subf %1411, %1412 : vector<1x128xf32>
    %1414 = vector.broadcast %1358 : vector<1x1xf32> to vector<1x128xf32>
    %1415 = arith.mulf %1413, %1414 : vector<1x128xf32>
    %1416 = arith.subf %1410, %1415 : vector<1x128xf32>
    %1417 = vector.broadcast %1351 : vector<1x1xf32> to vector<1x128xf32>
    %1418 = arith.mulf %1416, %1417 : vector<1x128xf32>
    %1419 = arith.addf %1415, %1418 : vector<1x128xf32>
    %1420 = arith.subf %1399, %1419 : vector<1x128xf32>
    %1421 = arith.subf %1334, %1420 : vector<1x128xf32>
    %1422 = vector.extract_strided_slice %1291 {offsets = [0, 14], sizes = [1, 1], strides = [1, 1]} : vector<1x20xf32> to vector<1x1xf32>
    %1423 = vector.extract_strided_slice %1291 {offsets = [0, 15], sizes = [1, 1], strides = [1, 1]} : vector<1x20xf32> to vector<1x1xf32>
    %1424 = vector.extract_strided_slice %1291 {offsets = [0, 16], sizes = [1, 1], strides = [1, 1]} : vector<1x20xf32> to vector<1x1xf32>
    %1425 = vector.extract_strided_slice %1291 {offsets = [0, 17], sizes = [1, 1], strides = [1, 1]} : vector<1x20xf32> to vector<1x1xf32>
    %1426 = arith.subf %1424, %1422 : vector<1x1xf32>
    %1427 = math.absf %1426 : vector<1x1xf32>
    %cst_194 = arith.constant 9.99999971E-10 : f32
    %1428 = vector.broadcast %cst_194 : f32 to vector<1x1xf32>
    %1429 = arith.cmpf olt, %1427, %1428 : vector<1x1xf32>
    %cst_195 = arith.constant 1.000000e+00 : f32
    %1430 = vector.broadcast %cst_195 : f32 to vector<1x1xf32>
    %1431 = arith.select %1429, %1430, %1426 : vector<1x1xi1>, vector<1x1xf32>
    %1432 = arith.subf %1425, %1423 : vector<1x1xf32>
    %1433 = arith.divf %1432, %1431 : vector<1x1xf32>
    %1434 = math.absf %1433 : vector<1x1xf32>
    %cst_196 = arith.constant 9.99999971E-10 : f32
    %1435 = vector.broadcast %cst_196 : f32 to vector<1x1xf32>
    %1436 = arith.cmpf olt, %1434, %1435 : vector<1x1xf32>
    %1437 = arith.extui %1436 : vector<1x1xi1> to vector<1x1xi32>
    %1438 = arith.sitofp %1437 : vector<1x1xi32> to vector<1x1xf32>
    %1439 = math.absf %1433 : vector<1x1xf32>
    %cst_197 = arith.constant 9.99999971E-10 : f32
    %1440 = vector.broadcast %cst_197 : f32 to vector<1x1xf32>
    %1441 = arith.cmpf olt, %1439, %1440 : vector<1x1xf32>
    %cst_198 = arith.constant 1.000000e+00 : f32
    %1442 = vector.broadcast %cst_198 : f32 to vector<1x1xf32>
    %1443 = arith.select %1441, %1442, %1433 : vector<1x1xi1>, vector<1x1xf32>
    %cst_199 = arith.constant 5.000000e-01 : f32
    %1444 = vector.broadcast %cst_199 : f32 to vector<1x1xf32>
    %1445 = arith.divf %1444, %1443 : vector<1x1xf32>
    %1446 = vector.broadcast %1422 : vector<1x1xf32> to vector<1x128xf32>
    %1447 = arith.maximumf %1446, %4 : vector<1x128xf32>
    %1448 = arith.minimumf %1447, %6 : vector<1x128xf32>
    %1449 = vector.broadcast %1424 : vector<1x1xf32> to vector<1x128xf32>
    %1450 = arith.maximumf %1449, %4 : vector<1x128xf32>
    %1451 = arith.minimumf %1450, %6 : vector<1x128xf32>
    %1452 = arith.subf %1451, %1448 : vector<1x128xf32>
    %1453 = vector.broadcast %1422 : vector<1x1xf32> to vector<1x128xf32>
    %1454 = arith.subf %1448, %1453 : vector<1x128xf32>
    %1455 = vector.broadcast %1433 : vector<1x1xf32> to vector<1x128xf32>
    %1456 = arith.mulf %1455, %1454 : vector<1x128xf32>
    %1457 = vector.broadcast %1423 : vector<1x1xf32> to vector<1x128xf32>
    %1458 = arith.addf %1457, %1456 : vector<1x128xf32>
    %1459 = vector.broadcast %1422 : vector<1x1xf32> to vector<1x128xf32>
    %1460 = arith.subf %1451, %1459 : vector<1x128xf32>
    %1461 = vector.broadcast %1433 : vector<1x1xf32> to vector<1x128xf32>
    %1462 = arith.mulf %1461, %1460 : vector<1x128xf32>
    %1463 = vector.broadcast %1423 : vector<1x1xf32> to vector<1x128xf32>
    %1464 = arith.addf %1463, %1462 : vector<1x128xf32>
    %1465 = arith.mulf %5, %1452 : vector<1x128xf32>
    %1466 = arith.subf %1458, %5 : vector<1x128xf32>
    %cst_200 = arith.constant 0.000000e+00 : f32
    %1467 = vector.broadcast %cst_200 : f32 to vector<1x128xf32>
    %1468 = arith.maximumf %1466, %1467 : vector<1x128xf32>
    %1469 = arith.subf %1464, %5 : vector<1x128xf32>
    %cst_201 = arith.constant 0.000000e+00 : f32
    %1470 = vector.broadcast %cst_201 : f32 to vector<1x128xf32>
    %1471 = arith.maximumf %1469, %1470 : vector<1x128xf32>
    %1472 = vector.broadcast %1423 : vector<1x1xf32> to vector<1x128xf32>
    %1473 = arith.subf %1472, %5 : vector<1x128xf32>
    %cst_202 = arith.constant 0.000000e+00 : f32
    %1474 = vector.broadcast %cst_202 : f32 to vector<1x128xf32>
    %1475 = arith.maximumf %1473, %1474 : vector<1x128xf32>
    %1476 = arith.mulf %1475, %1452 : vector<1x128xf32>
    %1477 = arith.mulf %1471, %1471 : vector<1x128xf32>
    %1478 = arith.mulf %1468, %1468 : vector<1x128xf32>
    %1479 = arith.subf %1477, %1478 : vector<1x128xf32>
    %1480 = vector.broadcast %1445 : vector<1x1xf32> to vector<1x128xf32>
    %1481 = arith.mulf %1479, %1480 : vector<1x128xf32>
    %1482 = arith.subf %1476, %1481 : vector<1x128xf32>
    %1483 = vector.broadcast %1438 : vector<1x1xf32> to vector<1x128xf32>
    %1484 = arith.mulf %1482, %1483 : vector<1x128xf32>
    %1485 = arith.addf %1481, %1484 : vector<1x128xf32>
    %1486 = arith.addf %1465, %1485 : vector<1x128xf32>
    %1487 = arith.subf %1458, %7 : vector<1x128xf32>
    %cst_203 = arith.constant 0.000000e+00 : f32
    %1488 = vector.broadcast %cst_203 : f32 to vector<1x128xf32>
    %1489 = arith.maximumf %1487, %1488 : vector<1x128xf32>
    %1490 = arith.subf %1464, %7 : vector<1x128xf32>
    %cst_204 = arith.constant 0.000000e+00 : f32
    %1491 = vector.broadcast %cst_204 : f32 to vector<1x128xf32>
    %1492 = arith.maximumf %1490, %1491 : vector<1x128xf32>
    %1493 = vector.broadcast %1423 : vector<1x1xf32> to vector<1x128xf32>
    %1494 = arith.subf %1493, %7 : vector<1x128xf32>
    %cst_205 = arith.constant 0.000000e+00 : f32
    %1495 = vector.broadcast %cst_205 : f32 to vector<1x128xf32>
    %1496 = arith.maximumf %1494, %1495 : vector<1x128xf32>
    %1497 = arith.mulf %1496, %1452 : vector<1x128xf32>
    %1498 = arith.mulf %1492, %1492 : vector<1x128xf32>
    %1499 = arith.mulf %1489, %1489 : vector<1x128xf32>
    %1500 = arith.subf %1498, %1499 : vector<1x128xf32>
    %1501 = vector.broadcast %1445 : vector<1x1xf32> to vector<1x128xf32>
    %1502 = arith.mulf %1500, %1501 : vector<1x128xf32>
    %1503 = arith.subf %1497, %1502 : vector<1x128xf32>
    %1504 = vector.broadcast %1438 : vector<1x1xf32> to vector<1x128xf32>
    %1505 = arith.mulf %1503, %1504 : vector<1x128xf32>
    %1506 = arith.addf %1502, %1505 : vector<1x128xf32>
    %1507 = arith.subf %1486, %1506 : vector<1x128xf32>
    %1508 = arith.subf %1421, %1507 : vector<1x128xf32>
    %1509 = vector.extract_strided_slice %1291 {offsets = [0, 16], sizes = [1, 1], strides = [1, 1]} : vector<1x20xf32> to vector<1x1xf32>
    %1510 = vector.extract_strided_slice %1291 {offsets = [0, 17], sizes = [1, 1], strides = [1, 1]} : vector<1x20xf32> to vector<1x1xf32>
    %1511 = vector.extract_strided_slice %1291 {offsets = [0, 18], sizes = [1, 1], strides = [1, 1]} : vector<1x20xf32> to vector<1x1xf32>
    %1512 = vector.extract_strided_slice %1291 {offsets = [0, 19], sizes = [1, 1], strides = [1, 1]} : vector<1x20xf32> to vector<1x1xf32>
    %1513 = arith.subf %1511, %1509 : vector<1x1xf32>
    %1514 = math.absf %1513 : vector<1x1xf32>
    %cst_206 = arith.constant 9.99999971E-10 : f32
    %1515 = vector.broadcast %cst_206 : f32 to vector<1x1xf32>
    %1516 = arith.cmpf olt, %1514, %1515 : vector<1x1xf32>
    %cst_207 = arith.constant 1.000000e+00 : f32
    %1517 = vector.broadcast %cst_207 : f32 to vector<1x1xf32>
    %1518 = arith.select %1516, %1517, %1513 : vector<1x1xi1>, vector<1x1xf32>
    %1519 = arith.subf %1512, %1510 : vector<1x1xf32>
    %1520 = arith.divf %1519, %1518 : vector<1x1xf32>
    %1521 = math.absf %1520 : vector<1x1xf32>
    %cst_208 = arith.constant 9.99999971E-10 : f32
    %1522 = vector.broadcast %cst_208 : f32 to vector<1x1xf32>
    %1523 = arith.cmpf olt, %1521, %1522 : vector<1x1xf32>
    %1524 = arith.extui %1523 : vector<1x1xi1> to vector<1x1xi32>
    %1525 = arith.sitofp %1524 : vector<1x1xi32> to vector<1x1xf32>
    %1526 = math.absf %1520 : vector<1x1xf32>
    %cst_209 = arith.constant 9.99999971E-10 : f32
    %1527 = vector.broadcast %cst_209 : f32 to vector<1x1xf32>
    %1528 = arith.cmpf olt, %1526, %1527 : vector<1x1xf32>
    %cst_210 = arith.constant 1.000000e+00 : f32
    %1529 = vector.broadcast %cst_210 : f32 to vector<1x1xf32>
    %1530 = arith.select %1528, %1529, %1520 : vector<1x1xi1>, vector<1x1xf32>
    %cst_211 = arith.constant 5.000000e-01 : f32
    %1531 = vector.broadcast %cst_211 : f32 to vector<1x1xf32>
    %1532 = arith.divf %1531, %1530 : vector<1x1xf32>
    %1533 = vector.broadcast %1509 : vector<1x1xf32> to vector<1x128xf32>
    %1534 = arith.maximumf %1533, %4 : vector<1x128xf32>
    %1535 = arith.minimumf %1534, %6 : vector<1x128xf32>
    %1536 = vector.broadcast %1511 : vector<1x1xf32> to vector<1x128xf32>
    %1537 = arith.maximumf %1536, %4 : vector<1x128xf32>
    %1538 = arith.minimumf %1537, %6 : vector<1x128xf32>
    %1539 = arith.subf %1538, %1535 : vector<1x128xf32>
    %1540 = vector.broadcast %1509 : vector<1x1xf32> to vector<1x128xf32>
    %1541 = arith.subf %1535, %1540 : vector<1x128xf32>
    %1542 = vector.broadcast %1520 : vector<1x1xf32> to vector<1x128xf32>
    %1543 = arith.mulf %1542, %1541 : vector<1x128xf32>
    %1544 = vector.broadcast %1510 : vector<1x1xf32> to vector<1x128xf32>
    %1545 = arith.addf %1544, %1543 : vector<1x128xf32>
    %1546 = vector.broadcast %1509 : vector<1x1xf32> to vector<1x128xf32>
    %1547 = arith.subf %1538, %1546 : vector<1x128xf32>
    %1548 = vector.broadcast %1520 : vector<1x1xf32> to vector<1x128xf32>
    %1549 = arith.mulf %1548, %1547 : vector<1x128xf32>
    %1550 = vector.broadcast %1510 : vector<1x1xf32> to vector<1x128xf32>
    %1551 = arith.addf %1550, %1549 : vector<1x128xf32>
    %1552 = arith.mulf %5, %1539 : vector<1x128xf32>
    %1553 = arith.subf %1545, %5 : vector<1x128xf32>
    %cst_212 = arith.constant 0.000000e+00 : f32
    %1554 = vector.broadcast %cst_212 : f32 to vector<1x128xf32>
    %1555 = arith.maximumf %1553, %1554 : vector<1x128xf32>
    %1556 = arith.subf %1551, %5 : vector<1x128xf32>
    %cst_213 = arith.constant 0.000000e+00 : f32
    %1557 = vector.broadcast %cst_213 : f32 to vector<1x128xf32>
    %1558 = arith.maximumf %1556, %1557 : vector<1x128xf32>
    %1559 = vector.broadcast %1510 : vector<1x1xf32> to vector<1x128xf32>
    %1560 = arith.subf %1559, %5 : vector<1x128xf32>
    %cst_214 = arith.constant 0.000000e+00 : f32
    %1561 = vector.broadcast %cst_214 : f32 to vector<1x128xf32>
    %1562 = arith.maximumf %1560, %1561 : vector<1x128xf32>
    %1563 = arith.mulf %1562, %1539 : vector<1x128xf32>
    %1564 = arith.mulf %1558, %1558 : vector<1x128xf32>
    %1565 = arith.mulf %1555, %1555 : vector<1x128xf32>
    %1566 = arith.subf %1564, %1565 : vector<1x128xf32>
    %1567 = vector.broadcast %1532 : vector<1x1xf32> to vector<1x128xf32>
    %1568 = arith.mulf %1566, %1567 : vector<1x128xf32>
    %1569 = arith.subf %1563, %1568 : vector<1x128xf32>
    %1570 = vector.broadcast %1525 : vector<1x1xf32> to vector<1x128xf32>
    %1571 = arith.mulf %1569, %1570 : vector<1x128xf32>
    %1572 = arith.addf %1568, %1571 : vector<1x128xf32>
    %1573 = arith.addf %1552, %1572 : vector<1x128xf32>
    %1574 = arith.subf %1545, %7 : vector<1x128xf32>
    %cst_215 = arith.constant 0.000000e+00 : f32
    %1575 = vector.broadcast %cst_215 : f32 to vector<1x128xf32>
    %1576 = arith.maximumf %1574, %1575 : vector<1x128xf32>
    %1577 = arith.subf %1551, %7 : vector<1x128xf32>
    %cst_216 = arith.constant 0.000000e+00 : f32
    %1578 = vector.broadcast %cst_216 : f32 to vector<1x128xf32>
    %1579 = arith.maximumf %1577, %1578 : vector<1x128xf32>
    %1580 = vector.broadcast %1510 : vector<1x1xf32> to vector<1x128xf32>
    %1581 = arith.subf %1580, %7 : vector<1x128xf32>
    %cst_217 = arith.constant 0.000000e+00 : f32
    %1582 = vector.broadcast %cst_217 : f32 to vector<1x128xf32>
    %1583 = arith.maximumf %1581, %1582 : vector<1x128xf32>
    %1584 = arith.mulf %1583, %1539 : vector<1x128xf32>
    %1585 = arith.mulf %1579, %1579 : vector<1x128xf32>
    %1586 = arith.mulf %1576, %1576 : vector<1x128xf32>
    %1587 = arith.subf %1585, %1586 : vector<1x128xf32>
    %1588 = vector.broadcast %1532 : vector<1x1xf32> to vector<1x128xf32>
    %1589 = arith.mulf %1587, %1588 : vector<1x128xf32>
    %1590 = arith.subf %1584, %1589 : vector<1x128xf32>
    %1591 = vector.broadcast %1525 : vector<1x1xf32> to vector<1x128xf32>
    %1592 = arith.mulf %1590, %1591 : vector<1x128xf32>
    %1593 = arith.addf %1589, %1592 : vector<1x128xf32>
    %1594 = arith.subf %1573, %1593 : vector<1x128xf32>
    %1595 = arith.subf %1508, %1594 : vector<1x128xf32>
    %1596 = vector.extract_strided_slice %1291 {offsets = [0, 18], sizes = [1, 1], strides = [1, 1]} : vector<1x20xf32> to vector<1x1xf32>
    %1597 = vector.extract_strided_slice %1291 {offsets = [0, 19], sizes = [1, 1], strides = [1, 1]} : vector<1x20xf32> to vector<1x1xf32>
    %1598 = vector.extract_strided_slice %1291 {offsets = [0, 12], sizes = [1, 1], strides = [1, 1]} : vector<1x20xf32> to vector<1x1xf32>
    %1599 = vector.extract_strided_slice %1291 {offsets = [0, 13], sizes = [1, 1], strides = [1, 1]} : vector<1x20xf32> to vector<1x1xf32>
    %1600 = arith.subf %1598, %1596 : vector<1x1xf32>
    %1601 = math.absf %1600 : vector<1x1xf32>
    %cst_218 = arith.constant 9.99999971E-10 : f32
    %1602 = vector.broadcast %cst_218 : f32 to vector<1x1xf32>
    %1603 = arith.cmpf olt, %1601, %1602 : vector<1x1xf32>
    %cst_219 = arith.constant 1.000000e+00 : f32
    %1604 = vector.broadcast %cst_219 : f32 to vector<1x1xf32>
    %1605 = arith.select %1603, %1604, %1600 : vector<1x1xi1>, vector<1x1xf32>
    %1606 = arith.subf %1599, %1597 : vector<1x1xf32>
    %1607 = arith.divf %1606, %1605 : vector<1x1xf32>
    %1608 = math.absf %1607 : vector<1x1xf32>
    %cst_220 = arith.constant 9.99999971E-10 : f32
    %1609 = vector.broadcast %cst_220 : f32 to vector<1x1xf32>
    %1610 = arith.cmpf olt, %1608, %1609 : vector<1x1xf32>
    %1611 = arith.extui %1610 : vector<1x1xi1> to vector<1x1xi32>
    %1612 = arith.sitofp %1611 : vector<1x1xi32> to vector<1x1xf32>
    %1613 = math.absf %1607 : vector<1x1xf32>
    %cst_221 = arith.constant 9.99999971E-10 : f32
    %1614 = vector.broadcast %cst_221 : f32 to vector<1x1xf32>
    %1615 = arith.cmpf olt, %1613, %1614 : vector<1x1xf32>
    %cst_222 = arith.constant 1.000000e+00 : f32
    %1616 = vector.broadcast %cst_222 : f32 to vector<1x1xf32>
    %1617 = arith.select %1615, %1616, %1607 : vector<1x1xi1>, vector<1x1xf32>
    %cst_223 = arith.constant 5.000000e-01 : f32
    %1618 = vector.broadcast %cst_223 : f32 to vector<1x1xf32>
    %1619 = arith.divf %1618, %1617 : vector<1x1xf32>
    %1620 = vector.broadcast %1596 : vector<1x1xf32> to vector<1x128xf32>
    %1621 = arith.maximumf %1620, %4 : vector<1x128xf32>
    %1622 = arith.minimumf %1621, %6 : vector<1x128xf32>
    %1623 = vector.broadcast %1598 : vector<1x1xf32> to vector<1x128xf32>
    %1624 = arith.maximumf %1623, %4 : vector<1x128xf32>
    %1625 = arith.minimumf %1624, %6 : vector<1x128xf32>
    %1626 = arith.subf %1625, %1622 : vector<1x128xf32>
    %1627 = vector.broadcast %1596 : vector<1x1xf32> to vector<1x128xf32>
    %1628 = arith.subf %1622, %1627 : vector<1x128xf32>
    %1629 = vector.broadcast %1607 : vector<1x1xf32> to vector<1x128xf32>
    %1630 = arith.mulf %1629, %1628 : vector<1x128xf32>
    %1631 = vector.broadcast %1597 : vector<1x1xf32> to vector<1x128xf32>
    %1632 = arith.addf %1631, %1630 : vector<1x128xf32>
    %1633 = vector.broadcast %1596 : vector<1x1xf32> to vector<1x128xf32>
    %1634 = arith.subf %1625, %1633 : vector<1x128xf32>
    %1635 = vector.broadcast %1607 : vector<1x1xf32> to vector<1x128xf32>
    %1636 = arith.mulf %1635, %1634 : vector<1x128xf32>
    %1637 = vector.broadcast %1597 : vector<1x1xf32> to vector<1x128xf32>
    %1638 = arith.addf %1637, %1636 : vector<1x128xf32>
    %1639 = arith.mulf %5, %1626 : vector<1x128xf32>
    %1640 = arith.subf %1632, %5 : vector<1x128xf32>
    %cst_224 = arith.constant 0.000000e+00 : f32
    %1641 = vector.broadcast %cst_224 : f32 to vector<1x128xf32>
    %1642 = arith.maximumf %1640, %1641 : vector<1x128xf32>
    %1643 = arith.subf %1638, %5 : vector<1x128xf32>
    %cst_225 = arith.constant 0.000000e+00 : f32
    %1644 = vector.broadcast %cst_225 : f32 to vector<1x128xf32>
    %1645 = arith.maximumf %1643, %1644 : vector<1x128xf32>
    %1646 = vector.broadcast %1597 : vector<1x1xf32> to vector<1x128xf32>
    %1647 = arith.subf %1646, %5 : vector<1x128xf32>
    %cst_226 = arith.constant 0.000000e+00 : f32
    %1648 = vector.broadcast %cst_226 : f32 to vector<1x128xf32>
    %1649 = arith.maximumf %1647, %1648 : vector<1x128xf32>
    %1650 = arith.mulf %1649, %1626 : vector<1x128xf32>
    %1651 = arith.mulf %1645, %1645 : vector<1x128xf32>
    %1652 = arith.mulf %1642, %1642 : vector<1x128xf32>
    %1653 = arith.subf %1651, %1652 : vector<1x128xf32>
    %1654 = vector.broadcast %1619 : vector<1x1xf32> to vector<1x128xf32>
    %1655 = arith.mulf %1653, %1654 : vector<1x128xf32>
    %1656 = arith.subf %1650, %1655 : vector<1x128xf32>
    %1657 = vector.broadcast %1612 : vector<1x1xf32> to vector<1x128xf32>
    %1658 = arith.mulf %1656, %1657 : vector<1x128xf32>
    %1659 = arith.addf %1655, %1658 : vector<1x128xf32>
    %1660 = arith.addf %1639, %1659 : vector<1x128xf32>
    %1661 = arith.subf %1632, %7 : vector<1x128xf32>
    %cst_227 = arith.constant 0.000000e+00 : f32
    %1662 = vector.broadcast %cst_227 : f32 to vector<1x128xf32>
    %1663 = arith.maximumf %1661, %1662 : vector<1x128xf32>
    %1664 = arith.subf %1638, %7 : vector<1x128xf32>
    %cst_228 = arith.constant 0.000000e+00 : f32
    %1665 = vector.broadcast %cst_228 : f32 to vector<1x128xf32>
    %1666 = arith.maximumf %1664, %1665 : vector<1x128xf32>
    %1667 = vector.broadcast %1597 : vector<1x1xf32> to vector<1x128xf32>
    %1668 = arith.subf %1667, %7 : vector<1x128xf32>
    %cst_229 = arith.constant 0.000000e+00 : f32
    %1669 = vector.broadcast %cst_229 : f32 to vector<1x128xf32>
    %1670 = arith.maximumf %1668, %1669 : vector<1x128xf32>
    %1671 = arith.mulf %1670, %1626 : vector<1x128xf32>
    %1672 = arith.mulf %1666, %1666 : vector<1x128xf32>
    %1673 = arith.mulf %1663, %1663 : vector<1x128xf32>
    %1674 = arith.subf %1672, %1673 : vector<1x128xf32>
    %1675 = vector.broadcast %1619 : vector<1x1xf32> to vector<1x128xf32>
    %1676 = arith.mulf %1674, %1675 : vector<1x128xf32>
    %1677 = arith.subf %1671, %1676 : vector<1x128xf32>
    %1678 = vector.broadcast %1612 : vector<1x1xf32> to vector<1x128xf32>
    %1679 = arith.mulf %1677, %1678 : vector<1x128xf32>
    %1680 = arith.addf %1676, %1679 : vector<1x128xf32>
    %1681 = arith.subf %1660, %1680 : vector<1x128xf32>
    %1682 = arith.subf %1595, %1681 : vector<1x128xf32>
    %1683 = math.absf %1682 : vector<1x128xf32>
    %1684 = vector.broadcast %1303 : vector<1x1xf32> to vector<1x128xf32>
    %1685 = arith.addf %1684, %20 : vector<1x128xf32>
    %1686 = arith.subf %1685, %1683 : vector<1x128xf32>
    %cst_230 = arith.constant 9.99999993E-9 : f32
    %1687 = vector.broadcast %cst_230 : f32 to vector<1x128xf32>
    %1688 = arith.maximumf %1686, %1687 : vector<1x128xf32>
    %1689 = arith.divf %1683, %1688 : vector<1x128xf32>
    %1690 = arith.cmpf ogt, %1333, %1271 : vector<1x128xf32>
    %1691 = arith.select %1690, %1333, %1271 : vector<1x128xi1>, vector<1x128xf32>
    %1692 = arith.select %1690, %1689, %1272 : vector<1x128xi1>, vector<1x128xf32>
    %1693 = vector.shape_cast %1292 : vector<1x1xf32> to vector<1x1xf32>
    %1694 = vector.broadcast %1693 : vector<1x1xf32> to vector<1x128xf32>
    %1695 = arith.select %1690, %1694, %1275 : vector<1x128xi1>, vector<1x128xf32>
    %1696 = vector.shape_cast %1293 : vector<1x1xf32> to vector<1x1xf32>
    %1697 = vector.broadcast %1696 : vector<1x1xf32> to vector<1x128xf32>
    %1698 = arith.select %1690, %1697, %1278 : vector<1x128xi1>, vector<1x128xf32>
    %1699 = vector.shape_cast %1294 : vector<1x1xf32> to vector<1x1xf32>
    %1700 = vector.broadcast %1699 : vector<1x1xf32> to vector<1x128xf32>
    %1701 = arith.select %1690, %1700, %1281 : vector<1x128xi1>, vector<1x128xf32>
    %1702 = vector.shape_cast %1295 : vector<1x1xf32> to vector<1x1xf32>
    %1703 = vector.broadcast %1702 : vector<1x1xf32> to vector<1x128xf32>
    %1704 = arith.select %1690, %1703, %1284 : vector<1x128xi1>, vector<1x128xf32>
    %1705 = vector.shape_cast %1296 : vector<1x1xf32> to vector<1x1xf32>
    %1706 = vector.broadcast %1705 : vector<1x1xf32> to vector<1x128xf32>
    %1707 = arith.select %1690, %1706, %1287 : vector<1x128xi1>, vector<1x128xf32>
    %1708 = vector.shape_cast %1297 : vector<1x1xf32> to vector<1x1xf32>
    %1709 = vector.broadcast %1708 : vector<1x1xf32> to vector<1x128xf32>
    %1710 = arith.select %1690, %1709, %1290 : vector<1x128xi1>, vector<1x128xf32>
    %1711 = vector.extract_strided_slice %22 {offsets = [4, 0], sizes = [1, 20], strides = [1, 1]} : vector<8x20xf32> to vector<1x20xf32>
    %1712 = vector.extract_strided_slice %1711 {offsets = [0, 0], sizes = [1, 1], strides = [1, 1]} : vector<1x20xf32> to vector<1x1xf32>
    %1713 = vector.extract_strided_slice %1711 {offsets = [0, 1], sizes = [1, 1], strides = [1, 1]} : vector<1x20xf32> to vector<1x1xf32>
    %1714 = vector.extract_strided_slice %1711 {offsets = [0, 2], sizes = [1, 1], strides = [1, 1]} : vector<1x20xf32> to vector<1x1xf32>
    %1715 = vector.extract_strided_slice %1711 {offsets = [0, 3], sizes = [1, 1], strides = [1, 1]} : vector<1x20xf32> to vector<1x1xf32>
    %1716 = vector.extract_strided_slice %1711 {offsets = [0, 4], sizes = [1, 1], strides = [1, 1]} : vector<1x20xf32> to vector<1x1xf32>
    %1717 = vector.extract_strided_slice %1711 {offsets = [0, 5], sizes = [1, 1], strides = [1, 1]} : vector<1x20xf32> to vector<1x1xf32>
    %1718 = vector.extract_strided_slice %1711 {offsets = [0, 6], sizes = [1, 1], strides = [1, 1]} : vector<1x20xf32> to vector<1x1xf32>
    %1719 = vector.extract_strided_slice %1711 {offsets = [0, 7], sizes = [1, 1], strides = [1, 1]} : vector<1x20xf32> to vector<1x1xf32>
    %1720 = vector.extract_strided_slice %1711 {offsets = [0, 8], sizes = [1, 1], strides = [1, 1]} : vector<1x20xf32> to vector<1x1xf32>
    %1721 = vector.extract_strided_slice %1711 {offsets = [0, 9], sizes = [1, 1], strides = [1, 1]} : vector<1x20xf32> to vector<1x1xf32>
    %1722 = vector.extract_strided_slice %1711 {offsets = [0, 10], sizes = [1, 1], strides = [1, 1]} : vector<1x20xf32> to vector<1x1xf32>
    %1723 = vector.extract_strided_slice %1711 {offsets = [0, 11], sizes = [1, 1], strides = [1, 1]} : vector<1x20xf32> to vector<1x1xf32>
    %1724 = vector.broadcast %1721 : vector<1x1xf32> to vector<1x128xf32>
    %1725 = arith.minimumf %6, %1724 : vector<1x128xf32>
    %1726 = vector.broadcast %1719 : vector<1x1xf32> to vector<1x128xf32>
    %1727 = arith.maximumf %4, %1726 : vector<1x128xf32>
    %1728 = arith.subf %1725, %1727 : vector<1x128xf32>
    %cst_231 = arith.constant 0.000000e+00 : f32
    %1729 = vector.broadcast %cst_231 : f32 to vector<1x128xf32>
    %1730 = arith.maximumf %1728, %1729 : vector<1x128xf32>
    %1731 = vector.broadcast %1722 : vector<1x1xf32> to vector<1x128xf32>
    %1732 = arith.minimumf %7, %1731 : vector<1x128xf32>
    %1733 = vector.broadcast %1720 : vector<1x1xf32> to vector<1x128xf32>
    %1734 = arith.maximumf %5, %1733 : vector<1x128xf32>
    %1735 = arith.subf %1732, %1734 : vector<1x128xf32>
    %cst_232 = arith.constant 0.000000e+00 : f32
    %1736 = vector.broadcast %cst_232 : f32 to vector<1x128xf32>
    %1737 = arith.maximumf %1735, %1736 : vector<1x128xf32>
    %1738 = arith.mulf %1730, %1737 : vector<1x128xf32>
    %1739 = arith.subf %1721, %1719 : vector<1x1xf32>
    %1740 = arith.subf %1722, %1720 : vector<1x1xf32>
    %1741 = arith.mulf %1739, %1740 : vector<1x1xf32>
    %1742 = vector.broadcast %1741 : vector<1x1xf32> to vector<1x128xf32>
    %1743 = arith.addf %20, %1742 : vector<1x128xf32>
    %1744 = arith.subf %1743, %1738 : vector<1x128xf32>
    %cst_233 = arith.constant 9.99999993E-9 : f32
    %1745 = vector.broadcast %cst_233 : f32 to vector<1x128xf32>
    %1746 = arith.maximumf %1744, %1745 : vector<1x128xf32>
    %1747 = arith.divf %1738, %1746 : vector<1x128xf32>
    %1748 = vector.broadcast %1718 : vector<1x1xf32> to vector<1x128xf32>
    %1749 = arith.mulf %1747, %1748 : vector<1x128xf32>
    %cst_234 = arith.constant 1.000000e+00 : f32
    %1750 = vector.broadcast %cst_234 : f32 to vector<1x1xf32>
    %1751 = arith.subf %1750, %1718 : vector<1x1xf32>
    %1752 = vector.broadcast %1751 : vector<1x1xf32> to vector<1x128xf32>
    %1753 = arith.subf %1749, %1752 : vector<1x128xf32>
    %cst_235 = arith.constant 0.000000e+00 : f32
    %1754 = vector.broadcast %cst_235 : f32 to vector<1x128xf32>
    %1755 = vector.extract_strided_slice %1711 {offsets = [0, 12], sizes = [1, 1], strides = [1, 1]} : vector<1x20xf32> to vector<1x1xf32>
    %1756 = vector.extract_strided_slice %1711 {offsets = [0, 13], sizes = [1, 1], strides = [1, 1]} : vector<1x20xf32> to vector<1x1xf32>
    %1757 = vector.extract_strided_slice %1711 {offsets = [0, 14], sizes = [1, 1], strides = [1, 1]} : vector<1x20xf32> to vector<1x1xf32>
    %1758 = vector.extract_strided_slice %1711 {offsets = [0, 15], sizes = [1, 1], strides = [1, 1]} : vector<1x20xf32> to vector<1x1xf32>
    %1759 = arith.subf %1757, %1755 : vector<1x1xf32>
    %1760 = math.absf %1759 : vector<1x1xf32>
    %cst_236 = arith.constant 9.99999971E-10 : f32
    %1761 = vector.broadcast %cst_236 : f32 to vector<1x1xf32>
    %1762 = arith.cmpf olt, %1760, %1761 : vector<1x1xf32>
    %cst_237 = arith.constant 1.000000e+00 : f32
    %1763 = vector.broadcast %cst_237 : f32 to vector<1x1xf32>
    %1764 = arith.select %1762, %1763, %1759 : vector<1x1xi1>, vector<1x1xf32>
    %1765 = arith.subf %1758, %1756 : vector<1x1xf32>
    %1766 = arith.divf %1765, %1764 : vector<1x1xf32>
    %1767 = math.absf %1766 : vector<1x1xf32>
    %cst_238 = arith.constant 9.99999971E-10 : f32
    %1768 = vector.broadcast %cst_238 : f32 to vector<1x1xf32>
    %1769 = arith.cmpf olt, %1767, %1768 : vector<1x1xf32>
    %1770 = arith.extui %1769 : vector<1x1xi1> to vector<1x1xi32>
    %1771 = arith.sitofp %1770 : vector<1x1xi32> to vector<1x1xf32>
    %1772 = math.absf %1766 : vector<1x1xf32>
    %cst_239 = arith.constant 9.99999971E-10 : f32
    %1773 = vector.broadcast %cst_239 : f32 to vector<1x1xf32>
    %1774 = arith.cmpf olt, %1772, %1773 : vector<1x1xf32>
    %cst_240 = arith.constant 1.000000e+00 : f32
    %1775 = vector.broadcast %cst_240 : f32 to vector<1x1xf32>
    %1776 = arith.select %1774, %1775, %1766 : vector<1x1xi1>, vector<1x1xf32>
    %cst_241 = arith.constant 5.000000e-01 : f32
    %1777 = vector.broadcast %cst_241 : f32 to vector<1x1xf32>
    %1778 = arith.divf %1777, %1776 : vector<1x1xf32>
    %1779 = vector.broadcast %1755 : vector<1x1xf32> to vector<1x128xf32>
    %1780 = arith.maximumf %1779, %4 : vector<1x128xf32>
    %1781 = arith.minimumf %1780, %6 : vector<1x128xf32>
    %1782 = vector.broadcast %1757 : vector<1x1xf32> to vector<1x128xf32>
    %1783 = arith.maximumf %1782, %4 : vector<1x128xf32>
    %1784 = arith.minimumf %1783, %6 : vector<1x128xf32>
    %1785 = arith.subf %1784, %1781 : vector<1x128xf32>
    %1786 = vector.broadcast %1755 : vector<1x1xf32> to vector<1x128xf32>
    %1787 = arith.subf %1781, %1786 : vector<1x128xf32>
    %1788 = vector.broadcast %1766 : vector<1x1xf32> to vector<1x128xf32>
    %1789 = arith.mulf %1788, %1787 : vector<1x128xf32>
    %1790 = vector.broadcast %1756 : vector<1x1xf32> to vector<1x128xf32>
    %1791 = arith.addf %1790, %1789 : vector<1x128xf32>
    %1792 = vector.broadcast %1755 : vector<1x1xf32> to vector<1x128xf32>
    %1793 = arith.subf %1784, %1792 : vector<1x128xf32>
    %1794 = vector.broadcast %1766 : vector<1x1xf32> to vector<1x128xf32>
    %1795 = arith.mulf %1794, %1793 : vector<1x128xf32>
    %1796 = vector.broadcast %1756 : vector<1x1xf32> to vector<1x128xf32>
    %1797 = arith.addf %1796, %1795 : vector<1x128xf32>
    %1798 = arith.mulf %5, %1785 : vector<1x128xf32>
    %1799 = arith.subf %1791, %5 : vector<1x128xf32>
    %cst_242 = arith.constant 0.000000e+00 : f32
    %1800 = vector.broadcast %cst_242 : f32 to vector<1x128xf32>
    %1801 = arith.maximumf %1799, %1800 : vector<1x128xf32>
    %1802 = arith.subf %1797, %5 : vector<1x128xf32>
    %cst_243 = arith.constant 0.000000e+00 : f32
    %1803 = vector.broadcast %cst_243 : f32 to vector<1x128xf32>
    %1804 = arith.maximumf %1802, %1803 : vector<1x128xf32>
    %1805 = vector.broadcast %1756 : vector<1x1xf32> to vector<1x128xf32>
    %1806 = arith.subf %1805, %5 : vector<1x128xf32>
    %cst_244 = arith.constant 0.000000e+00 : f32
    %1807 = vector.broadcast %cst_244 : f32 to vector<1x128xf32>
    %1808 = arith.maximumf %1806, %1807 : vector<1x128xf32>
    %1809 = arith.mulf %1808, %1785 : vector<1x128xf32>
    %1810 = arith.mulf %1804, %1804 : vector<1x128xf32>
    %1811 = arith.mulf %1801, %1801 : vector<1x128xf32>
    %1812 = arith.subf %1810, %1811 : vector<1x128xf32>
    %1813 = vector.broadcast %1778 : vector<1x1xf32> to vector<1x128xf32>
    %1814 = arith.mulf %1812, %1813 : vector<1x128xf32>
    %1815 = arith.subf %1809, %1814 : vector<1x128xf32>
    %1816 = vector.broadcast %1771 : vector<1x1xf32> to vector<1x128xf32>
    %1817 = arith.mulf %1815, %1816 : vector<1x128xf32>
    %1818 = arith.addf %1814, %1817 : vector<1x128xf32>
    %1819 = arith.addf %1798, %1818 : vector<1x128xf32>
    %1820 = arith.subf %1791, %7 : vector<1x128xf32>
    %cst_245 = arith.constant 0.000000e+00 : f32
    %1821 = vector.broadcast %cst_245 : f32 to vector<1x128xf32>
    %1822 = arith.maximumf %1820, %1821 : vector<1x128xf32>
    %1823 = arith.subf %1797, %7 : vector<1x128xf32>
    %cst_246 = arith.constant 0.000000e+00 : f32
    %1824 = vector.broadcast %cst_246 : f32 to vector<1x128xf32>
    %1825 = arith.maximumf %1823, %1824 : vector<1x128xf32>
    %1826 = vector.broadcast %1756 : vector<1x1xf32> to vector<1x128xf32>
    %1827 = arith.subf %1826, %7 : vector<1x128xf32>
    %cst_247 = arith.constant 0.000000e+00 : f32
    %1828 = vector.broadcast %cst_247 : f32 to vector<1x128xf32>
    %1829 = arith.maximumf %1827, %1828 : vector<1x128xf32>
    %1830 = arith.mulf %1829, %1785 : vector<1x128xf32>
    %1831 = arith.mulf %1825, %1825 : vector<1x128xf32>
    %1832 = arith.mulf %1822, %1822 : vector<1x128xf32>
    %1833 = arith.subf %1831, %1832 : vector<1x128xf32>
    %1834 = vector.broadcast %1778 : vector<1x1xf32> to vector<1x128xf32>
    %1835 = arith.mulf %1833, %1834 : vector<1x128xf32>
    %1836 = arith.subf %1830, %1835 : vector<1x128xf32>
    %1837 = vector.broadcast %1771 : vector<1x1xf32> to vector<1x128xf32>
    %1838 = arith.mulf %1836, %1837 : vector<1x128xf32>
    %1839 = arith.addf %1835, %1838 : vector<1x128xf32>
    %1840 = arith.subf %1819, %1839 : vector<1x128xf32>
    %1841 = arith.subf %1754, %1840 : vector<1x128xf32>
    %1842 = vector.extract_strided_slice %1711 {offsets = [0, 14], sizes = [1, 1], strides = [1, 1]} : vector<1x20xf32> to vector<1x1xf32>
    %1843 = vector.extract_strided_slice %1711 {offsets = [0, 15], sizes = [1, 1], strides = [1, 1]} : vector<1x20xf32> to vector<1x1xf32>
    %1844 = vector.extract_strided_slice %1711 {offsets = [0, 16], sizes = [1, 1], strides = [1, 1]} : vector<1x20xf32> to vector<1x1xf32>
    %1845 = vector.extract_strided_slice %1711 {offsets = [0, 17], sizes = [1, 1], strides = [1, 1]} : vector<1x20xf32> to vector<1x1xf32>
    %1846 = arith.subf %1844, %1842 : vector<1x1xf32>
    %1847 = math.absf %1846 : vector<1x1xf32>
    %cst_248 = arith.constant 9.99999971E-10 : f32
    %1848 = vector.broadcast %cst_248 : f32 to vector<1x1xf32>
    %1849 = arith.cmpf olt, %1847, %1848 : vector<1x1xf32>
    %cst_249 = arith.constant 1.000000e+00 : f32
    %1850 = vector.broadcast %cst_249 : f32 to vector<1x1xf32>
    %1851 = arith.select %1849, %1850, %1846 : vector<1x1xi1>, vector<1x1xf32>
    %1852 = arith.subf %1845, %1843 : vector<1x1xf32>
    %1853 = arith.divf %1852, %1851 : vector<1x1xf32>
    %1854 = math.absf %1853 : vector<1x1xf32>
    %cst_250 = arith.constant 9.99999971E-10 : f32
    %1855 = vector.broadcast %cst_250 : f32 to vector<1x1xf32>
    %1856 = arith.cmpf olt, %1854, %1855 : vector<1x1xf32>
    %1857 = arith.extui %1856 : vector<1x1xi1> to vector<1x1xi32>
    %1858 = arith.sitofp %1857 : vector<1x1xi32> to vector<1x1xf32>
    %1859 = math.absf %1853 : vector<1x1xf32>
    %cst_251 = arith.constant 9.99999971E-10 : f32
    %1860 = vector.broadcast %cst_251 : f32 to vector<1x1xf32>
    %1861 = arith.cmpf olt, %1859, %1860 : vector<1x1xf32>
    %cst_252 = arith.constant 1.000000e+00 : f32
    %1862 = vector.broadcast %cst_252 : f32 to vector<1x1xf32>
    %1863 = arith.select %1861, %1862, %1853 : vector<1x1xi1>, vector<1x1xf32>
    %cst_253 = arith.constant 5.000000e-01 : f32
    %1864 = vector.broadcast %cst_253 : f32 to vector<1x1xf32>
    %1865 = arith.divf %1864, %1863 : vector<1x1xf32>
    %1866 = vector.broadcast %1842 : vector<1x1xf32> to vector<1x128xf32>
    %1867 = arith.maximumf %1866, %4 : vector<1x128xf32>
    %1868 = arith.minimumf %1867, %6 : vector<1x128xf32>
    %1869 = vector.broadcast %1844 : vector<1x1xf32> to vector<1x128xf32>
    %1870 = arith.maximumf %1869, %4 : vector<1x128xf32>
    %1871 = arith.minimumf %1870, %6 : vector<1x128xf32>
    %1872 = arith.subf %1871, %1868 : vector<1x128xf32>
    %1873 = vector.broadcast %1842 : vector<1x1xf32> to vector<1x128xf32>
    %1874 = arith.subf %1868, %1873 : vector<1x128xf32>
    %1875 = vector.broadcast %1853 : vector<1x1xf32> to vector<1x128xf32>
    %1876 = arith.mulf %1875, %1874 : vector<1x128xf32>
    %1877 = vector.broadcast %1843 : vector<1x1xf32> to vector<1x128xf32>
    %1878 = arith.addf %1877, %1876 : vector<1x128xf32>
    %1879 = vector.broadcast %1842 : vector<1x1xf32> to vector<1x128xf32>
    %1880 = arith.subf %1871, %1879 : vector<1x128xf32>
    %1881 = vector.broadcast %1853 : vector<1x1xf32> to vector<1x128xf32>
    %1882 = arith.mulf %1881, %1880 : vector<1x128xf32>
    %1883 = vector.broadcast %1843 : vector<1x1xf32> to vector<1x128xf32>
    %1884 = arith.addf %1883, %1882 : vector<1x128xf32>
    %1885 = arith.mulf %5, %1872 : vector<1x128xf32>
    %1886 = arith.subf %1878, %5 : vector<1x128xf32>
    %cst_254 = arith.constant 0.000000e+00 : f32
    %1887 = vector.broadcast %cst_254 : f32 to vector<1x128xf32>
    %1888 = arith.maximumf %1886, %1887 : vector<1x128xf32>
    %1889 = arith.subf %1884, %5 : vector<1x128xf32>
    %cst_255 = arith.constant 0.000000e+00 : f32
    %1890 = vector.broadcast %cst_255 : f32 to vector<1x128xf32>
    %1891 = arith.maximumf %1889, %1890 : vector<1x128xf32>
    %1892 = vector.broadcast %1843 : vector<1x1xf32> to vector<1x128xf32>
    %1893 = arith.subf %1892, %5 : vector<1x128xf32>
    %cst_256 = arith.constant 0.000000e+00 : f32
    %1894 = vector.broadcast %cst_256 : f32 to vector<1x128xf32>
    %1895 = arith.maximumf %1893, %1894 : vector<1x128xf32>
    %1896 = arith.mulf %1895, %1872 : vector<1x128xf32>
    %1897 = arith.mulf %1891, %1891 : vector<1x128xf32>
    %1898 = arith.mulf %1888, %1888 : vector<1x128xf32>
    %1899 = arith.subf %1897, %1898 : vector<1x128xf32>
    %1900 = vector.broadcast %1865 : vector<1x1xf32> to vector<1x128xf32>
    %1901 = arith.mulf %1899, %1900 : vector<1x128xf32>
    %1902 = arith.subf %1896, %1901 : vector<1x128xf32>
    %1903 = vector.broadcast %1858 : vector<1x1xf32> to vector<1x128xf32>
    %1904 = arith.mulf %1902, %1903 : vector<1x128xf32>
    %1905 = arith.addf %1901, %1904 : vector<1x128xf32>
    %1906 = arith.addf %1885, %1905 : vector<1x128xf32>
    %1907 = arith.subf %1878, %7 : vector<1x128xf32>
    %cst_257 = arith.constant 0.000000e+00 : f32
    %1908 = vector.broadcast %cst_257 : f32 to vector<1x128xf32>
    %1909 = arith.maximumf %1907, %1908 : vector<1x128xf32>
    %1910 = arith.subf %1884, %7 : vector<1x128xf32>
    %cst_258 = arith.constant 0.000000e+00 : f32
    %1911 = vector.broadcast %cst_258 : f32 to vector<1x128xf32>
    %1912 = arith.maximumf %1910, %1911 : vector<1x128xf32>
    %1913 = vector.broadcast %1843 : vector<1x1xf32> to vector<1x128xf32>
    %1914 = arith.subf %1913, %7 : vector<1x128xf32>
    %cst_259 = arith.constant 0.000000e+00 : f32
    %1915 = vector.broadcast %cst_259 : f32 to vector<1x128xf32>
    %1916 = arith.maximumf %1914, %1915 : vector<1x128xf32>
    %1917 = arith.mulf %1916, %1872 : vector<1x128xf32>
    %1918 = arith.mulf %1912, %1912 : vector<1x128xf32>
    %1919 = arith.mulf %1909, %1909 : vector<1x128xf32>
    %1920 = arith.subf %1918, %1919 : vector<1x128xf32>
    %1921 = vector.broadcast %1865 : vector<1x1xf32> to vector<1x128xf32>
    %1922 = arith.mulf %1920, %1921 : vector<1x128xf32>
    %1923 = arith.subf %1917, %1922 : vector<1x128xf32>
    %1924 = vector.broadcast %1858 : vector<1x1xf32> to vector<1x128xf32>
    %1925 = arith.mulf %1923, %1924 : vector<1x128xf32>
    %1926 = arith.addf %1922, %1925 : vector<1x128xf32>
    %1927 = arith.subf %1906, %1926 : vector<1x128xf32>
    %1928 = arith.subf %1841, %1927 : vector<1x128xf32>
    %1929 = vector.extract_strided_slice %1711 {offsets = [0, 16], sizes = [1, 1], strides = [1, 1]} : vector<1x20xf32> to vector<1x1xf32>
    %1930 = vector.extract_strided_slice %1711 {offsets = [0, 17], sizes = [1, 1], strides = [1, 1]} : vector<1x20xf32> to vector<1x1xf32>
    %1931 = vector.extract_strided_slice %1711 {offsets = [0, 18], sizes = [1, 1], strides = [1, 1]} : vector<1x20xf32> to vector<1x1xf32>
    %1932 = vector.extract_strided_slice %1711 {offsets = [0, 19], sizes = [1, 1], strides = [1, 1]} : vector<1x20xf32> to vector<1x1xf32>
    %1933 = arith.subf %1931, %1929 : vector<1x1xf32>
    %1934 = math.absf %1933 : vector<1x1xf32>
    %cst_260 = arith.constant 9.99999971E-10 : f32
    %1935 = vector.broadcast %cst_260 : f32 to vector<1x1xf32>
    %1936 = arith.cmpf olt, %1934, %1935 : vector<1x1xf32>
    %cst_261 = arith.constant 1.000000e+00 : f32
    %1937 = vector.broadcast %cst_261 : f32 to vector<1x1xf32>
    %1938 = arith.select %1936, %1937, %1933 : vector<1x1xi1>, vector<1x1xf32>
    %1939 = arith.subf %1932, %1930 : vector<1x1xf32>
    %1940 = arith.divf %1939, %1938 : vector<1x1xf32>
    %1941 = math.absf %1940 : vector<1x1xf32>
    %cst_262 = arith.constant 9.99999971E-10 : f32
    %1942 = vector.broadcast %cst_262 : f32 to vector<1x1xf32>
    %1943 = arith.cmpf olt, %1941, %1942 : vector<1x1xf32>
    %1944 = arith.extui %1943 : vector<1x1xi1> to vector<1x1xi32>
    %1945 = arith.sitofp %1944 : vector<1x1xi32> to vector<1x1xf32>
    %1946 = math.absf %1940 : vector<1x1xf32>
    %cst_263 = arith.constant 9.99999971E-10 : f32
    %1947 = vector.broadcast %cst_263 : f32 to vector<1x1xf32>
    %1948 = arith.cmpf olt, %1946, %1947 : vector<1x1xf32>
    %cst_264 = arith.constant 1.000000e+00 : f32
    %1949 = vector.broadcast %cst_264 : f32 to vector<1x1xf32>
    %1950 = arith.select %1948, %1949, %1940 : vector<1x1xi1>, vector<1x1xf32>
    %cst_265 = arith.constant 5.000000e-01 : f32
    %1951 = vector.broadcast %cst_265 : f32 to vector<1x1xf32>
    %1952 = arith.divf %1951, %1950 : vector<1x1xf32>
    %1953 = vector.broadcast %1929 : vector<1x1xf32> to vector<1x128xf32>
    %1954 = arith.maximumf %1953, %4 : vector<1x128xf32>
    %1955 = arith.minimumf %1954, %6 : vector<1x128xf32>
    %1956 = vector.broadcast %1931 : vector<1x1xf32> to vector<1x128xf32>
    %1957 = arith.maximumf %1956, %4 : vector<1x128xf32>
    %1958 = arith.minimumf %1957, %6 : vector<1x128xf32>
    %1959 = arith.subf %1958, %1955 : vector<1x128xf32>
    %1960 = vector.broadcast %1929 : vector<1x1xf32> to vector<1x128xf32>
    %1961 = arith.subf %1955, %1960 : vector<1x128xf32>
    %1962 = vector.broadcast %1940 : vector<1x1xf32> to vector<1x128xf32>
    %1963 = arith.mulf %1962, %1961 : vector<1x128xf32>
    %1964 = vector.broadcast %1930 : vector<1x1xf32> to vector<1x128xf32>
    %1965 = arith.addf %1964, %1963 : vector<1x128xf32>
    %1966 = vector.broadcast %1929 : vector<1x1xf32> to vector<1x128xf32>
    %1967 = arith.subf %1958, %1966 : vector<1x128xf32>
    %1968 = vector.broadcast %1940 : vector<1x1xf32> to vector<1x128xf32>
    %1969 = arith.mulf %1968, %1967 : vector<1x128xf32>
    %1970 = vector.broadcast %1930 : vector<1x1xf32> to vector<1x128xf32>
    %1971 = arith.addf %1970, %1969 : vector<1x128xf32>
    %1972 = arith.mulf %5, %1959 : vector<1x128xf32>
    %1973 = arith.subf %1965, %5 : vector<1x128xf32>
    %cst_266 = arith.constant 0.000000e+00 : f32
    %1974 = vector.broadcast %cst_266 : f32 to vector<1x128xf32>
    %1975 = arith.maximumf %1973, %1974 : vector<1x128xf32>
    %1976 = arith.subf %1971, %5 : vector<1x128xf32>
    %cst_267 = arith.constant 0.000000e+00 : f32
    %1977 = vector.broadcast %cst_267 : f32 to vector<1x128xf32>
    %1978 = arith.maximumf %1976, %1977 : vector<1x128xf32>
    %1979 = vector.broadcast %1930 : vector<1x1xf32> to vector<1x128xf32>
    %1980 = arith.subf %1979, %5 : vector<1x128xf32>
    %cst_268 = arith.constant 0.000000e+00 : f32
    %1981 = vector.broadcast %cst_268 : f32 to vector<1x128xf32>
    %1982 = arith.maximumf %1980, %1981 : vector<1x128xf32>
    %1983 = arith.mulf %1982, %1959 : vector<1x128xf32>
    %1984 = arith.mulf %1978, %1978 : vector<1x128xf32>
    %1985 = arith.mulf %1975, %1975 : vector<1x128xf32>
    %1986 = arith.subf %1984, %1985 : vector<1x128xf32>
    %1987 = vector.broadcast %1952 : vector<1x1xf32> to vector<1x128xf32>
    %1988 = arith.mulf %1986, %1987 : vector<1x128xf32>
    %1989 = arith.subf %1983, %1988 : vector<1x128xf32>
    %1990 = vector.broadcast %1945 : vector<1x1xf32> to vector<1x128xf32>
    %1991 = arith.mulf %1989, %1990 : vector<1x128xf32>
    %1992 = arith.addf %1988, %1991 : vector<1x128xf32>
    %1993 = arith.addf %1972, %1992 : vector<1x128xf32>
    %1994 = arith.subf %1965, %7 : vector<1x128xf32>
    %cst_269 = arith.constant 0.000000e+00 : f32
    %1995 = vector.broadcast %cst_269 : f32 to vector<1x128xf32>
    %1996 = arith.maximumf %1994, %1995 : vector<1x128xf32>
    %1997 = arith.subf %1971, %7 : vector<1x128xf32>
    %cst_270 = arith.constant 0.000000e+00 : f32
    %1998 = vector.broadcast %cst_270 : f32 to vector<1x128xf32>
    %1999 = arith.maximumf %1997, %1998 : vector<1x128xf32>
    %2000 = vector.broadcast %1930 : vector<1x1xf32> to vector<1x128xf32>
    %2001 = arith.subf %2000, %7 : vector<1x128xf32>
    %cst_271 = arith.constant 0.000000e+00 : f32
    %2002 = vector.broadcast %cst_271 : f32 to vector<1x128xf32>
    %2003 = arith.maximumf %2001, %2002 : vector<1x128xf32>
    %2004 = arith.mulf %2003, %1959 : vector<1x128xf32>
    %2005 = arith.mulf %1999, %1999 : vector<1x128xf32>
    %2006 = arith.mulf %1996, %1996 : vector<1x128xf32>
    %2007 = arith.subf %2005, %2006 : vector<1x128xf32>
    %2008 = vector.broadcast %1952 : vector<1x1xf32> to vector<1x128xf32>
    %2009 = arith.mulf %2007, %2008 : vector<1x128xf32>
    %2010 = arith.subf %2004, %2009 : vector<1x128xf32>
    %2011 = vector.broadcast %1945 : vector<1x1xf32> to vector<1x128xf32>
    %2012 = arith.mulf %2010, %2011 : vector<1x128xf32>
    %2013 = arith.addf %2009, %2012 : vector<1x128xf32>
    %2014 = arith.subf %1993, %2013 : vector<1x128xf32>
    %2015 = arith.subf %1928, %2014 : vector<1x128xf32>
    %2016 = vector.extract_strided_slice %1711 {offsets = [0, 18], sizes = [1, 1], strides = [1, 1]} : vector<1x20xf32> to vector<1x1xf32>
    %2017 = vector.extract_strided_slice %1711 {offsets = [0, 19], sizes = [1, 1], strides = [1, 1]} : vector<1x20xf32> to vector<1x1xf32>
    %2018 = vector.extract_strided_slice %1711 {offsets = [0, 12], sizes = [1, 1], strides = [1, 1]} : vector<1x20xf32> to vector<1x1xf32>
    %2019 = vector.extract_strided_slice %1711 {offsets = [0, 13], sizes = [1, 1], strides = [1, 1]} : vector<1x20xf32> to vector<1x1xf32>
    %2020 = arith.subf %2018, %2016 : vector<1x1xf32>
    %2021 = math.absf %2020 : vector<1x1xf32>
    %cst_272 = arith.constant 9.99999971E-10 : f32
    %2022 = vector.broadcast %cst_272 : f32 to vector<1x1xf32>
    %2023 = arith.cmpf olt, %2021, %2022 : vector<1x1xf32>
    %cst_273 = arith.constant 1.000000e+00 : f32
    %2024 = vector.broadcast %cst_273 : f32 to vector<1x1xf32>
    %2025 = arith.select %2023, %2024, %2020 : vector<1x1xi1>, vector<1x1xf32>
    %2026 = arith.subf %2019, %2017 : vector<1x1xf32>
    %2027 = arith.divf %2026, %2025 : vector<1x1xf32>
    %2028 = math.absf %2027 : vector<1x1xf32>
    %cst_274 = arith.constant 9.99999971E-10 : f32
    %2029 = vector.broadcast %cst_274 : f32 to vector<1x1xf32>
    %2030 = arith.cmpf olt, %2028, %2029 : vector<1x1xf32>
    %2031 = arith.extui %2030 : vector<1x1xi1> to vector<1x1xi32>
    %2032 = arith.sitofp %2031 : vector<1x1xi32> to vector<1x1xf32>
    %2033 = math.absf %2027 : vector<1x1xf32>
    %cst_275 = arith.constant 9.99999971E-10 : f32
    %2034 = vector.broadcast %cst_275 : f32 to vector<1x1xf32>
    %2035 = arith.cmpf olt, %2033, %2034 : vector<1x1xf32>
    %cst_276 = arith.constant 1.000000e+00 : f32
    %2036 = vector.broadcast %cst_276 : f32 to vector<1x1xf32>
    %2037 = arith.select %2035, %2036, %2027 : vector<1x1xi1>, vector<1x1xf32>
    %cst_277 = arith.constant 5.000000e-01 : f32
    %2038 = vector.broadcast %cst_277 : f32 to vector<1x1xf32>
    %2039 = arith.divf %2038, %2037 : vector<1x1xf32>
    %2040 = vector.broadcast %2016 : vector<1x1xf32> to vector<1x128xf32>
    %2041 = arith.maximumf %2040, %4 : vector<1x128xf32>
    %2042 = arith.minimumf %2041, %6 : vector<1x128xf32>
    %2043 = vector.broadcast %2018 : vector<1x1xf32> to vector<1x128xf32>
    %2044 = arith.maximumf %2043, %4 : vector<1x128xf32>
    %2045 = arith.minimumf %2044, %6 : vector<1x128xf32>
    %2046 = arith.subf %2045, %2042 : vector<1x128xf32>
    %2047 = vector.broadcast %2016 : vector<1x1xf32> to vector<1x128xf32>
    %2048 = arith.subf %2042, %2047 : vector<1x128xf32>
    %2049 = vector.broadcast %2027 : vector<1x1xf32> to vector<1x128xf32>
    %2050 = arith.mulf %2049, %2048 : vector<1x128xf32>
    %2051 = vector.broadcast %2017 : vector<1x1xf32> to vector<1x128xf32>
    %2052 = arith.addf %2051, %2050 : vector<1x128xf32>
    %2053 = vector.broadcast %2016 : vector<1x1xf32> to vector<1x128xf32>
    %2054 = arith.subf %2045, %2053 : vector<1x128xf32>
    %2055 = vector.broadcast %2027 : vector<1x1xf32> to vector<1x128xf32>
    %2056 = arith.mulf %2055, %2054 : vector<1x128xf32>
    %2057 = vector.broadcast %2017 : vector<1x1xf32> to vector<1x128xf32>
    %2058 = arith.addf %2057, %2056 : vector<1x128xf32>
    %2059 = arith.mulf %5, %2046 : vector<1x128xf32>
    %2060 = arith.subf %2052, %5 : vector<1x128xf32>
    %cst_278 = arith.constant 0.000000e+00 : f32
    %2061 = vector.broadcast %cst_278 : f32 to vector<1x128xf32>
    %2062 = arith.maximumf %2060, %2061 : vector<1x128xf32>
    %2063 = arith.subf %2058, %5 : vector<1x128xf32>
    %cst_279 = arith.constant 0.000000e+00 : f32
    %2064 = vector.broadcast %cst_279 : f32 to vector<1x128xf32>
    %2065 = arith.maximumf %2063, %2064 : vector<1x128xf32>
    %2066 = vector.broadcast %2017 : vector<1x1xf32> to vector<1x128xf32>
    %2067 = arith.subf %2066, %5 : vector<1x128xf32>
    %cst_280 = arith.constant 0.000000e+00 : f32
    %2068 = vector.broadcast %cst_280 : f32 to vector<1x128xf32>
    %2069 = arith.maximumf %2067, %2068 : vector<1x128xf32>
    %2070 = arith.mulf %2069, %2046 : vector<1x128xf32>
    %2071 = arith.mulf %2065, %2065 : vector<1x128xf32>
    %2072 = arith.mulf %2062, %2062 : vector<1x128xf32>
    %2073 = arith.subf %2071, %2072 : vector<1x128xf32>
    %2074 = vector.broadcast %2039 : vector<1x1xf32> to vector<1x128xf32>
    %2075 = arith.mulf %2073, %2074 : vector<1x128xf32>
    %2076 = arith.subf %2070, %2075 : vector<1x128xf32>
    %2077 = vector.broadcast %2032 : vector<1x1xf32> to vector<1x128xf32>
    %2078 = arith.mulf %2076, %2077 : vector<1x128xf32>
    %2079 = arith.addf %2075, %2078 : vector<1x128xf32>
    %2080 = arith.addf %2059, %2079 : vector<1x128xf32>
    %2081 = arith.subf %2052, %7 : vector<1x128xf32>
    %cst_281 = arith.constant 0.000000e+00 : f32
    %2082 = vector.broadcast %cst_281 : f32 to vector<1x128xf32>
    %2083 = arith.maximumf %2081, %2082 : vector<1x128xf32>
    %2084 = arith.subf %2058, %7 : vector<1x128xf32>
    %cst_282 = arith.constant 0.000000e+00 : f32
    %2085 = vector.broadcast %cst_282 : f32 to vector<1x128xf32>
    %2086 = arith.maximumf %2084, %2085 : vector<1x128xf32>
    %2087 = vector.broadcast %2017 : vector<1x1xf32> to vector<1x128xf32>
    %2088 = arith.subf %2087, %7 : vector<1x128xf32>
    %cst_283 = arith.constant 0.000000e+00 : f32
    %2089 = vector.broadcast %cst_283 : f32 to vector<1x128xf32>
    %2090 = arith.maximumf %2088, %2089 : vector<1x128xf32>
    %2091 = arith.mulf %2090, %2046 : vector<1x128xf32>
    %2092 = arith.mulf %2086, %2086 : vector<1x128xf32>
    %2093 = arith.mulf %2083, %2083 : vector<1x128xf32>
    %2094 = arith.subf %2092, %2093 : vector<1x128xf32>
    %2095 = vector.broadcast %2039 : vector<1x1xf32> to vector<1x128xf32>
    %2096 = arith.mulf %2094, %2095 : vector<1x128xf32>
    %2097 = arith.subf %2091, %2096 : vector<1x128xf32>
    %2098 = vector.broadcast %2032 : vector<1x1xf32> to vector<1x128xf32>
    %2099 = arith.mulf %2097, %2098 : vector<1x128xf32>
    %2100 = arith.addf %2096, %2099 : vector<1x128xf32>
    %2101 = arith.subf %2080, %2100 : vector<1x128xf32>
    %2102 = arith.subf %2015, %2101 : vector<1x128xf32>
    %2103 = math.absf %2102 : vector<1x128xf32>
    %2104 = vector.broadcast %1723 : vector<1x1xf32> to vector<1x128xf32>
    %2105 = arith.addf %2104, %20 : vector<1x128xf32>
    %2106 = arith.subf %2105, %2103 : vector<1x128xf32>
    %cst_284 = arith.constant 9.99999993E-9 : f32
    %2107 = vector.broadcast %cst_284 : f32 to vector<1x128xf32>
    %2108 = arith.maximumf %2106, %2107 : vector<1x128xf32>
    %2109 = arith.divf %2103, %2108 : vector<1x128xf32>
    %2110 = arith.cmpf ogt, %1753, %1691 : vector<1x128xf32>
    %2111 = arith.select %2110, %1753, %1691 : vector<1x128xi1>, vector<1x128xf32>
    %2112 = arith.select %2110, %2109, %1692 : vector<1x128xi1>, vector<1x128xf32>
    %2113 = vector.shape_cast %1712 : vector<1x1xf32> to vector<1x1xf32>
    %2114 = vector.broadcast %2113 : vector<1x1xf32> to vector<1x128xf32>
    %2115 = arith.select %2110, %2114, %1695 : vector<1x128xi1>, vector<1x128xf32>
    %2116 = vector.shape_cast %1713 : vector<1x1xf32> to vector<1x1xf32>
    %2117 = vector.broadcast %2116 : vector<1x1xf32> to vector<1x128xf32>
    %2118 = arith.select %2110, %2117, %1698 : vector<1x128xi1>, vector<1x128xf32>
    %2119 = vector.shape_cast %1714 : vector<1x1xf32> to vector<1x1xf32>
    %2120 = vector.broadcast %2119 : vector<1x1xf32> to vector<1x128xf32>
    %2121 = arith.select %2110, %2120, %1701 : vector<1x128xi1>, vector<1x128xf32>
    %2122 = vector.shape_cast %1715 : vector<1x1xf32> to vector<1x1xf32>
    %2123 = vector.broadcast %2122 : vector<1x1xf32> to vector<1x128xf32>
    %2124 = arith.select %2110, %2123, %1704 : vector<1x128xi1>, vector<1x128xf32>
    %2125 = vector.shape_cast %1716 : vector<1x1xf32> to vector<1x1xf32>
    %2126 = vector.broadcast %2125 : vector<1x1xf32> to vector<1x128xf32>
    %2127 = arith.select %2110, %2126, %1707 : vector<1x128xi1>, vector<1x128xf32>
    %2128 = vector.shape_cast %1717 : vector<1x1xf32> to vector<1x1xf32>
    %2129 = vector.broadcast %2128 : vector<1x1xf32> to vector<1x128xf32>
    %2130 = arith.select %2110, %2129, %1710 : vector<1x128xi1>, vector<1x128xf32>
    %2131 = vector.extract_strided_slice %22 {offsets = [5, 0], sizes = [1, 20], strides = [1, 1]} : vector<8x20xf32> to vector<1x20xf32>
    %2132 = vector.extract_strided_slice %2131 {offsets = [0, 0], sizes = [1, 1], strides = [1, 1]} : vector<1x20xf32> to vector<1x1xf32>
    %2133 = vector.extract_strided_slice %2131 {offsets = [0, 1], sizes = [1, 1], strides = [1, 1]} : vector<1x20xf32> to vector<1x1xf32>
    %2134 = vector.extract_strided_slice %2131 {offsets = [0, 2], sizes = [1, 1], strides = [1, 1]} : vector<1x20xf32> to vector<1x1xf32>
    %2135 = vector.extract_strided_slice %2131 {offsets = [0, 3], sizes = [1, 1], strides = [1, 1]} : vector<1x20xf32> to vector<1x1xf32>
    %2136 = vector.extract_strided_slice %2131 {offsets = [0, 4], sizes = [1, 1], strides = [1, 1]} : vector<1x20xf32> to vector<1x1xf32>
    %2137 = vector.extract_strided_slice %2131 {offsets = [0, 5], sizes = [1, 1], strides = [1, 1]} : vector<1x20xf32> to vector<1x1xf32>
    %2138 = vector.extract_strided_slice %2131 {offsets = [0, 6], sizes = [1, 1], strides = [1, 1]} : vector<1x20xf32> to vector<1x1xf32>
    %2139 = vector.extract_strided_slice %2131 {offsets = [0, 7], sizes = [1, 1], strides = [1, 1]} : vector<1x20xf32> to vector<1x1xf32>
    %2140 = vector.extract_strided_slice %2131 {offsets = [0, 8], sizes = [1, 1], strides = [1, 1]} : vector<1x20xf32> to vector<1x1xf32>
    %2141 = vector.extract_strided_slice %2131 {offsets = [0, 9], sizes = [1, 1], strides = [1, 1]} : vector<1x20xf32> to vector<1x1xf32>
    %2142 = vector.extract_strided_slice %2131 {offsets = [0, 10], sizes = [1, 1], strides = [1, 1]} : vector<1x20xf32> to vector<1x1xf32>
    %2143 = vector.extract_strided_slice %2131 {offsets = [0, 11], sizes = [1, 1], strides = [1, 1]} : vector<1x20xf32> to vector<1x1xf32>
    %2144 = vector.broadcast %2141 : vector<1x1xf32> to vector<1x128xf32>
    %2145 = arith.minimumf %6, %2144 : vector<1x128xf32>
    %2146 = vector.broadcast %2139 : vector<1x1xf32> to vector<1x128xf32>
    %2147 = arith.maximumf %4, %2146 : vector<1x128xf32>
    %2148 = arith.subf %2145, %2147 : vector<1x128xf32>
    %cst_285 = arith.constant 0.000000e+00 : f32
    %2149 = vector.broadcast %cst_285 : f32 to vector<1x128xf32>
    %2150 = arith.maximumf %2148, %2149 : vector<1x128xf32>
    %2151 = vector.broadcast %2142 : vector<1x1xf32> to vector<1x128xf32>
    %2152 = arith.minimumf %7, %2151 : vector<1x128xf32>
    %2153 = vector.broadcast %2140 : vector<1x1xf32> to vector<1x128xf32>
    %2154 = arith.maximumf %5, %2153 : vector<1x128xf32>
    %2155 = arith.subf %2152, %2154 : vector<1x128xf32>
    %cst_286 = arith.constant 0.000000e+00 : f32
    %2156 = vector.broadcast %cst_286 : f32 to vector<1x128xf32>
    %2157 = arith.maximumf %2155, %2156 : vector<1x128xf32>
    %2158 = arith.mulf %2150, %2157 : vector<1x128xf32>
    %2159 = arith.subf %2141, %2139 : vector<1x1xf32>
    %2160 = arith.subf %2142, %2140 : vector<1x1xf32>
    %2161 = arith.mulf %2159, %2160 : vector<1x1xf32>
    %2162 = vector.broadcast %2161 : vector<1x1xf32> to vector<1x128xf32>
    %2163 = arith.addf %20, %2162 : vector<1x128xf32>
    %2164 = arith.subf %2163, %2158 : vector<1x128xf32>
    %cst_287 = arith.constant 9.99999993E-9 : f32
    %2165 = vector.broadcast %cst_287 : f32 to vector<1x128xf32>
    %2166 = arith.maximumf %2164, %2165 : vector<1x128xf32>
    %2167 = arith.divf %2158, %2166 : vector<1x128xf32>
    %2168 = vector.broadcast %2138 : vector<1x1xf32> to vector<1x128xf32>
    %2169 = arith.mulf %2167, %2168 : vector<1x128xf32>
    %cst_288 = arith.constant 1.000000e+00 : f32
    %2170 = vector.broadcast %cst_288 : f32 to vector<1x1xf32>
    %2171 = arith.subf %2170, %2138 : vector<1x1xf32>
    %2172 = vector.broadcast %2171 : vector<1x1xf32> to vector<1x128xf32>
    %2173 = arith.subf %2169, %2172 : vector<1x128xf32>
    %cst_289 = arith.constant 0.000000e+00 : f32
    %2174 = vector.broadcast %cst_289 : f32 to vector<1x128xf32>
    %2175 = vector.extract_strided_slice %2131 {offsets = [0, 12], sizes = [1, 1], strides = [1, 1]} : vector<1x20xf32> to vector<1x1xf32>
    %2176 = vector.extract_strided_slice %2131 {offsets = [0, 13], sizes = [1, 1], strides = [1, 1]} : vector<1x20xf32> to vector<1x1xf32>
    %2177 = vector.extract_strided_slice %2131 {offsets = [0, 14], sizes = [1, 1], strides = [1, 1]} : vector<1x20xf32> to vector<1x1xf32>
    %2178 = vector.extract_strided_slice %2131 {offsets = [0, 15], sizes = [1, 1], strides = [1, 1]} : vector<1x20xf32> to vector<1x1xf32>
    %2179 = arith.subf %2177, %2175 : vector<1x1xf32>
    %2180 = math.absf %2179 : vector<1x1xf32>
    %cst_290 = arith.constant 9.99999971E-10 : f32
    %2181 = vector.broadcast %cst_290 : f32 to vector<1x1xf32>
    %2182 = arith.cmpf olt, %2180, %2181 : vector<1x1xf32>
    %cst_291 = arith.constant 1.000000e+00 : f32
    %2183 = vector.broadcast %cst_291 : f32 to vector<1x1xf32>
    %2184 = arith.select %2182, %2183, %2179 : vector<1x1xi1>, vector<1x1xf32>
    %2185 = arith.subf %2178, %2176 : vector<1x1xf32>
    %2186 = arith.divf %2185, %2184 : vector<1x1xf32>
    %2187 = math.absf %2186 : vector<1x1xf32>
    %cst_292 = arith.constant 9.99999971E-10 : f32
    %2188 = vector.broadcast %cst_292 : f32 to vector<1x1xf32>
    %2189 = arith.cmpf olt, %2187, %2188 : vector<1x1xf32>
    %2190 = arith.extui %2189 : vector<1x1xi1> to vector<1x1xi32>
    %2191 = arith.sitofp %2190 : vector<1x1xi32> to vector<1x1xf32>
    %2192 = math.absf %2186 : vector<1x1xf32>
    %cst_293 = arith.constant 9.99999971E-10 : f32
    %2193 = vector.broadcast %cst_293 : f32 to vector<1x1xf32>
    %2194 = arith.cmpf olt, %2192, %2193 : vector<1x1xf32>
    %cst_294 = arith.constant 1.000000e+00 : f32
    %2195 = vector.broadcast %cst_294 : f32 to vector<1x1xf32>
    %2196 = arith.select %2194, %2195, %2186 : vector<1x1xi1>, vector<1x1xf32>
    %cst_295 = arith.constant 5.000000e-01 : f32
    %2197 = vector.broadcast %cst_295 : f32 to vector<1x1xf32>
    %2198 = arith.divf %2197, %2196 : vector<1x1xf32>
    %2199 = vector.broadcast %2175 : vector<1x1xf32> to vector<1x128xf32>
    %2200 = arith.maximumf %2199, %4 : vector<1x128xf32>
    %2201 = arith.minimumf %2200, %6 : vector<1x128xf32>
    %2202 = vector.broadcast %2177 : vector<1x1xf32> to vector<1x128xf32>
    %2203 = arith.maximumf %2202, %4 : vector<1x128xf32>
    %2204 = arith.minimumf %2203, %6 : vector<1x128xf32>
    %2205 = arith.subf %2204, %2201 : vector<1x128xf32>
    %2206 = vector.broadcast %2175 : vector<1x1xf32> to vector<1x128xf32>
    %2207 = arith.subf %2201, %2206 : vector<1x128xf32>
    %2208 = vector.broadcast %2186 : vector<1x1xf32> to vector<1x128xf32>
    %2209 = arith.mulf %2208, %2207 : vector<1x128xf32>
    %2210 = vector.broadcast %2176 : vector<1x1xf32> to vector<1x128xf32>
    %2211 = arith.addf %2210, %2209 : vector<1x128xf32>
    %2212 = vector.broadcast %2175 : vector<1x1xf32> to vector<1x128xf32>
    %2213 = arith.subf %2204, %2212 : vector<1x128xf32>
    %2214 = vector.broadcast %2186 : vector<1x1xf32> to vector<1x128xf32>
    %2215 = arith.mulf %2214, %2213 : vector<1x128xf32>
    %2216 = vector.broadcast %2176 : vector<1x1xf32> to vector<1x128xf32>
    %2217 = arith.addf %2216, %2215 : vector<1x128xf32>
    %2218 = arith.mulf %5, %2205 : vector<1x128xf32>
    %2219 = arith.subf %2211, %5 : vector<1x128xf32>
    %cst_296 = arith.constant 0.000000e+00 : f32
    %2220 = vector.broadcast %cst_296 : f32 to vector<1x128xf32>
    %2221 = arith.maximumf %2219, %2220 : vector<1x128xf32>
    %2222 = arith.subf %2217, %5 : vector<1x128xf32>
    %cst_297 = arith.constant 0.000000e+00 : f32
    %2223 = vector.broadcast %cst_297 : f32 to vector<1x128xf32>
    %2224 = arith.maximumf %2222, %2223 : vector<1x128xf32>
    %2225 = vector.broadcast %2176 : vector<1x1xf32> to vector<1x128xf32>
    %2226 = arith.subf %2225, %5 : vector<1x128xf32>
    %cst_298 = arith.constant 0.000000e+00 : f32
    %2227 = vector.broadcast %cst_298 : f32 to vector<1x128xf32>
    %2228 = arith.maximumf %2226, %2227 : vector<1x128xf32>
    %2229 = arith.mulf %2228, %2205 : vector<1x128xf32>
    %2230 = arith.mulf %2224, %2224 : vector<1x128xf32>
    %2231 = arith.mulf %2221, %2221 : vector<1x128xf32>
    %2232 = arith.subf %2230, %2231 : vector<1x128xf32>
    %2233 = vector.broadcast %2198 : vector<1x1xf32> to vector<1x128xf32>
    %2234 = arith.mulf %2232, %2233 : vector<1x128xf32>
    %2235 = arith.subf %2229, %2234 : vector<1x128xf32>
    %2236 = vector.broadcast %2191 : vector<1x1xf32> to vector<1x128xf32>
    %2237 = arith.mulf %2235, %2236 : vector<1x128xf32>
    %2238 = arith.addf %2234, %2237 : vector<1x128xf32>
    %2239 = arith.addf %2218, %2238 : vector<1x128xf32>
    %2240 = arith.subf %2211, %7 : vector<1x128xf32>
    %cst_299 = arith.constant 0.000000e+00 : f32
    %2241 = vector.broadcast %cst_299 : f32 to vector<1x128xf32>
    %2242 = arith.maximumf %2240, %2241 : vector<1x128xf32>
    %2243 = arith.subf %2217, %7 : vector<1x128xf32>
    %cst_300 = arith.constant 0.000000e+00 : f32
    %2244 = vector.broadcast %cst_300 : f32 to vector<1x128xf32>
    %2245 = arith.maximumf %2243, %2244 : vector<1x128xf32>
    %2246 = vector.broadcast %2176 : vector<1x1xf32> to vector<1x128xf32>
    %2247 = arith.subf %2246, %7 : vector<1x128xf32>
    %cst_301 = arith.constant 0.000000e+00 : f32
    %2248 = vector.broadcast %cst_301 : f32 to vector<1x128xf32>
    %2249 = arith.maximumf %2247, %2248 : vector<1x128xf32>
    %2250 = arith.mulf %2249, %2205 : vector<1x128xf32>
    %2251 = arith.mulf %2245, %2245 : vector<1x128xf32>
    %2252 = arith.mulf %2242, %2242 : vector<1x128xf32>
    %2253 = arith.subf %2251, %2252 : vector<1x128xf32>
    %2254 = vector.broadcast %2198 : vector<1x1xf32> to vector<1x128xf32>
    %2255 = arith.mulf %2253, %2254 : vector<1x128xf32>
    %2256 = arith.subf %2250, %2255 : vector<1x128xf32>
    %2257 = vector.broadcast %2191 : vector<1x1xf32> to vector<1x128xf32>
    %2258 = arith.mulf %2256, %2257 : vector<1x128xf32>
    %2259 = arith.addf %2255, %2258 : vector<1x128xf32>
    %2260 = arith.subf %2239, %2259 : vector<1x128xf32>
    %2261 = arith.subf %2174, %2260 : vector<1x128xf32>
    %2262 = vector.extract_strided_slice %2131 {offsets = [0, 14], sizes = [1, 1], strides = [1, 1]} : vector<1x20xf32> to vector<1x1xf32>
    %2263 = vector.extract_strided_slice %2131 {offsets = [0, 15], sizes = [1, 1], strides = [1, 1]} : vector<1x20xf32> to vector<1x1xf32>
    %2264 = vector.extract_strided_slice %2131 {offsets = [0, 16], sizes = [1, 1], strides = [1, 1]} : vector<1x20xf32> to vector<1x1xf32>
    %2265 = vector.extract_strided_slice %2131 {offsets = [0, 17], sizes = [1, 1], strides = [1, 1]} : vector<1x20xf32> to vector<1x1xf32>
    %2266 = arith.subf %2264, %2262 : vector<1x1xf32>
    %2267 = math.absf %2266 : vector<1x1xf32>
    %cst_302 = arith.constant 9.99999971E-10 : f32
    %2268 = vector.broadcast %cst_302 : f32 to vector<1x1xf32>
    %2269 = arith.cmpf olt, %2267, %2268 : vector<1x1xf32>
    %cst_303 = arith.constant 1.000000e+00 : f32
    %2270 = vector.broadcast %cst_303 : f32 to vector<1x1xf32>
    %2271 = arith.select %2269, %2270, %2266 : vector<1x1xi1>, vector<1x1xf32>
    %2272 = arith.subf %2265, %2263 : vector<1x1xf32>
    %2273 = arith.divf %2272, %2271 : vector<1x1xf32>
    %2274 = math.absf %2273 : vector<1x1xf32>
    %cst_304 = arith.constant 9.99999971E-10 : f32
    %2275 = vector.broadcast %cst_304 : f32 to vector<1x1xf32>
    %2276 = arith.cmpf olt, %2274, %2275 : vector<1x1xf32>
    %2277 = arith.extui %2276 : vector<1x1xi1> to vector<1x1xi32>
    %2278 = arith.sitofp %2277 : vector<1x1xi32> to vector<1x1xf32>
    %2279 = math.absf %2273 : vector<1x1xf32>
    %cst_305 = arith.constant 9.99999971E-10 : f32
    %2280 = vector.broadcast %cst_305 : f32 to vector<1x1xf32>
    %2281 = arith.cmpf olt, %2279, %2280 : vector<1x1xf32>
    %cst_306 = arith.constant 1.000000e+00 : f32
    %2282 = vector.broadcast %cst_306 : f32 to vector<1x1xf32>
    %2283 = arith.select %2281, %2282, %2273 : vector<1x1xi1>, vector<1x1xf32>
    %cst_307 = arith.constant 5.000000e-01 : f32
    %2284 = vector.broadcast %cst_307 : f32 to vector<1x1xf32>
    %2285 = arith.divf %2284, %2283 : vector<1x1xf32>
    %2286 = vector.broadcast %2262 : vector<1x1xf32> to vector<1x128xf32>
    %2287 = arith.maximumf %2286, %4 : vector<1x128xf32>
    %2288 = arith.minimumf %2287, %6 : vector<1x128xf32>
    %2289 = vector.broadcast %2264 : vector<1x1xf32> to vector<1x128xf32>
    %2290 = arith.maximumf %2289, %4 : vector<1x128xf32>
    %2291 = arith.minimumf %2290, %6 : vector<1x128xf32>
    %2292 = arith.subf %2291, %2288 : vector<1x128xf32>
    %2293 = vector.broadcast %2262 : vector<1x1xf32> to vector<1x128xf32>
    %2294 = arith.subf %2288, %2293 : vector<1x128xf32>
    %2295 = vector.broadcast %2273 : vector<1x1xf32> to vector<1x128xf32>
    %2296 = arith.mulf %2295, %2294 : vector<1x128xf32>
    %2297 = vector.broadcast %2263 : vector<1x1xf32> to vector<1x128xf32>
    %2298 = arith.addf %2297, %2296 : vector<1x128xf32>
    %2299 = vector.broadcast %2262 : vector<1x1xf32> to vector<1x128xf32>
    %2300 = arith.subf %2291, %2299 : vector<1x128xf32>
    %2301 = vector.broadcast %2273 : vector<1x1xf32> to vector<1x128xf32>
    %2302 = arith.mulf %2301, %2300 : vector<1x128xf32>
    %2303 = vector.broadcast %2263 : vector<1x1xf32> to vector<1x128xf32>
    %2304 = arith.addf %2303, %2302 : vector<1x128xf32>
    %2305 = arith.mulf %5, %2292 : vector<1x128xf32>
    %2306 = arith.subf %2298, %5 : vector<1x128xf32>
    %cst_308 = arith.constant 0.000000e+00 : f32
    %2307 = vector.broadcast %cst_308 : f32 to vector<1x128xf32>
    %2308 = arith.maximumf %2306, %2307 : vector<1x128xf32>
    %2309 = arith.subf %2304, %5 : vector<1x128xf32>
    %cst_309 = arith.constant 0.000000e+00 : f32
    %2310 = vector.broadcast %cst_309 : f32 to vector<1x128xf32>
    %2311 = arith.maximumf %2309, %2310 : vector<1x128xf32>
    %2312 = vector.broadcast %2263 : vector<1x1xf32> to vector<1x128xf32>
    %2313 = arith.subf %2312, %5 : vector<1x128xf32>
    %cst_310 = arith.constant 0.000000e+00 : f32
    %2314 = vector.broadcast %cst_310 : f32 to vector<1x128xf32>
    %2315 = arith.maximumf %2313, %2314 : vector<1x128xf32>
    %2316 = arith.mulf %2315, %2292 : vector<1x128xf32>
    %2317 = arith.mulf %2311, %2311 : vector<1x128xf32>
    %2318 = arith.mulf %2308, %2308 : vector<1x128xf32>
    %2319 = arith.subf %2317, %2318 : vector<1x128xf32>
    %2320 = vector.broadcast %2285 : vector<1x1xf32> to vector<1x128xf32>
    %2321 = arith.mulf %2319, %2320 : vector<1x128xf32>
    %2322 = arith.subf %2316, %2321 : vector<1x128xf32>
    %2323 = vector.broadcast %2278 : vector<1x1xf32> to vector<1x128xf32>
    %2324 = arith.mulf %2322, %2323 : vector<1x128xf32>
    %2325 = arith.addf %2321, %2324 : vector<1x128xf32>
    %2326 = arith.addf %2305, %2325 : vector<1x128xf32>
    %2327 = arith.subf %2298, %7 : vector<1x128xf32>
    %cst_311 = arith.constant 0.000000e+00 : f32
    %2328 = vector.broadcast %cst_311 : f32 to vector<1x128xf32>
    %2329 = arith.maximumf %2327, %2328 : vector<1x128xf32>
    %2330 = arith.subf %2304, %7 : vector<1x128xf32>
    %cst_312 = arith.constant 0.000000e+00 : f32
    %2331 = vector.broadcast %cst_312 : f32 to vector<1x128xf32>
    %2332 = arith.maximumf %2330, %2331 : vector<1x128xf32>
    %2333 = vector.broadcast %2263 : vector<1x1xf32> to vector<1x128xf32>
    %2334 = arith.subf %2333, %7 : vector<1x128xf32>
    %cst_313 = arith.constant 0.000000e+00 : f32
    %2335 = vector.broadcast %cst_313 : f32 to vector<1x128xf32>
    %2336 = arith.maximumf %2334, %2335 : vector<1x128xf32>
    %2337 = arith.mulf %2336, %2292 : vector<1x128xf32>
    %2338 = arith.mulf %2332, %2332 : vector<1x128xf32>
    %2339 = arith.mulf %2329, %2329 : vector<1x128xf32>
    %2340 = arith.subf %2338, %2339 : vector<1x128xf32>
    %2341 = vector.broadcast %2285 : vector<1x1xf32> to vector<1x128xf32>
    %2342 = arith.mulf %2340, %2341 : vector<1x128xf32>
    %2343 = arith.subf %2337, %2342 : vector<1x128xf32>
    %2344 = vector.broadcast %2278 : vector<1x1xf32> to vector<1x128xf32>
    %2345 = arith.mulf %2343, %2344 : vector<1x128xf32>
    %2346 = arith.addf %2342, %2345 : vector<1x128xf32>
    %2347 = arith.subf %2326, %2346 : vector<1x128xf32>
    %2348 = arith.subf %2261, %2347 : vector<1x128xf32>
    %2349 = vector.extract_strided_slice %2131 {offsets = [0, 16], sizes = [1, 1], strides = [1, 1]} : vector<1x20xf32> to vector<1x1xf32>
    %2350 = vector.extract_strided_slice %2131 {offsets = [0, 17], sizes = [1, 1], strides = [1, 1]} : vector<1x20xf32> to vector<1x1xf32>
    %2351 = vector.extract_strided_slice %2131 {offsets = [0, 18], sizes = [1, 1], strides = [1, 1]} : vector<1x20xf32> to vector<1x1xf32>
    %2352 = vector.extract_strided_slice %2131 {offsets = [0, 19], sizes = [1, 1], strides = [1, 1]} : vector<1x20xf32> to vector<1x1xf32>
    %2353 = arith.subf %2351, %2349 : vector<1x1xf32>
    %2354 = math.absf %2353 : vector<1x1xf32>
    %cst_314 = arith.constant 9.99999971E-10 : f32
    %2355 = vector.broadcast %cst_314 : f32 to vector<1x1xf32>
    %2356 = arith.cmpf olt, %2354, %2355 : vector<1x1xf32>
    %cst_315 = arith.constant 1.000000e+00 : f32
    %2357 = vector.broadcast %cst_315 : f32 to vector<1x1xf32>
    %2358 = arith.select %2356, %2357, %2353 : vector<1x1xi1>, vector<1x1xf32>
    %2359 = arith.subf %2352, %2350 : vector<1x1xf32>
    %2360 = arith.divf %2359, %2358 : vector<1x1xf32>
    %2361 = math.absf %2360 : vector<1x1xf32>
    %cst_316 = arith.constant 9.99999971E-10 : f32
    %2362 = vector.broadcast %cst_316 : f32 to vector<1x1xf32>
    %2363 = arith.cmpf olt, %2361, %2362 : vector<1x1xf32>
    %2364 = arith.extui %2363 : vector<1x1xi1> to vector<1x1xi32>
    %2365 = arith.sitofp %2364 : vector<1x1xi32> to vector<1x1xf32>
    %2366 = math.absf %2360 : vector<1x1xf32>
    %cst_317 = arith.constant 9.99999971E-10 : f32
    %2367 = vector.broadcast %cst_317 : f32 to vector<1x1xf32>
    %2368 = arith.cmpf olt, %2366, %2367 : vector<1x1xf32>
    %cst_318 = arith.constant 1.000000e+00 : f32
    %2369 = vector.broadcast %cst_318 : f32 to vector<1x1xf32>
    %2370 = arith.select %2368, %2369, %2360 : vector<1x1xi1>, vector<1x1xf32>
    %cst_319 = arith.constant 5.000000e-01 : f32
    %2371 = vector.broadcast %cst_319 : f32 to vector<1x1xf32>
    %2372 = arith.divf %2371, %2370 : vector<1x1xf32>
    %2373 = vector.broadcast %2349 : vector<1x1xf32> to vector<1x128xf32>
    %2374 = arith.maximumf %2373, %4 : vector<1x128xf32>
    %2375 = arith.minimumf %2374, %6 : vector<1x128xf32>
    %2376 = vector.broadcast %2351 : vector<1x1xf32> to vector<1x128xf32>
    %2377 = arith.maximumf %2376, %4 : vector<1x128xf32>
    %2378 = arith.minimumf %2377, %6 : vector<1x128xf32>
    %2379 = arith.subf %2378, %2375 : vector<1x128xf32>
    %2380 = vector.broadcast %2349 : vector<1x1xf32> to vector<1x128xf32>
    %2381 = arith.subf %2375, %2380 : vector<1x128xf32>
    %2382 = vector.broadcast %2360 : vector<1x1xf32> to vector<1x128xf32>
    %2383 = arith.mulf %2382, %2381 : vector<1x128xf32>
    %2384 = vector.broadcast %2350 : vector<1x1xf32> to vector<1x128xf32>
    %2385 = arith.addf %2384, %2383 : vector<1x128xf32>
    %2386 = vector.broadcast %2349 : vector<1x1xf32> to vector<1x128xf32>
    %2387 = arith.subf %2378, %2386 : vector<1x128xf32>
    %2388 = vector.broadcast %2360 : vector<1x1xf32> to vector<1x128xf32>
    %2389 = arith.mulf %2388, %2387 : vector<1x128xf32>
    %2390 = vector.broadcast %2350 : vector<1x1xf32> to vector<1x128xf32>
    %2391 = arith.addf %2390, %2389 : vector<1x128xf32>
    %2392 = arith.mulf %5, %2379 : vector<1x128xf32>
    %2393 = arith.subf %2385, %5 : vector<1x128xf32>
    %cst_320 = arith.constant 0.000000e+00 : f32
    %2394 = vector.broadcast %cst_320 : f32 to vector<1x128xf32>
    %2395 = arith.maximumf %2393, %2394 : vector<1x128xf32>
    %2396 = arith.subf %2391, %5 : vector<1x128xf32>
    %cst_321 = arith.constant 0.000000e+00 : f32
    %2397 = vector.broadcast %cst_321 : f32 to vector<1x128xf32>
    %2398 = arith.maximumf %2396, %2397 : vector<1x128xf32>
    %2399 = vector.broadcast %2350 : vector<1x1xf32> to vector<1x128xf32>
    %2400 = arith.subf %2399, %5 : vector<1x128xf32>
    %cst_322 = arith.constant 0.000000e+00 : f32
    %2401 = vector.broadcast %cst_322 : f32 to vector<1x128xf32>
    %2402 = arith.maximumf %2400, %2401 : vector<1x128xf32>
    %2403 = arith.mulf %2402, %2379 : vector<1x128xf32>
    %2404 = arith.mulf %2398, %2398 : vector<1x128xf32>
    %2405 = arith.mulf %2395, %2395 : vector<1x128xf32>
    %2406 = arith.subf %2404, %2405 : vector<1x128xf32>
    %2407 = vector.broadcast %2372 : vector<1x1xf32> to vector<1x128xf32>
    %2408 = arith.mulf %2406, %2407 : vector<1x128xf32>
    %2409 = arith.subf %2403, %2408 : vector<1x128xf32>
    %2410 = vector.broadcast %2365 : vector<1x1xf32> to vector<1x128xf32>
    %2411 = arith.mulf %2409, %2410 : vector<1x128xf32>
    %2412 = arith.addf %2408, %2411 : vector<1x128xf32>
    %2413 = arith.addf %2392, %2412 : vector<1x128xf32>
    %2414 = arith.subf %2385, %7 : vector<1x128xf32>
    %cst_323 = arith.constant 0.000000e+00 : f32
    %2415 = vector.broadcast %cst_323 : f32 to vector<1x128xf32>
    %2416 = arith.maximumf %2414, %2415 : vector<1x128xf32>
    %2417 = arith.subf %2391, %7 : vector<1x128xf32>
    %cst_324 = arith.constant 0.000000e+00 : f32
    %2418 = vector.broadcast %cst_324 : f32 to vector<1x128xf32>
    %2419 = arith.maximumf %2417, %2418 : vector<1x128xf32>
    %2420 = vector.broadcast %2350 : vector<1x1xf32> to vector<1x128xf32>
    %2421 = arith.subf %2420, %7 : vector<1x128xf32>
    %cst_325 = arith.constant 0.000000e+00 : f32
    %2422 = vector.broadcast %cst_325 : f32 to vector<1x128xf32>
    %2423 = arith.maximumf %2421, %2422 : vector<1x128xf32>
    %2424 = arith.mulf %2423, %2379 : vector<1x128xf32>
    %2425 = arith.mulf %2419, %2419 : vector<1x128xf32>
    %2426 = arith.mulf %2416, %2416 : vector<1x128xf32>
    %2427 = arith.subf %2425, %2426 : vector<1x128xf32>
    %2428 = vector.broadcast %2372 : vector<1x1xf32> to vector<1x128xf32>
    %2429 = arith.mulf %2427, %2428 : vector<1x128xf32>
    %2430 = arith.subf %2424, %2429 : vector<1x128xf32>
    %2431 = vector.broadcast %2365 : vector<1x1xf32> to vector<1x128xf32>
    %2432 = arith.mulf %2430, %2431 : vector<1x128xf32>
    %2433 = arith.addf %2429, %2432 : vector<1x128xf32>
    %2434 = arith.subf %2413, %2433 : vector<1x128xf32>
    %2435 = arith.subf %2348, %2434 : vector<1x128xf32>
    %2436 = vector.extract_strided_slice %2131 {offsets = [0, 18], sizes = [1, 1], strides = [1, 1]} : vector<1x20xf32> to vector<1x1xf32>
    %2437 = vector.extract_strided_slice %2131 {offsets = [0, 19], sizes = [1, 1], strides = [1, 1]} : vector<1x20xf32> to vector<1x1xf32>
    %2438 = vector.extract_strided_slice %2131 {offsets = [0, 12], sizes = [1, 1], strides = [1, 1]} : vector<1x20xf32> to vector<1x1xf32>
    %2439 = vector.extract_strided_slice %2131 {offsets = [0, 13], sizes = [1, 1], strides = [1, 1]} : vector<1x20xf32> to vector<1x1xf32>
    %2440 = arith.subf %2438, %2436 : vector<1x1xf32>
    %2441 = math.absf %2440 : vector<1x1xf32>
    %cst_326 = arith.constant 9.99999971E-10 : f32
    %2442 = vector.broadcast %cst_326 : f32 to vector<1x1xf32>
    %2443 = arith.cmpf olt, %2441, %2442 : vector<1x1xf32>
    %cst_327 = arith.constant 1.000000e+00 : f32
    %2444 = vector.broadcast %cst_327 : f32 to vector<1x1xf32>
    %2445 = arith.select %2443, %2444, %2440 : vector<1x1xi1>, vector<1x1xf32>
    %2446 = arith.subf %2439, %2437 : vector<1x1xf32>
    %2447 = arith.divf %2446, %2445 : vector<1x1xf32>
    %2448 = math.absf %2447 : vector<1x1xf32>
    %cst_328 = arith.constant 9.99999971E-10 : f32
    %2449 = vector.broadcast %cst_328 : f32 to vector<1x1xf32>
    %2450 = arith.cmpf olt, %2448, %2449 : vector<1x1xf32>
    %2451 = arith.extui %2450 : vector<1x1xi1> to vector<1x1xi32>
    %2452 = arith.sitofp %2451 : vector<1x1xi32> to vector<1x1xf32>
    %2453 = math.absf %2447 : vector<1x1xf32>
    %cst_329 = arith.constant 9.99999971E-10 : f32
    %2454 = vector.broadcast %cst_329 : f32 to vector<1x1xf32>
    %2455 = arith.cmpf olt, %2453, %2454 : vector<1x1xf32>
    %cst_330 = arith.constant 1.000000e+00 : f32
    %2456 = vector.broadcast %cst_330 : f32 to vector<1x1xf32>
    %2457 = arith.select %2455, %2456, %2447 : vector<1x1xi1>, vector<1x1xf32>
    %cst_331 = arith.constant 5.000000e-01 : f32
    %2458 = vector.broadcast %cst_331 : f32 to vector<1x1xf32>
    %2459 = arith.divf %2458, %2457 : vector<1x1xf32>
    %2460 = vector.broadcast %2436 : vector<1x1xf32> to vector<1x128xf32>
    %2461 = arith.maximumf %2460, %4 : vector<1x128xf32>
    %2462 = arith.minimumf %2461, %6 : vector<1x128xf32>
    %2463 = vector.broadcast %2438 : vector<1x1xf32> to vector<1x128xf32>
    %2464 = arith.maximumf %2463, %4 : vector<1x128xf32>
    %2465 = arith.minimumf %2464, %6 : vector<1x128xf32>
    %2466 = arith.subf %2465, %2462 : vector<1x128xf32>
    %2467 = vector.broadcast %2436 : vector<1x1xf32> to vector<1x128xf32>
    %2468 = arith.subf %2462, %2467 : vector<1x128xf32>
    %2469 = vector.broadcast %2447 : vector<1x1xf32> to vector<1x128xf32>
    %2470 = arith.mulf %2469, %2468 : vector<1x128xf32>
    %2471 = vector.broadcast %2437 : vector<1x1xf32> to vector<1x128xf32>
    %2472 = arith.addf %2471, %2470 : vector<1x128xf32>
    %2473 = vector.broadcast %2436 : vector<1x1xf32> to vector<1x128xf32>
    %2474 = arith.subf %2465, %2473 : vector<1x128xf32>
    %2475 = vector.broadcast %2447 : vector<1x1xf32> to vector<1x128xf32>
    %2476 = arith.mulf %2475, %2474 : vector<1x128xf32>
    %2477 = vector.broadcast %2437 : vector<1x1xf32> to vector<1x128xf32>
    %2478 = arith.addf %2477, %2476 : vector<1x128xf32>
    %2479 = arith.mulf %5, %2466 : vector<1x128xf32>
    %2480 = arith.subf %2472, %5 : vector<1x128xf32>
    %cst_332 = arith.constant 0.000000e+00 : f32
    %2481 = vector.broadcast %cst_332 : f32 to vector<1x128xf32>
    %2482 = arith.maximumf %2480, %2481 : vector<1x128xf32>
    %2483 = arith.subf %2478, %5 : vector<1x128xf32>
    %cst_333 = arith.constant 0.000000e+00 : f32
    %2484 = vector.broadcast %cst_333 : f32 to vector<1x128xf32>
    %2485 = arith.maximumf %2483, %2484 : vector<1x128xf32>
    %2486 = vector.broadcast %2437 : vector<1x1xf32> to vector<1x128xf32>
    %2487 = arith.subf %2486, %5 : vector<1x128xf32>
    %cst_334 = arith.constant 0.000000e+00 : f32
    %2488 = vector.broadcast %cst_334 : f32 to vector<1x128xf32>
    %2489 = arith.maximumf %2487, %2488 : vector<1x128xf32>
    %2490 = arith.mulf %2489, %2466 : vector<1x128xf32>
    %2491 = arith.mulf %2485, %2485 : vector<1x128xf32>
    %2492 = arith.mulf %2482, %2482 : vector<1x128xf32>
    %2493 = arith.subf %2491, %2492 : vector<1x128xf32>
    %2494 = vector.broadcast %2459 : vector<1x1xf32> to vector<1x128xf32>
    %2495 = arith.mulf %2493, %2494 : vector<1x128xf32>
    %2496 = arith.subf %2490, %2495 : vector<1x128xf32>
    %2497 = vector.broadcast %2452 : vector<1x1xf32> to vector<1x128xf32>
    %2498 = arith.mulf %2496, %2497 : vector<1x128xf32>
    %2499 = arith.addf %2495, %2498 : vector<1x128xf32>
    %2500 = arith.addf %2479, %2499 : vector<1x128xf32>
    %2501 = arith.subf %2472, %7 : vector<1x128xf32>
    %cst_335 = arith.constant 0.000000e+00 : f32
    %2502 = vector.broadcast %cst_335 : f32 to vector<1x128xf32>
    %2503 = arith.maximumf %2501, %2502 : vector<1x128xf32>
    %2504 = arith.subf %2478, %7 : vector<1x128xf32>
    %cst_336 = arith.constant 0.000000e+00 : f32
    %2505 = vector.broadcast %cst_336 : f32 to vector<1x128xf32>
    %2506 = arith.maximumf %2504, %2505 : vector<1x128xf32>
    %2507 = vector.broadcast %2437 : vector<1x1xf32> to vector<1x128xf32>
    %2508 = arith.subf %2507, %7 : vector<1x128xf32>
    %cst_337 = arith.constant 0.000000e+00 : f32
    %2509 = vector.broadcast %cst_337 : f32 to vector<1x128xf32>
    %2510 = arith.maximumf %2508, %2509 : vector<1x128xf32>
    %2511 = arith.mulf %2510, %2466 : vector<1x128xf32>
    %2512 = arith.mulf %2506, %2506 : vector<1x128xf32>
    %2513 = arith.mulf %2503, %2503 : vector<1x128xf32>
    %2514 = arith.subf %2512, %2513 : vector<1x128xf32>
    %2515 = vector.broadcast %2459 : vector<1x1xf32> to vector<1x128xf32>
    %2516 = arith.mulf %2514, %2515 : vector<1x128xf32>
    %2517 = arith.subf %2511, %2516 : vector<1x128xf32>
    %2518 = vector.broadcast %2452 : vector<1x1xf32> to vector<1x128xf32>
    %2519 = arith.mulf %2517, %2518 : vector<1x128xf32>
    %2520 = arith.addf %2516, %2519 : vector<1x128xf32>
    %2521 = arith.subf %2500, %2520 : vector<1x128xf32>
    %2522 = arith.subf %2435, %2521 : vector<1x128xf32>
    %2523 = math.absf %2522 : vector<1x128xf32>
    %2524 = vector.broadcast %2143 : vector<1x1xf32> to vector<1x128xf32>
    %2525 = arith.addf %2524, %20 : vector<1x128xf32>
    %2526 = arith.subf %2525, %2523 : vector<1x128xf32>
    %cst_338 = arith.constant 9.99999993E-9 : f32
    %2527 = vector.broadcast %cst_338 : f32 to vector<1x128xf32>
    %2528 = arith.maximumf %2526, %2527 : vector<1x128xf32>
    %2529 = arith.divf %2523, %2528 : vector<1x128xf32>
    %2530 = arith.cmpf ogt, %2173, %2111 : vector<1x128xf32>
    %2531 = arith.select %2530, %2173, %2111 : vector<1x128xi1>, vector<1x128xf32>
    %2532 = arith.select %2530, %2529, %2112 : vector<1x128xi1>, vector<1x128xf32>
    %2533 = vector.shape_cast %2132 : vector<1x1xf32> to vector<1x1xf32>
    %2534 = vector.broadcast %2533 : vector<1x1xf32> to vector<1x128xf32>
    %2535 = arith.select %2530, %2534, %2115 : vector<1x128xi1>, vector<1x128xf32>
    %2536 = vector.shape_cast %2133 : vector<1x1xf32> to vector<1x1xf32>
    %2537 = vector.broadcast %2536 : vector<1x1xf32> to vector<1x128xf32>
    %2538 = arith.select %2530, %2537, %2118 : vector<1x128xi1>, vector<1x128xf32>
    %2539 = vector.shape_cast %2134 : vector<1x1xf32> to vector<1x1xf32>
    %2540 = vector.broadcast %2539 : vector<1x1xf32> to vector<1x128xf32>
    %2541 = arith.select %2530, %2540, %2121 : vector<1x128xi1>, vector<1x128xf32>
    %2542 = vector.shape_cast %2135 : vector<1x1xf32> to vector<1x1xf32>
    %2543 = vector.broadcast %2542 : vector<1x1xf32> to vector<1x128xf32>
    %2544 = arith.select %2530, %2543, %2124 : vector<1x128xi1>, vector<1x128xf32>
    %2545 = vector.shape_cast %2136 : vector<1x1xf32> to vector<1x1xf32>
    %2546 = vector.broadcast %2545 : vector<1x1xf32> to vector<1x128xf32>
    %2547 = arith.select %2530, %2546, %2127 : vector<1x128xi1>, vector<1x128xf32>
    %2548 = vector.shape_cast %2137 : vector<1x1xf32> to vector<1x1xf32>
    %2549 = vector.broadcast %2548 : vector<1x1xf32> to vector<1x128xf32>
    %2550 = arith.select %2530, %2549, %2130 : vector<1x128xi1>, vector<1x128xf32>
    %2551 = vector.extract_strided_slice %22 {offsets = [6, 0], sizes = [1, 20], strides = [1, 1]} : vector<8x20xf32> to vector<1x20xf32>
    %2552 = vector.extract_strided_slice %2551 {offsets = [0, 0], sizes = [1, 1], strides = [1, 1]} : vector<1x20xf32> to vector<1x1xf32>
    %2553 = vector.extract_strided_slice %2551 {offsets = [0, 1], sizes = [1, 1], strides = [1, 1]} : vector<1x20xf32> to vector<1x1xf32>
    %2554 = vector.extract_strided_slice %2551 {offsets = [0, 2], sizes = [1, 1], strides = [1, 1]} : vector<1x20xf32> to vector<1x1xf32>
    %2555 = vector.extract_strided_slice %2551 {offsets = [0, 3], sizes = [1, 1], strides = [1, 1]} : vector<1x20xf32> to vector<1x1xf32>
    %2556 = vector.extract_strided_slice %2551 {offsets = [0, 4], sizes = [1, 1], strides = [1, 1]} : vector<1x20xf32> to vector<1x1xf32>
    %2557 = vector.extract_strided_slice %2551 {offsets = [0, 5], sizes = [1, 1], strides = [1, 1]} : vector<1x20xf32> to vector<1x1xf32>
    %2558 = vector.extract_strided_slice %2551 {offsets = [0, 6], sizes = [1, 1], strides = [1, 1]} : vector<1x20xf32> to vector<1x1xf32>
    %2559 = vector.extract_strided_slice %2551 {offsets = [0, 7], sizes = [1, 1], strides = [1, 1]} : vector<1x20xf32> to vector<1x1xf32>
    %2560 = vector.extract_strided_slice %2551 {offsets = [0, 8], sizes = [1, 1], strides = [1, 1]} : vector<1x20xf32> to vector<1x1xf32>
    %2561 = vector.extract_strided_slice %2551 {offsets = [0, 9], sizes = [1, 1], strides = [1, 1]} : vector<1x20xf32> to vector<1x1xf32>
    %2562 = vector.extract_strided_slice %2551 {offsets = [0, 10], sizes = [1, 1], strides = [1, 1]} : vector<1x20xf32> to vector<1x1xf32>
    %2563 = vector.extract_strided_slice %2551 {offsets = [0, 11], sizes = [1, 1], strides = [1, 1]} : vector<1x20xf32> to vector<1x1xf32>
    %2564 = vector.broadcast %2561 : vector<1x1xf32> to vector<1x128xf32>
    %2565 = arith.minimumf %6, %2564 : vector<1x128xf32>
    %2566 = vector.broadcast %2559 : vector<1x1xf32> to vector<1x128xf32>
    %2567 = arith.maximumf %4, %2566 : vector<1x128xf32>
    %2568 = arith.subf %2565, %2567 : vector<1x128xf32>
    %cst_339 = arith.constant 0.000000e+00 : f32
    %2569 = vector.broadcast %cst_339 : f32 to vector<1x128xf32>
    %2570 = arith.maximumf %2568, %2569 : vector<1x128xf32>
    %2571 = vector.broadcast %2562 : vector<1x1xf32> to vector<1x128xf32>
    %2572 = arith.minimumf %7, %2571 : vector<1x128xf32>
    %2573 = vector.broadcast %2560 : vector<1x1xf32> to vector<1x128xf32>
    %2574 = arith.maximumf %5, %2573 : vector<1x128xf32>
    %2575 = arith.subf %2572, %2574 : vector<1x128xf32>
    %cst_340 = arith.constant 0.000000e+00 : f32
    %2576 = vector.broadcast %cst_340 : f32 to vector<1x128xf32>
    %2577 = arith.maximumf %2575, %2576 : vector<1x128xf32>
    %2578 = arith.mulf %2570, %2577 : vector<1x128xf32>
    %2579 = arith.subf %2561, %2559 : vector<1x1xf32>
    %2580 = arith.subf %2562, %2560 : vector<1x1xf32>
    %2581 = arith.mulf %2579, %2580 : vector<1x1xf32>
    %2582 = vector.broadcast %2581 : vector<1x1xf32> to vector<1x128xf32>
    %2583 = arith.addf %20, %2582 : vector<1x128xf32>
    %2584 = arith.subf %2583, %2578 : vector<1x128xf32>
    %cst_341 = arith.constant 9.99999993E-9 : f32
    %2585 = vector.broadcast %cst_341 : f32 to vector<1x128xf32>
    %2586 = arith.maximumf %2584, %2585 : vector<1x128xf32>
    %2587 = arith.divf %2578, %2586 : vector<1x128xf32>
    %2588 = vector.broadcast %2558 : vector<1x1xf32> to vector<1x128xf32>
    %2589 = arith.mulf %2587, %2588 : vector<1x128xf32>
    %cst_342 = arith.constant 1.000000e+00 : f32
    %2590 = vector.broadcast %cst_342 : f32 to vector<1x1xf32>
    %2591 = arith.subf %2590, %2558 : vector<1x1xf32>
    %2592 = vector.broadcast %2591 : vector<1x1xf32> to vector<1x128xf32>
    %2593 = arith.subf %2589, %2592 : vector<1x128xf32>
    %cst_343 = arith.constant 0.000000e+00 : f32
    %2594 = vector.broadcast %cst_343 : f32 to vector<1x128xf32>
    %2595 = vector.extract_strided_slice %2551 {offsets = [0, 12], sizes = [1, 1], strides = [1, 1]} : vector<1x20xf32> to vector<1x1xf32>
    %2596 = vector.extract_strided_slice %2551 {offsets = [0, 13], sizes = [1, 1], strides = [1, 1]} : vector<1x20xf32> to vector<1x1xf32>
    %2597 = vector.extract_strided_slice %2551 {offsets = [0, 14], sizes = [1, 1], strides = [1, 1]} : vector<1x20xf32> to vector<1x1xf32>
    %2598 = vector.extract_strided_slice %2551 {offsets = [0, 15], sizes = [1, 1], strides = [1, 1]} : vector<1x20xf32> to vector<1x1xf32>
    %2599 = arith.subf %2597, %2595 : vector<1x1xf32>
    %2600 = math.absf %2599 : vector<1x1xf32>
    %cst_344 = arith.constant 9.99999971E-10 : f32
    %2601 = vector.broadcast %cst_344 : f32 to vector<1x1xf32>
    %2602 = arith.cmpf olt, %2600, %2601 : vector<1x1xf32>
    %cst_345 = arith.constant 1.000000e+00 : f32
    %2603 = vector.broadcast %cst_345 : f32 to vector<1x1xf32>
    %2604 = arith.select %2602, %2603, %2599 : vector<1x1xi1>, vector<1x1xf32>
    %2605 = arith.subf %2598, %2596 : vector<1x1xf32>
    %2606 = arith.divf %2605, %2604 : vector<1x1xf32>
    %2607 = math.absf %2606 : vector<1x1xf32>
    %cst_346 = arith.constant 9.99999971E-10 : f32
    %2608 = vector.broadcast %cst_346 : f32 to vector<1x1xf32>
    %2609 = arith.cmpf olt, %2607, %2608 : vector<1x1xf32>
    %2610 = arith.extui %2609 : vector<1x1xi1> to vector<1x1xi32>
    %2611 = arith.sitofp %2610 : vector<1x1xi32> to vector<1x1xf32>
    %2612 = math.absf %2606 : vector<1x1xf32>
    %cst_347 = arith.constant 9.99999971E-10 : f32
    %2613 = vector.broadcast %cst_347 : f32 to vector<1x1xf32>
    %2614 = arith.cmpf olt, %2612, %2613 : vector<1x1xf32>
    %cst_348 = arith.constant 1.000000e+00 : f32
    %2615 = vector.broadcast %cst_348 : f32 to vector<1x1xf32>
    %2616 = arith.select %2614, %2615, %2606 : vector<1x1xi1>, vector<1x1xf32>
    %cst_349 = arith.constant 5.000000e-01 : f32
    %2617 = vector.broadcast %cst_349 : f32 to vector<1x1xf32>
    %2618 = arith.divf %2617, %2616 : vector<1x1xf32>
    %2619 = vector.broadcast %2595 : vector<1x1xf32> to vector<1x128xf32>
    %2620 = arith.maximumf %2619, %4 : vector<1x128xf32>
    %2621 = arith.minimumf %2620, %6 : vector<1x128xf32>
    %2622 = vector.broadcast %2597 : vector<1x1xf32> to vector<1x128xf32>
    %2623 = arith.maximumf %2622, %4 : vector<1x128xf32>
    %2624 = arith.minimumf %2623, %6 : vector<1x128xf32>
    %2625 = arith.subf %2624, %2621 : vector<1x128xf32>
    %2626 = vector.broadcast %2595 : vector<1x1xf32> to vector<1x128xf32>
    %2627 = arith.subf %2621, %2626 : vector<1x128xf32>
    %2628 = vector.broadcast %2606 : vector<1x1xf32> to vector<1x128xf32>
    %2629 = arith.mulf %2628, %2627 : vector<1x128xf32>
    %2630 = vector.broadcast %2596 : vector<1x1xf32> to vector<1x128xf32>
    %2631 = arith.addf %2630, %2629 : vector<1x128xf32>
    %2632 = vector.broadcast %2595 : vector<1x1xf32> to vector<1x128xf32>
    %2633 = arith.subf %2624, %2632 : vector<1x128xf32>
    %2634 = vector.broadcast %2606 : vector<1x1xf32> to vector<1x128xf32>
    %2635 = arith.mulf %2634, %2633 : vector<1x128xf32>
    %2636 = vector.broadcast %2596 : vector<1x1xf32> to vector<1x128xf32>
    %2637 = arith.addf %2636, %2635 : vector<1x128xf32>
    %2638 = arith.mulf %5, %2625 : vector<1x128xf32>
    %2639 = arith.subf %2631, %5 : vector<1x128xf32>
    %cst_350 = arith.constant 0.000000e+00 : f32
    %2640 = vector.broadcast %cst_350 : f32 to vector<1x128xf32>
    %2641 = arith.maximumf %2639, %2640 : vector<1x128xf32>
    %2642 = arith.subf %2637, %5 : vector<1x128xf32>
    %cst_351 = arith.constant 0.000000e+00 : f32
    %2643 = vector.broadcast %cst_351 : f32 to vector<1x128xf32>
    %2644 = arith.maximumf %2642, %2643 : vector<1x128xf32>
    %2645 = vector.broadcast %2596 : vector<1x1xf32> to vector<1x128xf32>
    %2646 = arith.subf %2645, %5 : vector<1x128xf32>
    %cst_352 = arith.constant 0.000000e+00 : f32
    %2647 = vector.broadcast %cst_352 : f32 to vector<1x128xf32>
    %2648 = arith.maximumf %2646, %2647 : vector<1x128xf32>
    %2649 = arith.mulf %2648, %2625 : vector<1x128xf32>
    %2650 = arith.mulf %2644, %2644 : vector<1x128xf32>
    %2651 = arith.mulf %2641, %2641 : vector<1x128xf32>
    %2652 = arith.subf %2650, %2651 : vector<1x128xf32>
    %2653 = vector.broadcast %2618 : vector<1x1xf32> to vector<1x128xf32>
    %2654 = arith.mulf %2652, %2653 : vector<1x128xf32>
    %2655 = arith.subf %2649, %2654 : vector<1x128xf32>
    %2656 = vector.broadcast %2611 : vector<1x1xf32> to vector<1x128xf32>
    %2657 = arith.mulf %2655, %2656 : vector<1x128xf32>
    %2658 = arith.addf %2654, %2657 : vector<1x128xf32>
    %2659 = arith.addf %2638, %2658 : vector<1x128xf32>
    %2660 = arith.subf %2631, %7 : vector<1x128xf32>
    %cst_353 = arith.constant 0.000000e+00 : f32
    %2661 = vector.broadcast %cst_353 : f32 to vector<1x128xf32>
    %2662 = arith.maximumf %2660, %2661 : vector<1x128xf32>
    %2663 = arith.subf %2637, %7 : vector<1x128xf32>
    %cst_354 = arith.constant 0.000000e+00 : f32
    %2664 = vector.broadcast %cst_354 : f32 to vector<1x128xf32>
    %2665 = arith.maximumf %2663, %2664 : vector<1x128xf32>
    %2666 = vector.broadcast %2596 : vector<1x1xf32> to vector<1x128xf32>
    %2667 = arith.subf %2666, %7 : vector<1x128xf32>
    %cst_355 = arith.constant 0.000000e+00 : f32
    %2668 = vector.broadcast %cst_355 : f32 to vector<1x128xf32>
    %2669 = arith.maximumf %2667, %2668 : vector<1x128xf32>
    %2670 = arith.mulf %2669, %2625 : vector<1x128xf32>
    %2671 = arith.mulf %2665, %2665 : vector<1x128xf32>
    %2672 = arith.mulf %2662, %2662 : vector<1x128xf32>
    %2673 = arith.subf %2671, %2672 : vector<1x128xf32>
    %2674 = vector.broadcast %2618 : vector<1x1xf32> to vector<1x128xf32>
    %2675 = arith.mulf %2673, %2674 : vector<1x128xf32>
    %2676 = arith.subf %2670, %2675 : vector<1x128xf32>
    %2677 = vector.broadcast %2611 : vector<1x1xf32> to vector<1x128xf32>
    %2678 = arith.mulf %2676, %2677 : vector<1x128xf32>
    %2679 = arith.addf %2675, %2678 : vector<1x128xf32>
    %2680 = arith.subf %2659, %2679 : vector<1x128xf32>
    %2681 = arith.subf %2594, %2680 : vector<1x128xf32>
    %2682 = vector.extract_strided_slice %2551 {offsets = [0, 14], sizes = [1, 1], strides = [1, 1]} : vector<1x20xf32> to vector<1x1xf32>
    %2683 = vector.extract_strided_slice %2551 {offsets = [0, 15], sizes = [1, 1], strides = [1, 1]} : vector<1x20xf32> to vector<1x1xf32>
    %2684 = vector.extract_strided_slice %2551 {offsets = [0, 16], sizes = [1, 1], strides = [1, 1]} : vector<1x20xf32> to vector<1x1xf32>
    %2685 = vector.extract_strided_slice %2551 {offsets = [0, 17], sizes = [1, 1], strides = [1, 1]} : vector<1x20xf32> to vector<1x1xf32>
    %2686 = arith.subf %2684, %2682 : vector<1x1xf32>
    %2687 = math.absf %2686 : vector<1x1xf32>
    %cst_356 = arith.constant 9.99999971E-10 : f32
    %2688 = vector.broadcast %cst_356 : f32 to vector<1x1xf32>
    %2689 = arith.cmpf olt, %2687, %2688 : vector<1x1xf32>
    %cst_357 = arith.constant 1.000000e+00 : f32
    %2690 = vector.broadcast %cst_357 : f32 to vector<1x1xf32>
    %2691 = arith.select %2689, %2690, %2686 : vector<1x1xi1>, vector<1x1xf32>
    %2692 = arith.subf %2685, %2683 : vector<1x1xf32>
    %2693 = arith.divf %2692, %2691 : vector<1x1xf32>
    %2694 = math.absf %2693 : vector<1x1xf32>
    %cst_358 = arith.constant 9.99999971E-10 : f32
    %2695 = vector.broadcast %cst_358 : f32 to vector<1x1xf32>
    %2696 = arith.cmpf olt, %2694, %2695 : vector<1x1xf32>
    %2697 = arith.extui %2696 : vector<1x1xi1> to vector<1x1xi32>
    %2698 = arith.sitofp %2697 : vector<1x1xi32> to vector<1x1xf32>
    %2699 = math.absf %2693 : vector<1x1xf32>
    %cst_359 = arith.constant 9.99999971E-10 : f32
    %2700 = vector.broadcast %cst_359 : f32 to vector<1x1xf32>
    %2701 = arith.cmpf olt, %2699, %2700 : vector<1x1xf32>
    %cst_360 = arith.constant 1.000000e+00 : f32
    %2702 = vector.broadcast %cst_360 : f32 to vector<1x1xf32>
    %2703 = arith.select %2701, %2702, %2693 : vector<1x1xi1>, vector<1x1xf32>
    %cst_361 = arith.constant 5.000000e-01 : f32
    %2704 = vector.broadcast %cst_361 : f32 to vector<1x1xf32>
    %2705 = arith.divf %2704, %2703 : vector<1x1xf32>
    %2706 = vector.broadcast %2682 : vector<1x1xf32> to vector<1x128xf32>
    %2707 = arith.maximumf %2706, %4 : vector<1x128xf32>
    %2708 = arith.minimumf %2707, %6 : vector<1x128xf32>
    %2709 = vector.broadcast %2684 : vector<1x1xf32> to vector<1x128xf32>
    %2710 = arith.maximumf %2709, %4 : vector<1x128xf32>
    %2711 = arith.minimumf %2710, %6 : vector<1x128xf32>
    %2712 = arith.subf %2711, %2708 : vector<1x128xf32>
    %2713 = vector.broadcast %2682 : vector<1x1xf32> to vector<1x128xf32>
    %2714 = arith.subf %2708, %2713 : vector<1x128xf32>
    %2715 = vector.broadcast %2693 : vector<1x1xf32> to vector<1x128xf32>
    %2716 = arith.mulf %2715, %2714 : vector<1x128xf32>
    %2717 = vector.broadcast %2683 : vector<1x1xf32> to vector<1x128xf32>
    %2718 = arith.addf %2717, %2716 : vector<1x128xf32>
    %2719 = vector.broadcast %2682 : vector<1x1xf32> to vector<1x128xf32>
    %2720 = arith.subf %2711, %2719 : vector<1x128xf32>
    %2721 = vector.broadcast %2693 : vector<1x1xf32> to vector<1x128xf32>
    %2722 = arith.mulf %2721, %2720 : vector<1x128xf32>
    %2723 = vector.broadcast %2683 : vector<1x1xf32> to vector<1x128xf32>
    %2724 = arith.addf %2723, %2722 : vector<1x128xf32>
    %2725 = arith.mulf %5, %2712 : vector<1x128xf32>
    %2726 = arith.subf %2718, %5 : vector<1x128xf32>
    %cst_362 = arith.constant 0.000000e+00 : f32
    %2727 = vector.broadcast %cst_362 : f32 to vector<1x128xf32>
    %2728 = arith.maximumf %2726, %2727 : vector<1x128xf32>
    %2729 = arith.subf %2724, %5 : vector<1x128xf32>
    %cst_363 = arith.constant 0.000000e+00 : f32
    %2730 = vector.broadcast %cst_363 : f32 to vector<1x128xf32>
    %2731 = arith.maximumf %2729, %2730 : vector<1x128xf32>
    %2732 = vector.broadcast %2683 : vector<1x1xf32> to vector<1x128xf32>
    %2733 = arith.subf %2732, %5 : vector<1x128xf32>
    %cst_364 = arith.constant 0.000000e+00 : f32
    %2734 = vector.broadcast %cst_364 : f32 to vector<1x128xf32>
    %2735 = arith.maximumf %2733, %2734 : vector<1x128xf32>
    %2736 = arith.mulf %2735, %2712 : vector<1x128xf32>
    %2737 = arith.mulf %2731, %2731 : vector<1x128xf32>
    %2738 = arith.mulf %2728, %2728 : vector<1x128xf32>
    %2739 = arith.subf %2737, %2738 : vector<1x128xf32>
    %2740 = vector.broadcast %2705 : vector<1x1xf32> to vector<1x128xf32>
    %2741 = arith.mulf %2739, %2740 : vector<1x128xf32>
    %2742 = arith.subf %2736, %2741 : vector<1x128xf32>
    %2743 = vector.broadcast %2698 : vector<1x1xf32> to vector<1x128xf32>
    %2744 = arith.mulf %2742, %2743 : vector<1x128xf32>
    %2745 = arith.addf %2741, %2744 : vector<1x128xf32>
    %2746 = arith.addf %2725, %2745 : vector<1x128xf32>
    %2747 = arith.subf %2718, %7 : vector<1x128xf32>
    %cst_365 = arith.constant 0.000000e+00 : f32
    %2748 = vector.broadcast %cst_365 : f32 to vector<1x128xf32>
    %2749 = arith.maximumf %2747, %2748 : vector<1x128xf32>
    %2750 = arith.subf %2724, %7 : vector<1x128xf32>
    %cst_366 = arith.constant 0.000000e+00 : f32
    %2751 = vector.broadcast %cst_366 : f32 to vector<1x128xf32>
    %2752 = arith.maximumf %2750, %2751 : vector<1x128xf32>
    %2753 = vector.broadcast %2683 : vector<1x1xf32> to vector<1x128xf32>
    %2754 = arith.subf %2753, %7 : vector<1x128xf32>
    %cst_367 = arith.constant 0.000000e+00 : f32
    %2755 = vector.broadcast %cst_367 : f32 to vector<1x128xf32>
    %2756 = arith.maximumf %2754, %2755 : vector<1x128xf32>
    %2757 = arith.mulf %2756, %2712 : vector<1x128xf32>
    %2758 = arith.mulf %2752, %2752 : vector<1x128xf32>
    %2759 = arith.mulf %2749, %2749 : vector<1x128xf32>
    %2760 = arith.subf %2758, %2759 : vector<1x128xf32>
    %2761 = vector.broadcast %2705 : vector<1x1xf32> to vector<1x128xf32>
    %2762 = arith.mulf %2760, %2761 : vector<1x128xf32>
    %2763 = arith.subf %2757, %2762 : vector<1x128xf32>
    %2764 = vector.broadcast %2698 : vector<1x1xf32> to vector<1x128xf32>
    %2765 = arith.mulf %2763, %2764 : vector<1x128xf32>
    %2766 = arith.addf %2762, %2765 : vector<1x128xf32>
    %2767 = arith.subf %2746, %2766 : vector<1x128xf32>
    %2768 = arith.subf %2681, %2767 : vector<1x128xf32>
    %2769 = vector.extract_strided_slice %2551 {offsets = [0, 16], sizes = [1, 1], strides = [1, 1]} : vector<1x20xf32> to vector<1x1xf32>
    %2770 = vector.extract_strided_slice %2551 {offsets = [0, 17], sizes = [1, 1], strides = [1, 1]} : vector<1x20xf32> to vector<1x1xf32>
    %2771 = vector.extract_strided_slice %2551 {offsets = [0, 18], sizes = [1, 1], strides = [1, 1]} : vector<1x20xf32> to vector<1x1xf32>
    %2772 = vector.extract_strided_slice %2551 {offsets = [0, 19], sizes = [1, 1], strides = [1, 1]} : vector<1x20xf32> to vector<1x1xf32>
    %2773 = arith.subf %2771, %2769 : vector<1x1xf32>
    %2774 = math.absf %2773 : vector<1x1xf32>
    %cst_368 = arith.constant 9.99999971E-10 : f32
    %2775 = vector.broadcast %cst_368 : f32 to vector<1x1xf32>
    %2776 = arith.cmpf olt, %2774, %2775 : vector<1x1xf32>
    %cst_369 = arith.constant 1.000000e+00 : f32
    %2777 = vector.broadcast %cst_369 : f32 to vector<1x1xf32>
    %2778 = arith.select %2776, %2777, %2773 : vector<1x1xi1>, vector<1x1xf32>
    %2779 = arith.subf %2772, %2770 : vector<1x1xf32>
    %2780 = arith.divf %2779, %2778 : vector<1x1xf32>
    %2781 = math.absf %2780 : vector<1x1xf32>
    %cst_370 = arith.constant 9.99999971E-10 : f32
    %2782 = vector.broadcast %cst_370 : f32 to vector<1x1xf32>
    %2783 = arith.cmpf olt, %2781, %2782 : vector<1x1xf32>
    %2784 = arith.extui %2783 : vector<1x1xi1> to vector<1x1xi32>
    %2785 = arith.sitofp %2784 : vector<1x1xi32> to vector<1x1xf32>
    %2786 = math.absf %2780 : vector<1x1xf32>
    %cst_371 = arith.constant 9.99999971E-10 : f32
    %2787 = vector.broadcast %cst_371 : f32 to vector<1x1xf32>
    %2788 = arith.cmpf olt, %2786, %2787 : vector<1x1xf32>
    %cst_372 = arith.constant 1.000000e+00 : f32
    %2789 = vector.broadcast %cst_372 : f32 to vector<1x1xf32>
    %2790 = arith.select %2788, %2789, %2780 : vector<1x1xi1>, vector<1x1xf32>
    %cst_373 = arith.constant 5.000000e-01 : f32
    %2791 = vector.broadcast %cst_373 : f32 to vector<1x1xf32>
    %2792 = arith.divf %2791, %2790 : vector<1x1xf32>
    %2793 = vector.broadcast %2769 : vector<1x1xf32> to vector<1x128xf32>
    %2794 = arith.maximumf %2793, %4 : vector<1x128xf32>
    %2795 = arith.minimumf %2794, %6 : vector<1x128xf32>
    %2796 = vector.broadcast %2771 : vector<1x1xf32> to vector<1x128xf32>
    %2797 = arith.maximumf %2796, %4 : vector<1x128xf32>
    %2798 = arith.minimumf %2797, %6 : vector<1x128xf32>
    %2799 = arith.subf %2798, %2795 : vector<1x128xf32>
    %2800 = vector.broadcast %2769 : vector<1x1xf32> to vector<1x128xf32>
    %2801 = arith.subf %2795, %2800 : vector<1x128xf32>
    %2802 = vector.broadcast %2780 : vector<1x1xf32> to vector<1x128xf32>
    %2803 = arith.mulf %2802, %2801 : vector<1x128xf32>
    %2804 = vector.broadcast %2770 : vector<1x1xf32> to vector<1x128xf32>
    %2805 = arith.addf %2804, %2803 : vector<1x128xf32>
    %2806 = vector.broadcast %2769 : vector<1x1xf32> to vector<1x128xf32>
    %2807 = arith.subf %2798, %2806 : vector<1x128xf32>
    %2808 = vector.broadcast %2780 : vector<1x1xf32> to vector<1x128xf32>
    %2809 = arith.mulf %2808, %2807 : vector<1x128xf32>
    %2810 = vector.broadcast %2770 : vector<1x1xf32> to vector<1x128xf32>
    %2811 = arith.addf %2810, %2809 : vector<1x128xf32>
    %2812 = arith.mulf %5, %2799 : vector<1x128xf32>
    %2813 = arith.subf %2805, %5 : vector<1x128xf32>
    %cst_374 = arith.constant 0.000000e+00 : f32
    %2814 = vector.broadcast %cst_374 : f32 to vector<1x128xf32>
    %2815 = arith.maximumf %2813, %2814 : vector<1x128xf32>
    %2816 = arith.subf %2811, %5 : vector<1x128xf32>
    %cst_375 = arith.constant 0.000000e+00 : f32
    %2817 = vector.broadcast %cst_375 : f32 to vector<1x128xf32>
    %2818 = arith.maximumf %2816, %2817 : vector<1x128xf32>
    %2819 = vector.broadcast %2770 : vector<1x1xf32> to vector<1x128xf32>
    %2820 = arith.subf %2819, %5 : vector<1x128xf32>
    %cst_376 = arith.constant 0.000000e+00 : f32
    %2821 = vector.broadcast %cst_376 : f32 to vector<1x128xf32>
    %2822 = arith.maximumf %2820, %2821 : vector<1x128xf32>
    %2823 = arith.mulf %2822, %2799 : vector<1x128xf32>
    %2824 = arith.mulf %2818, %2818 : vector<1x128xf32>
    %2825 = arith.mulf %2815, %2815 : vector<1x128xf32>
    %2826 = arith.subf %2824, %2825 : vector<1x128xf32>
    %2827 = vector.broadcast %2792 : vector<1x1xf32> to vector<1x128xf32>
    %2828 = arith.mulf %2826, %2827 : vector<1x128xf32>
    %2829 = arith.subf %2823, %2828 : vector<1x128xf32>
    %2830 = vector.broadcast %2785 : vector<1x1xf32> to vector<1x128xf32>
    %2831 = arith.mulf %2829, %2830 : vector<1x128xf32>
    %2832 = arith.addf %2828, %2831 : vector<1x128xf32>
    %2833 = arith.addf %2812, %2832 : vector<1x128xf32>
    %2834 = arith.subf %2805, %7 : vector<1x128xf32>
    %cst_377 = arith.constant 0.000000e+00 : f32
    %2835 = vector.broadcast %cst_377 : f32 to vector<1x128xf32>
    %2836 = arith.maximumf %2834, %2835 : vector<1x128xf32>
    %2837 = arith.subf %2811, %7 : vector<1x128xf32>
    %cst_378 = arith.constant 0.000000e+00 : f32
    %2838 = vector.broadcast %cst_378 : f32 to vector<1x128xf32>
    %2839 = arith.maximumf %2837, %2838 : vector<1x128xf32>
    %2840 = vector.broadcast %2770 : vector<1x1xf32> to vector<1x128xf32>
    %2841 = arith.subf %2840, %7 : vector<1x128xf32>
    %cst_379 = arith.constant 0.000000e+00 : f32
    %2842 = vector.broadcast %cst_379 : f32 to vector<1x128xf32>
    %2843 = arith.maximumf %2841, %2842 : vector<1x128xf32>
    %2844 = arith.mulf %2843, %2799 : vector<1x128xf32>
    %2845 = arith.mulf %2839, %2839 : vector<1x128xf32>
    %2846 = arith.mulf %2836, %2836 : vector<1x128xf32>
    %2847 = arith.subf %2845, %2846 : vector<1x128xf32>
    %2848 = vector.broadcast %2792 : vector<1x1xf32> to vector<1x128xf32>
    %2849 = arith.mulf %2847, %2848 : vector<1x128xf32>
    %2850 = arith.subf %2844, %2849 : vector<1x128xf32>
    %2851 = vector.broadcast %2785 : vector<1x1xf32> to vector<1x128xf32>
    %2852 = arith.mulf %2850, %2851 : vector<1x128xf32>
    %2853 = arith.addf %2849, %2852 : vector<1x128xf32>
    %2854 = arith.subf %2833, %2853 : vector<1x128xf32>
    %2855 = arith.subf %2768, %2854 : vector<1x128xf32>
    %2856 = vector.extract_strided_slice %2551 {offsets = [0, 18], sizes = [1, 1], strides = [1, 1]} : vector<1x20xf32> to vector<1x1xf32>
    %2857 = vector.extract_strided_slice %2551 {offsets = [0, 19], sizes = [1, 1], strides = [1, 1]} : vector<1x20xf32> to vector<1x1xf32>
    %2858 = vector.extract_strided_slice %2551 {offsets = [0, 12], sizes = [1, 1], strides = [1, 1]} : vector<1x20xf32> to vector<1x1xf32>
    %2859 = vector.extract_strided_slice %2551 {offsets = [0, 13], sizes = [1, 1], strides = [1, 1]} : vector<1x20xf32> to vector<1x1xf32>
    %2860 = arith.subf %2858, %2856 : vector<1x1xf32>
    %2861 = math.absf %2860 : vector<1x1xf32>
    %cst_380 = arith.constant 9.99999971E-10 : f32
    %2862 = vector.broadcast %cst_380 : f32 to vector<1x1xf32>
    %2863 = arith.cmpf olt, %2861, %2862 : vector<1x1xf32>
    %cst_381 = arith.constant 1.000000e+00 : f32
    %2864 = vector.broadcast %cst_381 : f32 to vector<1x1xf32>
    %2865 = arith.select %2863, %2864, %2860 : vector<1x1xi1>, vector<1x1xf32>
    %2866 = arith.subf %2859, %2857 : vector<1x1xf32>
    %2867 = arith.divf %2866, %2865 : vector<1x1xf32>
    %2868 = math.absf %2867 : vector<1x1xf32>
    %cst_382 = arith.constant 9.99999971E-10 : f32
    %2869 = vector.broadcast %cst_382 : f32 to vector<1x1xf32>
    %2870 = arith.cmpf olt, %2868, %2869 : vector<1x1xf32>
    %2871 = arith.extui %2870 : vector<1x1xi1> to vector<1x1xi32>
    %2872 = arith.sitofp %2871 : vector<1x1xi32> to vector<1x1xf32>
    %2873 = math.absf %2867 : vector<1x1xf32>
    %cst_383 = arith.constant 9.99999971E-10 : f32
    %2874 = vector.broadcast %cst_383 : f32 to vector<1x1xf32>
    %2875 = arith.cmpf olt, %2873, %2874 : vector<1x1xf32>
    %cst_384 = arith.constant 1.000000e+00 : f32
    %2876 = vector.broadcast %cst_384 : f32 to vector<1x1xf32>
    %2877 = arith.select %2875, %2876, %2867 : vector<1x1xi1>, vector<1x1xf32>
    %cst_385 = arith.constant 5.000000e-01 : f32
    %2878 = vector.broadcast %cst_385 : f32 to vector<1x1xf32>
    %2879 = arith.divf %2878, %2877 : vector<1x1xf32>
    %2880 = vector.broadcast %2856 : vector<1x1xf32> to vector<1x128xf32>
    %2881 = arith.maximumf %2880, %4 : vector<1x128xf32>
    %2882 = arith.minimumf %2881, %6 : vector<1x128xf32>
    %2883 = vector.broadcast %2858 : vector<1x1xf32> to vector<1x128xf32>
    %2884 = arith.maximumf %2883, %4 : vector<1x128xf32>
    %2885 = arith.minimumf %2884, %6 : vector<1x128xf32>
    %2886 = arith.subf %2885, %2882 : vector<1x128xf32>
    %2887 = vector.broadcast %2856 : vector<1x1xf32> to vector<1x128xf32>
    %2888 = arith.subf %2882, %2887 : vector<1x128xf32>
    %2889 = vector.broadcast %2867 : vector<1x1xf32> to vector<1x128xf32>
    %2890 = arith.mulf %2889, %2888 : vector<1x128xf32>
    %2891 = vector.broadcast %2857 : vector<1x1xf32> to vector<1x128xf32>
    %2892 = arith.addf %2891, %2890 : vector<1x128xf32>
    %2893 = vector.broadcast %2856 : vector<1x1xf32> to vector<1x128xf32>
    %2894 = arith.subf %2885, %2893 : vector<1x128xf32>
    %2895 = vector.broadcast %2867 : vector<1x1xf32> to vector<1x128xf32>
    %2896 = arith.mulf %2895, %2894 : vector<1x128xf32>
    %2897 = vector.broadcast %2857 : vector<1x1xf32> to vector<1x128xf32>
    %2898 = arith.addf %2897, %2896 : vector<1x128xf32>
    %2899 = arith.mulf %5, %2886 : vector<1x128xf32>
    %2900 = arith.subf %2892, %5 : vector<1x128xf32>
    %cst_386 = arith.constant 0.000000e+00 : f32
    %2901 = vector.broadcast %cst_386 : f32 to vector<1x128xf32>
    %2902 = arith.maximumf %2900, %2901 : vector<1x128xf32>
    %2903 = arith.subf %2898, %5 : vector<1x128xf32>
    %cst_387 = arith.constant 0.000000e+00 : f32
    %2904 = vector.broadcast %cst_387 : f32 to vector<1x128xf32>
    %2905 = arith.maximumf %2903, %2904 : vector<1x128xf32>
    %2906 = vector.broadcast %2857 : vector<1x1xf32> to vector<1x128xf32>
    %2907 = arith.subf %2906, %5 : vector<1x128xf32>
    %cst_388 = arith.constant 0.000000e+00 : f32
    %2908 = vector.broadcast %cst_388 : f32 to vector<1x128xf32>
    %2909 = arith.maximumf %2907, %2908 : vector<1x128xf32>
    %2910 = arith.mulf %2909, %2886 : vector<1x128xf32>
    %2911 = arith.mulf %2905, %2905 : vector<1x128xf32>
    %2912 = arith.mulf %2902, %2902 : vector<1x128xf32>
    %2913 = arith.subf %2911, %2912 : vector<1x128xf32>
    %2914 = vector.broadcast %2879 : vector<1x1xf32> to vector<1x128xf32>
    %2915 = arith.mulf %2913, %2914 : vector<1x128xf32>
    %2916 = arith.subf %2910, %2915 : vector<1x128xf32>
    %2917 = vector.broadcast %2872 : vector<1x1xf32> to vector<1x128xf32>
    %2918 = arith.mulf %2916, %2917 : vector<1x128xf32>
    %2919 = arith.addf %2915, %2918 : vector<1x128xf32>
    %2920 = arith.addf %2899, %2919 : vector<1x128xf32>
    %2921 = arith.subf %2892, %7 : vector<1x128xf32>
    %cst_389 = arith.constant 0.000000e+00 : f32
    %2922 = vector.broadcast %cst_389 : f32 to vector<1x128xf32>
    %2923 = arith.maximumf %2921, %2922 : vector<1x128xf32>
    %2924 = arith.subf %2898, %7 : vector<1x128xf32>
    %cst_390 = arith.constant 0.000000e+00 : f32
    %2925 = vector.broadcast %cst_390 : f32 to vector<1x128xf32>
    %2926 = arith.maximumf %2924, %2925 : vector<1x128xf32>
    %2927 = vector.broadcast %2857 : vector<1x1xf32> to vector<1x128xf32>
    %2928 = arith.subf %2927, %7 : vector<1x128xf32>
    %cst_391 = arith.constant 0.000000e+00 : f32
    %2929 = vector.broadcast %cst_391 : f32 to vector<1x128xf32>
    %2930 = arith.maximumf %2928, %2929 : vector<1x128xf32>
    %2931 = arith.mulf %2930, %2886 : vector<1x128xf32>
    %2932 = arith.mulf %2926, %2926 : vector<1x128xf32>
    %2933 = arith.mulf %2923, %2923 : vector<1x128xf32>
    %2934 = arith.subf %2932, %2933 : vector<1x128xf32>
    %2935 = vector.broadcast %2879 : vector<1x1xf32> to vector<1x128xf32>
    %2936 = arith.mulf %2934, %2935 : vector<1x128xf32>
    %2937 = arith.subf %2931, %2936 : vector<1x128xf32>
    %2938 = vector.broadcast %2872 : vector<1x1xf32> to vector<1x128xf32>
    %2939 = arith.mulf %2937, %2938 : vector<1x128xf32>
    %2940 = arith.addf %2936, %2939 : vector<1x128xf32>
    %2941 = arith.subf %2920, %2940 : vector<1x128xf32>
    %2942 = arith.subf %2855, %2941 : vector<1x128xf32>
    %2943 = math.absf %2942 : vector<1x128xf32>
    %2944 = vector.broadcast %2563 : vector<1x1xf32> to vector<1x128xf32>
    %2945 = arith.addf %2944, %20 : vector<1x128xf32>
    %2946 = arith.subf %2945, %2943 : vector<1x128xf32>
    %cst_392 = arith.constant 9.99999993E-9 : f32
    %2947 = vector.broadcast %cst_392 : f32 to vector<1x128xf32>
    %2948 = arith.maximumf %2946, %2947 : vector<1x128xf32>
    %2949 = arith.divf %2943, %2948 : vector<1x128xf32>
    %2950 = arith.cmpf ogt, %2593, %2531 : vector<1x128xf32>
    %2951 = arith.select %2950, %2593, %2531 : vector<1x128xi1>, vector<1x128xf32>
    %2952 = arith.select %2950, %2949, %2532 : vector<1x128xi1>, vector<1x128xf32>
    %2953 = vector.shape_cast %2552 : vector<1x1xf32> to vector<1x1xf32>
    %2954 = vector.broadcast %2953 : vector<1x1xf32> to vector<1x128xf32>
    %2955 = arith.select %2950, %2954, %2535 : vector<1x128xi1>, vector<1x128xf32>
    %2956 = vector.shape_cast %2553 : vector<1x1xf32> to vector<1x1xf32>
    %2957 = vector.broadcast %2956 : vector<1x1xf32> to vector<1x128xf32>
    %2958 = arith.select %2950, %2957, %2538 : vector<1x128xi1>, vector<1x128xf32>
    %2959 = vector.shape_cast %2554 : vector<1x1xf32> to vector<1x1xf32>
    %2960 = vector.broadcast %2959 : vector<1x1xf32> to vector<1x128xf32>
    %2961 = arith.select %2950, %2960, %2541 : vector<1x128xi1>, vector<1x128xf32>
    %2962 = vector.shape_cast %2555 : vector<1x1xf32> to vector<1x1xf32>
    %2963 = vector.broadcast %2962 : vector<1x1xf32> to vector<1x128xf32>
    %2964 = arith.select %2950, %2963, %2544 : vector<1x128xi1>, vector<1x128xf32>
    %2965 = vector.shape_cast %2556 : vector<1x1xf32> to vector<1x1xf32>
    %2966 = vector.broadcast %2965 : vector<1x1xf32> to vector<1x128xf32>
    %2967 = arith.select %2950, %2966, %2547 : vector<1x128xi1>, vector<1x128xf32>
    %2968 = vector.shape_cast %2557 : vector<1x1xf32> to vector<1x1xf32>
    %2969 = vector.broadcast %2968 : vector<1x1xf32> to vector<1x128xf32>
    %2970 = arith.select %2950, %2969, %2550 : vector<1x128xi1>, vector<1x128xf32>
    %2971 = vector.extract_strided_slice %22 {offsets = [7, 0], sizes = [1, 20], strides = [1, 1]} : vector<8x20xf32> to vector<1x20xf32>
    %2972 = vector.extract_strided_slice %2971 {offsets = [0, 0], sizes = [1, 1], strides = [1, 1]} : vector<1x20xf32> to vector<1x1xf32>
    %2973 = vector.extract_strided_slice %2971 {offsets = [0, 1], sizes = [1, 1], strides = [1, 1]} : vector<1x20xf32> to vector<1x1xf32>
    %2974 = vector.extract_strided_slice %2971 {offsets = [0, 2], sizes = [1, 1], strides = [1, 1]} : vector<1x20xf32> to vector<1x1xf32>
    %2975 = vector.extract_strided_slice %2971 {offsets = [0, 3], sizes = [1, 1], strides = [1, 1]} : vector<1x20xf32> to vector<1x1xf32>
    %2976 = vector.extract_strided_slice %2971 {offsets = [0, 4], sizes = [1, 1], strides = [1, 1]} : vector<1x20xf32> to vector<1x1xf32>
    %2977 = vector.extract_strided_slice %2971 {offsets = [0, 5], sizes = [1, 1], strides = [1, 1]} : vector<1x20xf32> to vector<1x1xf32>
    %2978 = vector.extract_strided_slice %2971 {offsets = [0, 6], sizes = [1, 1], strides = [1, 1]} : vector<1x20xf32> to vector<1x1xf32>
    %2979 = vector.extract_strided_slice %2971 {offsets = [0, 7], sizes = [1, 1], strides = [1, 1]} : vector<1x20xf32> to vector<1x1xf32>
    %2980 = vector.extract_strided_slice %2971 {offsets = [0, 8], sizes = [1, 1], strides = [1, 1]} : vector<1x20xf32> to vector<1x1xf32>
    %2981 = vector.extract_strided_slice %2971 {offsets = [0, 9], sizes = [1, 1], strides = [1, 1]} : vector<1x20xf32> to vector<1x1xf32>
    %2982 = vector.extract_strided_slice %2971 {offsets = [0, 10], sizes = [1, 1], strides = [1, 1]} : vector<1x20xf32> to vector<1x1xf32>
    %2983 = vector.extract_strided_slice %2971 {offsets = [0, 11], sizes = [1, 1], strides = [1, 1]} : vector<1x20xf32> to vector<1x1xf32>
    %2984 = vector.broadcast %2981 : vector<1x1xf32> to vector<1x128xf32>
    %2985 = arith.minimumf %6, %2984 : vector<1x128xf32>
    %2986 = vector.broadcast %2979 : vector<1x1xf32> to vector<1x128xf32>
    %2987 = arith.maximumf %4, %2986 : vector<1x128xf32>
    %2988 = arith.subf %2985, %2987 : vector<1x128xf32>
    %cst_393 = arith.constant 0.000000e+00 : f32
    %2989 = vector.broadcast %cst_393 : f32 to vector<1x128xf32>
    %2990 = arith.maximumf %2988, %2989 : vector<1x128xf32>
    %2991 = vector.broadcast %2982 : vector<1x1xf32> to vector<1x128xf32>
    %2992 = arith.minimumf %7, %2991 : vector<1x128xf32>
    %2993 = vector.broadcast %2980 : vector<1x1xf32> to vector<1x128xf32>
    %2994 = arith.maximumf %5, %2993 : vector<1x128xf32>
    %2995 = arith.subf %2992, %2994 : vector<1x128xf32>
    %cst_394 = arith.constant 0.000000e+00 : f32
    %2996 = vector.broadcast %cst_394 : f32 to vector<1x128xf32>
    %2997 = arith.maximumf %2995, %2996 : vector<1x128xf32>
    %2998 = arith.mulf %2990, %2997 : vector<1x128xf32>
    %2999 = arith.subf %2981, %2979 : vector<1x1xf32>
    %3000 = arith.subf %2982, %2980 : vector<1x1xf32>
    %3001 = arith.mulf %2999, %3000 : vector<1x1xf32>
    %3002 = vector.broadcast %3001 : vector<1x1xf32> to vector<1x128xf32>
    %3003 = arith.addf %20, %3002 : vector<1x128xf32>
    %3004 = arith.subf %3003, %2998 : vector<1x128xf32>
    %cst_395 = arith.constant 9.99999993E-9 : f32
    %3005 = vector.broadcast %cst_395 : f32 to vector<1x128xf32>
    %3006 = arith.maximumf %3004, %3005 : vector<1x128xf32>
    %3007 = arith.divf %2998, %3006 : vector<1x128xf32>
    %3008 = vector.broadcast %2978 : vector<1x1xf32> to vector<1x128xf32>
    %3009 = arith.mulf %3007, %3008 : vector<1x128xf32>
    %cst_396 = arith.constant 1.000000e+00 : f32
    %3010 = vector.broadcast %cst_396 : f32 to vector<1x1xf32>
    %3011 = arith.subf %3010, %2978 : vector<1x1xf32>
    %3012 = vector.broadcast %3011 : vector<1x1xf32> to vector<1x128xf32>
    %3013 = arith.subf %3009, %3012 : vector<1x128xf32>
    %cst_397 = arith.constant 0.000000e+00 : f32
    %3014 = vector.broadcast %cst_397 : f32 to vector<1x128xf32>
    %3015 = vector.extract_strided_slice %2971 {offsets = [0, 12], sizes = [1, 1], strides = [1, 1]} : vector<1x20xf32> to vector<1x1xf32>
    %3016 = vector.extract_strided_slice %2971 {offsets = [0, 13], sizes = [1, 1], strides = [1, 1]} : vector<1x20xf32> to vector<1x1xf32>
    %3017 = vector.extract_strided_slice %2971 {offsets = [0, 14], sizes = [1, 1], strides = [1, 1]} : vector<1x20xf32> to vector<1x1xf32>
    %3018 = vector.extract_strided_slice %2971 {offsets = [0, 15], sizes = [1, 1], strides = [1, 1]} : vector<1x20xf32> to vector<1x1xf32>
    %3019 = arith.subf %3017, %3015 : vector<1x1xf32>
    %3020 = math.absf %3019 : vector<1x1xf32>
    %cst_398 = arith.constant 9.99999971E-10 : f32
    %3021 = vector.broadcast %cst_398 : f32 to vector<1x1xf32>
    %3022 = arith.cmpf olt, %3020, %3021 : vector<1x1xf32>
    %cst_399 = arith.constant 1.000000e+00 : f32
    %3023 = vector.broadcast %cst_399 : f32 to vector<1x1xf32>
    %3024 = arith.select %3022, %3023, %3019 : vector<1x1xi1>, vector<1x1xf32>
    %3025 = arith.subf %3018, %3016 : vector<1x1xf32>
    %3026 = arith.divf %3025, %3024 : vector<1x1xf32>
    %3027 = math.absf %3026 : vector<1x1xf32>
    %cst_400 = arith.constant 9.99999971E-10 : f32
    %3028 = vector.broadcast %cst_400 : f32 to vector<1x1xf32>
    %3029 = arith.cmpf olt, %3027, %3028 : vector<1x1xf32>
    %3030 = arith.extui %3029 : vector<1x1xi1> to vector<1x1xi32>
    %3031 = arith.sitofp %3030 : vector<1x1xi32> to vector<1x1xf32>
    %3032 = math.absf %3026 : vector<1x1xf32>
    %cst_401 = arith.constant 9.99999971E-10 : f32
    %3033 = vector.broadcast %cst_401 : f32 to vector<1x1xf32>
    %3034 = arith.cmpf olt, %3032, %3033 : vector<1x1xf32>
    %cst_402 = arith.constant 1.000000e+00 : f32
    %3035 = vector.broadcast %cst_402 : f32 to vector<1x1xf32>
    %3036 = arith.select %3034, %3035, %3026 : vector<1x1xi1>, vector<1x1xf32>
    %cst_403 = arith.constant 5.000000e-01 : f32
    %3037 = vector.broadcast %cst_403 : f32 to vector<1x1xf32>
    %3038 = arith.divf %3037, %3036 : vector<1x1xf32>
    %3039 = vector.broadcast %3015 : vector<1x1xf32> to vector<1x128xf32>
    %3040 = arith.maximumf %3039, %4 : vector<1x128xf32>
    %3041 = arith.minimumf %3040, %6 : vector<1x128xf32>
    %3042 = vector.broadcast %3017 : vector<1x1xf32> to vector<1x128xf32>
    %3043 = arith.maximumf %3042, %4 : vector<1x128xf32>
    %3044 = arith.minimumf %3043, %6 : vector<1x128xf32>
    %3045 = arith.subf %3044, %3041 : vector<1x128xf32>
    %3046 = vector.broadcast %3015 : vector<1x1xf32> to vector<1x128xf32>
    %3047 = arith.subf %3041, %3046 : vector<1x128xf32>
    %3048 = vector.broadcast %3026 : vector<1x1xf32> to vector<1x128xf32>
    %3049 = arith.mulf %3048, %3047 : vector<1x128xf32>
    %3050 = vector.broadcast %3016 : vector<1x1xf32> to vector<1x128xf32>
    %3051 = arith.addf %3050, %3049 : vector<1x128xf32>
    %3052 = vector.broadcast %3015 : vector<1x1xf32> to vector<1x128xf32>
    %3053 = arith.subf %3044, %3052 : vector<1x128xf32>
    %3054 = vector.broadcast %3026 : vector<1x1xf32> to vector<1x128xf32>
    %3055 = arith.mulf %3054, %3053 : vector<1x128xf32>
    %3056 = vector.broadcast %3016 : vector<1x1xf32> to vector<1x128xf32>
    %3057 = arith.addf %3056, %3055 : vector<1x128xf32>
    %3058 = arith.mulf %5, %3045 : vector<1x128xf32>
    %3059 = arith.subf %3051, %5 : vector<1x128xf32>
    %cst_404 = arith.constant 0.000000e+00 : f32
    %3060 = vector.broadcast %cst_404 : f32 to vector<1x128xf32>
    %3061 = arith.maximumf %3059, %3060 : vector<1x128xf32>
    %3062 = arith.subf %3057, %5 : vector<1x128xf32>
    %cst_405 = arith.constant 0.000000e+00 : f32
    %3063 = vector.broadcast %cst_405 : f32 to vector<1x128xf32>
    %3064 = arith.maximumf %3062, %3063 : vector<1x128xf32>
    %3065 = vector.broadcast %3016 : vector<1x1xf32> to vector<1x128xf32>
    %3066 = arith.subf %3065, %5 : vector<1x128xf32>
    %cst_406 = arith.constant 0.000000e+00 : f32
    %3067 = vector.broadcast %cst_406 : f32 to vector<1x128xf32>
    %3068 = arith.maximumf %3066, %3067 : vector<1x128xf32>
    %3069 = arith.mulf %3068, %3045 : vector<1x128xf32>
    %3070 = arith.mulf %3064, %3064 : vector<1x128xf32>
    %3071 = arith.mulf %3061, %3061 : vector<1x128xf32>
    %3072 = arith.subf %3070, %3071 : vector<1x128xf32>
    %3073 = vector.broadcast %3038 : vector<1x1xf32> to vector<1x128xf32>
    %3074 = arith.mulf %3072, %3073 : vector<1x128xf32>
    %3075 = arith.subf %3069, %3074 : vector<1x128xf32>
    %3076 = vector.broadcast %3031 : vector<1x1xf32> to vector<1x128xf32>
    %3077 = arith.mulf %3075, %3076 : vector<1x128xf32>
    %3078 = arith.addf %3074, %3077 : vector<1x128xf32>
    %3079 = arith.addf %3058, %3078 : vector<1x128xf32>
    %3080 = arith.subf %3051, %7 : vector<1x128xf32>
    %cst_407 = arith.constant 0.000000e+00 : f32
    %3081 = vector.broadcast %cst_407 : f32 to vector<1x128xf32>
    %3082 = arith.maximumf %3080, %3081 : vector<1x128xf32>
    %3083 = arith.subf %3057, %7 : vector<1x128xf32>
    %cst_408 = arith.constant 0.000000e+00 : f32
    %3084 = vector.broadcast %cst_408 : f32 to vector<1x128xf32>
    %3085 = arith.maximumf %3083, %3084 : vector<1x128xf32>
    %3086 = vector.broadcast %3016 : vector<1x1xf32> to vector<1x128xf32>
    %3087 = arith.subf %3086, %7 : vector<1x128xf32>
    %cst_409 = arith.constant 0.000000e+00 : f32
    %3088 = vector.broadcast %cst_409 : f32 to vector<1x128xf32>
    %3089 = arith.maximumf %3087, %3088 : vector<1x128xf32>
    %3090 = arith.mulf %3089, %3045 : vector<1x128xf32>
    %3091 = arith.mulf %3085, %3085 : vector<1x128xf32>
    %3092 = arith.mulf %3082, %3082 : vector<1x128xf32>
    %3093 = arith.subf %3091, %3092 : vector<1x128xf32>
    %3094 = vector.broadcast %3038 : vector<1x1xf32> to vector<1x128xf32>
    %3095 = arith.mulf %3093, %3094 : vector<1x128xf32>
    %3096 = arith.subf %3090, %3095 : vector<1x128xf32>
    %3097 = vector.broadcast %3031 : vector<1x1xf32> to vector<1x128xf32>
    %3098 = arith.mulf %3096, %3097 : vector<1x128xf32>
    %3099 = arith.addf %3095, %3098 : vector<1x128xf32>
    %3100 = arith.subf %3079, %3099 : vector<1x128xf32>
    %3101 = arith.subf %3014, %3100 : vector<1x128xf32>
    %3102 = vector.extract_strided_slice %2971 {offsets = [0, 14], sizes = [1, 1], strides = [1, 1]} : vector<1x20xf32> to vector<1x1xf32>
    %3103 = vector.extract_strided_slice %2971 {offsets = [0, 15], sizes = [1, 1], strides = [1, 1]} : vector<1x20xf32> to vector<1x1xf32>
    %3104 = vector.extract_strided_slice %2971 {offsets = [0, 16], sizes = [1, 1], strides = [1, 1]} : vector<1x20xf32> to vector<1x1xf32>
    %3105 = vector.extract_strided_slice %2971 {offsets = [0, 17], sizes = [1, 1], strides = [1, 1]} : vector<1x20xf32> to vector<1x1xf32>
    %3106 = arith.subf %3104, %3102 : vector<1x1xf32>
    %3107 = math.absf %3106 : vector<1x1xf32>
    %cst_410 = arith.constant 9.99999971E-10 : f32
    %3108 = vector.broadcast %cst_410 : f32 to vector<1x1xf32>
    %3109 = arith.cmpf olt, %3107, %3108 : vector<1x1xf32>
    %cst_411 = arith.constant 1.000000e+00 : f32
    %3110 = vector.broadcast %cst_411 : f32 to vector<1x1xf32>
    %3111 = arith.select %3109, %3110, %3106 : vector<1x1xi1>, vector<1x1xf32>
    %3112 = arith.subf %3105, %3103 : vector<1x1xf32>
    %3113 = arith.divf %3112, %3111 : vector<1x1xf32>
    %3114 = math.absf %3113 : vector<1x1xf32>
    %cst_412 = arith.constant 9.99999971E-10 : f32
    %3115 = vector.broadcast %cst_412 : f32 to vector<1x1xf32>
    %3116 = arith.cmpf olt, %3114, %3115 : vector<1x1xf32>
    %3117 = arith.extui %3116 : vector<1x1xi1> to vector<1x1xi32>
    %3118 = arith.sitofp %3117 : vector<1x1xi32> to vector<1x1xf32>
    %3119 = math.absf %3113 : vector<1x1xf32>
    %cst_413 = arith.constant 9.99999971E-10 : f32
    %3120 = vector.broadcast %cst_413 : f32 to vector<1x1xf32>
    %3121 = arith.cmpf olt, %3119, %3120 : vector<1x1xf32>
    %cst_414 = arith.constant 1.000000e+00 : f32
    %3122 = vector.broadcast %cst_414 : f32 to vector<1x1xf32>
    %3123 = arith.select %3121, %3122, %3113 : vector<1x1xi1>, vector<1x1xf32>
    %cst_415 = arith.constant 5.000000e-01 : f32
    %3124 = vector.broadcast %cst_415 : f32 to vector<1x1xf32>
    %3125 = arith.divf %3124, %3123 : vector<1x1xf32>
    %3126 = vector.broadcast %3102 : vector<1x1xf32> to vector<1x128xf32>
    %3127 = arith.maximumf %3126, %4 : vector<1x128xf32>
    %3128 = arith.minimumf %3127, %6 : vector<1x128xf32>
    %3129 = vector.broadcast %3104 : vector<1x1xf32> to vector<1x128xf32>
    %3130 = arith.maximumf %3129, %4 : vector<1x128xf32>
    %3131 = arith.minimumf %3130, %6 : vector<1x128xf32>
    %3132 = arith.subf %3131, %3128 : vector<1x128xf32>
    %3133 = vector.broadcast %3102 : vector<1x1xf32> to vector<1x128xf32>
    %3134 = arith.subf %3128, %3133 : vector<1x128xf32>
    %3135 = vector.broadcast %3113 : vector<1x1xf32> to vector<1x128xf32>
    %3136 = arith.mulf %3135, %3134 : vector<1x128xf32>
    %3137 = vector.broadcast %3103 : vector<1x1xf32> to vector<1x128xf32>
    %3138 = arith.addf %3137, %3136 : vector<1x128xf32>
    %3139 = vector.broadcast %3102 : vector<1x1xf32> to vector<1x128xf32>
    %3140 = arith.subf %3131, %3139 : vector<1x128xf32>
    %3141 = vector.broadcast %3113 : vector<1x1xf32> to vector<1x128xf32>
    %3142 = arith.mulf %3141, %3140 : vector<1x128xf32>
    %3143 = vector.broadcast %3103 : vector<1x1xf32> to vector<1x128xf32>
    %3144 = arith.addf %3143, %3142 : vector<1x128xf32>
    %3145 = arith.mulf %5, %3132 : vector<1x128xf32>
    %3146 = arith.subf %3138, %5 : vector<1x128xf32>
    %cst_416 = arith.constant 0.000000e+00 : f32
    %3147 = vector.broadcast %cst_416 : f32 to vector<1x128xf32>
    %3148 = arith.maximumf %3146, %3147 : vector<1x128xf32>
    %3149 = arith.subf %3144, %5 : vector<1x128xf32>
    %cst_417 = arith.constant 0.000000e+00 : f32
    %3150 = vector.broadcast %cst_417 : f32 to vector<1x128xf32>
    %3151 = arith.maximumf %3149, %3150 : vector<1x128xf32>
    %3152 = vector.broadcast %3103 : vector<1x1xf32> to vector<1x128xf32>
    %3153 = arith.subf %3152, %5 : vector<1x128xf32>
    %cst_418 = arith.constant 0.000000e+00 : f32
    %3154 = vector.broadcast %cst_418 : f32 to vector<1x128xf32>
    %3155 = arith.maximumf %3153, %3154 : vector<1x128xf32>
    %3156 = arith.mulf %3155, %3132 : vector<1x128xf32>
    %3157 = arith.mulf %3151, %3151 : vector<1x128xf32>
    %3158 = arith.mulf %3148, %3148 : vector<1x128xf32>
    %3159 = arith.subf %3157, %3158 : vector<1x128xf32>
    %3160 = vector.broadcast %3125 : vector<1x1xf32> to vector<1x128xf32>
    %3161 = arith.mulf %3159, %3160 : vector<1x128xf32>
    %3162 = arith.subf %3156, %3161 : vector<1x128xf32>
    %3163 = vector.broadcast %3118 : vector<1x1xf32> to vector<1x128xf32>
    %3164 = arith.mulf %3162, %3163 : vector<1x128xf32>
    %3165 = arith.addf %3161, %3164 : vector<1x128xf32>
    %3166 = arith.addf %3145, %3165 : vector<1x128xf32>
    %3167 = arith.subf %3138, %7 : vector<1x128xf32>
    %cst_419 = arith.constant 0.000000e+00 : f32
    %3168 = vector.broadcast %cst_419 : f32 to vector<1x128xf32>
    %3169 = arith.maximumf %3167, %3168 : vector<1x128xf32>
    %3170 = arith.subf %3144, %7 : vector<1x128xf32>
    %cst_420 = arith.constant 0.000000e+00 : f32
    %3171 = vector.broadcast %cst_420 : f32 to vector<1x128xf32>
    %3172 = arith.maximumf %3170, %3171 : vector<1x128xf32>
    %3173 = vector.broadcast %3103 : vector<1x1xf32> to vector<1x128xf32>
    %3174 = arith.subf %3173, %7 : vector<1x128xf32>
    %cst_421 = arith.constant 0.000000e+00 : f32
    %3175 = vector.broadcast %cst_421 : f32 to vector<1x128xf32>
    %3176 = arith.maximumf %3174, %3175 : vector<1x128xf32>
    %3177 = arith.mulf %3176, %3132 : vector<1x128xf32>
    %3178 = arith.mulf %3172, %3172 : vector<1x128xf32>
    %3179 = arith.mulf %3169, %3169 : vector<1x128xf32>
    %3180 = arith.subf %3178, %3179 : vector<1x128xf32>
    %3181 = vector.broadcast %3125 : vector<1x1xf32> to vector<1x128xf32>
    %3182 = arith.mulf %3180, %3181 : vector<1x128xf32>
    %3183 = arith.subf %3177, %3182 : vector<1x128xf32>
    %3184 = vector.broadcast %3118 : vector<1x1xf32> to vector<1x128xf32>
    %3185 = arith.mulf %3183, %3184 : vector<1x128xf32>
    %3186 = arith.addf %3182, %3185 : vector<1x128xf32>
    %3187 = arith.subf %3166, %3186 : vector<1x128xf32>
    %3188 = arith.subf %3101, %3187 : vector<1x128xf32>
    %3189 = vector.extract_strided_slice %2971 {offsets = [0, 16], sizes = [1, 1], strides = [1, 1]} : vector<1x20xf32> to vector<1x1xf32>
    %3190 = vector.extract_strided_slice %2971 {offsets = [0, 17], sizes = [1, 1], strides = [1, 1]} : vector<1x20xf32> to vector<1x1xf32>
    %3191 = vector.extract_strided_slice %2971 {offsets = [0, 18], sizes = [1, 1], strides = [1, 1]} : vector<1x20xf32> to vector<1x1xf32>
    %3192 = vector.extract_strided_slice %2971 {offsets = [0, 19], sizes = [1, 1], strides = [1, 1]} : vector<1x20xf32> to vector<1x1xf32>
    %3193 = arith.subf %3191, %3189 : vector<1x1xf32>
    %3194 = math.absf %3193 : vector<1x1xf32>
    %cst_422 = arith.constant 9.99999971E-10 : f32
    %3195 = vector.broadcast %cst_422 : f32 to vector<1x1xf32>
    %3196 = arith.cmpf olt, %3194, %3195 : vector<1x1xf32>
    %cst_423 = arith.constant 1.000000e+00 : f32
    %3197 = vector.broadcast %cst_423 : f32 to vector<1x1xf32>
    %3198 = arith.select %3196, %3197, %3193 : vector<1x1xi1>, vector<1x1xf32>
    %3199 = arith.subf %3192, %3190 : vector<1x1xf32>
    %3200 = arith.divf %3199, %3198 : vector<1x1xf32>
    %3201 = math.absf %3200 : vector<1x1xf32>
    %cst_424 = arith.constant 9.99999971E-10 : f32
    %3202 = vector.broadcast %cst_424 : f32 to vector<1x1xf32>
    %3203 = arith.cmpf olt, %3201, %3202 : vector<1x1xf32>
    %3204 = arith.extui %3203 : vector<1x1xi1> to vector<1x1xi32>
    %3205 = arith.sitofp %3204 : vector<1x1xi32> to vector<1x1xf32>
    %3206 = math.absf %3200 : vector<1x1xf32>
    %cst_425 = arith.constant 9.99999971E-10 : f32
    %3207 = vector.broadcast %cst_425 : f32 to vector<1x1xf32>
    %3208 = arith.cmpf olt, %3206, %3207 : vector<1x1xf32>
    %cst_426 = arith.constant 1.000000e+00 : f32
    %3209 = vector.broadcast %cst_426 : f32 to vector<1x1xf32>
    %3210 = arith.select %3208, %3209, %3200 : vector<1x1xi1>, vector<1x1xf32>
    %cst_427 = arith.constant 5.000000e-01 : f32
    %3211 = vector.broadcast %cst_427 : f32 to vector<1x1xf32>
    %3212 = arith.divf %3211, %3210 : vector<1x1xf32>
    %3213 = vector.broadcast %3189 : vector<1x1xf32> to vector<1x128xf32>
    %3214 = arith.maximumf %3213, %4 : vector<1x128xf32>
    %3215 = arith.minimumf %3214, %6 : vector<1x128xf32>
    %3216 = vector.broadcast %3191 : vector<1x1xf32> to vector<1x128xf32>
    %3217 = arith.maximumf %3216, %4 : vector<1x128xf32>
    %3218 = arith.minimumf %3217, %6 : vector<1x128xf32>
    %3219 = arith.subf %3218, %3215 : vector<1x128xf32>
    %3220 = vector.broadcast %3189 : vector<1x1xf32> to vector<1x128xf32>
    %3221 = arith.subf %3215, %3220 : vector<1x128xf32>
    %3222 = vector.broadcast %3200 : vector<1x1xf32> to vector<1x128xf32>
    %3223 = arith.mulf %3222, %3221 : vector<1x128xf32>
    %3224 = vector.broadcast %3190 : vector<1x1xf32> to vector<1x128xf32>
    %3225 = arith.addf %3224, %3223 : vector<1x128xf32>
    %3226 = vector.broadcast %3189 : vector<1x1xf32> to vector<1x128xf32>
    %3227 = arith.subf %3218, %3226 : vector<1x128xf32>
    %3228 = vector.broadcast %3200 : vector<1x1xf32> to vector<1x128xf32>
    %3229 = arith.mulf %3228, %3227 : vector<1x128xf32>
    %3230 = vector.broadcast %3190 : vector<1x1xf32> to vector<1x128xf32>
    %3231 = arith.addf %3230, %3229 : vector<1x128xf32>
    %3232 = arith.mulf %5, %3219 : vector<1x128xf32>
    %3233 = arith.subf %3225, %5 : vector<1x128xf32>
    %cst_428 = arith.constant 0.000000e+00 : f32
    %3234 = vector.broadcast %cst_428 : f32 to vector<1x128xf32>
    %3235 = arith.maximumf %3233, %3234 : vector<1x128xf32>
    %3236 = arith.subf %3231, %5 : vector<1x128xf32>
    %cst_429 = arith.constant 0.000000e+00 : f32
    %3237 = vector.broadcast %cst_429 : f32 to vector<1x128xf32>
    %3238 = arith.maximumf %3236, %3237 : vector<1x128xf32>
    %3239 = vector.broadcast %3190 : vector<1x1xf32> to vector<1x128xf32>
    %3240 = arith.subf %3239, %5 : vector<1x128xf32>
    %cst_430 = arith.constant 0.000000e+00 : f32
    %3241 = vector.broadcast %cst_430 : f32 to vector<1x128xf32>
    %3242 = arith.maximumf %3240, %3241 : vector<1x128xf32>
    %3243 = arith.mulf %3242, %3219 : vector<1x128xf32>
    %3244 = arith.mulf %3238, %3238 : vector<1x128xf32>
    %3245 = arith.mulf %3235, %3235 : vector<1x128xf32>
    %3246 = arith.subf %3244, %3245 : vector<1x128xf32>
    %3247 = vector.broadcast %3212 : vector<1x1xf32> to vector<1x128xf32>
    %3248 = arith.mulf %3246, %3247 : vector<1x128xf32>
    %3249 = arith.subf %3243, %3248 : vector<1x128xf32>
    %3250 = vector.broadcast %3205 : vector<1x1xf32> to vector<1x128xf32>
    %3251 = arith.mulf %3249, %3250 : vector<1x128xf32>
    %3252 = arith.addf %3248, %3251 : vector<1x128xf32>
    %3253 = arith.addf %3232, %3252 : vector<1x128xf32>
    %3254 = arith.subf %3225, %7 : vector<1x128xf32>
    %cst_431 = arith.constant 0.000000e+00 : f32
    %3255 = vector.broadcast %cst_431 : f32 to vector<1x128xf32>
    %3256 = arith.maximumf %3254, %3255 : vector<1x128xf32>
    %3257 = arith.subf %3231, %7 : vector<1x128xf32>
    %cst_432 = arith.constant 0.000000e+00 : f32
    %3258 = vector.broadcast %cst_432 : f32 to vector<1x128xf32>
    %3259 = arith.maximumf %3257, %3258 : vector<1x128xf32>
    %3260 = vector.broadcast %3190 : vector<1x1xf32> to vector<1x128xf32>
    %3261 = arith.subf %3260, %7 : vector<1x128xf32>
    %cst_433 = arith.constant 0.000000e+00 : f32
    %3262 = vector.broadcast %cst_433 : f32 to vector<1x128xf32>
    %3263 = arith.maximumf %3261, %3262 : vector<1x128xf32>
    %3264 = arith.mulf %3263, %3219 : vector<1x128xf32>
    %3265 = arith.mulf %3259, %3259 : vector<1x128xf32>
    %3266 = arith.mulf %3256, %3256 : vector<1x128xf32>
    %3267 = arith.subf %3265, %3266 : vector<1x128xf32>
    %3268 = vector.broadcast %3212 : vector<1x1xf32> to vector<1x128xf32>
    %3269 = arith.mulf %3267, %3268 : vector<1x128xf32>
    %3270 = arith.subf %3264, %3269 : vector<1x128xf32>
    %3271 = vector.broadcast %3205 : vector<1x1xf32> to vector<1x128xf32>
    %3272 = arith.mulf %3270, %3271 : vector<1x128xf32>
    %3273 = arith.addf %3269, %3272 : vector<1x128xf32>
    %3274 = arith.subf %3253, %3273 : vector<1x128xf32>
    %3275 = arith.subf %3188, %3274 : vector<1x128xf32>
    %3276 = vector.extract_strided_slice %2971 {offsets = [0, 18], sizes = [1, 1], strides = [1, 1]} : vector<1x20xf32> to vector<1x1xf32>
    %3277 = vector.extract_strided_slice %2971 {offsets = [0, 19], sizes = [1, 1], strides = [1, 1]} : vector<1x20xf32> to vector<1x1xf32>
    %3278 = vector.extract_strided_slice %2971 {offsets = [0, 12], sizes = [1, 1], strides = [1, 1]} : vector<1x20xf32> to vector<1x1xf32>
    %3279 = vector.extract_strided_slice %2971 {offsets = [0, 13], sizes = [1, 1], strides = [1, 1]} : vector<1x20xf32> to vector<1x1xf32>
    %3280 = arith.subf %3278, %3276 : vector<1x1xf32>
    %3281 = math.absf %3280 : vector<1x1xf32>
    %cst_434 = arith.constant 9.99999971E-10 : f32
    %3282 = vector.broadcast %cst_434 : f32 to vector<1x1xf32>
    %3283 = arith.cmpf olt, %3281, %3282 : vector<1x1xf32>
    %cst_435 = arith.constant 1.000000e+00 : f32
    %3284 = vector.broadcast %cst_435 : f32 to vector<1x1xf32>
    %3285 = arith.select %3283, %3284, %3280 : vector<1x1xi1>, vector<1x1xf32>
    %3286 = arith.subf %3279, %3277 : vector<1x1xf32>
    %3287 = arith.divf %3286, %3285 : vector<1x1xf32>
    %3288 = math.absf %3287 : vector<1x1xf32>
    %cst_436 = arith.constant 9.99999971E-10 : f32
    %3289 = vector.broadcast %cst_436 : f32 to vector<1x1xf32>
    %3290 = arith.cmpf olt, %3288, %3289 : vector<1x1xf32>
    %3291 = arith.extui %3290 : vector<1x1xi1> to vector<1x1xi32>
    %3292 = arith.sitofp %3291 : vector<1x1xi32> to vector<1x1xf32>
    %3293 = math.absf %3287 : vector<1x1xf32>
    %cst_437 = arith.constant 9.99999971E-10 : f32
    %3294 = vector.broadcast %cst_437 : f32 to vector<1x1xf32>
    %3295 = arith.cmpf olt, %3293, %3294 : vector<1x1xf32>
    %cst_438 = arith.constant 1.000000e+00 : f32
    %3296 = vector.broadcast %cst_438 : f32 to vector<1x1xf32>
    %3297 = arith.select %3295, %3296, %3287 : vector<1x1xi1>, vector<1x1xf32>
    %cst_439 = arith.constant 5.000000e-01 : f32
    %3298 = vector.broadcast %cst_439 : f32 to vector<1x1xf32>
    %3299 = arith.divf %3298, %3297 : vector<1x1xf32>
    %3300 = vector.broadcast %3276 : vector<1x1xf32> to vector<1x128xf32>
    %3301 = arith.maximumf %3300, %4 : vector<1x128xf32>
    %3302 = arith.minimumf %3301, %6 : vector<1x128xf32>
    %3303 = vector.broadcast %3278 : vector<1x1xf32> to vector<1x128xf32>
    %3304 = arith.maximumf %3303, %4 : vector<1x128xf32>
    %3305 = arith.minimumf %3304, %6 : vector<1x128xf32>
    %3306 = arith.subf %3305, %3302 : vector<1x128xf32>
    %3307 = vector.broadcast %3276 : vector<1x1xf32> to vector<1x128xf32>
    %3308 = arith.subf %3302, %3307 : vector<1x128xf32>
    %3309 = vector.broadcast %3287 : vector<1x1xf32> to vector<1x128xf32>
    %3310 = arith.mulf %3309, %3308 : vector<1x128xf32>
    %3311 = vector.broadcast %3277 : vector<1x1xf32> to vector<1x128xf32>
    %3312 = arith.addf %3311, %3310 : vector<1x128xf32>
    %3313 = vector.broadcast %3276 : vector<1x1xf32> to vector<1x128xf32>
    %3314 = arith.subf %3305, %3313 : vector<1x128xf32>
    %3315 = vector.broadcast %3287 : vector<1x1xf32> to vector<1x128xf32>
    %3316 = arith.mulf %3315, %3314 : vector<1x128xf32>
    %3317 = vector.broadcast %3277 : vector<1x1xf32> to vector<1x128xf32>
    %3318 = arith.addf %3317, %3316 : vector<1x128xf32>
    %3319 = arith.mulf %5, %3306 : vector<1x128xf32>
    %3320 = arith.subf %3312, %5 : vector<1x128xf32>
    %cst_440 = arith.constant 0.000000e+00 : f32
    %3321 = vector.broadcast %cst_440 : f32 to vector<1x128xf32>
    %3322 = arith.maximumf %3320, %3321 : vector<1x128xf32>
    %3323 = arith.subf %3318, %5 : vector<1x128xf32>
    %cst_441 = arith.constant 0.000000e+00 : f32
    %3324 = vector.broadcast %cst_441 : f32 to vector<1x128xf32>
    %3325 = arith.maximumf %3323, %3324 : vector<1x128xf32>
    %3326 = vector.broadcast %3277 : vector<1x1xf32> to vector<1x128xf32>
    %3327 = arith.subf %3326, %5 : vector<1x128xf32>
    %cst_442 = arith.constant 0.000000e+00 : f32
    %3328 = vector.broadcast %cst_442 : f32 to vector<1x128xf32>
    %3329 = arith.maximumf %3327, %3328 : vector<1x128xf32>
    %3330 = arith.mulf %3329, %3306 : vector<1x128xf32>
    %3331 = arith.mulf %3325, %3325 : vector<1x128xf32>
    %3332 = arith.mulf %3322, %3322 : vector<1x128xf32>
    %3333 = arith.subf %3331, %3332 : vector<1x128xf32>
    %3334 = vector.broadcast %3299 : vector<1x1xf32> to vector<1x128xf32>
    %3335 = arith.mulf %3333, %3334 : vector<1x128xf32>
    %3336 = arith.subf %3330, %3335 : vector<1x128xf32>
    %3337 = vector.broadcast %3292 : vector<1x1xf32> to vector<1x128xf32>
    %3338 = arith.mulf %3336, %3337 : vector<1x128xf32>
    %3339 = arith.addf %3335, %3338 : vector<1x128xf32>
    %3340 = arith.addf %3319, %3339 : vector<1x128xf32>
    %3341 = arith.subf %3312, %7 : vector<1x128xf32>
    %cst_443 = arith.constant 0.000000e+00 : f32
    %3342 = vector.broadcast %cst_443 : f32 to vector<1x128xf32>
    %3343 = arith.maximumf %3341, %3342 : vector<1x128xf32>
    %3344 = arith.subf %3318, %7 : vector<1x128xf32>
    %cst_444 = arith.constant 0.000000e+00 : f32
    %3345 = vector.broadcast %cst_444 : f32 to vector<1x128xf32>
    %3346 = arith.maximumf %3344, %3345 : vector<1x128xf32>
    %3347 = vector.broadcast %3277 : vector<1x1xf32> to vector<1x128xf32>
    %3348 = arith.subf %3347, %7 : vector<1x128xf32>
    %cst_445 = arith.constant 0.000000e+00 : f32
    %3349 = vector.broadcast %cst_445 : f32 to vector<1x128xf32>
    %3350 = arith.maximumf %3348, %3349 : vector<1x128xf32>
    %3351 = arith.mulf %3350, %3306 : vector<1x128xf32>
    %3352 = arith.mulf %3346, %3346 : vector<1x128xf32>
    %3353 = arith.mulf %3343, %3343 : vector<1x128xf32>
    %3354 = arith.subf %3352, %3353 : vector<1x128xf32>
    %3355 = vector.broadcast %3299 : vector<1x1xf32> to vector<1x128xf32>
    %3356 = arith.mulf %3354, %3355 : vector<1x128xf32>
    %3357 = arith.subf %3351, %3356 : vector<1x128xf32>
    %3358 = vector.broadcast %3292 : vector<1x1xf32> to vector<1x128xf32>
    %3359 = arith.mulf %3357, %3358 : vector<1x128xf32>
    %3360 = arith.addf %3356, %3359 : vector<1x128xf32>
    %3361 = arith.subf %3340, %3360 : vector<1x128xf32>
    %3362 = arith.subf %3275, %3361 : vector<1x128xf32>
    %3363 = math.absf %3362 : vector<1x128xf32>
    %3364 = vector.broadcast %2983 : vector<1x1xf32> to vector<1x128xf32>
    %3365 = arith.addf %3364, %20 : vector<1x128xf32>
    %3366 = arith.subf %3365, %3363 : vector<1x128xf32>
    %cst_446 = arith.constant 9.99999993E-9 : f32
    %3367 = vector.broadcast %cst_446 : f32 to vector<1x128xf32>
    %3368 = arith.maximumf %3366, %3367 : vector<1x128xf32>
    %3369 = arith.divf %3363, %3368 : vector<1x128xf32>
    %3370 = arith.cmpf ogt, %3013, %2951 : vector<1x128xf32>
    %3371 = arith.select %3370, %3013, %2951 : vector<1x128xi1>, vector<1x128xf32>
    %3372 = arith.select %3370, %3369, %2952 : vector<1x128xi1>, vector<1x128xf32>
    %3373 = vector.shape_cast %2972 : vector<1x1xf32> to vector<1x1xf32>
    %3374 = vector.broadcast %3373 : vector<1x1xf32> to vector<1x128xf32>
    %3375 = arith.select %3370, %3374, %2955 : vector<1x128xi1>, vector<1x128xf32>
    %3376 = vector.shape_cast %2973 : vector<1x1xf32> to vector<1x1xf32>
    %3377 = vector.broadcast %3376 : vector<1x1xf32> to vector<1x128xf32>
    %3378 = arith.select %3370, %3377, %2958 : vector<1x128xi1>, vector<1x128xf32>
    %3379 = vector.shape_cast %2974 : vector<1x1xf32> to vector<1x1xf32>
    %3380 = vector.broadcast %3379 : vector<1x1xf32> to vector<1x128xf32>
    %3381 = arith.select %3370, %3380, %2961 : vector<1x128xi1>, vector<1x128xf32>
    %3382 = vector.shape_cast %2975 : vector<1x1xf32> to vector<1x1xf32>
    %3383 = vector.broadcast %3382 : vector<1x1xf32> to vector<1x128xf32>
    %3384 = arith.select %3370, %3383, %2964 : vector<1x128xi1>, vector<1x128xf32>
    %3385 = vector.shape_cast %2976 : vector<1x1xf32> to vector<1x1xf32>
    %3386 = vector.broadcast %3385 : vector<1x1xf32> to vector<1x128xf32>
    %3387 = arith.select %3370, %3386, %2967 : vector<1x128xi1>, vector<1x128xf32>
    %3388 = vector.shape_cast %2977 : vector<1x1xf32> to vector<1x1xf32>
    %3389 = vector.broadcast %3388 : vector<1x1xf32> to vector<1x128xf32>
    %3390 = arith.select %3370, %3389, %2970 : vector<1x128xi1>, vector<1x128xf32>
    %cst_447 = arith.constant 6.000000e-01 : f32
    %3391 = vector.broadcast %cst_447 : f32 to vector<1x128xf32>
    %3392 = arith.cmpf oge, %3371, %3391 : vector<1x128xf32>
    %cst_448 = arith.constant 3.000000e-01 : f32
    %3393 = vector.broadcast %cst_448 : f32 to vector<1x128xf32>
    %3394 = arith.cmpf oge, %3372, %3393 : vector<1x128xf32>
    %3395 = arith.andi %3392, %3394 : vector<1x128xi1>
    %cst_449 = arith.constant 4.000000e-01 : f32
    %3396 = vector.broadcast %cst_449 : f32 to vector<1x128xf32>
    %3397 = arith.cmpf olt, %3371, %3396 : vector<1x128xf32>
    %3398 = arith.andi %3397, %11 : vector<1x128xi1>
    %3399 = arith.extui %3395 : vector<1x128xi1> to vector<1x128xi32>
    %3400 = arith.sitofp %3399 : vector<1x128xi32> to vector<1x128xf32>
    %c0_450 = arith.constant 0 : index
    %c0_451 = arith.constant 0 : index
    %3401 = vector.load %arg11[%c0_450, %c0_451] : memref<1x128xf32, #tpu.memory_space<vmem>>, vector<1x128xf32>
    %3402 = arith.addf %3401, %3400 : vector<1x128xf32>
    %c0_452 = arith.constant 0 : index
    %c0_453 = arith.constant 0 : index
    %3403 = vector.load %arg11[%c0_452, %c0_453] : memref<1x128xf32, #tpu.memory_space<vmem>>, vector<1x128xf32>
    tpu.vector_store %arg11[%c0_452, %c0_453], %3402 {strides = array<i32>} : memref<1x128xf32, #tpu.memory_space<vmem>>, vector<1x128xf32>,
    %cst_454 = arith.constant 9.99999997E-7 : f32
    %3404 = vector.broadcast %cst_454 : f32 to vector<1x128xf32>
    %3405 = arith.maximumf %12, %3404 : vector<1x128xf32>
    %cst_455 = arith.constant 9.99999997E-7 : f32
    %3406 = vector.broadcast %cst_455 : f32 to vector<1x128xf32>
    %3407 = arith.maximumf %13, %3406 : vector<1x128xf32>
    %3408 = arith.subf %3375, %16 : vector<1x128xf32>
    %3409 = arith.divf %3408, %3405 : vector<1x128xf32>
    %cst_456 = arith.constant 0.000000e+00 : f32
    %3410 = vector.broadcast %cst_456 : f32 to vector<1x128xf32>
    %3411 = arith.select %3395, %3409, %3410 : vector<1x128xi1>, vector<1x128xf32>
    %3412 = arith.subf %3378, %19 : vector<1x128xf32>
    %3413 = arith.divf %3412, %3407 : vector<1x128xf32>
    %cst_457 = arith.constant 0.000000e+00 : f32
    %3414 = vector.broadcast %cst_457 : f32 to vector<1x128xf32>
    %3415 = arith.select %3395, %3413, %3414 : vector<1x128xi1>, vector<1x128xf32>
    %3416 = arith.divf %3381, %3405 : vector<1x128xf32>
    %3417 = math.log %3416 : vector<1x128xf32>
    %cst_458 = arith.constant 0.000000e+00 : f32
    %3418 = vector.broadcast %cst_458 : f32 to vector<1x128xf32>
    %3419 = arith.select %3395, %3417, %3418 : vector<1x128xi1>, vector<1x128xf32>
    %3420 = arith.divf %3384, %3407 : vector<1x128xf32>
    %3421 = math.log %3420 : vector<1x128xf32>
    %cst_459 = arith.constant 0.000000e+00 : f32
    %3422 = vector.broadcast %cst_459 : f32 to vector<1x128xf32>
    %3423 = arith.select %3395, %3421, %3422 : vector<1x128xi1>, vector<1x128xf32>
    %3424 = arith.subf %3387, %8 : vector<1x128xf32>
    %cst_460 = arith.constant 0.0174532924 : f32
    %3425 = vector.broadcast %cst_460 : f32 to vector<1x128xf32>
    %3426 = arith.mulf %3424, %3425 : vector<1x128xf32>
    %cst_461 = arith.constant 0.000000e+00 : f32
    %3427 = vector.broadcast %cst_461 : f32 to vector<1x128xf32>
    %3428 = arith.select %3395, %3426, %3427 : vector<1x128xi1>, vector<1x128xf32>
    %c0_462 = arith.constant 0 : index
    %c0_463 = arith.constant 0 : index
    %c0_464 = arith.constant 0 : index
    %3429 = vector.load %arg5[%c0_462, %c0_463, %c0_464] : memref<1x5x128xf32, #tpu.memory_space<vmem>>, vector<1x5x128xf32>
    %3430 = vector.shape_cast %3429 : vector<1x5x128xf32> to vector<5x128xf32>
    %3431 = vector.extract_strided_slice %3430 {offsets = [0, 0], sizes = [1, 128], strides = [1, 1]} : vector<5x128xf32> to vector<1x128xf32>
    %3432 = arith.subf %3411, %3431 : vector<1x128xf32>
    %3433 = math.absf %3432 : vector<1x128xf32>
    %cst_465 = arith.constant 1.000000e+00 : f32
    %3434 = vector.broadcast %cst_465 : f32 to vector<1x128xf32>
    %3435 = arith.cmpf ole, %3433, %3434 : vector<1x128xf32>
    %cst_466 = arith.constant 5.000000e-01 : f32
    %3436 = vector.broadcast %cst_466 : f32 to vector<1x128xf32>
    %3437 = arith.mulf %3436, %3433 : vector<1x128xf32>
    %3438 = arith.mulf %3437, %3433 : vector<1x128xf32>
    %cst_467 = arith.constant 5.000000e-01 : f32
    %3439 = vector.broadcast %cst_467 : f32 to vector<1x128xf32>
    %3440 = arith.subf %3433, %3439 : vector<1x128xf32>
    %3441 = arith.select %3435, %3438, %3440 : vector<1x128xi1>, vector<1x128xf32>
    %3442 = vector.extract_strided_slice %3430 {offsets = [1, 0], sizes = [1, 128], strides = [1, 1]} : vector<5x128xf32> to vector<1x128xf32>
    %3443 = arith.subf %3415, %3442 : vector<1x128xf32>
    %3444 = math.absf %3443 : vector<1x128xf32>
    %cst_468 = arith.constant 1.000000e+00 : f32
    %3445 = vector.broadcast %cst_468 : f32 to vector<1x128xf32>
    %3446 = arith.cmpf ole, %3444, %3445 : vector<1x128xf32>
    %cst_469 = arith.constant 5.000000e-01 : f32
    %3447 = vector.broadcast %cst_469 : f32 to vector<1x128xf32>
    %3448 = arith.mulf %3447, %3444 : vector<1x128xf32>
    %3449 = arith.mulf %3448, %3444 : vector<1x128xf32>
    %cst_470 = arith.constant 5.000000e-01 : f32
    %3450 = vector.broadcast %cst_470 : f32 to vector<1x128xf32>
    %3451 = arith.subf %3444, %3450 : vector<1x128xf32>
    %3452 = arith.select %3446, %3449, %3451 : vector<1x128xi1>, vector<1x128xf32>
    %3453 = arith.addf %3441, %3452 : vector<1x128xf32>
    %3454 = vector.extract_strided_slice %3430 {offsets = [2, 0], sizes = [1, 128], strides = [1, 1]} : vector<5x128xf32> to vector<1x128xf32>
    %3455 = arith.subf %3419, %3454 : vector<1x128xf32>
    %3456 = math.absf %3455 : vector<1x128xf32>
    %cst_471 = arith.constant 1.000000e+00 : f32
    %3457 = vector.broadcast %cst_471 : f32 to vector<1x128xf32>
    %3458 = arith.cmpf ole, %3456, %3457 : vector<1x128xf32>
    %cst_472 = arith.constant 5.000000e-01 : f32
    %3459 = vector.broadcast %cst_472 : f32 to vector<1x128xf32>
    %3460 = arith.mulf %3459, %3456 : vector<1x128xf32>
    %3461 = arith.mulf %3460, %3456 : vector<1x128xf32>
    %cst_473 = arith.constant 5.000000e-01 : f32
    %3462 = vector.broadcast %cst_473 : f32 to vector<1x128xf32>
    %3463 = arith.subf %3456, %3462 : vector<1x128xf32>
    %3464 = arith.select %3458, %3461, %3463 : vector<1x128xi1>, vector<1x128xf32>
    %3465 = arith.addf %3453, %3464 : vector<1x128xf32>
    %3466 = vector.extract_strided_slice %3430 {offsets = [3, 0], sizes = [1, 128], strides = [1, 1]} : vector<5x128xf32> to vector<1x128xf32>
    %3467 = arith.subf %3423, %3466 : vector<1x128xf32>
    %3468 = math.absf %3467 : vector<1x128xf32>
    %cst_474 = arith.constant 1.000000e+00 : f32
    %3469 = vector.broadcast %cst_474 : f32 to vector<1x128xf32>
    %3470 = arith.cmpf ole, %3468, %3469 : vector<1x128xf32>
    %cst_475 = arith.constant 5.000000e-01 : f32
    %3471 = vector.broadcast %cst_475 : f32 to vector<1x128xf32>
    %3472 = arith.mulf %3471, %3468 : vector<1x128xf32>
    %3473 = arith.mulf %3472, %3468 : vector<1x128xf32>
    %cst_476 = arith.constant 5.000000e-01 : f32
    %3474 = vector.broadcast %cst_476 : f32 to vector<1x128xf32>
    %3475 = arith.subf %3468, %3474 : vector<1x128xf32>
    %3476 = arith.select %3470, %3473, %3475 : vector<1x128xi1>, vector<1x128xf32>
    %3477 = arith.addf %3465, %3476 : vector<1x128xf32>
    %3478 = vector.extract_strided_slice %3430 {offsets = [4, 0], sizes = [1, 128], strides = [1, 1]} : vector<5x128xf32> to vector<1x128xf32>
    %3479 = arith.subf %3428, %3478 : vector<1x128xf32>
    %3480 = math.absf %3479 : vector<1x128xf32>
    %cst_477 = arith.constant 1.000000e+00 : f32
    %3481 = vector.broadcast %cst_477 : f32 to vector<1x128xf32>
    %3482 = arith.cmpf ole, %3480, %3481 : vector<1x128xf32>
    %cst_478 = arith.constant 5.000000e-01 : f32
    %3483 = vector.broadcast %cst_478 : f32 to vector<1x128xf32>
    %3484 = arith.mulf %3483, %3480 : vector<1x128xf32>
    %3485 = arith.mulf %3484, %3480 : vector<1x128xf32>
    %cst_479 = arith.constant 5.000000e-01 : f32
    %3486 = vector.broadcast %cst_479 : f32 to vector<1x128xf32>
    %3487 = arith.subf %3480, %3486 : vector<1x128xf32>
    %3488 = arith.select %3482, %3485, %3487 : vector<1x128xi1>, vector<1x128xf32>
    %3489 = arith.addf %3477, %3488 : vector<1x128xf32>
    %c0_480 = arith.constant 0 : index
    %c0_481 = arith.constant 0 : index
    %3490 = vector.load %arg10[%c0_480, %c0_481] : memref<1x128xf32, #tpu.memory_space<vmem>>, vector<1x128xf32>
    %3491 = arith.mulf %3489, %3400 : vector<1x128xf32>
    %3492 = arith.addf %3490, %3491 : vector<1x128xf32>
    %c0_482 = arith.constant 0 : index
    %c0_483 = arith.constant 0 : index
    %3493 = vector.load %arg10[%c0_482, %c0_483] : memref<1x128xf32, #tpu.memory_space<vmem>>, vector<1x128xf32>
    tpu.vector_store %arg10[%c0_482, %c0_483], %3492 {strides = array<i32>} : memref<1x128xf32, #tpu.memory_space<vmem>>, vector<1x128xf32>,
    %c0_484 = arith.constant 0 : index
    %c0_485 = arith.constant 0 : index
    %c0_486 = arith.constant 0 : index
    %3494 = vector.load %arg4[%c0_484, %c0_485, %c0_486] : memref<1x8x128xf32, #tpu.memory_space<vmem>>, vector<1x8x128xf32>
    %3495 = vector.shape_cast %3494 : vector<1x8x128xf32> to vector<8x128xf32>
    %cst_487 = arith.constant 9.99999974E-5 : f32
    %cst_488 = arith.constant 0.999899983 : f32
    %3496 = vector.broadcast %cst_487 : f32 to vector<8x128xf32>
    %3497 = arith.maximumf %3496, %3495 : vector<8x128xf32>
    %3498 = vector.broadcast %cst_488 : f32 to vector<8x128xf32>
    %3499 = arith.minimumf %3498, %3497 : vector<8x128xf32>
    %cst_489 = arith.constant -1.000000e+00 : f32
    %3500 = vector.broadcast %cst_489 : f32 to vector<1x128xf32>
    %3501 = arith.select %3395, %3390, %3500 : vector<1x128xi1>, vector<1x128xf32>
    %3502 = arith.fptosi %3501 : vector<1x128xf32> to vector<1x128xi32>
    %3503 = tpu.iota {dimensions = array<i32: 0>} : vector<8x128xi32>
    %3504 = vector.broadcast %3502 : vector<1x128xi32> to vector<8x128xi32>
    %3505 = arith.cmpi eq, %3503, %3504 : vector<8x128xi32>
    %3506 = arith.ori %3395, %3398 : vector<1x128xi1>
    %cst_490 = arith.constant 7.500000e-01 : f32
    %cst_491 = arith.constant 0.000000e+00 : f32
    %3507 = vector.broadcast %cst_490 : f32 to vector<1x128xf32>
    %3508 = vector.broadcast %cst_491 : f32 to vector<1x128xf32>
    %3509 = arith.select %3506, %3507, %3508 : vector<1x128xi1>, vector<1x128xf32>
    %cst_492 = arith.constant 2.500000e-01 : f32
    %3510 = vector.broadcast %cst_492 : f32 to vector<8x128xf32>
    %3511 = vector.shape_cast %3509 : vector<1x128xf32> to vector<1x128xf32>
    %3512 = vector.broadcast %3511 : vector<1x128xf32> to vector<8x128xf32>
    %3513 = arith.select %3505, %3510, %3512 : vector<8x128xi1>, vector<8x128xf32>
    %cst_493 = arith.constant 1.000000e+00 : f32
    %3514 = vector.broadcast %cst_493 : f32 to vector<8x128xf32>
    %3515 = arith.subf %3514, %3499 : vector<8x128xf32>
    %3516 = arith.select %3505, %3515, %3499 : vector<8x128xi1>, vector<8x128xf32>
    %cst_494 = arith.constant 1.000000e+00 : f32
    %3517 = vector.broadcast %cst_494 : f32 to vector<8x128xf32>
    %3518 = arith.subf %3517, %3499 : vector<8x128xf32>
    %3519 = arith.select %3505, %3499, %3518 : vector<8x128xi1>, vector<8x128xf32>
    %3520 = math.log %3519 : vector<8x128xf32>
    %cst_495 = arith.constant 0.000000e+00 : f32
    %3521 = vector.broadcast %cst_495 : f32 to vector<8x128xf32>
    %3522 = arith.subf %3521, %3520 : vector<8x128xf32>
    %c0_496 = arith.constant 0 : index
    %c0_497 = arith.constant 0 : index
    %3523 = vector.load %arg9[%c0_496, %c0_497] : memref<1x128xf32, #tpu.memory_space<vmem>>, vector<1x128xf32>
    %3524 = arith.mulf %3516, %3516 : vector<8x128xf32>
    %3525 = arith.mulf %3513, %3524 : vector<8x128xf32>
    %3526 = arith.mulf %3525, %3522 : vector<8x128xf32>
    %cst_498 = arith.constant dense<0.000000e+00> : vector<128xf32>
    %3527 = vector.multi_reduction <add>, %3526, %cst_498 [0] : vector<8x128xf32> to vector<128xf32>
    %3528 = vector.shape_cast %3527 : vector<128xf32> to vector<1x128xf32>
    %3529 = arith.addf %3523, %3528 : vector<1x128xf32>
    %c0_499 = arith.constant 0 : index
    %c0_500 = arith.constant 0 : index
    %3530 = vector.load %arg9[%c0_499, %c0_500] : memref<1x128xf32, #tpu.memory_space<vmem>>, vector<1x128xf32>
    tpu.vector_store %arg9[%c0_499, %c0_500], %3529 {strides = array<i32>} : memref<1x128xf32, #tpu.memory_space<vmem>>, vector<1x128xf32>,
    %c0_i32_501 = arith.constant 0 : i32
    %3531 = arith.cmpi eq, %arg1, %c0_i32_501 : i32
    %3532 = arith.extui %3531 : i1 to i32
    %c0_i32_502 = arith.constant 0 : i32
    %3533 = arith.cmpi ne, %3532, %c0_i32_502 : i32
    scf.if %3533 {
      %c0_503 = arith.constant 0 : index
      %c0_504 = arith.constant 0 : index
      %c0_505 = arith.constant 0 : index
      %3534 = vector.load %arg6[%c0_503, %c0_504, %c0_505] : memref<1x1x1xf32, #tpu.memory_space<vmem>>, vector<1x1x1xf32>
      %c0_506 = arith.constant 0 : index
      %c0_507 = arith.constant 0 : index
      %3535 = vector.load %arg9[%c0_506, %c0_507] : memref<1x128xf32, #tpu.memory_space<vmem>>, vector<1x128xf32>
      %3536 = vector.shape_cast %3535 : vector<1x128xf32> to vector<1x1x128xf32>
      %cst_508 = arith.constant dense<0.000000e+00> : vector<1xf32>
      %3537 = vector.multi_reduction <add>, %3536, %cst_508 [1, 2] : vector<1x1x128xf32> to vector<1xf32>
      %3538 = vector.shape_cast %3537 : vector<1xf32> to vector<1x1x1xf32>
      %3539 = vector.extract %3538[0, 0, 0] : f32 from vector<1x1x1xf32>
      %3540 = vector.broadcast %3539 : f32 to vector<1x1x1xf32>
      %3541 = arith.addf %3534, %3540 : vector<1x1x1xf32>
      %c0_509 = arith.constant 0 : index
      %c0_510 = arith.constant 0 : index
      %c0_511 = arith.constant 0 : index
      %3542 = vector.load %arg6[%c0_509, %c0_510, %c0_511] : memref<1x1x1xf32, #tpu.memory_space<vmem>>, vector<1x1x1xf32>
      tpu.vector_store %arg6[%c0_509, %c0_510, %c0_511], %3541 {strides = array<i32>} : memref<1x1x1xf32, #tpu.memory_space<vmem>>, vector<1x1x1xf32>,
      %c0_512 = arith.constant 0 : index
      %c0_513 = arith.constant 0 : index
      %c0_514 = arith.constant 0 : index
      %3543 = vector.load %arg7[%c0_512, %c0_513, %c0_514] : memref<1x1x1xf32, #tpu.memory_space<vmem>>, vector<1x1x1xf32>
      %c0_515 = arith.constant 0 : index
      %c0_516 = arith.constant 0 : index
      %3544 = vector.load %arg10[%c0_515, %c0_516] : memref<1x128xf32, #tpu.memory_space<vmem>>, vector<1x128xf32>
      %3545 = vector.shape_cast %3544 : vector<1x128xf32> to vector<1x1x128xf32>
      %cst_517 = arith.constant dense<0.000000e+00> : vector<1xf32>
      %3546 = vector.multi_reduction <add>, %3545, %cst_517 [1, 2] : vector<1x1x128xf32> to vector<1xf32>
      %3547 = vector.shape_cast %3546 : vector<1xf32> to vector<1x1x1xf32>
      %3548 = vector.extract %3547[0, 0, 0] : f32 from vector<1x1x1xf32>
      %3549 = vector.broadcast %3548 : f32 to vector<1x1x1xf32>
      %3550 = arith.addf %3543, %3549 : vector<1x1x1xf32>
      %c0_518 = arith.constant 0 : index
      %c0_519 = arith.constant 0 : index
      %c0_520 = arith.constant 0 : index
      %3551 = vector.load %arg7[%c0_518, %c0_519, %c0_520] : memref<1x1x1xf32, #tpu.memory_space<vmem>>, vector<1x1x1xf32>
      tpu.vector_store %arg7[%c0_518, %c0_519, %c0_520], %3550 {strides = array<i32>} : memref<1x1x1xf32, #tpu.memory_space<vmem>>, vector<1x1x1xf32>,
      %c0_521 = arith.constant 0 : index
      %c0_522 = arith.constant 0 : index
      %c0_523 = arith.constant 0 : index
      %3552 = vector.load %arg8[%c0_521, %c0_522, %c0_523] : memref<1x1x1xf32, #tpu.memory_space<vmem>>, vector<1x1x1xf32>
      %c0_524 = arith.constant 0 : index
      %c0_525 = arith.constant 0 : index
      %3553 = vector.load %arg11[%c0_524, %c0_525] : memref<1x128xf32, #tpu.memory_space<vmem>>, vector<1x128xf32>
      %3554 = vector.shape_cast %3553 : vector<1x128xf32> to vector<1x1x128xf32>
      %cst_526 = arith.constant dense<0.000000e+00> : vector<1xf32>
      %3555 = vector.multi_reduction <add>, %3554, %cst_526 [1, 2] : vector<1x1x128xf32> to vector<1xf32>
      %3556 = vector.shape_cast %3555 : vector<1xf32> to vector<1x1x1xf32>
      %3557 = vector.extract %3556[0, 0, 0] : f32 from vector<1x1x1xf32>
      %3558 = vector.broadcast %3557 : f32 to vector<1x1x1xf32>
      %3559 = arith.addf %3552, %3558 : vector<1x1x1xf32>
      %c0_527 = arith.constant 0 : index
      %c0_528 = arith.constant 0 : index
      %c0_529 = arith.constant 0 : index
      %3560 = vector.load %arg8[%c0_527, %c0_528, %c0_529] : memref<1x1x1xf32, #tpu.memory_space<vmem>>, vector<1x1x1xf32>
      tpu.vector_store %arg8[%c0_527, %c0_528, %c0_529], %3559 {strides = array<i32>} : memref<1x1x1xf32, #tpu.memory_space<vmem>>, vector<1x1x1xf32>,
    } else {
    }
    return
  }
  func.func @transform_0(%arg0: i32, %arg1: i32) -> (i32, i32, i32) {
    %c0_i32 = arith.constant 0 : i32
    %c0_i32_0 = arith.constant 0 : i32
    %c0_i32_1 = arith.constant 0 : i32
    return %arg0, %c0_i32, %c0_i32_0 : i32, i32, i32
  }
  func.func @transform_1(%arg0: i32, %arg1: i32) -> (i32, i32) {
    %c0_i32 = arith.constant 0 : i32
    %c0_i32_0 = arith.constant 0 : i32
    return %c0_i32, %arg1 : i32, i32
  }
  func.func @transform_2(%arg0: i32, %arg1: i32) -> (i32, i32, i32) {
    %c0_i32 = arith.constant 0 : i32
    %c0_i32_0 = arith.constant 0 : i32
    return %arg0, %c0_i32, %arg1 : i32, i32, i32
  }
  func.func @transform_3(%arg0: i32, %arg1: i32) -> (i32, i32, i32) {
    %c0_i32 = arith.constant 0 : i32
    %c0_i32_0 = arith.constant 0 : i32
    return %arg0, %c0_i32, %arg1 : i32, i32, i32
  }
  func.func @transform_4(%arg0: i32, %arg1: i32) -> (i32, i32, i32) {
    %c0_i32 = arith.constant 0 : i32
    %c0_i32_0 = arith.constant 0 : i32
    %c0_i32_1 = arith.constant 0 : i32
    return %arg0, %c0_i32, %c0_i32_0 : i32, i32, i32
  }
  func.func @transform_5(%arg0: i32, %arg1: i32) -> (i32, i32, i32) {
    %c0_i32 = arith.constant 0 : i32
    %c0_i32_0 = arith.constant 0 : i32
    %c0_i32_1 = arith.constant 0 : i32
    return %arg0, %c0_i32, %c0_i32_0 : i32, i32, i32
  }
  func.func @transform_6(%arg0: i32, %arg1: i32) -> (i32, i32, i32) {
    %c0_i32 = arith.constant 0 : i32
    %c0_i32_0 = arith.constant 0 : i32
    %c0_i32_1 = arith.constant 0 : i32
    return %arg0, %c0_i32, %c0_i32_0 : i32, i32, i32
  }
}

</mosaic_0001>

<llo_original>
// kernel: focal_loss_forward.1
$region0: #{focal_loss_forward.1}
  #allocation0 [shape = 'u32[]', space=smem, size = 0x4, offset = 0x4, fixed_abs, tag = 'smem constant byte address 0x4 - core index']
  #allocation1 [shape = 'u32[72,128]{1,0:T(1,128)}', space=vmem, size = 0x9000, scoped, tag = 'internal scratch']
  #allocation2 [shape = 'f32[1,128]{1,0:T(1,128)}', space=vmem, size = 0x200, scoped, tag = 'scratch operand']
  #allocation3 [shape = 'f32[1,128]{1,0:T(1,128)}', space=vmem, size = 0x200, scoped, tag = 'scratch operand']
  #allocation4 [shape = 'f32[1,128]{1,0:T(1,128)}', space=vmem, size = 0x200, scoped, tag = 'scratch operand']
  %s0 = inlined_call_operand.vmem [shape: f32[2,8,20], index: 0, kind: input, shape index: {}]
  %s1 = inlined_call_operand.vmem [shape: f32[6,128], index: 1, kind: input, shape index: {}]
  %s2 = inlined_call_operand.vmem [shape: f32[2,8,128], index: 2, kind: input, shape index: {}]
  %s3 = inlined_call_operand.vmem [shape: f32[2,5,128], index: 3, kind: input, shape index: {}]
  %s4 = inlined_call_operand.vmem [shape: f32[2,1,1], index: 4, kind: output, shape index: {0}]
  %s5 = inlined_call_operand.vmem [shape: f32[2,1,1], index: 5, kind: output, shape index: {1}]
  %s6 = inlined_call_operand.vmem [shape: f32[2,1,1], index: 6, kind: output, shape index: {2}]
  %7 = xla_tuple %s4, %s5, %s6
  %s8 = sld [smem:[#allocation0]]
  $region73: #{focal_loss_forward.1} parent=0
    _
  %s10 = ssub.s32 1, %s8
  %s11 = scalar_select 0, %s10, %s8
  loop: start=0, step=1, limit=4
  $region2: #{focal_loss_forward.1} parent=0 // loop_pre_header
    _
  $region3: #{focal_loss_forward.1} parent=0 // loop_header
    %s13 = sphi 0, %s17
    %p14 = scmp.ge.s32.totalorder %s13, 4
    %s20 = sphi 0, %s32
    %s21 = sphi 0, %s28
    %s22 = sphi 0, %s20
    %s23 = sphi 0, %s21
    %s24 = sphi 0, %s22
    %s25 = sphi 0, %s23
    %s35 = sphi 0, %s37
    %s38 = sphi 0, %s35
    %s39 = sphi 0, %s38
    %s55 = sphi 0, %s39
    %s61 = sphi 0, %s63
    %s64 = sphi 0, %s61
    %s65 = sphi 0, %s64
    %s81 = sphi 0, %s65
    %s89 = sphi 0, %s91
    %s92 = sphi 0, %s89
    %s93 = sphi 0, %s92
    %s109 = sphi 0, %s93
    %s117 = sphi 0, %s119
    %s120 = sphi 0, %s117
    %s121 = sphi 0, %s120
    %s137 = sphi 0, %s121
    %s143 = sphi 0, %s145
    %s146 = sphi 0, %s143
    %s147 = sphi 0, %s146
    %s163 = sphi 0, %s147
    %s169 = sphi 0, %s171
    %s172 = sphi 0, %s169
    %s173 = sphi 0, %s172
    %s189 = sphi 0, %s173
    %s195 = sphi 0, %s197
    %s198 = sphi 0, %s195
    %s199 = sphi 0, %s198
    %s215 = sphi 0, %s199
  $region4: #{focal_loss_forward.1} parent=0 // loop_header_branch
    %16 = sbr.rel (%p14) target = $region8
  $region5: #{focal_loss_forward.1} parent=0 // loop_body
    %s18 = ssub.s32 %s13, 1
    %s19 = ssub.s32 %s13, 2
    %s26 = sadd.s32 1, %s21
    %p27 = scmp.ge.s32.totalorder %s26, 1
    %s28 = scalar_select %p27, 0, %s26
    %s29 = sadd.s32 1, %s20
    %s30 = scalar_select %p27, %s29, %s20
    %p31 = scmp.ge.s32.totalorder %s30, 2
    %s32 = scalar_select %p31, 0, %s30
    %s33 = ssub.s32 %s20, %s32
    %p34 = scmp.eq.s32.totalorder %s33, 0
    %s36 = sadd.s32 %s35, 1
    %s37 = scalar_select %p34, %s35, %s36
    %p40 = pneg %p34
    %p41 = scmp.eq.s32.totalorder %s13, 1
    %p42 = por %p40, %p41
    %p43 = scmp.ne.s32.totalorder %s35, %s38
    %p44 = scmp.eq.s32.totalorder %s13, 0
    %p45 = por %p43, %p44
    %p46 = scmp.ne.s32.totalorder %s35, %s38
    %p47 = scmp.eq.s32.totalorder %s18, 1
    %p48 = por %p46, %p47
    %p49 = scmp.ne.s32.totalorder %s38, %s39
    %p50 = scmp.eq.s32.totalorder %s18, 0
    %p51 = por %p49, %p50
    %p52 = scmp.ne.s32.totalorder %s38, %s39
    %p53 = scmp.eq.s32.totalorder %s19, 1
    %p54 = por %p52, %p53
    %p56 = scmp.ne.s32.totalorder %s39, %s55
    %p57 = scmp.eq.s32.totalorder %s19, 0
    %p58 = por %p56, %p57
    %s59 = ssub.s32 %s21, %s28
    %p60 = scmp.eq.s32.totalorder %s59, 0
    %s62 = sadd.s32 %s61, 1
    %s63 = scalar_select %p60, %s61, %s62
    %p66 = pneg %p60
    %p67 = scmp.eq.s32.totalorder %s13, 1
    %p68 = por %p66, %p67
    %p69 = scmp.ne.s32.totalorder %s61, %s64
    %p70 = scmp.eq.s32.totalorder %s13, 0
    %p71 = por %p69, %p70
    %p72 = scmp.ne.s32.totalorder %s61, %s64
    %p73 = scmp.eq.s32.totalorder %s18, 1
    %p74 = por %p72, %p73
    %p75 = scmp.ne.s32.totalorder %s64, %s65
    %p76 = scmp.eq.s32.totalorder %s18, 0
    %p77 = por %p75, %p76
    %p78 = scmp.ne.s32.totalorder %s64, %s65
    %p79 = scmp.eq.s32.totalorder %s19, 1
    %p80 = por %p78, %p79
    %p82 = scmp.ne.s32.totalorder %s65, %s81
    %p83 = scmp.eq.s32.totalorder %s19, 0
    %p84 = por %p82, %p83
    %s85 = ssub.s32 %s20, %s32
    %s86 = ssub.s32 %s21, %s28
    %s87 = sor.u32 %s85, %s86
    %p88 = scmp.eq.s32.totalorder %s87, 0
    %s90 = sadd.s32 %s89, 1
    %s91 = scalar_select %p88, %s89, %s90
    %p94 = pneg %p88
    %p95 = scmp.eq.s32.totalorder %s13, 1
    %p96 = por %p94, %p95
    %p97 = scmp.ne.s32.totalorder %s89, %s92
    %p98 = scmp.eq.s32.totalorder %s13, 0
    %p99 = por %p97, %p98
    %p100 = scmp.ne.s32.totalorder %s89, %s92
    %p101 = scmp.eq.s32.totalorder %s18, 1
    %p102 = por %p100, %p101
    %p103 = scmp.ne.s32.totalorder %s92, %s93
    %p104 = scmp.eq.s32.totalorder %s18, 0
    %p105 = por %p103, %p104
    %p106 = scmp.ne.s32.totalorder %s92, %s93
    %p107 = scmp.eq.s32.totalorder %s19, 1
    %p108 = por %p106, %p107
    %p110 = scmp.ne.s32.totalorder %s93, %s109
    %p111 = scmp.eq.s32.totalorder %s19, 0
    %p112 = por %p110, %p111
    %s113 = ssub.s32 %s20, %s32
    %s114 = ssub.s32 %s21, %s28
    %s115 = sor.u32 %s113, %s114
    %p116 = scmp.eq.s32.totalorder %s115, 0
    %s118 = sadd.s32 %s117, 1
    %s119 = scalar_select %p116, %s117, %s118
    %p122 = pneg %p116
    %p123 = scmp.eq.s32.totalorder %s13, 1
    %p124 = por %p122, %p123
    %p125 = scmp.ne.s32.totalorder %s117, %s120
    %p126 = scmp.eq.s32.totalorder %s13, 0
    %p127 = por %p125, %p126
    %p128 = scmp.ne.s32.totalorder %s117, %s120
    %p129 = scmp.eq.s32.totalorder %s18, 1
    %p130 = por %p128, %p129
    %p131 = scmp.ne.s32.totalorder %s120, %s121
    %p132 = scmp.eq.s32.totalorder %s18, 0
    %p133 = por %p131, %p132
    %p134 = scmp.ne.s32.totalorder %s120, %s121
    %p135 = scmp.eq.s32.totalorder %s19, 1
    %p136 = por %p134, %p135
    %p138 = scmp.ne.s32.totalorder %s121, %s137
    %p139 = scmp.eq.s32.totalorder %s19, 0
    %p140 = por %p138, %p139
    %s141 = ssub.s32 %s20, %s32
    %p142 = scmp.eq.s32.totalorder %s141, 0
    %s144 = sadd.s32 %s143, 1
    %s145 = scalar_select %p142, %s143, %s144
    %p148 = pneg %p142
    %p149 = scmp.eq.s32.totalorder %s13, 1
    %p150 = por %p148, %p149
    %p151 = scmp.ne.s32.totalorder %s143, %s146
    %p152 = scmp.eq.s32.totalorder %s13, 0
    %p153 = por %p151, %p152
    %p154 = scmp.ne.s32.totalorder %s143, %s146
    %p155 = scmp.eq.s32.totalorder %s18, 1
    %p156 = por %p154, %p155
    %p157 = scmp.ne.s32.totalorder %s146, %s147
    %p158 = scmp.eq.s32.totalorder %s18, 0
    %p159 = por %p157, %p158
    %p160 = scmp.ne.s32.totalorder %s146, %s147
    %p161 = scmp.eq.s32.totalorder %s19, 1
    %p162 = por %p160, %p161
    %p164 = scmp.ne.s32.totalorder %s147, %s163
    %p165 = scmp.eq.s32.totalorder %s19, 0
    %p166 = por %p164, %p165
    %s167 = ssub.s32 %s20, %s32
    %p168 = scmp.eq.s32.totalorder %s167, 0
    %s170 = sadd.s32 %s169, 1
    %s171 = scalar_select %p168, %s169, %s170
    %p174 = pneg %p168
    %p175 = scmp.eq.s32.totalorder %s13, 1
    %p176 = por %p174, %p175
    %p177 = scmp.ne.s32.totalorder %s169, %s172
    %p178 = scmp.eq.s32.totalorder %s13, 0
    %p179 = por %p177, %p178
    %p180 = scmp.ne.s32.totalorder %s169, %s172
    %p181 = scmp.eq.s32.totalorder %s18, 1
    %p182 = por %p180, %p181
    %p183 = scmp.ne.s32.totalorder %s172, %s173
    %p184 = scmp.eq.s32.totalorder %s18, 0
    %p185 = por %p183, %p184
    %p186 = scmp.ne.s32.totalorder %s172, %s173
    %p187 = scmp.eq.s32.totalorder %s19, 1
    %p188 = por %p186, %p187
    %p190 = scmp.ne.s32.totalorder %s173, %s189
    %p191 = scmp.eq.s32.totalorder %s19, 0
    %p192 = por %p190, %p191
    %s193 = ssub.s32 %s20, %s32
    %p194 = scmp.eq.s32.totalorder %s193, 0
    %s196 = sadd.s32 %s195, 1
    %s197 = scalar_select %p194, %s195, %s196
    %p200 = pneg %p194
    %p201 = scmp.eq.s32.totalorder %s13, 1
    %p202 = por %p200, %p201
    %p203 = scmp.ne.s32.totalorder %s195, %s198
    %p204 = scmp.eq.s32.totalorder %s13, 0
    %p205 = por %p203, %p204
    %p206 = scmp.ne.s32.totalorder %s195, %s198
    %p207 = scmp.eq.s32.totalorder %s18, 1
    %p208 = por %p206, %p207
    %p209 = scmp.ne.s32.totalorder %s198, %s199
    %p210 = scmp.eq.s32.totalorder %s18, 0
    %p211 = por %p209, %p210
    %p212 = scmp.ne.s32.totalorder %s198, %s199
    %p213 = scmp.eq.s32.totalorder %s19, 1
    %p214 = por %p212, %p213
    %p216 = scmp.ne.s32.totalorder %s199, %s215
    %p217 = scmp.eq.s32.totalorder %s19, 0
    %p218 = por %p216, %p217
    %p219 = scmp.le.s32.totalorder 1, %s13
    %p220 = scmp.lt.s32.totalorder %s13, 3
    %p221 = pnand %p219, %p220
    %p222 = pneg %p221
    // Predicated region
    $region9: #{focal_loss_forward.1} parent=5 // pred_check
      _
    $region10: #{focal_loss_forward.1} parent=5 // pred_check_branch
      %224 = sbr.rel (%p221) target = $region12
    $region11: #{focal_loss_forward.1} parent=5 // pred_region
      %s225 = ssub.s32 %s13, 1
      // Predicated region
      $region13: #{focal_loss_forward.1} parent=11 // pred_check
        %p226 = pneg %p77
      $region14: #{focal_loss_forward.1} parent=11 // pred_check_branch
        %228 = sbr.rel (%p226) target = $region16
      $region15: #{focal_loss_forward.1} parent=11 // pred_region
        %p229 = scmp.lt.s32.totalorder %s23, 0
        %s230 = scalar_select %p229, %s23, 0
        %s231 = smul.addr %s230, 8
        %s232 = scalar_lea.vmem %s1, %s231
      $region16: #{focal_loss_forward.1} parent=11 // pred_fallthru
        _
    $region12: #{focal_loss_forward.1} parent=5 // pred_fallthru
      _
    %p233 = scmp.lt.s32.totalorder %s13, 2
    // Predicated region
    $region17: #{focal_loss_forward.1} parent=5 // pred_check
      %p234 = pneg %p233
    $region18: #{focal_loss_forward.1} parent=5 // pred_check_branch
      %236 = sbr.rel (%p234) target = $region20
    $region19: #{focal_loss_forward.1} parent=5 // pred_region
      // Predicated region
      $region21: #{focal_loss_forward.1} parent=19 // pred_check
        %p237 = pneg %p45
      $region22: #{focal_loss_forward.1} parent=19 // pred_check_branch
        %239 = sbr.rel (%p237) target = $region24
      $region23: #{focal_loss_forward.1} parent=19 // pred_region
        %p240 = scmp.lt.s32.totalorder %s20, 1
        %s241 = scalar_select %p240, %s20, 1
        %s242 = smul.addr %s241, 8
        %s243 = scalar_lea.vmem %s0, %s242
      $region24: #{focal_loss_forward.1} parent=19 // pred_fallthru
        _
      // Predicated region
      $region25: #{focal_loss_forward.1} parent=19 // pred_check
        %p244 = pneg %p99
      $region26: #{focal_loss_forward.1} parent=19 // pred_check_branch
        %246 = sbr.rel (%p244) target = $region28
      $region27: #{focal_loss_forward.1} parent=19 // pred_region
        %p247 = scmp.lt.s32.totalorder %s20, 1
        %s248 = scalar_select %p247, %s20, 1
        %p249 = scmp.lt.s32.totalorder %s21, 0
        %s250 = scalar_select %p249, %s21, 0
        %s251 = sadd.s32 %s250, %s248
        %s252 = smul.addr %s251, 8
        %s253 = scalar_lea.vmem %s2, %s252
      $region28: #{focal_loss_forward.1} parent=19 // pred_fallthru
        _
      // Predicated region
      $region29: #{focal_loss_forward.1} parent=19 // pred_check
        %p254 = pneg %p127
      $region30: #{focal_loss_forward.1} parent=19 // pred_check_branch
        %256 = sbr.rel (%p254) target = $region32
      $region31: #{focal_loss_forward.1} parent=19 // pred_region
        %p257 = scmp.lt.s32.totalorder %s20, 1
        %s258 = scalar_select %p257, %s20, 1
        %p259 = scmp.lt.s32.totalorder %s21, 0
        %s260 = scalar_select %p259, %s21, 0
        %s261 = sadd.s32 %s260, %s258
        %s262 = smul.addr %s261, 8
        %s263 = scalar_lea.vmem %s3, %s262
      $region32: #{focal_loss_forward.1} parent=19 // pred_fallthru
        _
    $region20: #{focal_loss_forward.1} parent=5 // pred_fallthru
      _
    %p264 = scmp.le.s32.totalorder 1, %s13
    %p265 = scmp.lt.s32.totalorder %s13, 3
    %p266 = pnand %p264, %p265
    %p267 = pneg %p266
    // Predicated region
    $region33: #{focal_loss_forward.1} parent=5 // pred_check
      _
    $region34: #{focal_loss_forward.1} parent=5 // pred_check_branch
      %269 = sbr.rel (%p266) target = $region36
    $region35: #{focal_loss_forward.1} parent=5 // pred_region
      %s270 = ssub.s32 %s13, 1
      %p271 = scmp.lt.s32.totalorder %s22, 1
      %s272 = scalar_select %p271, %s22, 1
      %s273 = smul.addr %s272, 8
      %s274 = scalar_lea.vmem %s0, %s273
      %p275 = pneg %p51
      %p276 = pneg %p48
      %p277 = scmp.lt.s32.totalorder %s23, 0
      %s278 = scalar_select %p277, %s23, 0
      %s279 = smul.addr %s278, 8
      %s280 = scalar_lea.vmem %s1, %s279
      %p281 = pneg %p77
      %p282 = pneg %p74
      %p283 = scmp.lt.s32.totalorder %s22, 1
      %s284 = scalar_select %p283, %s22, 1
      %p285 = scmp.lt.s32.totalorder %s23, 0
      %s286 = scalar_select %p285, %s23, 0
      %s287 = sadd.s32 %s286, %s284
      %s288 = smul.addr %s287, 8
      %s289 = scalar_lea.vmem %s2, %s288
      %p290 = pneg %p105
      %p291 = pneg %p102
      %p292 = scmp.lt.s32.totalorder %s22, 1
      %s293 = scalar_select %p292, %s22, 1
      %p294 = scmp.lt.s32.totalorder %s23, 0
      %s295 = scalar_select %p294, %s23, 0
      %s296 = sadd.s32 %s295, %s293
      %s297 = smul.addr %s296, 8
      %s298 = scalar_lea.vmem %s3, %s297
      %p299 = pneg %p133
      %p300 = pneg %p130
      %p301 = pneg %p159
      %p302 = pneg %p156
      %p303 = scmp.lt.s32.totalorder %s22, 1
      %s304 = scalar_select %p303, %s22, 1
      %s305 = scalar_lea.vmem %s4, %s304
      %p306 = pneg %p185
      %p307 = pneg %p182
      %p308 = scmp.lt.s32.totalorder %s22, 1
      %s309 = scalar_select %p308, %s22, 1
      %s310 = scalar_lea.vmem %s5, %s309
      %p311 = pneg %p211
      %p312 = pneg %p208
      %p313 = scmp.lt.s32.totalorder %s22, 1
      %s314 = scalar_select %p313, %s22, 1
      %s315 = scalar_lea.vmem %s6, %s314
      %p316 = scmp.lt.s32.totalorder %s22, 1
      %s317 = scalar_select %p316, %s22, 1
      %s318 = smul.addr %s317, 8
      %s319 = scalar_lea.vmem %s0, %s318
      %p320 = scmp.lt.s32.totalorder %s23, 0
      %s321 = scalar_select %p320, %s23, 0
      %s322 = smul.addr %s321, 8
      %s323 = scalar_lea.vmem %s1, %s322
      %p324 = scmp.lt.s32.totalorder %s22, 1
      %s325 = scalar_select %p324, %s22, 1
      %p326 = scmp.lt.s32.totalorder %s23, 0
      %s327 = scalar_select %p326, %s23, 0
      %s328 = sadd.s32 %s327, %s325
      %s329 = smul.addr %s328, 8
      %s330 = scalar_lea.vmem %s2, %s329
      %p331 = scmp.lt.s32.totalorder %s22, 1
      %s332 = scalar_select %p331, %s22, 1
      %p333 = scmp.lt.s32.totalorder %s23, 0
      %s334 = scalar_select %p333, %s23, 0
      %s335 = sadd.s32 %s334, %s332
      %s336 = smul.addr %s335, 8
      %s337 = scalar_lea.vmem %s3, %s336
      %p338 = scmp.lt.s32.totalorder %s22, 1
      %s339 = scalar_select %p338, %s22, 1
      %s340 = scalar_lea.vmem %s4, %s339
      %p341 = scmp.lt.s32.totalorder %s22, 1
      %s342 = scalar_select %p341, %s22, 1
      %s343 = scalar_lea.vmem %s5, %s342
      %p344 = scmp.lt.s32.totalorder %s22, 1
      %s345 = scalar_select %p344, %s22, 1
      %s346 = scalar_lea.vmem %s6, %s345
      %p347 = scmp.eq.s32.totalorder %s23, 0
      // Predicated region
      $region37: #{focal_loss_forward.1} parent=35 // pred_check
        %p348 = pneg %p347
      $region38: #{focal_loss_forward.1} parent=35 // pred_check_branch
        %350 = sbr.rel (%p348) target = $region40
      $region39: #{focal_loss_forward.1} parent=35 // pred_region
        %351 = vst [vmem:[#allocation2] sm:$0x1] 0.0
        %352 = vst [vmem:[#allocation3] sm:$0x1] 0.0
        %353 = vst [vmem:[#allocation4] sm:$0x1] 0.0
        %vm354 = vcmask 0
        %355 = vst.msk [vmem:[%s340] sm:$0x1] %vm354, 0.0
        %356 = vst.msk [vmem:[%s343] sm:$0x1] %vm354, 0.0
        %357 = vst.msk [vmem:[%s346] sm:$0x1] %vm354, 0.0
      $region40: #{focal_loss_forward.1} parent=35 // pred_fallthru
        _
      %v358 = vld [vmem:[%s323] sm:$0x3f]
      %vm359 = vcmp.gt.f32.partialorder %v358, 0.0
      %v361 = vrot.slane %v358, 6
      %v363 = vsub.f32 %v358, %v361
      %v364 = vmul.f32 %v363, 0.5
      %v366 = vrot.slane %v364, 2
      %v368 = vadd.f32 %v358, %v366
      %v370 = vrot.slane %v363, 1
      %v372 = vmul.f32 %v363, %v370
      %v373 = vld [vmem:[%s319] sm:$0xff]
      %375 = vset.pattern.permute.xlu0 9
      %376 = vperm.xlu0 %375, %v373
      %v377 = vpop.permute.xlu0 %376
      %v378 = vrot.slane %v377, 6
      %v380 = vmin.f32 %v358, %v378
      %381 = vset.pattern.permute.xlu0 7
      %382 = vperm.xlu0 %381, %v373
      %v383 = vpop.permute.xlu0 %382
      %v385 = vmax.f32 %v358, %v383
      %v387 = vrot.slane %v385, 6
      %v389 = vsub.f32 %v380, %v387
      %v390 = vmax.f32 %v389, 0.0
      %391 = vset.pattern.permute.xlu0 10
      %392 = vperm.xlu0 %391, %v373
      %v393 = vpop.permute.xlu0 %392
      %v394 = vrot.slane %v393, 5
      %v396 = vmin.f32 %v358, %v394
      %397 = vset.pattern.permute.xlu0 8
      %398 = vperm.xlu0 %397, %v373
      %v399 = vpop.permute.xlu0 %398
      %v400 = vrot.slane %v399, 7
      %v402 = vmax.f32 %v358, %v400
      %v404 = vrot.slane %v402, 6
      %v406 = vsub.f32 %v396, %v404
      %v407 = vmax.f32 %v406, 0.0
      %v409 = vrot.slane %v407, 1
      %v411 = vmul.f32 %v390, %v409
      %412 = vrot.lane.b32.xlu0 %v373, 2
      %v413 = vpop.permute.xlu0 %412
      %v415 = vsub.f32 %v373, %v413
      %417 = vrot.lane.b32.xlu0 %v415, 127
      %v418 = vpop.permute.xlu0 %417
      %v420 = vmul.f32 %v415, %v418
      %422 = vset.pattern.permute.xlu0 9
      %423 = vperm.xlu0 %422, %v420
      %v424 = vpop.permute.xlu0 %423
      %v425 = vrot.slane %v424, 6
      %v427 = vadd.f32 %v372, %v425
      %v428 = vsub.f32 %v427, %v411
      %v429 = vmax.f32 %v428, 1e-08
      %v430 = vrcp.pop %v429
      %v431 = vmul.f32 %v429, %v430
      %v432 = vsub.f32 1.0, %v431
      %v433 = vmul.f32 %v430, %v432
      %v434 = vadd.f32 %v430, %v433
      %vm435 = vweird.f32 %v429
      %vm436 = vweird.f32 %v430
      %vm437 = vmor %vm435, %vm436
      %v438 = vsel %vm437, %v430, %v434
      %v439 = vand.u32 2147483647, %v429
      %vm440 = vcmp.eq.f32.partialorder %v439, 8.507059e+37
      %v441 = vand.u32 %v429, 2147483648
      %v442 = vor.u32 1.1754944e-38, %v441
      %v443 = vsel %vm440, %v442, %v438
      %v444 = vmul.f32 %v411, %v443
      %445 = vset.pattern.permute.xlu0 6
      %446 = vperm.xlu0 %445, %v373
      %v447 = vpop.permute.xlu0 %446
      %v448 = vrot.slane %v447, 6
      %v450 = vmul.f32 %v444, %v448
      %v451 = vsub.f32 1.0, %v373
      %453 = vset.pattern.permute.xlu0 6
      %454 = vperm.xlu0 %453, %v451
      %v455 = vpop.permute.xlu0 %454
      %v456 = vrot.slane %v455, 6
      %v458 = vsub.f32 %v450, %v456
      %v459 = vand.u32 2147483647, %v415
      %vm460 = vcmp.lt.f32.partialorder %v459, 1e-09
      %v461 = vsel %vm460, 1.0, %v415
      %463 = vrot.lane.b32.xlu0 %v461, 1
      %v464 = vpop.permute.xlu0 %463
      %v466 = vrcp.pop %v464
      %v467 = vmul.f32 %v464, %v466
      %v468 = vsub.f32 1.0, %v467
      %v469 = vmul.f32 %v466, %v468
      %v470 = vadd.f32 %v466, %v469
      %vm471 = vweird.f32 %v464
      %vm472 = vweird.f32 %v466
      %vm473 = vmor %vm471, %vm472
      %v474 = vsel %vm473, %v466, %v470
      %v475 = vand.u32 2147483647, %v464
      %vm476 = vcmp.eq.f32.partialorder %v475, 8.507059e+37
      %v477 = vand.u32 %v464, 2147483648
      %v478 = vor.u32 1.1754944e-38, %v477
      %v479 = vsel %vm476, %v478, %v474
      %v480 = vmul.f32 %v415, %v479
      %v481 = vand.u32 2147483647, %v480
      %vm482 = vcmp.lt.f32.partialorder %v481, 1e-09
      %v483 = vsel %vm482, 1, 0
      %v484 = vcvt.s32.f32 %v483
      %v485 = vsel %vm482, 1.0, %v480
      %v486 = vrcp.pop %v485
      %v487 = vmul.f32 %v485, %v486
      %v488 = vsub.f32 1.0, %v487
      %v489 = vmul.f32 %v486, %v488
      %v490 = vadd.f32 %v486, %v489
      %vm491 = vweird.f32 %v485
      %vm492 = vweird.f32 %v486
      %vm493 = vmor %vm491, %vm492
      %v494 = vsel %vm493, %v486, %v490
      %v495 = vand.u32 2147483647, %v485
      %vm496 = vcmp.eq.f32.partialorder %v495, 8.507059e+37
      %v497 = vand.u32 %v485, 2147483648
      %v498 = vor.u32 1.1754944e-38, %v497
      %v499 = vsel %vm496, %v498, %v494
      %v500 = vmul.f32 0.5, %v499
      %501 = vset.pattern.permute.xlu0 12
      %502 = vperm.xlu0 %501, %v373
      %v503 = vpop.permute.xlu0 %502
      %v505 = vmax.f32 %v503, %v358
      %v506 = vrot.slane %v358, 2
      %v508 = vmin.f32 %v505, %v506
      %509 = vset.pattern.permute.xlu0 14
      %510 = vperm.xlu0 %509, %v373
      %v511 = vpop.permute.xlu0 %510
      %v513 = vmax.f32 %v511, %v358
      %v514 = vmin.f32 %v513, %v506
      %v515 = vsub.f32 %v514, %v508
      %v516 = vsub.f32 %v508, %v503
      %518 = vset.pattern.permute.xlu0 15
      %519 = vperm.xlu0 %518, %v480
      %v520 = vpop.permute.xlu0 %519
      %v522 = vmul.f32 %v520, %v516
      %523 = vset.pattern.permute.xlu0 13
      %524 = vperm.xlu0 %523, %v373
      %v525 = vpop.permute.xlu0 %524
      %v527 = vadd.f32 %v525, %v522
      %v528 = vsub.f32 %v514, %v503
      %v529 = vmul.f32 %v520, %v528
      %v530 = vadd.f32 %v525, %v529
      %v532 = vrot.slane %v515, 7
      %v534 = vmul.f32 %v358, %v532
      %v535 = vrot.slane %v358, 1
      %v537 = vsub.f32 %v527, %v535
      %v538 = vmax.f32 %v537, 0.0
      %v539 = vsub.f32 %v530, %v535
      %v540 = vmax.f32 %v539, 0.0
      %v541 = vsub.f32 %v525, %v535
      %v542 = vmax.f32 %v541, 0.0
      %v543 = vmul.f32 %v542, %v515
      %v544 = vmul.f32 %v540, %v540
      %v545 = vmul.f32 %v538, %v538
      %v546 = vsub.f32 %v544, %v545
      %548 = vset.pattern.permute.xlu0 15
      %549 = vperm.xlu0 %548, %v500
      %v550 = vpop.permute.xlu0 %549
      %v552 = vmul.f32 %v546, %v550
      %v553 = vsub.f32 %v543, %v552
      %555 = vset.pattern.permute.xlu0 15
      %556 = vperm.xlu0 %555, %v484
      %v557 = vpop.permute.xlu0 %556
      %v559 = vmul.f32 %v553, %v557
      %v560 = vadd.f32 %v552, %v559
      %v562 = vrot.slane %v560, 7
      %v564 = vadd.f32 %v534, %v562
      %v565 = vrot.slane %v358, 3
      %v567 = vsub.f32 %v527, %v565
      %v568 = vmax.f32 %v567, 0.0
      %v569 = vsub.f32 %v530, %v565
      %v570 = vmax.f32 %v569, 0.0
      %v571 = vsub.f32 %v525, %v565
      %v572 = vmax.f32 %v571, 0.0
      %v573 = vmul.f32 %v572, %v515
      %v574 = vmul.f32 %v570, %v570
      %v575 = vmul.f32 %v568, %v568
      %v576 = vsub.f32 %v574, %v575
      %v577 = vmul.f32 %v576, %v550
      %v578 = vsub.f32 %v573, %v577
      %v579 = vmul.f32 %v578, %v557
      %v580 = vadd.f32 %v577, %v579
      %v582 = vrot.slane %v580, 7
      %v584 = vsub.f32 %v564, %v582
      %v585 = vsub.f32 0.0, %v584
      %586 = vset.pattern.permute.xlu0 16
      %587 = vperm.xlu0 %586, %v373
      %v588 = vpop.permute.xlu0 %587
      %v590 = vmax.f32 %v588, %v358
      %v591 = vmin.f32 %v590, %v506
      %v592 = vsub.f32 %v591, %v514
      %v593 = vsub.f32 %v514, %v511
      %594 = vset.pattern.permute.xlu0 17
      %595 = vperm.xlu0 %594, %v480
      %v596 = vpop.permute.xlu0 %595
      %v598 = vmul.f32 %v596, %v593
      %599 = vset.pattern.permute.xlu0 15
      %600 = vperm.xlu0 %599, %v373
      %v601 = vpop.permute.xlu0 %600
      %v603 = vadd.f32 %v601, %v598
      %v604 = vsub.f32 %v591, %v511
      %v605 = vmul.f32 %v596, %v604
      %v606 = vadd.f32 %v601, %v605
      %v608 = vrot.slane %v592, 7
      %v610 = vmul.f32 %v358, %v608
      %v611 = vsub.f32 %v603, %v535
      %v612 = vmax.f32 %v611, 0.0
      %v613 = vsub.f32 %v606, %v535
      %v614 = vmax.f32 %v613, 0.0
      %v615 = vsub.f32 %v601, %v535
      %v616 = vmax.f32 %v615, 0.0
      %v617 = vmul.f32 %v616, %v592
      %v618 = vmul.f32 %v614, %v614
      %v619 = vmul.f32 %v612, %v612
      %v620 = vsub.f32 %v618, %v619
      %621 = vset.pattern.permute.xlu0 17
      %622 = vperm.xlu0 %621, %v500
      %v623 = vpop.permute.xlu0 %622
      %v625 = vmul.f32 %v620, %v623
      %v626 = vsub.f32 %v617, %v625
      %627 = vset.pattern.permute.xlu0 17
      %628 = vperm.xlu0 %627, %v484
      %v629 = vpop.permute.xlu0 %628
      %v631 = vmul.f32 %v626, %v629
      %v632 = vadd.f32 %v625, %v631
      %v634 = vrot.slane %v632, 7
      %v636 = vadd.f32 %v610, %v634
      %v637 = vsub.f32 %v603, %v565
      %v638 = vmax.f32 %v637, 0.0
      %v639 = vsub.f32 %v606, %v565
      %v640 = vmax.f32 %v639, 0.0
      %v641 = vsub.f32 %v601, %v565
      %v642 = vmax.f32 %v641, 0.0
      %v643 = vmul.f32 %v642, %v592
      %v644 = vmul.f32 %v640, %v640
      %v645 = vmul.f32 %v638, %v638
      %v646 = vsub.f32 %v644, %v645
      %v647 = vmul.f32 %v646, %v623
      %v648 = vsub.f32 %v643, %v647
      %v649 = vmul.f32 %v648, %v629
      %v650 = vadd.f32 %v647, %v649
      %v652 = vrot.slane %v650, 7
      %v654 = vsub.f32 %v636, %v652
      %v655 = vsub.f32 %v585, %v654
      %656 = vset.pattern.permute.xlu0 18
      %657 = vperm.xlu0 %656, %v373
      %v658 = vpop.permute.xlu0 %657
      %v660 = vmax.f32 %v658, %v358
      %v661 = vmin.f32 %v660, %v506
      %v662 = vsub.f32 %v661, %v591
      %v663 = vsub.f32 %v591, %v588
      %664 = vset.pattern.permute.xlu0 19
      %665 = vperm.xlu0 %664, %v480
      %v666 = vpop.permute.xlu0 %665
      %v668 = vmul.f32 %v666, %v663
      %669 = vset.pattern.permute.xlu0 17
      %670 = vperm.xlu0 %669, %v373
      %v671 = vpop.permute.xlu0 %670
      %v673 = vadd.f32 %v671, %v668
      %v674 = vsub.f32 %v661, %v588
      %v675 = vmul.f32 %v666, %v674
      %v676 = vadd.f32 %v671, %v675
      %v678 = vrot.slane %v662, 7
      %v680 = vmul.f32 %v358, %v678
      %v681 = vsub.f32 %v673, %v535
      %v682 = vmax.f32 %v681, 0.0
      %v683 = vsub.f32 %v676, %v535
      %v684 = vmax.f32 %v683, 0.0
      %v685 = vsub.f32 %v671, %v535
      %v686 = vmax.f32 %v685, 0.0
      %v687 = vmul.f32 %v686, %v662
      %v688 = vmul.f32 %v684, %v684
      %v689 = vmul.f32 %v682, %v682
      %v690 = vsub.f32 %v688, %v689
      %691 = vset.pattern.permute.xlu0 19
      %692 = vperm.xlu0 %691, %v500
      %v693 = vpop.permute.xlu0 %692
      %v695 = vmul.f32 %v690, %v693
      %v696 = vsub.f32 %v687, %v695
      %697 = vset.pattern.permute.xlu0 19
      %698 = vperm.xlu0 %697, %v484
      %v699 = vpop.permute.xlu0 %698
      %v701 = vmul.f32 %v696, %v699
      %v702 = vadd.f32 %v695, %v701
      %v704 = vrot.slane %v702, 7
      %v706 = vadd.f32 %v680, %v704
      %v707 = vsub.f32 %v673, %v565
      %v708 = vmax.f32 %v707, 0.0
      %v709 = vsub.f32 %v676, %v565
      %v710 = vmax.f32 %v709, 0.0
      %v711 = vsub.f32 %v671, %v565
      %v712 = vmax.f32 %v711, 0.0
      %v713 = vmul.f32 %v712, %v662
      %v714 = vmul.f32 %v710, %v710
      %v715 = vmul.f32 %v708, %v708
      %v716 = vsub.f32 %v714, %v715
      %v717 = vmul.f32 %v716, %v693
      %v718 = vsub.f32 %v713, %v717
      %v719 = vmul.f32 %v718, %v699
      %v720 = vadd.f32 %v717, %v719
      %v722 = vrot.slane %v720, 7
      %v724 = vsub.f32 %v706, %v722
      %v725 = vsub.f32 %v655, %v724
      %726 = vrot.lane.b32.xlu0 %v373, 122
      %v727 = vpop.permute.xlu0 %726
      %v729 = vsub.f32 %v373, %v727
      %v730 = vand.u32 2147483647, %v729
      %vm731 = vcmp.lt.f32.partialorder %v730, 1e-09
      %v732 = vsel %vm731, 1.0, %v729
      %734 = vrot.lane.b32.xlu0 %v732, 1
      %v735 = vpop.permute.xlu0 %734
      %v737 = vrcp.pop %v735
      %v738 = vmul.f32 %v735, %v737
      %v739 = vsub.f32 1.0, %v738
      %v740 = vmul.f32 %v737, %v739
      %v741 = vadd.f32 %v737, %v740
      %vm742 = vweird.f32 %v735
      %vm743 = vweird.f32 %v737
      %vm744 = vmor %vm742, %vm743
      %v745 = vsel %vm744, %v737, %v741
      %v746 = vand.u32 2147483647, %v735
      %vm747 = vcmp.eq.f32.partialorder %v746, 8.507059e+37
      %v748 = vand.u32 %v735, 2147483648
      %v749 = vor.u32 1.1754944e-38, %v748
      %v750 = vsel %vm747, %v749, %v745
      %v751 = vmul.f32 %v729, %v750
      %v752 = vand.u32 2147483647, %v751
      %vm753 = vcmp.lt.f32.partialorder %v752, 1e-09
      %v754 = vsel %vm753, 1, 0
      %v755 = vcvt.s32.f32 %v754
      %v756 = vsel %vm753, 1.0, %v751
      %v757 = vrcp.pop %v756
      %v758 = vmul.f32 %v756, %v757
      %v759 = vsub.f32 1.0, %v758
      %v760 = vmul.f32 %v757, %v759
      %v761 = vadd.f32 %v757, %v760
      %vm762 = vweird.f32 %v756
      %vm763 = vweird.f32 %v757
      %vm764 = vmor %vm762, %vm763
      %v765 = vsel %vm764, %v757, %v761
      %v766 = vand.u32 2147483647, %v756
      %vm767 = vcmp.eq.f32.partialorder %v766, 8.507059e+37
      %v768 = vand.u32 %v756, 2147483648
      %v769 = vor.u32 1.1754944e-38, %v768
      %v770 = vsel %vm767, %v769, %v765
      %v771 = vmul.f32 0.5, %v770
      %v772 = vsub.f32 %v508, %v661
      %v773 = vsub.f32 %v661, %v658
      %775 = vset.pattern.permute.xlu0 13
      %776 = vperm.xlu0 %775, %v751
      %v777 = vpop.permute.xlu0 %776
      %v779 = vmul.f32 %v777, %v773
      %780 = vset.pattern.permute.xlu0 19
      %781 = vperm.xlu0 %780, %v373
      %v782 = vpop.permute.xlu0 %781
      %v784 = vadd.f32 %v782, %v779
      %v785 = vsub.f32 %v508, %v658
      %v786 = vmul.f32 %v777, %v785
      %v787 = vadd.f32 %v782, %v786
      %v789 = vrot.slane %v772, 7
      %v791 = vmul.f32 %v358, %v789
      %v792 = vsub.f32 %v784, %v535
      %v793 = vmax.f32 %v792, 0.0
      %v794 = vsub.f32 %v787, %v535
      %v795 = vmax.f32 %v794, 0.0
      %v796 = vsub.f32 %v782, %v535
      %v797 = vmax.f32 %v796, 0.0
      %v798 = vmul.f32 %v797, %v772
      %v799 = vmul.f32 %v795, %v795
      %v800 = vmul.f32 %v793, %v793
      %v801 = vsub.f32 %v799, %v800
      %803 = vset.pattern.permute.xlu0 13
      %804 = vperm.xlu0 %803, %v771
      %v805 = vpop.permute.xlu0 %804
      %v807 = vmul.f32 %v801, %v805
      %v808 = vsub.f32 %v798, %v807
      %810 = vset.pattern.permute.xlu0 13
      %811 = vperm.xlu0 %810, %v755
      %v812 = vpop.permute.xlu0 %811
      %v814 = vmul.f32 %v808, %v812
      %v815 = vadd.f32 %v807, %v814
      %v817 = vrot.slane %v815, 7
      %v819 = vadd.f32 %v791, %v817
      %v820 = vsub.f32 %v784, %v565
      %v821 = vmax.f32 %v820, 0.0
      %v822 = vsub.f32 %v787, %v565
      %v823 = vmax.f32 %v822, 0.0
      %v824 = vsub.f32 %v782, %v565
      %v825 = vmax.f32 %v824, 0.0
      %v826 = vmul.f32 %v825, %v772
      %v827 = vmul.f32 %v823, %v823
      %v828 = vmul.f32 %v821, %v821
      %v829 = vsub.f32 %v827, %v828
      %v830 = vmul.f32 %v829, %v805
      %v831 = vsub.f32 %v826, %v830
      %v832 = vmul.f32 %v831, %v812
      %v833 = vadd.f32 %v830, %v832
      %v835 = vrot.slane %v833, 7
      %v837 = vsub.f32 %v819, %v835
      %v838 = vsub.f32 %v725, %v837
      %v839 = vand.u32 2147483647, %v838
      %840 = vset.pattern.permute.xlu0 11
      %841 = vperm.xlu0 %840, %v373
      %v842 = vpop.permute.xlu0 %841
      %v845 = vrot.slane %v372, 2
      %v847 = vadd.f32 %v842, %v845
      %v849 = vrot.slane %v839, 1
      %v851 = vsub.f32 %v847, %v849
      %v852 = vmax.f32 %v851, 1e-08
      %v854 = vrot.slane %v852, 7
      %v856 = vrcp.pop %v854
      %v857 = vmul.f32 %v854, %v856
      %v858 = vsub.f32 1.0, %v857
      %v859 = vmul.f32 %v856, %v858
      %v860 = vadd.f32 %v856, %v859
      %vm861 = vweird.f32 %v854
      %vm862 = vweird.f32 %v856
      %vm863 = vmor %vm861, %vm862
      %v864 = vsel %vm863, %v856, %v860
      %v865 = vand.u32 2147483647, %v854
      %vm866 = vcmp.eq.f32.partialorder %v865, 8.507059e+37
      %v867 = vand.u32 %v854, 2147483648
      %v868 = vor.u32 1.1754944e-38, %v867
      %v869 = vsel %vm866, %v868, %v864
      %v870 = vmul.f32 %v839, %v869
      %vm871 = vcmp.gt.f32.partialorder %v458, -1.0
      %v872 = vsel %vm871, %v458, -1.0
      %v874 = vrot.slane %v870, 7
      %v876 = vsel %vm871, %v874, 0.0
      %877 = vset.pattern.permute.xlu0 0
      %878 = vperm.xlu0 %877, %v373
      %v879 = vpop.permute.xlu0 %878
      %v880 = vrot.slane %v879, 6
      %v882 = vsel %vm871, %v880, 0.0
      %883 = vset.pattern.permute.xlu0 1
      %884 = vperm.xlu0 %883, %v373
      %v885 = vpop.permute.xlu0 %884
      %v886 = vrot.slane %v885, 6
      %v888 = vsel %vm871, %v886, 0.0
      %889 = vset.pattern.permute.xlu0 2
      %890 = vperm.xlu0 %889, %v373
      %v891 = vpop.permute.xlu0 %890
      %v892 = vrot.slane %v891, 6
      %v894 = vsel %vm871, %v892, 1.0
      %895 = vset.pattern.permute.xlu0 3
      %896 = vperm.xlu0 %895, %v373
      %v897 = vpop.permute.xlu0 %896
      %v898 = vrot.slane %v897, 6
      %v900 = vsel %vm871, %v898, 1.0
      %901 = vset.pattern.permute.xlu0 4
      %902 = vperm.xlu0 %901, %v373
      %v903 = vpop.permute.xlu0 %902
      %v904 = vrot.slane %v903, 6
      %v906 = vsel %vm871, %v904, 0.0
      %907 = vset.pattern.permute.xlu0 5
      %908 = vperm.xlu0 %907, %v373
      %v909 = vpop.permute.xlu0 %908
      %v910 = vrot.slane %v909, 6
      %v912 = vsel %vm871, %v910, 0.0
      %v913 = vrot.slane %v377, 7
      %v915 = vmin.f32 %v358, %v913
      %v916 = vrot.slane %v383, 1
      %v918 = vmax.f32 %v358, %v916
      %v920 = vrot.slane %v918, 6
      %v922 = vsub.f32 %v915, %v920
      %v923 = vmax.f32 %v922, 0.0
      %v924 = vrot.slane %v393, 6
      %v926 = vmin.f32 %v358, %v924
      %v928 = vmax.f32 %v358, %v399
      %v930 = vrot.slane %v928, 6
      %v932 = vsub.f32 %v926, %v930
      %v933 = vmax.f32 %v932, 0.0
      %v935 = vrot.slane %v933, 1
      %v937 = vmul.f32 %v923, %v935
      %v938 = vrot.slane %v424, 7
      %v940 = vadd.f32 %v372, %v938
      %v941 = vsub.f32 %v940, %v937
      %v942 = vmax.f32 %v941, 1e-08
      %v943 = vrcp.pop %v942
      %v944 = vmul.f32 %v942, %v943
      %v945 = vsub.f32 1.0, %v944
      %v946 = vmul.f32 %v943, %v945
      %v947 = vadd.f32 %v943, %v946
      %vm948 = vweird.f32 %v942
      %vm949 = vweird.f32 %v943
      %vm950 = vmor %vm948, %vm949
      %v951 = vsel %vm950, %v943, %v947
      %v952 = vand.u32 2147483647, %v942
      %vm953 = vcmp.eq.f32.partialorder %v952, 8.507059e+37
      %v954 = vand.u32 %v942, 2147483648
      %v955 = vor.u32 1.1754944e-38, %v954
      %v956 = vsel %vm953, %v955, %v951
      %v957 = vmul.f32 %v937, %v956
      %v958 = vrot.slane %v447, 7
      %v960 = vmul.f32 %v957, %v958
      %v961 = vrot.slane %v455, 7
      %v963 = vsub.f32 %v960, %v961
      %v964 = vrot.slane %v358, 7
      %v966 = vmax.f32 %v503, %v964
      %v967 = vmin.f32 %v966, %v535
      %v968 = vmax.f32 %v511, %v964
      %v969 = vmin.f32 %v968, %v535
      %v970 = vsub.f32 %v969, %v967
      %v971 = vsub.f32 %v967, %v503
      %v972 = vmul.f32 %v520, %v971
      %v973 = vadd.f32 %v525, %v972
      %v974 = vsub.f32 %v969, %v503
      %v975 = vmul.f32 %v520, %v974
      %v976 = vadd.f32 %v525, %v975
      %v977 = vmul.f32 %v358, %v970
      %v978 = vsub.f32 %v973, %v358
      %v979 = vmax.f32 %v978, 0.0
      %v980 = vsub.f32 %v976, %v358
      %v981 = vmax.f32 %v980, 0.0
      %v982 = vsub.f32 %v525, %v358
      %v983 = vmax.f32 %v982, 0.0
      %v984 = vmul.f32 %v983, %v970
      %v985 = vmul.f32 %v981, %v981
      %v986 = vmul.f32 %v979, %v979
      %v987 = vsub.f32 %v985, %v986
      %v988 = vmul.f32 %v987, %v550
      %v989 = vsub.f32 %v984, %v988
      %v990 = vmul.f32 %v989, %v557
      %v991 = vadd.f32 %v988, %v990
      %v992 = vadd.f32 %v977, %v991
      %v993 = vsub.f32 %v973, %v506
      %v994 = vmax.f32 %v993, 0.0
      %v995 = vsub.f32 %v976, %v506
      %v996 = vmax.f32 %v995, 0.0
      %v997 = vsub.f32 %v525, %v506
      %v998 = vmax.f32 %v997, 0.0
      %v999 = vmul.f32 %v998, %v970
      %v1000 = vmul.f32 %v996, %v996
      %v1001 = vmul.f32 %v994, %v994
      %v1002 = vsub.f32 %v1000, %v1001
      %v1003 = vmul.f32 %v1002, %v550
      %v1004 = vsub.f32 %v999, %v1003
      %v1005 = vmul.f32 %v1004, %v557
      %v1006 = vadd.f32 %v1003, %v1005
      %v1007 = vsub.f32 %v992, %v1006
      %v1008 = vsub.f32 0.0, %v1007
      %v1009 = vmax.f32 %v588, %v964
      %v1010 = vmin.f32 %v1009, %v535
      %v1011 = vsub.f32 %v1010, %v969
      %v1012 = vsub.f32 %v969, %v511
      %v1013 = vmul.f32 %v596, %v1012
      %v1014 = vadd.f32 %v601, %v1013
      %v1015 = vsub.f32 %v1010, %v511
      %v1016 = vmul.f32 %v596, %v1015
      %v1017 = vadd.f32 %v601, %v1016
      %v1018 = vmul.f32 %v358, %v1011
      %v1019 = vsub.f32 %v1014, %v358
      %v1020 = vmax.f32 %v1019, 0.0
      %v1021 = vsub.f32 %v1017, %v358
      %v1022 = vmax.f32 %v1021, 0.0
      %v1023 = vsub.f32 %v601, %v358
      %v1024 = vmax.f32 %v1023, 0.0
      %v1025 = vmul.f32 %v1024, %v1011
      %v1026 = vmul.f32 %v1022, %v1022
      %v1027 = vmul.f32 %v1020, %v1020
      %v1028 = vsub.f32 %v1026, %v1027
      %v1029 = vmul.f32 %v1028, %v623
      %v1030 = vsub.f32 %v1025, %v1029
      %v1031 = vmul.f32 %v1030, %v629
      %v1032 = vadd.f32 %v1029, %v1031
      %v1033 = vadd.f32 %v1018, %v1032
      %v1034 = vsub.f32 %v1014, %v506
      %v1035 = vmax.f32 %v1034, 0.0
      %v1036 = vsub.f32 %v1017, %v506
      %v1037 = vmax.f32 %v1036, 0.0
      %v1038 = vsub.f32 %v601, %v506
      %v1039 = vmax.f32 %v1038, 0.0
      %v1040 = vmul.f32 %v1039, %v1011
      %v1041 = vmul.f32 %v1037, %v1037
      %v1042 = vmul.f32 %v1035, %v1035
      %v1043 = vsub.f32 %v1041, %v1042
      %v1044 = vmul.f32 %v1043, %v623
      %v1045 = vsub.f32 %v1040, %v1044
      %v1046 = vmul.f32 %v1045, %v629
      %v1047 = vadd.f32 %v1044, %v1046
      %v1048 = vsub.f32 %v1033, %v1047
      %v1049 = vsub.f32 %v1008, %v1048
      %v1050 = vmax.f32 %v658, %v964
      %v1051 = vmin.f32 %v1050, %v535
      %v1052 = vsub.f32 %v1051, %v1010
      %v1053 = vsub.f32 %v1010, %v588
      %v1054 = vmul.f32 %v666, %v1053
      %v1055 = vadd.f32 %v671, %v1054
      %v1056 = vsub.f32 %v1051, %v588
      %v1057 = vmul.f32 %v666, %v1056
      %v1058 = vadd.f32 %v671, %v1057
      %v1059 = vmul.f32 %v358, %v1052
      %v1060 = vsub.f32 %v1055, %v358
      %v1061 = vmax.f32 %v1060, 0.0
      %v1062 = vsub.f32 %v1058, %v358
      %v1063 = vmax.f32 %v1062, 0.0
      %v1064 = vsub.f32 %v671, %v358
      %v1065 = vmax.f32 %v1064, 0.0
      %v1066 = vmul.f32 %v1065, %v1052
      %v1067 = vmul.f32 %v1063, %v1063
      %v1068 = vmul.f32 %v1061, %v1061
      %v1069 = vsub.f32 %v1067, %v1068
      %v1070 = vmul.f32 %v1069, %v693
      %v1071 = vsub.f32 %v1066, %v1070
      %v1072 = vmul.f32 %v1071, %v699
      %v1073 = vadd.f32 %v1070, %v1072
      %v1074 = vadd.f32 %v1059, %v1073
      %v1075 = vsub.f32 %v1055, %v506
      %v1076 = vmax.f32 %v1075, 0.0
      %v1077 = vsub.f32 %v1058, %v506
      %v1078 = vmax.f32 %v1077, 0.0
      %v1079 = vsub.f32 %v671, %v506
      %v1080 = vmax.f32 %v1079, 0.0
      %v1081 = vmul.f32 %v1080, %v1052
      %v1082 = vmul.f32 %v1078, %v1078
      %v1083 = vmul.f32 %v1076, %v1076
      %v1084 = vsub.f32 %v1082, %v1083
      %v1085 = vmul.f32 %v1084, %v693
      %v1086 = vsub.f32 %v1081, %v1085
      %v1087 = vmul.f32 %v1086, %v699
      %v1088 = vadd.f32 %v1085, %v1087
      %v1089 = vsub.f32 %v1074, %v1088
      %v1090 = vsub.f32 %v1049, %v1089
      %v1091 = vsub.f32 %v967, %v1051
      %v1092 = vsub.f32 %v1051, %v658
      %v1093 = vmul.f32 %v777, %v1092
      %v1094 = vadd.f32 %v782, %v1093
      %v1095 = vsub.f32 %v967, %v658
      %v1096 = vmul.f32 %v777, %v1095
      %v1097 = vadd.f32 %v782, %v1096
      %v1098 = vmul.f32 %v358, %v1091
      %v1099 = vsub.f32 %v1094, %v358
      %v1100 = vmax.f32 %v1099, 0.0
      %v1101 = vsub.f32 %v1097, %v358
      %v1102 = vmax.f32 %v1101, 0.0
      %v1103 = vsub.f32 %v782, %v358
      %v1104 = vmax.f32 %v1103, 0.0
      %v1105 = vmul.f32 %v1104, %v1091
      %v1106 = vmul.f32 %v1102, %v1102
      %v1107 = vmul.f32 %v1100, %v1100
      %v1108 = vsub.f32 %v1106, %v1107
      %v1109 = vmul.f32 %v1108, %v805
      %v1110 = vsub.f32 %v1105, %v1109
      %v1111 = vmul.f32 %v1110, %v812
      %v1112 = vadd.f32 %v1109, %v1111
      %v1113 = vadd.f32 %v1098, %v1112
      %v1114 = vsub.f32 %v1094, %v506
      %v1115 = vmax.f32 %v1114, 0.0
      %v1116 = vsub.f32 %v1097, %v506
      %v1117 = vmax.f32 %v1116, 0.0
      %v1118 = vsub.f32 %v782, %v506
      %v1119 = vmax.f32 %v1118, 0.0
      %v1120 = vmul.f32 %v1119, %v1091
      %v1121 = vmul.f32 %v1117, %v1117
      %v1122 = vmul.f32 %v1115, %v1115
      %v1123 = vsub.f32 %v1121, %v1122
      %v1124 = vmul.f32 %v1123, %v805
      %v1125 = vsub.f32 %v1120, %v1124
      %v1126 = vmul.f32 %v1125, %v812
      %v1127 = vadd.f32 %v1124, %v1126
      %v1128 = vsub.f32 %v1113, %v1127
      %v1129 = vsub.f32 %v1090, %v1128
      %v1130 = vand.u32 2147483647, %v1129
      %v1131 = vrot.slane %v372, 1
      %v1133 = vadd.f32 %v842, %v1131
      %v1134 = vsub.f32 %v1133, %v1130
      %v1135 = vmax.f32 %v1134, 1e-08
      %v1136 = vrcp.pop %v1135
      %v1137 = vmul.f32 %v1135, %v1136
      %v1138 = vsub.f32 1.0, %v1137
      %v1139 = vmul.f32 %v1136, %v1138
      %v1140 = vadd.f32 %v1136, %v1139
      %vm1141 = vweird.f32 %v1135
      %vm1142 = vweird.f32 %v1136
      %vm1143 = vmor %vm1141, %vm1142
      %v1144 = vsel %vm1143, %v1136, %v1140
      %v1145 = vand.u32 2147483647, %v1135
      %vm1146 = vcmp.eq.f32.partialorder %v1145, 8.507059e+37
      %v1147 = vand.u32 %v1135, 2147483648
      %v1148 = vor.u32 1.1754944e-38, %v1147
      %v1149 = vsel %vm1146, %v1148, %v1144
      %v1150 = vmul.f32 %v1130, %v1149
      %vm1151 = vcmp.gt.f32.partialorder %v963, %v872
      %v1152 = vsel %vm1151, %v963, %v872
      %v1154 = vrot.slane %v1150, 7
      %v1156 = vsel %vm1151, %v1154, %v876
      %v1157 = vrot.slane %v879, 7
      %v1159 = vsel %vm1151, %v1157, %v882
      %v1160 = vrot.slane %v885, 7
      %v1162 = vsel %vm1151, %v1160, %v888
      %v1163 = vrot.slane %v891, 7
      %v1165 = vsel %vm1151, %v1163, %v894
      %v1166 = vrot.slane %v897, 7
      %v1168 = vsel %vm1151, %v1166, %v900
      %v1169 = vrot.slane %v903, 7
      %v1171 = vsel %vm1151, %v1169, %v906
      %v1172 = vrot.slane %v909, 7
      %v1174 = vsel %vm1151, %v1172, %v912
      %v1176 = vmin.f32 %v358, %v377
      %v1177 = vrot.slane %v383, 2
      %v1179 = vmax.f32 %v358, %v1177
      %v1181 = vrot.slane %v1179, 6
      %v1183 = vsub.f32 %v1176, %v1181
      %v1184 = vmax.f32 %v1183, 0.0
      %v1185 = vrot.slane %v393, 7
      %v1187 = vmin.f32 %v358, %v1185
      %v1188 = vrot.slane %v399, 1
      %v1190 = vmax.f32 %v358, %v1188
      %v1192 = vrot.slane %v1190, 6
      %v1194 = vsub.f32 %v1187, %v1192
      %v1195 = vmax.f32 %v1194, 0.0
      %v1197 = vrot.slane %v1195, 1
      %v1199 = vmul.f32 %v1184, %v1197
      %v1201 = vadd.f32 %v372, %v424
      %v1202 = vsub.f32 %v1201, %v1199
      %v1203 = vmax.f32 %v1202, 1e-08
      %v1204 = vrcp.pop %v1203
      %v1205 = vmul.f32 %v1203, %v1204
      %v1206 = vsub.f32 1.0, %v1205
      %v1207 = vmul.f32 %v1204, %v1206
      %v1208 = vadd.f32 %v1204, %v1207
      %vm1209 = vweird.f32 %v1203
      %vm1210 = vweird.f32 %v1204
      %vm1211 = vmor %vm1209, %vm1210
      %v1212 = vsel %vm1211, %v1204, %v1208
      %v1213 = vand.u32 2147483647, %v1203
      %vm1214 = vcmp.eq.f32.partialorder %v1213, 8.507059e+37
      %v1215 = vand.u32 %v1203, 2147483648
      %v1216 = vor.u32 1.1754944e-38, %v1215
      %v1217 = vsel %vm1214, %v1216, %v1212
      %v1218 = vmul.f32 %v1199, %v1217
      %v1220 = vmul.f32 %v1218, %v447
      %v1222 = vsub.f32 %v1220, %v455
      %v1223 = vmax.f32 %v503, %v361
      %v1224 = vmin.f32 %v1223, %v358
      %v1225 = vmax.f32 %v511, %v361
      %v1226 = vmin.f32 %v1225, %v358
      %v1227 = vsub.f32 %v1226, %v1224
      %v1228 = vsub.f32 %v1224, %v503
      %v1229 = vmul.f32 %v520, %v1228
      %v1230 = vadd.f32 %v525, %v1229
      %v1231 = vsub.f32 %v1226, %v503
      %v1232 = vmul.f32 %v520, %v1231
      %v1233 = vadd.f32 %v525, %v1232
      %v1235 = vrot.slane %v1227, 1
      %v1237 = vmul.f32 %v358, %v1235
      %v1238 = vsub.f32 %v1230, %v964
      %v1239 = vmax.f32 %v1238, 0.0
      %v1240 = vsub.f32 %v1233, %v964
      %v1241 = vmax.f32 %v1240, 0.0
      %v1242 = vsub.f32 %v525, %v964
      %v1243 = vmax.f32 %v1242, 0.0
      %v1244 = vmul.f32 %v1243, %v1227
      %v1245 = vmul.f32 %v1241, %v1241
      %v1246 = vmul.f32 %v1239, %v1239
      %v1247 = vsub.f32 %v1245, %v1246
      %v1248 = vmul.f32 %v1247, %v550
      %v1249 = vsub.f32 %v1244, %v1248
      %v1250 = vmul.f32 %v1249, %v557
      %v1251 = vadd.f32 %v1248, %v1250
      %v1253 = vrot.slane %v1251, 1
      %v1255 = vadd.f32 %v1237, %v1253
      %v1256 = vsub.f32 %v1230, %v535
      %v1257 = vmax.f32 %v1256, 0.0
      %v1258 = vsub.f32 %v1233, %v535
      %v1259 = vmax.f32 %v1258, 0.0
      %v1260 = vmul.f32 %v542, %v1227
      %v1261 = vmul.f32 %v1259, %v1259
      %v1262 = vmul.f32 %v1257, %v1257
      %v1263 = vsub.f32 %v1261, %v1262
      %v1264 = vmul.f32 %v1263, %v550
      %v1265 = vsub.f32 %v1260, %v1264
      %v1266 = vmul.f32 %v1265, %v557
      %v1267 = vadd.f32 %v1264, %v1266
      %v1269 = vrot.slane %v1267, 1
      %v1271 = vsub.f32 %v1255, %v1269
      %v1272 = vsub.f32 0.0, %v1271
      %v1273 = vmax.f32 %v588, %v361
      %v1274 = vmin.f32 %v1273, %v358
      %v1275 = vsub.f32 %v1274, %v1226
      %v1276 = vsub.f32 %v1226, %v511
      %v1277 = vmul.f32 %v596, %v1276
      %v1278 = vadd.f32 %v601, %v1277
      %v1279 = vsub.f32 %v1274, %v511
      %v1280 = vmul.f32 %v596, %v1279
      %v1281 = vadd.f32 %v601, %v1280
      %v1283 = vrot.slane %v1275, 1
      %v1285 = vmul.f32 %v358, %v1283
      %v1286 = vsub.f32 %v1278, %v964
      %v1287 = vmax.f32 %v1286, 0.0
      %v1288 = vsub.f32 %v1281, %v964
      %v1289 = vmax.f32 %v1288, 0.0
      %v1290 = vsub.f32 %v601, %v964
      %v1291 = vmax.f32 %v1290, 0.0
      %v1292 = vmul.f32 %v1291, %v1275
      %v1293 = vmul.f32 %v1289, %v1289
      %v1294 = vmul.f32 %v1287, %v1287
      %v1295 = vsub.f32 %v1293, %v1294
      %v1296 = vmul.f32 %v1295, %v623
      %v1297 = vsub.f32 %v1292, %v1296
      %v1298 = vmul.f32 %v1297, %v629
      %v1299 = vadd.f32 %v1296, %v1298
      %v1301 = vrot.slane %v1299, 1
      %v1303 = vadd.f32 %v1285, %v1301
      %v1304 = vsub.f32 %v1278, %v535
      %v1305 = vmax.f32 %v1304, 0.0
      %v1306 = vsub.f32 %v1281, %v535
      %v1307 = vmax.f32 %v1306, 0.0
      %v1308 = vmul.f32 %v616, %v1275
      %v1309 = vmul.f32 %v1307, %v1307
      %v1310 = vmul.f32 %v1305, %v1305
      %v1311 = vsub.f32 %v1309, %v1310
      %v1312 = vmul.f32 %v1311, %v623
      %v1313 = vsub.f32 %v1308, %v1312
      %v1314 = vmul.f32 %v1313, %v629
      %v1315 = vadd.f32 %v1312, %v1314
      %v1317 = vrot.slane %v1315, 1
      %v1319 = vsub.f32 %v1303, %v1317
      %v1320 = vsub.f32 %v1272, %v1319
      %v1321 = vmax.f32 %v658, %v361
      %v1322 = vmin.f32 %v1321, %v358
      %v1323 = vsub.f32 %v1322, %v1274
      %v1324 = vsub.f32 %v1274, %v588
      %v1325 = vmul.f32 %v666, %v1324
      %v1326 = vadd.f32 %v671, %v1325
      %v1327 = vsub.f32 %v1322, %v588
      %v1328 = vmul.f32 %v666, %v1327
      %v1329 = vadd.f32 %v671, %v1328
      %v1331 = vrot.slane %v1323, 1
      %v1333 = vmul.f32 %v358, %v1331
      %v1334 = vsub.f32 %v1326, %v964
      %v1335 = vmax.f32 %v1334, 0.0
      %v1336 = vsub.f32 %v1329, %v964
      %v1337 = vmax.f32 %v1336, 0.0
      %v1338 = vsub.f32 %v671, %v964
      %v1339 = vmax.f32 %v1338, 0.0
      %v1340 = vmul.f32 %v1339, %v1323
      %v1341 = vmul.f32 %v1337, %v1337
      %v1342 = vmul.f32 %v1335, %v1335
      %v1343 = vsub.f32 %v1341, %v1342
      %v1344 = vmul.f32 %v1343, %v693
      %v1345 = vsub.f32 %v1340, %v1344
      %v1346 = vmul.f32 %v1345, %v699
      %v1347 = vadd.f32 %v1344, %v1346
      %v1349 = vrot.slane %v1347, 1
      %v1351 = vadd.f32 %v1333, %v1349
      %v1352 = vsub.f32 %v1326, %v535
      %v1353 = vmax.f32 %v1352, 0.0
      %v1354 = vsub.f32 %v1329, %v535
      %v1355 = vmax.f32 %v1354, 0.0
      %v1356 = vmul.f32 %v686, %v1323
      %v1357 = vmul.f32 %v1355, %v1355
      %v1358 = vmul.f32 %v1353, %v1353
      %v1359 = vsub.f32 %v1357, %v1358
      %v1360 = vmul.f32 %v1359, %v693
      %v1361 = vsub.f32 %v1356, %v1360
      %v1362 = vmul.f32 %v1361, %v699
      %v1363 = vadd.f32 %v1360, %v1362
      %v1365 = vrot.slane %v1363, 1
      %v1367 = vsub.f32 %v1351, %v1365
      %v1368 = vsub.f32 %v1320, %v1367
      %v1369 = vsub.f32 %v1224, %v1322
      %v1370 = vsub.f32 %v1322, %v658
      %v1371 = vmul.f32 %v777, %v1370
      %v1372 = vadd.f32 %v782, %v1371
      %v1373 = vsub.f32 %v1224, %v658
      %v1374 = vmul.f32 %v777, %v1373
      %v1375 = vadd.f32 %v782, %v1374
      %v1377 = vrot.slane %v1369, 1
      %v1379 = vmul.f32 %v358, %v1377
      %v1380 = vsub.f32 %v1372, %v964
      %v1381 = vmax.f32 %v1380, 0.0
      %v1382 = vsub.f32 %v1375, %v964
      %v1383 = vmax.f32 %v1382, 0.0
      %v1384 = vsub.f32 %v782, %v964
      %v1385 = vmax.f32 %v1384, 0.0
      %v1386 = vmul.f32 %v1385, %v1369
      %v1387 = vmul.f32 %v1383, %v1383
      %v1388 = vmul.f32 %v1381, %v1381
      %v1389 = vsub.f32 %v1387, %v1388
      %v1390 = vmul.f32 %v1389, %v805
      %v1391 = vsub.f32 %v1386, %v1390
      %v1392 = vmul.f32 %v1391, %v812
      %v1393 = vadd.f32 %v1390, %v1392
      %v1395 = vrot.slane %v1393, 1
      %v1397 = vadd.f32 %v1379, %v1395
      %v1398 = vsub.f32 %v1372, %v535
      %v1399 = vmax.f32 %v1398, 0.0
      %v1400 = vsub.f32 %v1375, %v535
      %v1401 = vmax.f32 %v1400, 0.0
      %v1402 = vmul.f32 %v797, %v1369
      %v1403 = vmul.f32 %v1401, %v1401
      %v1404 = vmul.f32 %v1399, %v1399
      %v1405 = vsub.f32 %v1403, %v1404
      %v1406 = vmul.f32 %v1405, %v805
      %v1407 = vsub.f32 %v1402, %v1406
      %v1408 = vmul.f32 %v1407, %v812
      %v1409 = vadd.f32 %v1406, %v1408
      %v1411 = vrot.slane %v1409, 1
      %v1413 = vsub.f32 %v1397, %v1411
      %v1414 = vsub.f32 %v1368, %v1413
      %v1415 = vand.u32 2147483647, %v1414
      %v1416 = vadd.f32 %v842, %v372
      %v1418 = vrot.slane %v1415, 7
      %v1420 = vsub.f32 %v1416, %v1418
      %v1421 = vmax.f32 %v1420, 1e-08
      %v1423 = vrot.slane %v1421, 1
      %v1425 = vrcp.pop %v1423
      %v1426 = vmul.f32 %v1423, %v1425
      %v1427 = vsub.f32 1.0, %v1426
      %v1428 = vmul.f32 %v1425, %v1427
      %v1429 = vadd.f32 %v1425, %v1428
      %vm1430 = vweird.f32 %v1423
      %vm1431 = vweird.f32 %v1425
      %vm1432 = vmor %vm1430, %vm1431
      %v1433 = vsel %vm1432, %v1425, %v1429
      %v1434 = vand.u32 2147483647, %v1423
      %vm1435 = vcmp.eq.f32.partialorder %v1434, 8.507059e+37
      %v1436 = vand.u32 %v1423, 2147483648
      %v1437 = vor.u32 1.1754944e-38, %v1436
      %v1438 = vsel %vm1435, %v1437, %v1433
      %v1439 = vmul.f32 %v1415, %v1438
      %vm1440 = vcmp.gt.f32.partialorder %v1222, %v1152
      %v1441 = vsel %vm1440, %v1222, %v1152
      %v1443 = vrot.slane %v1439, 7
      %v1445 = vsel %vm1440, %v1443, %v1156
      %v1447 = vsel %vm1440, %v879, %v1159
      %v1449 = vsel %vm1440, %v885, %v1162
      %v1451 = vsel %vm1440, %v891, %v1165
      %v1453 = vsel %vm1440, %v897, %v1168
      %v1455 = vsel %vm1440, %v903, %v1171
      %v1457 = vsel %vm1440, %v909, %v1174
      %v1458 = vrot.slane %v377, 1
      %v1460 = vmin.f32 %v358, %v1458
      %v1461 = vrot.slane %v383, 3
      %v1463 = vmax.f32 %v358, %v1461
      %v1465 = vrot.slane %v1463, 6
      %v1467 = vsub.f32 %v1460, %v1465
      %v1468 = vmax.f32 %v1467, 0.0
      %v1470 = vmin.f32 %v358, %v393
      %v1471 = vrot.slane %v399, 2
      %v1473 = vmax.f32 %v358, %v1471
      %v1475 = vrot.slane %v1473, 6
      %v1477 = vsub.f32 %v1470, %v1475
      %v1478 = vmax.f32 %v1477, 0.0
      %v1480 = vrot.slane %v1478, 1
      %v1482 = vmul.f32 %v1468, %v1480
      %v1483 = vrot.slane %v424, 1
      %v1485 = vadd.f32 %v372, %v1483
      %v1486 = vsub.f32 %v1485, %v1482
      %v1487 = vmax.f32 %v1486, 1e-08
      %v1488 = vrcp.pop %v1487
      %v1489 = vmul.f32 %v1487, %v1488
      %v1490 = vsub.f32 1.0, %v1489
      %v1491 = vmul.f32 %v1488, %v1490
      %v1492 = vadd.f32 %v1488, %v1491
      %vm1493 = vweird.f32 %v1487
      %vm1494 = vweird.f32 %v1488
      %vm1495 = vmor %vm1493, %vm1494
      %v1496 = vsel %vm1495, %v1488, %v1492
      %v1497 = vand.u32 2147483647, %v1487
      %vm1498 = vcmp.eq.f32.partialorder %v1497, 8.507059e+37
      %v1499 = vand.u32 %v1487, 2147483648
      %v1500 = vor.u32 1.1754944e-38, %v1499
      %v1501 = vsel %vm1498, %v1500, %v1496
      %v1502 = vmul.f32 %v1482, %v1501
      %v1503 = vrot.slane %v447, 1
      %v1505 = vmul.f32 %v1502, %v1503
      %v1506 = vrot.slane %v455, 1
      %v1508 = vsub.f32 %v1505, %v1506
      %v1509 = vrot.slane %v358, 5
      %v1511 = vmax.f32 %v503, %v1509
      %v1512 = vmin.f32 %v1511, %v964
      %v1513 = vmax.f32 %v511, %v1509
      %v1514 = vmin.f32 %v1513, %v964
      %v1515 = vsub.f32 %v1514, %v1512
      %v1516 = vsub.f32 %v1512, %v503
      %v1517 = vmul.f32 %v520, %v1516
      %v1518 = vadd.f32 %v525, %v1517
      %v1519 = vsub.f32 %v1514, %v503
      %v1520 = vmul.f32 %v520, %v1519
      %v1521 = vadd.f32 %v525, %v1520
      %v1523 = vrot.slane %v1515, 2
      %v1525 = vmul.f32 %v358, %v1523
      %v1526 = vsub.f32 %v1518, %v361
      %v1527 = vmax.f32 %v1526, 0.0
      %v1528 = vsub.f32 %v1521, %v361
      %v1529 = vmax.f32 %v1528, 0.0
      %v1530 = vsub.f32 %v525, %v361
      %v1531 = vmax.f32 %v1530, 0.0
      %v1532 = vmul.f32 %v1531, %v1515
      %v1533 = vmul.f32 %v1529, %v1529
      %v1534 = vmul.f32 %v1527, %v1527
      %v1535 = vsub.f32 %v1533, %v1534
      %v1536 = vmul.f32 %v1535, %v550
      %v1537 = vsub.f32 %v1532, %v1536
      %v1538 = vmul.f32 %v1537, %v557
      %v1539 = vadd.f32 %v1536, %v1538
      %v1541 = vrot.slane %v1539, 2
      %v1543 = vadd.f32 %v1525, %v1541
      %v1544 = vsub.f32 %v1518, %v358
      %v1545 = vmax.f32 %v1544, 0.0
      %v1546 = vsub.f32 %v1521, %v358
      %v1547 = vmax.f32 %v1546, 0.0
      %v1548 = vmul.f32 %v983, %v1515
      %v1549 = vmul.f32 %v1547, %v1547
      %v1550 = vmul.f32 %v1545, %v1545
      %v1551 = vsub.f32 %v1549, %v1550
      %v1552 = vmul.f32 %v1551, %v550
      %v1553 = vsub.f32 %v1548, %v1552
      %v1554 = vmul.f32 %v1553, %v557
      %v1555 = vadd.f32 %v1552, %v1554
      %v1557 = vrot.slane %v1555, 2
      %v1559 = vsub.f32 %v1543, %v1557
      %v1560 = vsub.f32 0.0, %v1559
      %v1561 = vmax.f32 %v588, %v1509
      %v1562 = vmin.f32 %v1561, %v964
      %v1563 = vsub.f32 %v1562, %v1514
      %v1564 = vsub.f32 %v1514, %v511
      %v1565 = vmul.f32 %v596, %v1564
      %v1566 = vadd.f32 %v601, %v1565
      %v1567 = vsub.f32 %v1562, %v511
      %v1568 = vmul.f32 %v596, %v1567
      %v1569 = vadd.f32 %v601, %v1568
      %v1571 = vrot.slane %v1563, 2
      %v1573 = vmul.f32 %v358, %v1571
      %v1574 = vsub.f32 %v1566, %v361
      %v1575 = vmax.f32 %v1574, 0.0
      %v1576 = vsub.f32 %v1569, %v361
      %v1577 = vmax.f32 %v1576, 0.0
      %v1578 = vsub.f32 %v601, %v361
      %v1579 = vmax.f32 %v1578, 0.0
      %v1580 = vmul.f32 %v1579, %v1563
      %v1581 = vmul.f32 %v1577, %v1577
      %v1582 = vmul.f32 %v1575, %v1575
      %v1583 = vsub.f32 %v1581, %v1582
      %v1584 = vmul.f32 %v1583, %v623
      %v1585 = vsub.f32 %v1580, %v1584
      %v1586 = vmul.f32 %v1585, %v629
      %v1587 = vadd.f32 %v1584, %v1586
      %v1589 = vrot.slane %v1587, 2
      %v1591 = vadd.f32 %v1573, %v1589
      %v1592 = vsub.f32 %v1566, %v358
      %v1593 = vmax.f32 %v1592, 0.0
      %v1594 = vsub.f32 %v1569, %v358
      %v1595 = vmax.f32 %v1594, 0.0
      %v1596 = vmul.f32 %v1024, %v1563
      %v1597 = vmul.f32 %v1595, %v1595
      %v1598 = vmul.f32 %v1593, %v1593
      %v1599 = vsub.f32 %v1597, %v1598
      %v1600 = vmul.f32 %v1599, %v623
      %v1601 = vsub.f32 %v1596, %v1600
      %v1602 = vmul.f32 %v1601, %v629
      %v1603 = vadd.f32 %v1600, %v1602
      %v1605 = vrot.slane %v1603, 2
      %v1607 = vsub.f32 %v1591, %v1605
      %v1608 = vsub.f32 %v1560, %v1607
      %v1609 = vmax.f32 %v658, %v1509
      %v1610 = vmin.f32 %v1609, %v964
      %v1611 = vsub.f32 %v1610, %v1562
      %v1612 = vsub.f32 %v1562, %v588
      %v1613 = vmul.f32 %v666, %v1612
      %v1614 = vadd.f32 %v671, %v1613
      %v1615 = vsub.f32 %v1610, %v588
      %v1616 = vmul.f32 %v666, %v1615
      %v1617 = vadd.f32 %v671, %v1616
      %v1619 = vrot.slane %v1611, 2
      %v1621 = vmul.f32 %v358, %v1619
      %v1622 = vsub.f32 %v1614, %v361
      %v1623 = vmax.f32 %v1622, 0.0
      %v1624 = vsub.f32 %v1617, %v361
      %v1625 = vmax.f32 %v1624, 0.0
      %v1626 = vsub.f32 %v671, %v361
      %v1627 = vmax.f32 %v1626, 0.0
      %v1628 = vmul.f32 %v1627, %v1611
      %v1629 = vmul.f32 %v1625, %v1625
      %v1630 = vmul.f32 %v1623, %v1623
      %v1631 = vsub.f32 %v1629, %v1630
      %v1632 = vmul.f32 %v1631, %v693
      %v1633 = vsub.f32 %v1628, %v1632
      %v1634 = vmul.f32 %v1633, %v699
      %v1635 = vadd.f32 %v1632, %v1634
      %v1637 = vrot.slane %v1635, 2
      %v1639 = vadd.f32 %v1621, %v1637
      %v1640 = vsub.f32 %v1614, %v358
      %v1641 = vmax.f32 %v1640, 0.0
      %v1642 = vsub.f32 %v1617, %v358
      %v1643 = vmax.f32 %v1642, 0.0
      %v1644 = vmul.f32 %v1065, %v1611
      %v1645 = vmul.f32 %v1643, %v1643
      %v1646 = vmul.f32 %v1641, %v1641
      %v1647 = vsub.f32 %v1645, %v1646
      %v1648 = vmul.f32 %v1647, %v693
      %v1649 = vsub.f32 %v1644, %v1648
      %v1650 = vmul.f32 %v1649, %v699
      %v1651 = vadd.f32 %v1648, %v1650
      %v1653 = vrot.slane %v1651, 2
      %v1655 = vsub.f32 %v1639, %v1653
      %v1656 = vsub.f32 %v1608, %v1655
      %v1657 = vsub.f32 %v1512, %v1610
      %v1658 = vsub.f32 %v1610, %v658
      %v1659 = vmul.f32 %v777, %v1658
      %v1660 = vadd.f32 %v782, %v1659
      %v1661 = vsub.f32 %v1512, %v658
      %v1662 = vmul.f32 %v777, %v1661
      %v1663 = vadd.f32 %v782, %v1662
      %v1665 = vrot.slane %v1657, 2
      %v1667 = vmul.f32 %v358, %v1665
      %v1668 = vsub.f32 %v1660, %v361
      %v1669 = vmax.f32 %v1668, 0.0
      %v1670 = vsub.f32 %v1663, %v361
      %v1671 = vmax.f32 %v1670, 0.0
      %v1672 = vsub.f32 %v782, %v361
      %v1673 = vmax.f32 %v1672, 0.0
      %v1674 = vmul.f32 %v1673, %v1657
      %v1675 = vmul.f32 %v1671, %v1671
      %v1676 = vmul.f32 %v1669, %v1669
      %v1677 = vsub.f32 %v1675, %v1676
      %v1678 = vmul.f32 %v1677, %v805
      %v1679 = vsub.f32 %v1674, %v1678
      %v1680 = vmul.f32 %v1679, %v812
      %v1681 = vadd.f32 %v1678, %v1680
      %v1683 = vrot.slane %v1681, 2
      %v1685 = vadd.f32 %v1667, %v1683
      %v1686 = vsub.f32 %v1660, %v358
      %v1687 = vmax.f32 %v1686, 0.0
      %v1688 = vsub.f32 %v1663, %v358
      %v1689 = vmax.f32 %v1688, 0.0
      %v1690 = vmul.f32 %v1104, %v1657
      %v1691 = vmul.f32 %v1689, %v1689
      %v1692 = vmul.f32 %v1687, %v1687
      %v1693 = vsub.f32 %v1691, %v1692
      %v1694 = vmul.f32 %v1693, %v805
      %v1695 = vsub.f32 %v1690, %v1694
      %v1696 = vmul.f32 %v1695, %v812
      %v1697 = vadd.f32 %v1694, %v1696
      %v1699 = vrot.slane %v1697, 2
      %v1701 = vsub.f32 %v1685, %v1699
      %v1702 = vsub.f32 %v1656, %v1701
      %v1703 = vand.u32 2147483647, %v1702
      %v1704 = vrot.slane %v372, 7
      %v1706 = vadd.f32 %v842, %v1704
      %v1708 = vrot.slane %v1703, 6
      %v1710 = vsub.f32 %v1706, %v1708
      %v1711 = vmax.f32 %v1710, 1e-08
      %v1713 = vrot.slane %v1711, 2
      %v1715 = vrcp.pop %v1713
      %v1716 = vmul.f32 %v1713, %v1715
      %v1717 = vsub.f32 1.0, %v1716
      %v1718 = vmul.f32 %v1715, %v1717
      %v1719 = vadd.f32 %v1715, %v1718
      %vm1720 = vweird.f32 %v1713
      %vm1721 = vweird.f32 %v1715
      %vm1722 = vmor %vm1720, %vm1721
      %v1723 = vsel %vm1722, %v1715, %v1719
      %v1724 = vand.u32 2147483647, %v1713
      %vm1725 = vcmp.eq.f32.partialorder %v1724, 8.507059e+37
      %v1726 = vand.u32 %v1713, 2147483648
      %v1727 = vor.u32 1.1754944e-38, %v1726
      %v1728 = vsel %vm1725, %v1727, %v1723
      %v1729 = vmul.f32 %v1703, %v1728
      %vm1730 = vcmp.gt.f32.partialorder %v1508, %v1441
      %v1731 = vsel %vm1730, %v1508, %v1441
      %v1733 = vrot.slane %v1729, 7
      %v1735 = vsel %vm1730, %v1733, %v1445
      %v1736 = vrot.slane %v879, 1
      %v1738 = vsel %vm1730, %v1736, %v1447
      %v1739 = vrot.slane %v885, 1
      %v1741 = vsel %vm1730, %v1739, %v1449
      %v1742 = vrot.slane %v891, 1
      %v1744 = vsel %vm1730, %v1742, %v1451
      %v1745 = vrot.slane %v897, 1
      %v1747 = vsel %vm1730, %v1745, %v1453
      %v1748 = vrot.slane %v903, 1
      %v1750 = vsel %vm1730, %v1748, %v1455
      %v1751 = vrot.slane %v909, 1
      %v1753 = vsel %vm1730, %v1751, %v1457
      %v1754 = vrot.slane %v377, 2
      %v1756 = vmin.f32 %v358, %v1754
      %v1757 = vrot.slane %v383, 4
      %v1759 = vmax.f32 %v358, %v1757
      %v1761 = vrot.slane %v1759, 6
      %v1763 = vsub.f32 %v1756, %v1761
      %v1764 = vmax.f32 %v1763, 0.0
      %v1765 = vrot.slane %v393, 1
      %v1767 = vmin.f32 %v358, %v1765
      %v1768 = vrot.slane %v399, 3
      %v1770 = vmax.f32 %v358, %v1768
      %v1772 = vrot.slane %v1770, 6
      %v1774 = vsub.f32 %v1767, %v1772
      %v1775 = vmax.f32 %v1774, 0.0
      %v1777 = vrot.slane %v1775, 1
      %v1779 = vmul.f32 %v1764, %v1777
      %v1780 = vrot.slane %v424, 2
      %v1782 = vadd.f32 %v372, %v1780
      %v1783 = vsub.f32 %v1782, %v1779
      %v1784 = vmax.f32 %v1783, 1e-08
      %v1785 = vrcp.pop %v1784
      %v1786 = vmul.f32 %v1784, %v1785
      %v1787 = vsub.f32 1.0, %v1786
      %v1788 = vmul.f32 %v1785, %v1787
      %v1789 = vadd.f32 %v1785, %v1788
      %vm1790 = vweird.f32 %v1784
      %vm1791 = vweird.f32 %v1785
      %vm1792 = vmor %vm1790, %vm1791
      %v1793 = vsel %vm1792, %v1785, %v1789
      %v1794 = vand.u32 2147483647, %v1784
      %vm1795 = vcmp.eq.f32.partialorder %v1794, 8.507059e+37
      %v1796 = vand.u32 %v1784, 2147483648
      %v1797 = vor.u32 1.1754944e-38, %v1796
      %v1798 = vsel %vm1795, %v1797, %v1793
      %v1799 = vmul.f32 %v1779, %v1798
      %v1800 = vrot.slane %v447, 2
      %v1802 = vmul.f32 %v1799, %v1800
      %v1803 = vrot.slane %v455, 2
      %v1805 = vsub.f32 %v1802, %v1803
      %v1806 = vrot.slane %v358, 4
      %v1808 = vmax.f32 %v503, %v1806
      %v1809 = vmin.f32 %v1808, %v361
      %v1810 = vmax.f32 %v511, %v1806
      %v1811 = vmin.f32 %v1810, %v361
      %v1812 = vsub.f32 %v1811, %v1809
      %v1813 = vsub.f32 %v1809, %v503
      %v1814 = vmul.f32 %v520, %v1813
      %v1815 = vadd.f32 %v525, %v1814
      %v1816 = vsub.f32 %v1811, %v503
      %v1817 = vmul.f32 %v520, %v1816
      %v1818 = vadd.f32 %v525, %v1817
      %v1820 = vrot.slane %v1812, 3
      %v1822 = vmul.f32 %v358, %v1820
      %v1823 = vsub.f32 %v1815, %v1509
      %v1824 = vmax.f32 %v1823, 0.0
      %v1825 = vsub.f32 %v1818, %v1509
      %v1826 = vmax.f32 %v1825, 0.0
      %v1827 = vsub.f32 %v525, %v1509
      %v1828 = vmax.f32 %v1827, 0.0
      %v1829 = vmul.f32 %v1828, %v1812
      %v1830 = vmul.f32 %v1826, %v1826
      %v1831 = vmul.f32 %v1824, %v1824
      %v1832 = vsub.f32 %v1830, %v1831
      %v1833 = vmul.f32 %v1832, %v550
      %v1834 = vsub.f32 %v1829, %v1833
      %v1835 = vmul.f32 %v1834, %v557
      %v1836 = vadd.f32 %v1833, %v1835
      %v1838 = vrot.slane %v1836, 3
      %v1840 = vadd.f32 %v1822, %v1838
      %v1841 = vsub.f32 %v1815, %v964
      %v1842 = vmax.f32 %v1841, 0.0
      %v1843 = vsub.f32 %v1818, %v964
      %v1844 = vmax.f32 %v1843, 0.0
      %v1845 = vmul.f32 %v1243, %v1812
      %v1846 = vmul.f32 %v1844, %v1844
      %v1847 = vmul.f32 %v1842, %v1842
      %v1848 = vsub.f32 %v1846, %v1847
      %v1849 = vmul.f32 %v1848, %v550
      %v1850 = vsub.f32 %v1845, %v1849
      %v1851 = vmul.f32 %v1850, %v557
      %v1852 = vadd.f32 %v1849, %v1851
      %v1854 = vrot.slane %v1852, 3
      %v1856 = vsub.f32 %v1840, %v1854
      %v1857 = vsub.f32 0.0, %v1856
      %v1858 = vmax.f32 %v588, %v1806
      %v1859 = vmin.f32 %v1858, %v361
      %v1860 = vsub.f32 %v1859, %v1811
      %v1861 = vsub.f32 %v1811, %v511
      %v1862 = vmul.f32 %v596, %v1861
      %v1863 = vadd.f32 %v601, %v1862
      %v1864 = vsub.f32 %v1859, %v511
      %v1865 = vmul.f32 %v596, %v1864
      %v1866 = vadd.f32 %v601, %v1865
      %v1868 = vrot.slane %v1860, 3
      %v1870 = vmul.f32 %v358, %v1868
      %v1871 = vsub.f32 %v1863, %v1509
      %v1872 = vmax.f32 %v1871, 0.0
      %v1873 = vsub.f32 %v1866, %v1509
      %v1874 = vmax.f32 %v1873, 0.0
      %v1875 = vsub.f32 %v601, %v1509
      %v1876 = vmax.f32 %v1875, 0.0
      %v1877 = vmul.f32 %v1876, %v1860
      %v1878 = vmul.f32 %v1874, %v1874
      %v1879 = vmul.f32 %v1872, %v1872
      %v1880 = vsub.f32 %v1878, %v1879
      %v1881 = vmul.f32 %v1880, %v623
      %v1882 = vsub.f32 %v1877, %v1881
      %v1883 = vmul.f32 %v1882, %v629
      %v1884 = vadd.f32 %v1881, %v1883
      %v1886 = vrot.slane %v1884, 3
      %v1888 = vadd.f32 %v1870, %v1886
      %v1889 = vsub.f32 %v1863, %v964
      %v1890 = vmax.f32 %v1889, 0.0
      %v1891 = vsub.f32 %v1866, %v964
      %v1892 = vmax.f32 %v1891, 0.0
      %v1893 = vmul.f32 %v1291, %v1860
      %v1894 = vmul.f32 %v1892, %v1892
      %v1895 = vmul.f32 %v1890, %v1890
      %v1896 = vsub.f32 %v1894, %v1895
      %v1897 = vmul.f32 %v1896, %v623
      %v1898 = vsub.f32 %v1893, %v1897
      %v1899 = vmul.f32 %v1898, %v629
      %v1900 = vadd.f32 %v1897, %v1899
      %v1902 = vrot.slane %v1900, 3
      %v1904 = vsub.f32 %v1888, %v1902
      %v1905 = vsub.f32 %v1857, %v1904
      %v1906 = vmax.f32 %v658, %v1806
      %v1907 = vmin.f32 %v1906, %v361
      %v1908 = vsub.f32 %v1907, %v1859
      %v1909 = vsub.f32 %v1859, %v588
      %v1910 = vmul.f32 %v666, %v1909
      %v1911 = vadd.f32 %v671, %v1910
      %v1912 = vsub.f32 %v1907, %v588
      %v1913 = vmul.f32 %v666, %v1912
      %v1914 = vadd.f32 %v671, %v1913
      %v1916 = vrot.slane %v1908, 3
      %v1918 = vmul.f32 %v358, %v1916
      %v1919 = vsub.f32 %v1911, %v1509
      %v1920 = vmax.f32 %v1919, 0.0
      %v1921 = vsub.f32 %v1914, %v1509
      %v1922 = vmax.f32 %v1921, 0.0
      %v1923 = vsub.f32 %v671, %v1509
      %v1924 = vmax.f32 %v1923, 0.0
      %v1925 = vmul.f32 %v1924, %v1908
      %v1926 = vmul.f32 %v1922, %v1922
      %v1927 = vmul.f32 %v1920, %v1920
      %v1928 = vsub.f32 %v1926, %v1927
      %v1929 = vmul.f32 %v1928, %v693
      %v1930 = vsub.f32 %v1925, %v1929
      %v1931 = vmul.f32 %v1930, %v699
      %v1932 = vadd.f32 %v1929, %v1931
      %v1934 = vrot.slane %v1932, 3
      %v1936 = vadd.f32 %v1918, %v1934
      %v1937 = vsub.f32 %v1911, %v964
      %v1938 = vmax.f32 %v1937, 0.0
      %v1939 = vsub.f32 %v1914, %v964
      %v1940 = vmax.f32 %v1939, 0.0
      %v1941 = vmul.f32 %v1339, %v1908
      %v1942 = vmul.f32 %v1940, %v1940
      %v1943 = vmul.f32 %v1938, %v1938
      %v1944 = vsub.f32 %v1942, %v1943
      %v1945 = vmul.f32 %v1944, %v693
      %v1946 = vsub.f32 %v1941, %v1945
      %v1947 = vmul.f32 %v1946, %v699
      %v1948 = vadd.f32 %v1945, %v1947
      %v1950 = vrot.slane %v1948, 3
      %v1952 = vsub.f32 %v1936, %v1950
      %v1953 = vsub.f32 %v1905, %v1952
      %v1954 = vsub.f32 %v1809, %v1907
      %v1955 = vsub.f32 %v1907, %v658
      %v1956 = vmul.f32 %v777, %v1955
      %v1957 = vadd.f32 %v782, %v1956
      %v1958 = vsub.f32 %v1809, %v658
      %v1959 = vmul.f32 %v777, %v1958
      %v1960 = vadd.f32 %v782, %v1959
      %v1962 = vrot.slane %v1954, 3
      %v1964 = vmul.f32 %v358, %v1962
      %v1965 = vsub.f32 %v1957, %v1509
      %v1966 = vmax.f32 %v1965, 0.0
      %v1967 = vsub.f32 %v1960, %v1509
      %v1968 = vmax.f32 %v1967, 0.0
      %v1969 = vsub.f32 %v782, %v1509
      %v1970 = vmax.f32 %v1969, 0.0
      %v1971 = vmul.f32 %v1970, %v1954
      %v1972 = vmul.f32 %v1968, %v1968
      %v1973 = vmul.f32 %v1966, %v1966
      %v1974 = vsub.f32 %v1972, %v1973
      %v1975 = vmul.f32 %v1974, %v805
      %v1976 = vsub.f32 %v1971, %v1975
      %v1977 = vmul.f32 %v1976, %v812
      %v1978 = vadd.f32 %v1975, %v1977
      %v1980 = vrot.slane %v1978, 3
      %v1982 = vadd.f32 %v1964, %v1980
      %v1983 = vsub.f32 %v1957, %v964
      %v1984 = vmax.f32 %v1983, 0.0
      %v1985 = vsub.f32 %v1960, %v964
      %v1986 = vmax.f32 %v1985, 0.0
      %v1987 = vmul.f32 %v1385, %v1954
      %v1988 = vmul.f32 %v1986, %v1986
      %v1989 = vmul.f32 %v1984, %v1984
      %v1990 = vsub.f32 %v1988, %v1989
      %v1991 = vmul.f32 %v1990, %v805
      %v1992 = vsub.f32 %v1987, %v1991
      %v1993 = vmul.f32 %v1992, %v812
      %v1994 = vadd.f32 %v1991, %v1993
      %v1996 = vrot.slane %v1994, 3
      %v1998 = vsub.f32 %v1982, %v1996
      %v1999 = vsub.f32 %v1953, %v1998
      %v2000 = vand.u32 2147483647, %v1999
      %v2001 = vrot.slane %v372, 6
      %v2003 = vadd.f32 %v842, %v2001
      %v2005 = vrot.slane %v2000, 5
      %v2007 = vsub.f32 %v2003, %v2005
      %v2008 = vmax.f32 %v2007, 1e-08
      %v2010 = vrot.slane %v2008, 3
      %v2012 = vrcp.pop %v2010
      %v2013 = vmul.f32 %v2010, %v2012
      %v2014 = vsub.f32 1.0, %v2013
      %v2015 = vmul.f32 %v2012, %v2014
      %v2016 = vadd.f32 %v2012, %v2015
      %vm2017 = vweird.f32 %v2010
      %vm2018 = vweird.f32 %v2012
      %vm2019 = vmor %vm2017, %vm2018
      %v2020 = vsel %vm2019, %v2012, %v2016
      %v2021 = vand.u32 2147483647, %v2010
      %vm2022 = vcmp.eq.f32.partialorder %v2021, 8.507059e+37
      %v2023 = vand.u32 %v2010, 2147483648
      %v2024 = vor.u32 1.1754944e-38, %v2023
      %v2025 = vsel %vm2022, %v2024, %v2020
      %v2026 = vmul.f32 %v2000, %v2025
      %vm2027 = vcmp.gt.f32.partialorder %v1805, %v1731
      %v2028 = vsel %vm2027, %v1805, %v1731
      %v2030 = vrot.slane %v2026, 7
      %v2032 = vsel %vm2027, %v2030, %v1735
      %v2033 = vrot.slane %v879, 2
      %v2035 = vsel %vm2027, %v2033, %v1738
      %v2036 = vrot.slane %v885, 2
      %v2038 = vsel %vm2027, %v2036, %v1741
      %v2039 = vrot.slane %v891, 2
      %v2041 = vsel %vm2027, %v2039, %v1744
      %v2042 = vrot.slane %v897, 2
      %v2044 = vsel %vm2027, %v2042, %v1747
      %v2045 = vrot.slane %v903, 2
      %v2047 = vsel %vm2027, %v2045, %v1750
      %v2048 = vrot.slane %v909, 2
      %v2050 = vsel %vm2027, %v2048, %v1753
      %v2051 = vrot.slane %v377, 3
      %v2053 = vmin.f32 %v358, %v2051
      %v2054 = vrot.slane %v383, 5
      %v2056 = vmax.f32 %v358, %v2054
      %v2058 = vrot.slane %v2056, 6
      %v2060 = vsub.f32 %v2053, %v2058
      %v2061 = vmax.f32 %v2060, 0.0
      %v2062 = vrot.slane %v393, 2
      %v2064 = vmin.f32 %v358, %v2062
      %v2065 = vrot.slane %v399, 4
      %v2067 = vmax.f32 %v358, %v2065
      %v2069 = vrot.slane %v2067, 6
      %v2071 = vsub.f32 %v2064, %v2069
      %v2072 = vmax.f32 %v2071, 0.0
      %v2074 = vrot.slane %v2072, 1
      %v2076 = vmul.f32 %v2061, %v2074
      %v2077 = vrot.slane %v424, 3
      %v2079 = vadd.f32 %v372, %v2077
      %v2080 = vsub.f32 %v2079, %v2076
      %v2081 = vmax.f32 %v2080, 1e-08
      %v2082 = vrcp.pop %v2081
      %v2083 = vmul.f32 %v2081, %v2082
      %v2084 = vsub.f32 1.0, %v2083
      %v2085 = vmul.f32 %v2082, %v2084
      %v2086 = vadd.f32 %v2082, %v2085
      %vm2087 = vweird.f32 %v2081
      %vm2088 = vweird.f32 %v2082
      %vm2089 = vmor %vm2087, %vm2088
      %v2090 = vsel %vm2089, %v2082, %v2086
      %v2091 = vand.u32 2147483647, %v2081
      %vm2092 = vcmp.eq.f32.partialorder %v2091, 8.507059e+37
      %v2093 = vand.u32 %v2081, 2147483648
      %v2094 = vor.u32 1.1754944e-38, %v2093
      %v2095 = vsel %vm2092, %v2094, %v2090
      %v2096 = vmul.f32 %v2076, %v2095
      %v2097 = vrot.slane %v447, 3
      %v2099 = vmul.f32 %v2096, %v2097
      %v2100 = vrot.slane %v455, 3
      %v2102 = vsub.f32 %v2099, %v2100
      %v2103 = vmax.f32 %v503, %v565
      %v2104 = vmin.f32 %v2103, %v1509
      %v2105 = vmax.f32 %v511, %v565
      %v2106 = vmin.f32 %v2105, %v1509
      %v2107 = vsub.f32 %v2106, %v2104
      %v2108 = vsub.f32 %v2104, %v503
      %v2109 = vmul.f32 %v520, %v2108
      %v2110 = vadd.f32 %v525, %v2109
      %v2111 = vsub.f32 %v2106, %v503
      %v2112 = vmul.f32 %v520, %v2111
      %v2113 = vadd.f32 %v525, %v2112
      %v2115 = vrot.slane %v2107, 4
      %v2117 = vmul.f32 %v358, %v2115
      %v2118 = vsub.f32 %v2110, %v1806
      %v2119 = vmax.f32 %v2118, 0.0
      %v2120 = vsub.f32 %v2113, %v1806
      %v2121 = vmax.f32 %v2120, 0.0
      %v2122 = vsub.f32 %v525, %v1806
      %v2123 = vmax.f32 %v2122, 0.0
      %v2124 = vmul.f32 %v2123, %v2107
      %v2125 = vmul.f32 %v2121, %v2121
      %v2126 = vmul.f32 %v2119, %v2119
      %v2127 = vsub.f32 %v2125, %v2126
      %v2128 = vmul.f32 %v2127, %v550
      %v2129 = vsub.f32 %v2124, %v2128
      %v2130 = vmul.f32 %v2129, %v557
      %v2131 = vadd.f32 %v2128, %v2130
      %v2133 = vrot.slane %v2131, 4
      %v2135 = vadd.f32 %v2117, %v2133
      %v2136 = vsub.f32 %v2110, %v361
      %v2137 = vmax.f32 %v2136, 0.0
      %v2138 = vsub.f32 %v2113, %v361
      %v2139 = vmax.f32 %v2138, 0.0
      %v2140 = vmul.f32 %v1531, %v2107
      %v2141 = vmul.f32 %v2139, %v2139
      %v2142 = vmul.f32 %v2137, %v2137
      %v2143 = vsub.f32 %v2141, %v2142
      %v2144 = vmul.f32 %v2143, %v550
      %v2145 = vsub.f32 %v2140, %v2144
      %v2146 = vmul.f32 %v2145, %v557
      %v2147 = vadd.f32 %v2144, %v2146
      %v2149 = vrot.slane %v2147, 4
      %v2151 = vsub.f32 %v2135, %v2149
      %v2152 = vsub.f32 0.0, %v2151
      %v2153 = vmax.f32 %v588, %v565
      %v2154 = vmin.f32 %v2153, %v1509
      %v2155 = vsub.f32 %v2154, %v2106
      %v2156 = vsub.f32 %v2106, %v511
      %v2157 = vmul.f32 %v596, %v2156
      %v2158 = vadd.f32 %v601, %v2157
      %v2159 = vsub.f32 %v2154, %v511
      %v2160 = vmul.f32 %v596, %v2159
      %v2161 = vadd.f32 %v601, %v2160
      %v2163 = vrot.slane %v2155, 4
      %v2165 = vmul.f32 %v358, %v2163
      %v2166 = vsub.f32 %v2158, %v1806
      %v2167 = vmax.f32 %v2166, 0.0
      %v2168 = vsub.f32 %v2161, %v1806
      %v2169 = vmax.f32 %v2168, 0.0
      %v2170 = vsub.f32 %v601, %v1806
      %v2171 = vmax.f32 %v2170, 0.0
      %v2172 = vmul.f32 %v2171, %v2155
      %v2173 = vmul.f32 %v2169, %v2169
      %v2174 = vmul.f32 %v2167, %v2167
      %v2175 = vsub.f32 %v2173, %v2174
      %v2176 = vmul.f32 %v2175, %v623
      %v2177 = vsub.f32 %v2172, %v2176
      %v2178 = vmul.f32 %v2177, %v629
      %v2179 = vadd.f32 %v2176, %v2178
      %v2181 = vrot.slane %v2179, 4
      %v2183 = vadd.f32 %v2165, %v2181
      %v2184 = vsub.f32 %v2158, %v361
      %v2185 = vmax.f32 %v2184, 0.0
      %v2186 = vsub.f32 %v2161, %v361
      %v2187 = vmax.f32 %v2186, 0.0
      %v2188 = vmul.f32 %v1579, %v2155
      %v2189 = vmul.f32 %v2187, %v2187
      %v2190 = vmul.f32 %v2185, %v2185
      %v2191 = vsub.f32 %v2189, %v2190
      %v2192 = vmul.f32 %v2191, %v623
      %v2193 = vsub.f32 %v2188, %v2192
      %v2194 = vmul.f32 %v2193, %v629
      %v2195 = vadd.f32 %v2192, %v2194
      %v2197 = vrot.slane %v2195, 4
      %v2199 = vsub.f32 %v2183, %v2197
      %v2200 = vsub.f32 %v2152, %v2199
      %v2201 = vmax.f32 %v658, %v565
      %v2202 = vmin.f32 %v2201, %v1509
      %v2203 = vsub.f32 %v2202, %v2154
      %v2204 = vsub.f32 %v2154, %v588
      %v2205 = vmul.f32 %v666, %v2204
      %v2206 = vadd.f32 %v671, %v2205
      %v2207 = vsub.f32 %v2202, %v588
      %v2208 = vmul.f32 %v666, %v2207
      %v2209 = vadd.f32 %v671, %v2208
      %v2211 = vrot.slane %v2203, 4
      %v2213 = vmul.f32 %v358, %v2211
      %v2214 = vsub.f32 %v2206, %v1806
      %v2215 = vmax.f32 %v2214, 0.0
      %v2216 = vsub.f32 %v2209, %v1806
      %v2217 = vmax.f32 %v2216, 0.0
      %v2218 = vsub.f32 %v671, %v1806
      %v2219 = vmax.f32 %v2218, 0.0
      %v2220 = vmul.f32 %v2219, %v2203
      %v2221 = vmul.f32 %v2217, %v2217
      %v2222 = vmul.f32 %v2215, %v2215
      %v2223 = vsub.f32 %v2221, %v2222
      %v2224 = vmul.f32 %v2223, %v693
      %v2225 = vsub.f32 %v2220, %v2224
      %v2226 = vmul.f32 %v2225, %v699
      %v2227 = vadd.f32 %v2224, %v2226
      %v2229 = vrot.slane %v2227, 4
      %v2231 = vadd.f32 %v2213, %v2229
      %v2232 = vsub.f32 %v2206, %v361
      %v2233 = vmax.f32 %v2232, 0.0
      %v2234 = vsub.f32 %v2209, %v361
      %v2235 = vmax.f32 %v2234, 0.0
      %v2236 = vmul.f32 %v1627, %v2203
      %v2237 = vmul.f32 %v2235, %v2235
      %v2238 = vmul.f32 %v2233, %v2233
      %v2239 = vsub.f32 %v2237, %v2238
      %v2240 = vmul.f32 %v2239, %v693
      %v2241 = vsub.f32 %v2236, %v2240
      %v2242 = vmul.f32 %v2241, %v699
      %v2243 = vadd.f32 %v2240, %v2242
      %v2245 = vrot.slane %v2243, 4
      %v2247 = vsub.f32 %v2231, %v2245
      %v2248 = vsub.f32 %v2200, %v2247
      %v2249 = vsub.f32 %v2104, %v2202
      %v2250 = vsub.f32 %v2202, %v658
      %v2251 = vmul.f32 %v777, %v2250
      %v2252 = vadd.f32 %v782, %v2251
      %v2253 = vsub.f32 %v2104, %v658
      %v2254 = vmul.f32 %v777, %v2253
      %v2255 = vadd.f32 %v782, %v2254
      %v2257 = vrot.slane %v2249, 4
      %v2259 = vmul.f32 %v358, %v2257
      %v2260 = vsub.f32 %v2252, %v1806
      %v2261 = vmax.f32 %v2260, 0.0
      %v2262 = vsub.f32 %v2255, %v1806
      %v2263 = vmax.f32 %v2262, 0.0
      %v2264 = vsub.f32 %v782, %v1806
      %v2265 = vmax.f32 %v2264, 0.0
      %v2266 = vmul.f32 %v2265, %v2249
      %v2267 = vmul.f32 %v2263, %v2263
      %v2268 = vmul.f32 %v2261, %v2261
      %v2269 = vsub.f32 %v2267, %v2268
      %v2270 = vmul.f32 %v2269, %v805
      %v2271 = vsub.f32 %v2266, %v2270
      %v2272 = vmul.f32 %v2271, %v812
      %v2273 = vadd.f32 %v2270, %v2272
      %v2275 = vrot.slane %v2273, 4
      %v2277 = vadd.f32 %v2259, %v2275
      %v2278 = vsub.f32 %v2252, %v361
      %v2279 = vmax.f32 %v2278, 0.0
      %v2280 = vsub.f32 %v2255, %v361
      %v2281 = vmax.f32 %v2280, 0.0
      %v2282 = vmul.f32 %v1673, %v2249
      %v2283 = vmul.f32 %v2281, %v2281
      %v2284 = vmul.f32 %v2279, %v2279
      %v2285 = vsub.f32 %v2283, %v2284
      %v2286 = vmul.f32 %v2285, %v805
      %v2287 = vsub.f32 %v2282, %v2286
      %v2288 = vmul.f32 %v2287, %v812
      %v2289 = vadd.f32 %v2286, %v2288
      %v2291 = vrot.slane %v2289, 4
      %v2293 = vsub.f32 %v2277, %v2291
      %v2294 = vsub.f32 %v2248, %v2293
      %v2295 = vand.u32 2147483647, %v2294
      %v2296 = vrot.slane %v372, 5
      %v2298 = vadd.f32 %v842, %v2296
      %v2300 = vrot.slane %v2295, 4
      %v2302 = vsub.f32 %v2298, %v2300
      %v2303 = vmax.f32 %v2302, 1e-08
      %v2305 = vrot.slane %v2303, 4
      %v2307 = vrcp.pop %v2305
      %v2308 = vmul.f32 %v2305, %v2307
      %v2309 = vsub.f32 1.0, %v2308
      %v2310 = vmul.f32 %v2307, %v2309
      %v2311 = vadd.f32 %v2307, %v2310
      %vm2312 = vweird.f32 %v2305
      %vm2313 = vweird.f32 %v2307
      %vm2314 = vmor %vm2312, %vm2313
      %v2315 = vsel %vm2314, %v2307, %v2311
      %v2316 = vand.u32 2147483647, %v2305
      %vm2317 = vcmp.eq.f32.partialorder %v2316, 8.507059e+37
      %v2318 = vand.u32 %v2305, 2147483648
      %v2319 = vor.u32 1.1754944e-38, %v2318
      %v2320 = vsel %vm2317, %v2319, %v2315
      %v2321 = vmul.f32 %v2295, %v2320
      %vm2322 = vcmp.gt.f32.partialorder %v2102, %v2028
      %v2323 = vsel %vm2322, %v2102, %v2028
      %v2325 = vrot.slane %v2321, 7
      %v2327 = vsel %vm2322, %v2325, %v2032
      %v2328 = vrot.slane %v879, 3
      %v2330 = vsel %vm2322, %v2328, %v2035
      %v2331 = vrot.slane %v885, 3
      %v2333 = vsel %vm2322, %v2331, %v2038
      %v2334 = vrot.slane %v891, 3
      %v2336 = vsel %vm2322, %v2334, %v2041
      %v2337 = vrot.slane %v897, 3
      %v2339 = vsel %vm2322, %v2337, %v2044
      %v2340 = vrot.slane %v903, 3
      %v2342 = vsel %vm2322, %v2340, %v2047
      %v2343 = vrot.slane %v909, 3
      %v2345 = vsel %vm2322, %v2343, %v2050
      %v2346 = vrot.slane %v377, 4
      %v2348 = vmin.f32 %v358, %v2346
      %v2349 = vrot.slane %v383, 6
      %v2351 = vmax.f32 %v358, %v2349
      %v2353 = vrot.slane %v2351, 6
      %v2355 = vsub.f32 %v2348, %v2353
      %v2356 = vmax.f32 %v2355, 0.0
      %v2357 = vrot.slane %v393, 3
      %v2359 = vmin.f32 %v358, %v2357
      %v2360 = vrot.slane %v399, 5
      %v2362 = vmax.f32 %v358, %v2360
      %v2364 = vrot.slane %v2362, 6
      %v2366 = vsub.f32 %v2359, %v2364
      %v2367 = vmax.f32 %v2366, 0.0
      %v2369 = vrot.slane %v2367, 1
      %v2371 = vmul.f32 %v2356, %v2369
      %v2372 = vrot.slane %v424, 4
      %v2374 = vadd.f32 %v372, %v2372
      %v2375 = vsub.f32 %v2374, %v2371
      %v2376 = vmax.f32 %v2375, 1e-08
      %v2377 = vrcp.pop %v2376
      %v2378 = vmul.f32 %v2376, %v2377
      %v2379 = vsub.f32 1.0, %v2378
      %v2380 = vmul.f32 %v2377, %v2379
      %v2381 = vadd.f32 %v2377, %v2380
      %vm2382 = vweird.f32 %v2376
      %vm2383 = vweird.f32 %v2377
      %vm2384 = vmor %vm2382, %vm2383
      %v2385 = vsel %vm2384, %v2377, %v2381
      %v2386 = vand.u32 2147483647, %v2376
      %vm2387 = vcmp.eq.f32.partialorder %v2386, 8.507059e+37
      %v2388 = vand.u32 %v2376, 2147483648
      %v2389 = vor.u32 1.1754944e-38, %v2388
      %v2390 = vsel %vm2387, %v2389, %v2385
      %v2391 = vmul.f32 %v2371, %v2390
      %v2392 = vrot.slane %v447, 4
      %v2394 = vmul.f32 %v2391, %v2392
      %v2395 = vrot.slane %v455, 4
      %v2397 = vsub.f32 %v2394, %v2395
      %v2398 = vmax.f32 %v503, %v506
      %v2399 = vmin.f32 %v2398, %v1806
      %v2400 = vmax.f32 %v511, %v506
      %v2401 = vmin.f32 %v2400, %v1806
      %v2402 = vsub.f32 %v2401, %v2399
      %v2403 = vsub.f32 %v2399, %v503
      %v2404 = vmul.f32 %v520, %v2403
      %v2405 = vadd.f32 %v525, %v2404
      %v2406 = vsub.f32 %v2401, %v503
      %v2407 = vmul.f32 %v520, %v2406
      %v2408 = vadd.f32 %v525, %v2407
      %v2410 = vrot.slane %v2402, 5
      %v2412 = vmul.f32 %v358, %v2410
      %v2413 = vsub.f32 %v2405, %v565
      %v2414 = vmax.f32 %v2413, 0.0
      %v2415 = vsub.f32 %v2408, %v565
      %v2416 = vmax.f32 %v2415, 0.0
      %v2417 = vmul.f32 %v572, %v2402
      %v2418 = vmul.f32 %v2416, %v2416
      %v2419 = vmul.f32 %v2414, %v2414
      %v2420 = vsub.f32 %v2418, %v2419
      %v2421 = vmul.f32 %v2420, %v550
      %v2422 = vsub.f32 %v2417, %v2421
      %v2423 = vmul.f32 %v2422, %v557
      %v2424 = vadd.f32 %v2421, %v2423
      %v2426 = vrot.slane %v2424, 5
      %v2428 = vadd.f32 %v2412, %v2426
      %v2429 = vsub.f32 %v2405, %v1509
      %v2430 = vmax.f32 %v2429, 0.0
      %v2431 = vsub.f32 %v2408, %v1509
      %v2432 = vmax.f32 %v2431, 0.0
      %v2433 = vmul.f32 %v1828, %v2402
      %v2434 = vmul.f32 %v2432, %v2432
      %v2435 = vmul.f32 %v2430, %v2430
      %v2436 = vsub.f32 %v2434, %v2435
      %v2437 = vmul.f32 %v2436, %v550
      %v2438 = vsub.f32 %v2433, %v2437
      %v2439 = vmul.f32 %v2438, %v557
      %v2440 = vadd.f32 %v2437, %v2439
      %v2442 = vrot.slane %v2440, 5
      %v2444 = vsub.f32 %v2428, %v2442
      %v2445 = vsub.f32 0.0, %v2444
      %v2446 = vmax.f32 %v588, %v506
      %v2447 = vmin.f32 %v2446, %v1806
      %v2448 = vsub.f32 %v2447, %v2401
      %v2449 = vsub.f32 %v2401, %v511
      %v2450 = vmul.f32 %v596, %v2449
      %v2451 = vadd.f32 %v601, %v2450
      %v2452 = vsub.f32 %v2447, %v511
      %v2453 = vmul.f32 %v596, %v2452
      %v2454 = vadd.f32 %v601, %v2453
      %v2456 = vrot.slane %v2448, 5
      %v2458 = vmul.f32 %v358, %v2456
      %v2459 = vsub.f32 %v2451, %v565
      %v2460 = vmax.f32 %v2459, 0.0
      %v2461 = vsub.f32 %v2454, %v565
      %v2462 = vmax.f32 %v2461, 0.0
      %v2463 = vmul.f32 %v642, %v2448
      %v2464 = vmul.f32 %v2462, %v2462
      %v2465 = vmul.f32 %v2460, %v2460
      %v2466 = vsub.f32 %v2464, %v2465
      %v2467 = vmul.f32 %v2466, %v623
      %v2468 = vsub.f32 %v2463, %v2467
      %v2469 = vmul.f32 %v2468, %v629
      %v2470 = vadd.f32 %v2467, %v2469
      %v2472 = vrot.slane %v2470, 5
      %v2474 = vadd.f32 %v2458, %v2472
      %v2475 = vsub.f32 %v2451, %v1509
      %v2476 = vmax.f32 %v2475, 0.0
      %v2477 = vsub.f32 %v2454, %v1509
      %v2478 = vmax.f32 %v2477, 0.0
      %v2479 = vmul.f32 %v1876, %v2448
      %v2480 = vmul.f32 %v2478, %v2478
      %v2481 = vmul.f32 %v2476, %v2476
      %v2482 = vsub.f32 %v2480, %v2481
      %v2483 = vmul.f32 %v2482, %v623
      %v2484 = vsub.f32 %v2479, %v2483
      %v2485 = vmul.f32 %v2484, %v629
      %v2486 = vadd.f32 %v2483, %v2485
      %v2488 = vrot.slane %v2486, 5
      %v2490 = vsub.f32 %v2474, %v2488
      %v2491 = vsub.f32 %v2445, %v2490
      %v2492 = vmax.f32 %v658, %v506
      %v2493 = vmin.f32 %v2492, %v1806
      %v2494 = vsub.f32 %v2493, %v2447
      %v2495 = vsub.f32 %v2447, %v588
      %v2496 = vmul.f32 %v666, %v2495
      %v2497 = vadd.f32 %v671, %v2496
      %v2498 = vsub.f32 %v2493, %v588
      %v2499 = vmul.f32 %v666, %v2498
      %v2500 = vadd.f32 %v671, %v2499
      %v2502 = vrot.slane %v2494, 5
      %v2504 = vmul.f32 %v358, %v2502
      %v2505 = vsub.f32 %v2497, %v565
      %v2506 = vmax.f32 %v2505, 0.0
      %v2507 = vsub.f32 %v2500, %v565
      %v2508 = vmax.f32 %v2507, 0.0
      %v2509 = vmul.f32 %v712, %v2494
      %v2510 = vmul.f32 %v2508, %v2508
      %v2511 = vmul.f32 %v2506, %v2506
      %v2512 = vsub.f32 %v2510, %v2511
      %v2513 = vmul.f32 %v2512, %v693
      %v2514 = vsub.f32 %v2509, %v2513
      %v2515 = vmul.f32 %v2514, %v699
      %v2516 = vadd.f32 %v2513, %v2515
      %v2518 = vrot.slane %v2516, 5
      %v2520 = vadd.f32 %v2504, %v2518
      %v2521 = vsub.f32 %v2497, %v1509
      %v2522 = vmax.f32 %v2521, 0.0
      %v2523 = vsub.f32 %v2500, %v1509
      %v2524 = vmax.f32 %v2523, 0.0
      %v2525 = vmul.f32 %v1924, %v2494
      %v2526 = vmul.f32 %v2524, %v2524
      %v2527 = vmul.f32 %v2522, %v2522
      %v2528 = vsub.f32 %v2526, %v2527
      %v2529 = vmul.f32 %v2528, %v693
      %v2530 = vsub.f32 %v2525, %v2529
      %v2531 = vmul.f32 %v2530, %v699
      %v2532 = vadd.f32 %v2529, %v2531
      %v2534 = vrot.slane %v2532, 5
      %v2536 = vsub.f32 %v2520, %v2534
      %v2537 = vsub.f32 %v2491, %v2536
      %v2538 = vsub.f32 %v2399, %v2493
      %v2539 = vsub.f32 %v2493, %v658
      %v2540 = vmul.f32 %v777, %v2539
      %v2541 = vadd.f32 %v782, %v2540
      %v2542 = vsub.f32 %v2399, %v658
      %v2543 = vmul.f32 %v777, %v2542
      %v2544 = vadd.f32 %v782, %v2543
      %v2546 = vrot.slane %v2538, 5
      %v2548 = vmul.f32 %v358, %v2546
      %v2549 = vsub.f32 %v2541, %v565
      %v2550 = vmax.f32 %v2549, 0.0
      %v2551 = vsub.f32 %v2544, %v565
      %v2552 = vmax.f32 %v2551, 0.0
      %v2553 = vmul.f32 %v825, %v2538
      %v2554 = vmul.f32 %v2552, %v2552
      %v2555 = vmul.f32 %v2550, %v2550
      %v2556 = vsub.f32 %v2554, %v2555
      %v2557 = vmul.f32 %v2556, %v805
      %v2558 = vsub.f32 %v2553, %v2557
      %v2559 = vmul.f32 %v2558, %v812
      %v2560 = vadd.f32 %v2557, %v2559
      %v2562 = vrot.slane %v2560, 5
      %v2564 = vadd.f32 %v2548, %v2562
      %v2565 = vsub.f32 %v2541, %v1509
      %v2566 = vmax.f32 %v2565, 0.0
      %v2567 = vsub.f32 %v2544, %v1509
      %v2568 = vmax.f32 %v2567, 0.0
      %v2569 = vmul.f32 %v1970, %v2538
      %v2570 = vmul.f32 %v2568, %v2568
      %v2571 = vmul.f32 %v2566, %v2566
      %v2572 = vsub.f32 %v2570, %v2571
      %v2573 = vmul.f32 %v2572, %v805
      %v2574 = vsub.f32 %v2569, %v2573
      %v2575 = vmul.f32 %v2574, %v812
      %v2576 = vadd.f32 %v2573, %v2575
      %v2578 = vrot.slane %v2576, 5
      %v2580 = vsub.f32 %v2564, %v2578
      %v2581 = vsub.f32 %v2537, %v2580
      %v2582 = vand.u32 2147483647, %v2581
      %v2583 = vrot.slane %v372, 4
      %v2585 = vadd.f32 %v842, %v2583
      %v2587 = vrot.slane %v2582, 3
      %v2589 = vsub.f32 %v2585, %v2587
      %v2590 = vmax.f32 %v2589, 1e-08
      %v2592 = vrot.slane %v2590, 5
      %v2594 = vrcp.pop %v2592
      %v2595 = vmul.f32 %v2592, %v2594
      %v2596 = vsub.f32 1.0, %v2595
      %v2597 = vmul.f32 %v2594, %v2596
      %v2598 = vadd.f32 %v2594, %v2597
      %vm2599 = vweird.f32 %v2592
      %vm2600 = vweird.f32 %v2594
      %vm2601 = vmor %vm2599, %vm2600
      %v2602 = vsel %vm2601, %v2594, %v2598
      %v2603 = vand.u32 2147483647, %v2592
      %vm2604 = vcmp.eq.f32.partialorder %v2603, 8.507059e+37
      %v2605 = vand.u32 %v2592, 2147483648
      %v2606 = vor.u32 1.1754944e-38, %v2605
      %v2607 = vsel %vm2604, %v2606, %v2602
      %v2608 = vmul.f32 %v2582, %v2607
      %vm2609 = vcmp.gt.f32.partialorder %v2397, %v2323
      %v2610 = vsel %vm2609, %v2397, %v2323
      %v2612 = vrot.slane %v2608, 7
      %v2614 = vsel %vm2609, %v2612, %v2327
      %v2615 = vrot.slane %v879, 4
      %v2617 = vsel %vm2609, %v2615, %v2330
      %v2618 = vrot.slane %v885, 4
      %v2620 = vsel %vm2609, %v2618, %v2333
      %v2621 = vrot.slane %v891, 4
      %v2623 = vsel %vm2609, %v2621, %v2336
      %v2624 = vrot.slane %v897, 4
      %v2626 = vsel %vm2609, %v2624, %v2339
      %v2627 = vrot.slane %v903, 4
      %v2629 = vsel %vm2609, %v2627, %v2342
      %v2630 = vrot.slane %v909, 4
      %v2632 = vsel %vm2609, %v2630, %v2345
      %v2633 = vrot.slane %v377, 5
      %v2635 = vmin.f32 %v358, %v2633
      %v2636 = vrot.slane %v383, 7
      %v2638 = vmax.f32 %v358, %v2636
      %v2640 = vrot.slane %v2638, 6
      %v2642 = vsub.f32 %v2635, %v2640
      %v2643 = vmax.f32 %v2642, 0.0
      %v2644 = vrot.slane %v393, 4
      %v2646 = vmin.f32 %v358, %v2644
      %v2647 = vrot.slane %v399, 6
      %v2649 = vmax.f32 %v358, %v2647
      %v2651 = vrot.slane %v2649, 6
      %v2653 = vsub.f32 %v2646, %v2651
      %v2654 = vmax.f32 %v2653, 0.0
      %v2656 = vrot.slane %v2654, 1
      %v2658 = vmul.f32 %v2643, %v2656
      %v2659 = vrot.slane %v424, 5
      %v2661 = vadd.f32 %v372, %v2659
      %v2662 = vsub.f32 %v2661, %v2658
      %v2663 = vmax.f32 %v2662, 1e-08
      %v2664 = vrcp.pop %v2663
      %v2665 = vmul.f32 %v2663, %v2664
      %v2666 = vsub.f32 1.0, %v2665
      %v2667 = vmul.f32 %v2664, %v2666
      %v2668 = vadd.f32 %v2664, %v2667
      %vm2669 = vweird.f32 %v2663
      %vm2670 = vweird.f32 %v2664
      %vm2671 = vmor %vm2669, %vm2670
      %v2672 = vsel %vm2671, %v2664, %v2668
      %v2673 = vand.u32 2147483647, %v2663
      %vm2674 = vcmp.eq.f32.partialorder %v2673, 8.507059e+37
      %v2675 = vand.u32 %v2663, 2147483648
      %v2676 = vor.u32 1.1754944e-38, %v2675
      %v2677 = vsel %vm2674, %v2676, %v2672
      %v2678 = vmul.f32 %v2658, %v2677
      %v2679 = vrot.slane %v447, 5
      %v2681 = vmul.f32 %v2678, %v2679
      %v2682 = vrot.slane %v455, 5
      %v2684 = vsub.f32 %v2681, %v2682
      %v2685 = vmax.f32 %v503, %v535
      %v2686 = vmin.f32 %v2685, %v565
      %v2687 = vmax.f32 %v511, %v535
      %v2688 = vmin.f32 %v2687, %v565
      %v2689 = vsub.f32 %v2688, %v2686
      %v2690 = vsub.f32 %v2686, %v503
      %v2691 = vmul.f32 %v520, %v2690
      %v2692 = vadd.f32 %v525, %v2691
      %v2693 = vsub.f32 %v2688, %v503
      %v2694 = vmul.f32 %v520, %v2693
      %v2695 = vadd.f32 %v525, %v2694
      %v2697 = vrot.slane %v2689, 6
      %v2699 = vmul.f32 %v358, %v2697
      %v2700 = vsub.f32 %v2692, %v506
      %v2701 = vmax.f32 %v2700, 0.0
      %v2702 = vsub.f32 %v2695, %v506
      %v2703 = vmax.f32 %v2702, 0.0
      %v2704 = vmul.f32 %v998, %v2689
      %v2705 = vmul.f32 %v2703, %v2703
      %v2706 = vmul.f32 %v2701, %v2701
      %v2707 = vsub.f32 %v2705, %v2706
      %v2708 = vmul.f32 %v2707, %v550
      %v2709 = vsub.f32 %v2704, %v2708
      %v2710 = vmul.f32 %v2709, %v557
      %v2711 = vadd.f32 %v2708, %v2710
      %v2713 = vrot.slane %v2711, 6
      %v2715 = vadd.f32 %v2699, %v2713
      %v2716 = vsub.f32 %v2692, %v1806
      %v2717 = vmax.f32 %v2716, 0.0
      %v2718 = vsub.f32 %v2695, %v1806
      %v2719 = vmax.f32 %v2718, 0.0
      %v2720 = vmul.f32 %v2123, %v2689
      %v2721 = vmul.f32 %v2719, %v2719
      %v2722 = vmul.f32 %v2717, %v2717
      %v2723 = vsub.f32 %v2721, %v2722
      %v2724 = vmul.f32 %v2723, %v550
      %v2725 = vsub.f32 %v2720, %v2724
      %v2726 = vmul.f32 %v2725, %v557
      %v2727 = vadd.f32 %v2724, %v2726
      %v2729 = vrot.slane %v2727, 6
      %v2731 = vsub.f32 %v2715, %v2729
      %v2732 = vsub.f32 0.0, %v2731
      %v2733 = vmax.f32 %v588, %v535
      %v2734 = vmin.f32 %v2733, %v565
      %v2735 = vsub.f32 %v2734, %v2688
      %v2736 = vsub.f32 %v2688, %v511
      %v2737 = vmul.f32 %v596, %v2736
      %v2738 = vadd.f32 %v601, %v2737
      %v2739 = vsub.f32 %v2734, %v511
      %v2740 = vmul.f32 %v596, %v2739
      %v2741 = vadd.f32 %v601, %v2740
      %v2743 = vrot.slane %v2735, 6
      %v2745 = vmul.f32 %v358, %v2743
      %v2746 = vsub.f32 %v2738, %v506
      %v2747 = vmax.f32 %v2746, 0.0
      %v2748 = vsub.f32 %v2741, %v506
      %v2749 = vmax.f32 %v2748, 0.0
      %v2750 = vmul.f32 %v1039, %v2735
      %v2751 = vmul.f32 %v2749, %v2749
      %v2752 = vmul.f32 %v2747, %v2747
      %v2753 = vsub.f32 %v2751, %v2752
      %v2754 = vmul.f32 %v2753, %v623
      %v2755 = vsub.f32 %v2750, %v2754
      %v2756 = vmul.f32 %v2755, %v629
      %v2757 = vadd.f32 %v2754, %v2756
      %v2759 = vrot.slane %v2757, 6
      %v2761 = vadd.f32 %v2745, %v2759
      %v2762 = vsub.f32 %v2738, %v1806
      %v2763 = vmax.f32 %v2762, 0.0
      %v2764 = vsub.f32 %v2741, %v1806
      %v2765 = vmax.f32 %v2764, 0.0
      %v2766 = vmul.f32 %v2171, %v2735
      %v2767 = vmul.f32 %v2765, %v2765
      %v2768 = vmul.f32 %v2763, %v2763
      %v2769 = vsub.f32 %v2767, %v2768
      %v2770 = vmul.f32 %v2769, %v623
      %v2771 = vsub.f32 %v2766, %v2770
      %v2772 = vmul.f32 %v2771, %v629
      %v2773 = vadd.f32 %v2770, %v2772
      %v2775 = vrot.slane %v2773, 6
      %v2777 = vsub.f32 %v2761, %v2775
      %v2778 = vsub.f32 %v2732, %v2777
      %v2779 = vmax.f32 %v658, %v535
      %v2780 = vmin.f32 %v2779, %v565
      %v2781 = vsub.f32 %v2780, %v2734
      %v2782 = vsub.f32 %v2734, %v588
      %v2783 = vmul.f32 %v666, %v2782
      %v2784 = vadd.f32 %v671, %v2783
      %v2785 = vsub.f32 %v2780, %v588
      %v2786 = vmul.f32 %v666, %v2785
      %v2787 = vadd.f32 %v671, %v2786
      %v2789 = vrot.slane %v2781, 6
      %v2791 = vmul.f32 %v358, %v2789
      %v2792 = vsub.f32 %v2784, %v506
      %v2793 = vmax.f32 %v2792, 0.0
      %v2794 = vsub.f32 %v2787, %v506
      %v2795 = vmax.f32 %v2794, 0.0
      %v2796 = vmul.f32 %v1080, %v2781
      %v2797 = vmul.f32 %v2795, %v2795
      %v2798 = vmul.f32 %v2793, %v2793
      %v2799 = vsub.f32 %v2797, %v2798
      %v2800 = vmul.f32 %v2799, %v693
      %v2801 = vsub.f32 %v2796, %v2800
      %v2802 = vmul.f32 %v2801, %v699
      %v2803 = vadd.f32 %v2800, %v2802
      %v2805 = vrot.slane %v2803, 6
      %v2807 = vadd.f32 %v2791, %v2805
      %v2808 = vsub.f32 %v2784, %v1806
      %v2809 = vmax.f32 %v2808, 0.0
      %v2810 = vsub.f32 %v2787, %v1806
      %v2811 = vmax.f32 %v2810, 0.0
      %v2812 = vmul.f32 %v2219, %v2781
      %v2813 = vmul.f32 %v2811, %v2811
      %v2814 = vmul.f32 %v2809, %v2809
      %v2815 = vsub.f32 %v2813, %v2814
      %v2816 = vmul.f32 %v2815, %v693
      %v2817 = vsub.f32 %v2812, %v2816
      %v2818 = vmul.f32 %v2817, %v699
      %v2819 = vadd.f32 %v2816, %v2818
      %v2821 = vrot.slane %v2819, 6
      %v2823 = vsub.f32 %v2807, %v2821
      %v2824 = vsub.f32 %v2778, %v2823
      %v2825 = vsub.f32 %v2686, %v2780
      %v2826 = vsub.f32 %v2780, %v658
      %v2827 = vmul.f32 %v777, %v2826
      %v2828 = vadd.f32 %v782, %v2827
      %v2829 = vsub.f32 %v2686, %v658
      %v2830 = vmul.f32 %v777, %v2829
      %v2831 = vadd.f32 %v782, %v2830
      %v2833 = vrot.slane %v2825, 6
      %v2835 = vmul.f32 %v358, %v2833
      %v2836 = vsub.f32 %v2828, %v506
      %v2837 = vmax.f32 %v2836, 0.0
      %v2838 = vsub.f32 %v2831, %v506
      %v2839 = vmax.f32 %v2838, 0.0
      %v2840 = vmul.f32 %v1119, %v2825
      %v2841 = vmul.f32 %v2839, %v2839
      %v2842 = vmul.f32 %v2837, %v2837
      %v2843 = vsub.f32 %v2841, %v2842
      %v2844 = vmul.f32 %v2843, %v805
      %v2845 = vsub.f32 %v2840, %v2844
      %v2846 = vmul.f32 %v2845, %v812
      %v2847 = vadd.f32 %v2844, %v2846
      %v2849 = vrot.slane %v2847, 6
      %v2851 = vadd.f32 %v2835, %v2849
      %v2852 = vsub.f32 %v2828, %v1806
      %v2853 = vmax.f32 %v2852, 0.0
      %v2854 = vsub.f32 %v2831, %v1806
      %v2855 = vmax.f32 %v2854, 0.0
      %v2856 = vmul.f32 %v2265, %v2825
      %v2857 = vmul.f32 %v2855, %v2855
      %v2858 = vmul.f32 %v2853, %v2853
      %v2859 = vsub.f32 %v2857, %v2858
      %v2860 = vmul.f32 %v2859, %v805
      %v2861 = vsub.f32 %v2856, %v2860
      %v2862 = vmul.f32 %v2861, %v812
      %v2863 = vadd.f32 %v2860, %v2862
      %v2865 = vrot.slane %v2863, 6
      %v2867 = vsub.f32 %v2851, %v2865
      %v2868 = vsub.f32 %v2824, %v2867
      %v2869 = vand.u32 2147483647, %v2868
      %v2870 = vrot.slane %v372, 3
      %v2872 = vadd.f32 %v842, %v2870
      %v2874 = vrot.slane %v2869, 2
      %v2876 = vsub.f32 %v2872, %v2874
      %v2877 = vmax.f32 %v2876, 1e-08
      %v2879 = vrot.slane %v2877, 6
      %v2881 = vrcp.pop %v2879
      %v2882 = vmul.f32 %v2879, %v2881
      %v2883 = vsub.f32 1.0, %v2882
      %v2884 = vmul.f32 %v2881, %v2883
      %v2885 = vadd.f32 %v2881, %v2884
      %vm2886 = vweird.f32 %v2879
      %vm2887 = vweird.f32 %v2881
      %vm2888 = vmor %vm2886, %vm2887
      %v2889 = vsel %vm2888, %v2881, %v2885
      %v2890 = vand.u32 2147483647, %v2879
      %vm2891 = vcmp.eq.f32.partialorder %v2890, 8.507059e+37
      %v2892 = vand.u32 %v2879, 2147483648
      %v2893 = vor.u32 1.1754944e-38, %v2892
      %v2894 = vsel %vm2891, %v2893, %v2889
      %v2895 = vmul.f32 %v2869, %v2894
      %vm2896 = vcmp.gt.f32.partialorder %v2684, %v2610
      %v2897 = vsel %vm2896, %v2684, %v2610
      %v2899 = vrot.slane %v2895, 7
      %v2901 = vsel %vm2896, %v2899, %v2614
      %v2902 = vrot.slane %v879, 5
      %v2904 = vsel %vm2896, %v2902, %v2617
      %v2905 = vrot.slane %v885, 5
      %v2907 = vsel %vm2896, %v2905, %v2620
      %v2908 = vrot.slane %v891, 5
      %v2910 = vsel %vm2896, %v2908, %v2623
      %v2911 = vrot.slane %v897, 5
      %v2913 = vsel %vm2896, %v2911, %v2626
      %v2914 = vrot.slane %v903, 5
      %v2916 = vsel %vm2896, %v2914, %v2629
      %v2917 = vrot.slane %v909, 5
      %v2919 = vsel %vm2896, %v2917, %v2632
      %vm2920 = vcmp.ge.f32.partialorder %v2897, 0.6
      %vm2921 = vcmp.ge.f32.partialorder %v2901, 0.3
      %vm2922 = vmand %vm2920, %vm2921
      %vm2923 = vcmp.lt.f32.partialorder %v2897, 0.4
      %v2924 = vsel %vm359, 1, 0
      %v2925 = vrot.slane %v2924, 3
      %vm2926 = vcmp.ne.s32.totalorder %v2925, 0
      %vm2927 = vmand %vm2923, %vm2926
      %v2928 = vsel %vm2922, 1, 0
      %v2929 = vcvt.s32.f32 %v2928
      %v2930 = vld [vmem:[#allocation4] sm:$0x1]
      %2932 = vst [vmem:[#allocation1] sm:$0xff] %v2929
      %s2933 = scalar_lea.vmem [#allocation1], 2
      %v2934 = vld [vmem:[%s2933] ss:$9 sm:$0xff]
      %v2936 = vadd.f32 %v2930, %v2934
      %2937 = vst [vmem:[#allocation4] sm:$0x1] %v2936
      %v2938 = vmax.f32 %v363, 1e-06
      %v2940 = vrot.slane %v368, 6
      %v2942 = vsub.f32 %v2904, %v2940
      %v2943 = vrcp.pop %v2938
      %v2944 = vmul.f32 %v2938, %v2943
      %v2945 = vsub.f32 1.0, %v2944
      %v2946 = vmul.f32 %v2943, %v2945
      %v2947 = vadd.f32 %v2943, %v2946
      %vm2948 = vweird.f32 %v2938
      %vm2949 = vweird.f32 %v2943
      %vm2950 = vmor %vm2948, %vm2949
      %v2951 = vsel %vm2950, %v2943, %v2947
      %v2952 = vand.u32 2147483647, %v2938
      %vm2953 = vcmp.eq.f32.partialorder %v2952, 8.507059e+37
      %v2954 = vand.u32 %v2938, 2147483648
      %v2955 = vor.u32 1.1754944e-38, %v2954
      %v2956 = vsel %vm2953, %v2955, %v2951
      %v2957 = vmul.f32 %v2942, %v2956
      %v2958 = vsel %vm2922, %v2957, 0.0
      %v2959 = vrot.slane %v368, 7
      %v2961 = vsub.f32 %v2907, %v2959
      %v2963 = vrot.slane %v2938, 1
      %v2965 = vrcp.pop %v2963
      %v2966 = vmul.f32 %v2963, %v2965
      %v2967 = vsub.f32 1.0, %v2966
      %v2968 = vmul.f32 %v2965, %v2967
      %v2969 = vadd.f32 %v2965, %v2968
      %vm2970 = vweird.f32 %v2963
      %vm2971 = vweird.f32 %v2965
      %vm2972 = vmor %vm2970, %vm2971
      %v2973 = vsel %vm2972, %v2965, %v2969
      %v2974 = vand.u32 2147483647, %v2963
      %vm2975 = vcmp.eq.f32.partialorder %v2974, 8.507059e+37
      %v2976 = vand.u32 %v2963, 2147483648
      %v2977 = vor.u32 1.1754944e-38, %v2976
      %v2978 = vsel %vm2975, %v2977, %v2973
      %v2979 = vmul.f32 %v2961, %v2978
      %v2980 = vsel %vm2922, %v2979, 0.0
      %v2981 = vmul.f32 %v2910, %v2956
      %v2982 = vlog2.pop %v2981
      %v2983 = vmul.f32 %v2982, 0.6931472
      %v2984 = vsel %vm2922, %v2983, 0.0
      %v2985 = vmul.f32 %v2913, %v2978
      %v2986 = vlog2.pop %v2985
      %v2987 = vmul.f32 %v2986, 0.6931472
      %v2988 = vsel %vm2922, %v2987, 0.0
      %v2989 = vsub.f32 %v2916, %v506
      %v2990 = vmul.f32 %v2989, 0.017453292
      %v2991 = vsel %vm2922, %v2990, 0.0
      %v2992 = vld [vmem:[%s337] sm:$0x1f]
      %v2994 = vrot.slane %v2992, 6
      %v2996 = vsub.f32 %v2958, %v2994
      %v2997 = vand.u32 2147483647, %v2996
      %vm2998 = vcmp.le.f32.partialorder %v2997, 1.0
      %v2999 = vmul.f32 %v2997, 0.5
      %v3000 = vmul.f32 %v2999, %v2997
      %v3001 = vsub.f32 %v2997, 0.5
      %v3002 = vsel %vm2998, %v3000, %v3001
      %v3003 = vrot.slane %v2992, 7
      %v3005 = vsub.f32 %v2980, %v3003
      %v3006 = vand.u32 2147483647, %v3005
      %vm3007 = vcmp.le.f32.partialorder %v3006, 1.0
      %v3008 = vmul.f32 %v3006, 0.5
      %v3009 = vmul.f32 %v3008, %v3006
      %v3010 = vsub.f32 %v3006, 0.5
      %v3011 = vsel %vm3007, %v3009, %v3010
      %v3012 = vadd.f32 %v3002, %v3011
      %v3013 = vsub.f32 %v2984, %v2992
      %v3014 = vand.u32 2147483647, %v3013
      %vm3015 = vcmp.le.f32.partialorder %v3014, 1.0
      %v3016 = vmul.f32 %v3014, 0.5
      %v3017 = vmul.f32 %v3016, %v3014
      %v3018 = vsub.f32 %v3014, 0.5
      %v3019 = vsel %vm3015, %v3017, %v3018
      %v3020 = vadd.f32 %v3012, %v3019
      %v3021 = vrot.slane %v2992, 1
      %v3023 = vsub.f32 %v2988, %v3021
      %v3024 = vand.u32 2147483647, %v3023
      %vm3025 = vcmp.le.f32.partialorder %v3024, 1.0
      %v3026 = vmul.f32 %v3024, 0.5
      %v3027 = vmul.f32 %v3026, %v3024
      %v3028 = vsub.f32 %v3024, 0.5
      %v3029 = vsel %vm3025, %v3027, %v3028
      %v3030 = vadd.f32 %v3020, %v3029
      %v3031 = vrot.slane %v2992, 2
      %v3033 = vsub.f32 %v2991, %v3031
      %v3034 = vand.u32 2147483647, %v3033
      %vm3035 = vcmp.le.f32.partialorder %v3034, 1.0
      %v3036 = vmul.f32 %v3034, 0.5
      %v3037 = vmul.f32 %v3036, %v3034
      %v3038 = vsub.f32 %v3034, 0.5
      %v3039 = vsel %vm3035, %v3037, %v3038
      %v3040 = vadd.f32 %v3030, %v3039
      %v3041 = vld [vmem:[#allocation3] sm:$0x1]
      %v3042 = vmul.f32 %v3040, %v2929
      %3044 = vst [vmem:[#allocation1] sm:$0xff] %v3042
      %s3045 = scalar_lea.vmem [#allocation1], 2
      %v3046 = vld [vmem:[%s3045] ss:$9 sm:$0xff]
      %v3048 = vadd.f32 %v3041, %v3046
      %3049 = vst [vmem:[#allocation3] sm:$0x1] %v3048
      %v3050 = vld [vmem:[%s330] sm:$0xff]
      %v3051 = vmax.f32 %v3050, 0.0001
      %v3052 = vmin.f32 %v3051, 0.9999
      %v3053 = vsel %vm2922, %v2919, -1.0
      %v3054 = vcvt.f32.s32.to.zero.pseudo %v3053
      %v3055 = vlaneseq
      %v3056 = vshrl.u32 %v3055, 7
      %v3057 = vperm.slane %v3054, 2
      %vm3058 = vcmp.eq.s32.totalorder %v3056, %v3057
      %vm3059 = vmor %vm2922, %vm2927
      %v3060 = vsel %vm3059, 0.75, 0.0
      %v3061 = vperm.slane %v3060, 2
      %v3062 = vsel %vm3058, 0.25, %v3061
      %v3063 = vsub.f32 1.0, %v3052
      %v3064 = vsel %vm3058, %v3063, %v3052
      %v3065 = vsel %vm3058, %v3052, %v3063
      %v3066 = vlog2.pop %v3065
      %v3067 = vmul.f32 %v3066, 0.6931472
      %v3068 = vsub.f32 0.0, %v3067
      %v3069 = vld [vmem:[#allocation2] sm:$0x1]
      %v3070 = vmul.f32 %v3064, %v3064
      %v3071 = vmul.f32 %v3062, %v3070
      %v3072 = vmul.f32 %v3071, %v3068
      %v3073 = vrot.slane %v3072, 4
      %v3074 = vadd.f32 %v3072, %v3073
      %v3075 = vrot.slane %v3074, 2
      %v3076 = vadd.f32 %v3074, %v3075
      %v3077 = vrot.slane %v3076, 1
      %v3078 = vadd.f32 %v3076, %v3077
      %v3079 = vadd.f32 %v3069, %v3078
      %3080 = vst [vmem:[#allocation2] sm:$0x1] %v3079
      // Predicated region
      $region41: #{focal_loss_forward.1} parent=35 // pred_check
        %p3081 = pneg %p347
      $region42: #{focal_loss_forward.1} parent=35 // pred_check_branch
        %3083 = sbr.rel (%p3081) target = $region44
      $region43: #{focal_loss_forward.1} parent=35 // pred_region
        %v3084 = vld [vmem:[%s340] sm:$0x1]
        %v3085 = vld [vmem:[#allocation2] sm:$0x1]
        %vm3086 = vcmask 1040384
        %v3087 = vsel %vm3086, %v3085, 0.0
        %3088 = vadd.xlane.f32.xlu0 %v3087
        %v3089 = vpop.xlane.xlu0 %3088
        %v3090 = vrot.slane %v3089, 4
        %v3091 = vadd.f32 %v3089, %v3090
        %v3092 = vrot.slane %v3091, 2
        %v3093 = vadd.f32 %v3091, %v3092
        %v3094 = vrot.slane %v3093, 1
        %v3095 = vadd.f32 %v3093, %v3094
        %s3096 = vtos %v3095
        %v3097 = vstv %s3096
        %v3098 = vadd.f32 %v3084, %v3097
        %vm3099 = vcmask 0
        %3100 = vst.msk [vmem:[%s340] sm:$0x1] %vm3099, %v3098
        %v3101 = vld [vmem:[%s343] sm:$0x1]
        %v3102 = vld [vmem:[#allocation3] sm:$0x1]
        %v3103 = vsel %vm3086, %v3102, 0.0
        %3104 = vadd.xlane.f32.xlu0 %v3103
        %v3105 = vpop.xlane.xlu0 %3104
        %v3106 = vrot.slane %v3105, 4
        %v3107 = vadd.f32 %v3105, %v3106
        %v3108 = vrot.slane %v3107, 2
        %v3109 = vadd.f32 %v3107, %v3108
        %v3110 = vrot.slane %v3109, 1
        %v3111 = vadd.f32 %v3109, %v3110
        %s3112 = vtos %v3111
        %v3113 = vstv %s3112
        %v3114 = vadd.f32 %v3101, %v3113
        %3115 = vst.msk [vmem:[%s343] sm:$0x1] %vm3099, %v3114
        %v3116 = vld [vmem:[%s346] sm:$0x1]
        %v3117 = vld [vmem:[#allocation4] sm:$0x1]
        %v3118 = vsel %vm3086, %v3117, 0.0
        %3119 = vadd.xlane.f32.xlu0 %v3118
        %v3120 = vpop.xlane.xlu0 %3119
        %v3121 = vrot.slane %v3120, 4
        %v3122 = vadd.f32 %v3120, %v3121
        %v3123 = vrot.slane %v3122, 2
        %v3124 = vadd.f32 %v3122, %v3123
        %v3125 = vrot.slane %v3124, 1
        %v3126 = vadd.f32 %v3124, %v3125
        %s3127 = vtos %v3126
        %v3128 = vstv %s3127
        %v3129 = vadd.f32 %v3116, %v3128
        %3130 = vst.msk [vmem:[%s346] sm:$0x1] %vm3099, %v3129
      $region44: #{focal_loss_forward.1} parent=35 // pred_fallthru
        _
      %p3131 = scmp.lt.s32.totalorder %s22, 1
      %s3132 = scalar_select %p3131, %s22, 1
      %s3133 = scalar_lea.vmem %s4, %s3132
      %p3134 = scmp.lt.s32.totalorder %s22, 1
      %s3135 = scalar_select %p3134, %s22, 1
      %s3136 = scalar_lea.vmem %s5, %s3135
      %p3137 = scmp.lt.s32.totalorder %s22, 1
      %s3138 = scalar_select %p3137, %s22, 1
      %s3139 = scalar_lea.vmem %s6, %s3138
      // Predicated region
      $region45: #{focal_loss_forward.1} parent=35 // pred_check
        %p3140 = pneg %p156
      $region46: #{focal_loss_forward.1} parent=35 // pred_check_branch
        %3142 = sbr.rel (%p3140) target = $region48
      $region47: #{focal_loss_forward.1} parent=35 // pred_region
        _
      $region48: #{focal_loss_forward.1} parent=35 // pred_fallthru
        _
      // Predicated region
      $region49: #{focal_loss_forward.1} parent=35 // pred_check
        %p3143 = pneg %p182
      $region50: #{focal_loss_forward.1} parent=35 // pred_check_branch
        %3145 = sbr.rel (%p3143) target = $region52
      $region51: #{focal_loss_forward.1} parent=35 // pred_region
        _
      $region52: #{focal_loss_forward.1} parent=35 // pred_fallthru
        _
      // Predicated region
      $region53: #{focal_loss_forward.1} parent=35 // pred_check
        %p3146 = pneg %p208
      $region54: #{focal_loss_forward.1} parent=35 // pred_check_branch
        %3148 = sbr.rel (%p3146) target = $region56
      $region55: #{focal_loss_forward.1} parent=35 // pred_region
        _
      $region56: #{focal_loss_forward.1} parent=35 // pred_fallthru
        _
    $region36: #{focal_loss_forward.1} parent=5 // pred_fallthru
      _
    %p3149 = scmp.le.s32.totalorder 2, %s13
    // Predicated region
    $region57: #{focal_loss_forward.1} parent=5 // pred_check
      %p3150 = pneg %p3149
    $region58: #{focal_loss_forward.1} parent=5 // pred_check_branch
      %3152 = sbr.rel (%p3150) target = $region60
    $region59: #{focal_loss_forward.1} parent=5 // pred_region
      %s3153 = ssub.s32 %s13, 2
      // Predicated region
      $region61: #{focal_loss_forward.1} parent=59 // pred_check
        %p3154 = pneg %p162
      $region62: #{focal_loss_forward.1} parent=59 // pred_check_branch
        %3156 = sbr.rel (%p3154) target = $region64
      $region63: #{focal_loss_forward.1} parent=59 // pred_region
        %p3157 = scmp.lt.s32.totalorder %s24, 1
        %s3158 = scalar_select %p3157, %s24, 1
        %s3159 = scalar_lea.vmem %s4, %s3158
      $region64: #{focal_loss_forward.1} parent=59 // pred_fallthru
        _
      // Predicated region
      $region65: #{focal_loss_forward.1} parent=59 // pred_check
        %p3160 = pneg %p188
      $region66: #{focal_loss_forward.1} parent=59 // pred_check_branch
        %3162 = sbr.rel (%p3160) target = $region68
      $region67: #{focal_loss_forward.1} parent=59 // pred_region
        %p3163 = scmp.lt.s32.totalorder %s24, 1
        %s3164 = scalar_select %p3163, %s24, 1
        %s3165 = scalar_lea.vmem %s5, %s3164
      $region68: #{focal_loss_forward.1} parent=59 // pred_fallthru
        _
      // Predicated region
      $region69: #{focal_loss_forward.1} parent=59 // pred_check
        %p3166 = pneg %p214
      $region70: #{focal_loss_forward.1} parent=59 // pred_check_branch
        %3168 = sbr.rel (%p3166) target = $region72
      $region71: #{focal_loss_forward.1} parent=59 // pred_region
        %p3169 = scmp.lt.s32.totalorder %s24, 1
        %s3170 = scalar_select %p3169, %s24, 1
        %s3171 = scalar_lea.vmem %s6, %s3170
      $region72: #{focal_loss_forward.1} parent=59 // pred_fallthru
        _
    $region60: #{focal_loss_forward.1} parent=5 // pred_fallthru
      _
  $region6: #{focal_loss_forward.1} parent=0 // loop_footer
    %s17 = sadd.s32 1, %s13
  $region7: #{focal_loss_forward.1} parent=0 // loop_footer_branch
    %12 = sbr.rel target = $region3
  $region8: #{focal_loss_forward.1} parent=0 // loop_exit
    _

</llo_original>
